<compile_context>
chip_gen: v7x
topology: tpu7x:2x2x1
jax: 0.10.0
libtpu: 0.0.40
codegen_flags: <defaults>
</compile_context>

<pallas_src>
import jax
import jax.numpy as jnp
import numpy as np
from jax.experimental import pallas as pl
from jax.experimental.pallas import tpu as pltpu

EMB = 512              # per-task, per-modality embedding (3 modalities * 512 = 1536)
NUM_TASKS = 6          # spectacles, facial_hair, pose, emotion, gender, id
NUM_HEADS = 5          # the five 2-way Linear heads
HEAD_PAD = 128         # lane-dense packed head output width (first 10 cols used)
NORM_LA, NORM_UA = 10.0, 110.0


def _pick_tile(dim, target):
    """Largest multiple of 128 that divides `dim` and is <= target; else full dim."""
    t = min(target, dim)
    t -= t % 128
    while t >= 128:
        if dim % t == 0:
            return t
        t -= 128
    return dim


# ----------------------------- kernels ------------------------------------ #

def backbone_kernel(x_ref, w_ref, b_ref, o_ref, acc_ref):
    # grid = (modality, n_tile, k_tile); k (reduction over F) innermost.
    # x: (B, tk) f32, w: (tk, tn) bf16, b: (1, tn) f32, o: (B, tn) bf16, acc f32.
    k = pl.program_id(2)

    @pl.when(k == 0)
    def _init():
        acc_ref[...] = jnp.zeros_like(acc_ref)

    acc_ref[...] += jnp.dot(x_ref[...].astype(jnp.bfloat16), w_ref[...],
                            preferred_element_type=jnp.float32)

    @pl.when(k == pl.num_programs(2) - 1)
    def _done():
        o_ref[...] = (acc_ref[...] + b_ref[...]).astype(o_ref.dtype)


def heads_kernel(e_ref, w_ref, b_ref, o_ref, acc_ref):
    # All 5 Linear heads as one lane-dense matmul, accumulated over modalities.
    # e: (B, 5*EMB) bf16 (modality m's task-0..4 embeddings),
    # w: (5*EMB, HEAD_PAD) bf16 block-diagonal packed, b: (1, HEAD_PAD) f32,
    # o/acc: (B, HEAD_PAD) f32.
    m = pl.program_id(0)

    @pl.when(m == 0)
    def _init():
        acc_ref[...] = jnp.zeros_like(acc_ref)

    acc_ref[...] += jnp.dot(e_ref[...], w_ref[...],
                            preferred_element_type=jnp.float32)

    @pl.when(m == pl.num_programs(0) - 1)
    def _done():
        o_ref[...] = acc_ref[...] + b_ref[...]


def maglinear_kernel(x_ref, w_ref, o_ref):
    # x: (B, 1536) bf16 already L2-normalized; w: (1536, tn) bf16 column-normalized.
    cos = jnp.dot(x_ref[...], w_ref[...], preferred_element_type=jnp.float32)
    o_ref[...] = jnp.clip(cos, -1.0, 1.0)


# ----------------------------- wrappers ------------------------------------ #

def run_backbones(x2, w_bb, b_bb):
    # x2: (B, 3*F_pad) f32 (modality m occupies columns [m*F_pad, (m+1)*F_pad)),
    # w_bb: (3, F_pad, 6*EMB) bf16, b_bb: (3, 1, 6*EMB) f32 -> emb (3, B, 6*EMB) bf16
    B = x2.shape[0]
    M, F_pad, OUT = w_bb.shape
    tk = _pick_tile(F_pad, 1024)
    tn = _pick_tile(OUT, 1024)          # <= ~2 MiB/buffer bf16 weight tiles
    kt = F_pad // tk
    grid = (M, OUT // tn, kt)
    return pl.pallas_call(
        backbone_kernel,
        out_shape=jax.ShapeDtypeStruct((M, B, OUT), jnp.bfloat16),
        grid=grid,
        in_specs=[
            pl.BlockSpec((B, tk), lambda m, n, k: (0, m * kt + k)),
            pl.BlockSpec((None, tk, tn), lambda m, n, k: (m, k, n)),
            pl.BlockSpec((None, 1, tn), lambda m, n, k: (m, 0, n)),
        ],
        out_specs=pl.BlockSpec((None, B, tn), lambda m, n, k: (m, 0, n)),
        scratch_shapes=[pltpu.VMEM((B, tn), jnp.float32)],
        compiler_params=pltpu.CompilerParams(
            dimension_semantics=("parallel", "parallel", "arbitrary")),
    )(x2, w_bb, b_bb)


def run_heads(emb, w_pack, b_pack):
    # emb: (3, B, 6*EMB) bf16; w_pack: (3, 5*EMB, HEAD_PAD) bf16; b_pack: (1, HEAD_PAD) f32
    M, B, _ = emb.shape
    HIN = w_pack.shape[1]               # 5*EMB = 2560 (heads read emb[..., :2560])
    HOUT = w_pack.shape[2]              # 128 (lane-dense)
    return pl.pallas_call(
        heads_kernel,
        out_shape=jax.ShapeDtypeStruct((B, HOUT), jnp.float32),
        grid=(M,),
        in_specs=[
            pl.BlockSpec((None, B, HIN), lambda m: (m, 0, 0)),
            pl.BlockSpec((None, HIN, HOUT), lambda m: (m, 0, 0)),
            pl.BlockSpec((1, HOUT), lambda m: (0, 0)),
        ],
        out_specs=pl.BlockSpec((B, HOUT), lambda m: (0, 0)),
        scratch_shapes=[pltpu.VMEM((B, HOUT), jnp.float32)],
        compiler_params=pltpu.CompilerParams(
            dimension_semantics=("arbitrary",)),
    )(emb, w_pack, b_pack)


def run_maglinear(x_hat, w_hat):
    # x_hat: (B, 1536) bf16 (pre-normalized, resident), w_hat: (1536, NC) bf16
    # (column-normalized) streamed in class tiles -> (B, NC) f32 clipped cosines.
    B, D = x_hat.shape
    NC = w_hat.shape[1]
    tn = _pick_tile(NC, 2048)           # 1536*2048*2B ~= 6 MiB/buffer -> v7x safe
    return pl.pallas_call(
        maglinear_kernel,
        out_shape=jax.ShapeDtypeStruct((B, NC), jnp.float32),
        grid=(NC // tn,),
        in_specs=[
            pl.BlockSpec((B, D), lambda j: (0, 0)),
            pl.BlockSpec((D, tn), lambda j: (0, j)),
        ],
        out_specs=pl.BlockSpec((B, tn), lambda j: (0, j)),
        compiler_params=pltpu.CompilerParams(
            dimension_semantics=("parallel",)),
    )(x_hat, w_hat)


# ----------------------------- parameters ---------------------------------- #

def pack_heads(w_heads, b_heads):
    """Pack 5 (1536, 2) heads into per-modality block-diagonal (2560, 128) weights
    so all heads become a single lane-dense matmul accumulated over modalities."""
    w_pack = jnp.zeros((3, NUM_HEADS * EMB, HEAD_PAD), jnp.float32)
    b_pack = jnp.zeros((1, HEAD_PAD), jnp.float32)
    for t in range(NUM_HEADS):
        for m in range(3):
            w_pack = w_pack.at[m, t * EMB:(t + 1) * EMB, 2 * t:2 * t + 2].set(
                w_heads[t, m * EMB:(m + 1) * EMB, :])
        b_pack = b_pack.at[0, 2 * t:2 * t + 2].set(b_heads[t])
    return w_pack.astype(jnp.bfloat16), b_pack


def init_params(key, feat_dim, num_classes):
    F_pad = ((feat_dim + 127) // 128) * 128       # lane-align the feature dim
    k = jax.random.split(key, 6)
    w_bb = 0.02 * jax.random.normal(k[0], (3, F_pad, NUM_TASKS * EMB), jnp.float32)
    w_bb = w_bb.at[:, feat_dim:, :].set(0.0)      # padded feature rows are inert
    b_bb = 0.01 * jax.random.normal(k[1], (3, 1, NUM_TASKS * EMB), jnp.float32)
    w_heads = 0.02 * jax.random.normal(k[2], (NUM_HEADS, 3 * EMB, 2), jnp.float32)
    b_heads = 0.01 * jax.random.normal(k[3], (NUM_HEADS, 2), jnp.float32)
    w_id = 0.02 * jax.random.normal(k[4], (3 * EMB, num_classes), jnp.float32)
    w_pack, b_pack = pack_heads(w_heads, b_heads)
    return {
        "w_bb": w_bb.astype(jnp.bfloat16),        # bf16 streamed weights
        "b_bb": b_bb,
        "w_heads_packed": w_pack,                 # bf16 (3, 2560, 128)
        "b_heads_packed": b_pack,                 # f32  (1, 128)
        "w_id": w_id.astype(jnp.bfloat16),        # bf16 (1536, NC)
        # raw per-head weights kept only for the pure-JAX reference check
        "w_heads": w_heads.astype(jnp.bfloat16),
        "b_heads": b_heads,
    }


# ----------------------------- forward ------------------------------------- #

@jax.jit
def concat_mtl_forward(x, params):
    """x: (B, 3 modalities, C, H, W) float32 — normalmap, albedo, depthmap."""
    B = x.shape[0]
    F = x.shape[2] * x.shape[3] * x.shape[4]
    F_pad = params["w_bb"].shape[1]
    x3 = x.reshape(B, 3, F)
    if F_pad != F:
        x3 = jnp.pad(x3, ((0, 0), (0, 0), (0, F_pad - F)))
    x2 = x3.reshape(B, 3 * F_pad)      # contiguous flatten — no transpose copy

    emb = run_backbones(x2, params["w_bb"], params["b_bb"])   # (3, B, 3072) bf16

    # fused 5 heads: sum over modality of per-modality partial matmuls (lane-dense)
    heads = run_heads(emb, params["w_heads_packed"], params["b_heads_packed"])
    x_spectacles = heads[:, 0:2]
    x_facial_hair = heads[:, 2:4]
    x_pose = heads[:, 4:6]
    x_emotion = heads[:, 6:8]
    x_gender = heads[:, 8:10]

    # MagLinear id head: torch.cat([normalmap_id, albedo_id, depthmap_id], dim=1)
    id_e = jnp.concatenate(
        [emb[0, :, 5 * EMB:], emb[1, :, 5 * EMB:], emb[2, :, 5 * EMB:]],
        axis=1).astype(jnp.float32)                            # (B, 1536)
    sq = jnp.sum(id_e * id_e, axis=1, keepdims=True)
    x_norm = jnp.sqrt(sq)
    x_hat = (id_e * jax.lax.rsqrt(jnp.maximum(sq, 1e-24))).astype(jnp.bfloat16)

    # TODO(synk): for inference the column-normalized W should be cached across
    #             calls instead of re-derived each forward.
    w = params["w_id"].astype(jnp.float32)
    w_hat = (w * jax.lax.rsqrt(
        jnp.maximum(jnp.sum(w * w, axis=0, keepdims=True), 1e-24))
             ).astype(jnp.bfloat16)

    x_id_logits = run_maglinear(x_hat, w_hat)                  # (B, NC) f32
    x_id_norm = jnp.clip(x_norm, NORM_LA, NORM_UA)             # (B, 1)

    return (x_spectacles, x_facial_hair, x_pose, x_emotion, x_gender,
            x_id_logits, x_id_norm)


# ----------------------------- reference ----------------------------------- #

def reference_forward(x, params):
    """Pure-JAX reference with the same bf16 operand values as the kernels."""
    B = x.shape[0]
    F = x.shape[2] * x.shape[3] * x.shape[4]
    F_pad = params["w_bb"].shape[1]
    x3 = x.reshape(B, 3, F)
    if F_pad != F:
        x3 = jnp.pad(x3, ((0, 0), (0, 0), (0, F_pad - F)))
    embs = []
    for m in range(3):
        xm = x3[:, m, :].astype(jnp.bfloat16).astype(jnp.float32)
        wm = params["w_bb"][m].astype(jnp.float32)
        embs.append((xm @ wm + params["b_bb"][m]).astype(jnp.bfloat16))

    def task(t):
        return jnp.concatenate([e[:, t * EMB:(t + 1) * EMB] for e in embs], axis=1)

    outs = []
    for t in range(NUM_HEADS):
        wt = params["w_heads"][t].astype(jnp.float32)
        outs.append(task(t).astype(jnp.float32) @ wt + params["b_heads"][t])

    id_e = task(5).astype(jnp.float32)
    sq = jnp.sum(id_e * id_e, axis=1, keepdims=True)
    x_norm = jnp.sqrt(sq)
    x_hat = (id_e * jax.lax.rsqrt(jnp.maximum(sq, 1e-24))
             ).astype(jnp.bfloat16).astype(jnp.float32)
    w = params["w_id"].astype(jnp.float32)
    w_hat = (w * jax.lax.rsqrt(
        jnp.maximum(jnp.sum(w * w, axis=0, keepdims=True), 1e-24))
             ).astype(jnp.bfloat16).astype(jnp.float32)
    cos = jnp.clip(x_hat @ w_hat, -1.0, 1.0)
    return (*outs, cos, jnp.clip(x_norm, NORM_LA, NORM_UA))


if __name__ == "__main__":
    B, C, H, W = 2, 4, 16, 16
    NUM_CLASSES = 512
    key = jax.random.PRNGKey(0)
    kx, kp = jax.random.split(key)

    x = jax.random.normal(kx, (B, 3, C, H, W), jnp.float32)
    params = init_params(kp, C * H * W, NUM_CLASSES)

    outs = concat_mtl_forward(x, params)
    outs = jax.tree_util.tree_map(jax.block_until_ready, outs)

    expected = [(B, 2)] * 5 + [(B, NUM_CLASSES), (B, 1)]
    assert all(o.shape == s for o, s in zip(outs, expected)), \
        [o.shape for o in outs]

    refs = reference_forward(x, params)
    for o, r in zip(outs, refs):
        np.testing.assert_allclose(np.asarray(o, np.float32),
                                   np.asarray(r, np.float32),
                                   rtol=2e-2, atol=2e-2)
    print("KERNEL_OK")
</pallas_src>

<mosaic_0001>
module attributes {stable_mosaic.version = 11 : i64} {
  func.func @backbone_kernel(%arg0: i32, %arg1: i32, %arg2: i32, %arg3: memref<2x1024xf32, #tpu.memory_space<vmem>>, %arg4: memref<1x1024x1024xbf16, #tpu.memory_space<vmem>>, %arg5: memref<1x1x1024xf32, #tpu.memory_space<vmem>>, %arg6: memref<1x2x1024xbf16, #tpu.memory_space<vmem>>, %arg7: memref<2x1024xf32, #tpu.memory_space<vmem>>) attributes {dimension_semantics = [#tpu.dimension_semantics<parallel>, #tpu.dimension_semantics<parallel>, #tpu.dimension_semantics<arbitrary>], iteration_bounds = array<i64: 3, 3, 1>, scalar_prefetch = 0 : i64, scratch_operands = 1 : i64, tpu.core_type = #tpu.core_type<tc>, window_params = [{transform_indices = @transform_0, window_bounds = array<i64: 2, 1024>}, {transform_indices = @transform_1, window_bounds = array<i64: 1, 1024, 1024>}, {transform_indices = @transform_2, window_bounds = array<i64: 1, 1, 1024>}, {transform_indices = @transform_3, window_bounds = array<i64: 1, 2, 1024>}]} {
    %c0_i32 = arith.constant 0 : i32
    %0 = arith.cmpi eq, %arg2, %c0_i32 : i32
    %1 = arith.extui %0 : i1 to i32
    %c0_i32_0 = arith.constant 0 : i32
    %2 = arith.cmpi ne, %1, %c0_i32_0 : i32
    scf.if %2 {
      %cst_11 = arith.constant 0.000000e+00 : f32
      %14 = vector.broadcast %cst_11 : f32 to vector<2x1024xf32>
      %c0_12 = arith.constant 0 : index
      %c0_13 = arith.constant 0 : index
      %15 = vector.load %arg7[%c0_12, %c0_13] : memref<2x1024xf32, #tpu.memory_space<vmem>>, vector<2x1024xf32>
      tpu.vector_store %arg7[%c0_12, %c0_13], %14 {strides = array<i32>} : memref<2x1024xf32, #tpu.memory_space<vmem>>, vector<2x1024xf32>,
    } else {
    }
    %c0 = arith.constant 0 : index
    %c0_1 = arith.constant 0 : index
    %3 = vector.load %arg7[%c0, %c0_1] : memref<2x1024xf32, #tpu.memory_space<vmem>>, vector<2x1024xf32>
    %c0_2 = arith.constant 0 : index
    %c0_3 = arith.constant 0 : index
    %4 = vector.load %arg3[%c0_2, %c0_3] : memref<2x1024xf32, #tpu.memory_space<vmem>>, vector<2x1024xf32>
    %5 = arith.truncf %4 : vector<2x1024xf32> to vector<2x1024xbf16>
    %c0_4 = arith.constant 0 : index
    %c0_5 = arith.constant 0 : index
    %c0_6 = arith.constant 0 : index
    %6 = vector.load %arg4[%c0_4, %c0_5, %c0_6] : memref<1x1024x1024xbf16, #tpu.memory_space<vmem>>, vector<1x1024x1024xbf16>
    %7 = vector.shape_cast %6 : vector<1x1024x1024xbf16> to vector<1024x1024xbf16>
    %cst = arith.constant dense<0.000000e+00> : vector<2x1024xf32>
    %8 = tpu.matmul %5, %7, %cst {dimension_numbers = #tpu.dot_dimension_numbers<[1], [0], [0], [1], [0, 0, 1, 1], [], []>} : vector<2x1024xbf16>, vector<1024x1024xbf16>, vector<2x1024xf32> -> vector<2x1024xf32>
    %9 = arith.addf %3, %8 : vector<2x1024xf32>
    %c0_7 = arith.constant 0 : index
    %c0_8 = arith.constant 0 : index
    %10 = vector.load %arg7[%c0_7, %c0_8] : memref<2x1024xf32, #tpu.memory_space<vmem>>, vector<2x1024xf32>
    tpu.vector_store %arg7[%c0_7, %c0_8], %9 {strides = array<i32>} : memref<2x1024xf32, #tpu.memory_space<vmem>>, vector<2x1024xf32>,
    %c0_i32_9 = arith.constant 0 : i32
    %11 = arith.cmpi eq, %arg2, %c0_i32_9 : i32
    %12 = arith.extui %11 : i1 to i32
    %c0_i32_10 = arith.constant 0 : i32
    %13 = arith.cmpi ne, %12, %c0_i32_10 : i32
    scf.if %13 {
      %c0_11 = arith.constant 0 : index
      %c0_12 = arith.constant 0 : index
      %14 = vector.load %arg7[%c0_11, %c0_12] : memref<2x1024xf32, #tpu.memory_space<vmem>>, vector<2x1024xf32>
      %c0_13 = arith.constant 0 : index
      %c0_14 = arith.constant 0 : index
      %c0_15 = arith.constant 0 : index
      %15 = vector.load %arg5[%c0_13, %c0_14, %c0_15] : memref<1x1x1024xf32, #tpu.memory_space<vmem>>, vector<1x1x1024xf32>
      %16 = vector.shape_cast %15 : vector<1x1x1024xf32> to vector<1x1024xf32>
      %17 = vector.broadcast %16 : vector<1x1024xf32> to vector<2x1024xf32>
      %18 = arith.addf %14, %17 : vector<2x1024xf32>
      %19 = arith.truncf %18 : vector<2x1024xf32> to vector<2x1024xbf16>
      %c0_16 = arith.constant 0 : index
      %c0_17 = arith.constant 0 : index
      %c0_18 = arith.constant 0 : index
      %20 = vector.load %arg6[%c0_16, %c0_17, %c0_18] : memref<1x2x1024xbf16, #tpu.memory_space<vmem>>, vector<1x2x1024xbf16>
      %21 = vector.shape_cast %20 : vector<1x2x1024xbf16> to vector<2x1024xbf16>
      %22 = vector.shape_cast %19 : vector<2x1024xbf16> to vector<1x2x1024xbf16>
      tpu.vector_store %arg6[%c0_16, %c0_17, %c0_18], %22 {strides = array<i32>} : memref<1x2x1024xbf16, #tpu.memory_space<vmem>>, vector<1x2x1024xbf16>,
    } else {
    }
    return
  }
  func.func @transform_0(%arg0: i32, %arg1: i32, %arg2: i32) -> (i32, i32) {
    %c1_i32 = arith.constant 1 : i32
    %0 = arith.muli %arg0, %c1_i32 : i32
    %1 = arith.addi %0, %arg2 : i32
    %c0_i32 = arith.constant 0 : i32
    %c0_i32_0 = arith.constant 0 : i32
    return %c0_i32, %1 : i32, i32
  }
  func.func @transform_1(%arg0: i32, %arg1: i32, %arg2: i32) -> (i32, i32, i32) {
    %c0_i32 = arith.constant 0 : i32
    return %arg0, %arg2, %arg1 : i32, i32, i32
  }
  func.func @transform_2(%arg0: i32, %arg1: i32, %arg2: i32) -> (i32, i32, i32) {
    %c0_i32 = arith.constant 0 : i32
    %c0_i32_0 = arith.constant 0 : i32
    return %arg0, %c0_i32, %arg1 : i32, i32, i32
  }
  func.func @transform_3(%arg0: i32, %arg1: i32, %arg2: i32) -> (i32, i32, i32) {
    %c0_i32 = arith.constant 0 : i32
    %c0_i32_0 = arith.constant 0 : i32
    return %arg0, %c0_i32, %arg1 : i32, i32, i32
  }
}

module attributes {stable_mosaic.version = 11 : i64} {
  func.func @heads_kernel(%arg0: i32, %arg1: memref<1x2x2560xbf16, #tpu.memory_space<vmem>>, %arg2: memref<1x2560x128xbf16, #tpu.memory_space<vmem>>, %arg3: memref<1x128xf32, #tpu.memory_space<vmem>>, %arg4: memref<2x128xf32, #tpu.memory_space<vmem>>, %arg5: memref<2x128xf32, #tpu.memory_space<vmem>>) attributes {dimension_semantics = [#tpu.dimension_semantics<arbitrary>], iteration_bounds = array<i64: 3>, scalar_prefetch = 0 : i64, scratch_operands = 1 : i64, tpu.core_type = #tpu.core_type<tc>, window_params = [{transform_indices = @transform_0, window_bounds = array<i64: 1, 2, 2560>}, {transform_indices = @transform_1, window_bounds = array<i64: 1, 2560, 128>}, {pipeline_mode = #tpu.pipeline_mode<synchronous>, transform_indices = @transform_2, window_bounds = array<i64: 1, 128>}, {pipeline_mode = #tpu.pipeline_mode<synchronous>, transform_indices = @transform_3, window_bounds = array<i64: 2, 128>}]} {
    %c0_i32 = arith.constant 0 : i32
    %0 = arith.cmpi eq, %arg0, %c0_i32 : i32
    %1 = arith.extui %0 : i1 to i32
    %c0_i32_0 = arith.constant 0 : i32
    %2 = arith.cmpi ne, %1, %c0_i32_0 : i32
    scf.if %2 {
      %cst_11 = arith.constant 0.000000e+00 : f32
      %14 = vector.broadcast %cst_11 : f32 to vector<2x128xf32>
      %c0_12 = arith.constant 0 : index
      %c0_13 = arith.constant 0 : index
      %15 = vector.load %arg5[%c0_12, %c0_13] : memref<2x128xf32, #tpu.memory_space<vmem>>, vector<2x128xf32>
      tpu.vector_store %arg5[%c0_12, %c0_13], %14 {strides = array<i32>} : memref<2x128xf32, #tpu.memory_space<vmem>>, vector<2x128xf32>,
    } else {
    }
    %c0 = arith.constant 0 : index
    %c0_1 = arith.constant 0 : index
    %3 = vector.load %arg5[%c0, %c0_1] : memref<2x128xf32, #tpu.memory_space<vmem>>, vector<2x128xf32>
    %c0_2 = arith.constant 0 : index
    %c0_3 = arith.constant 0 : index
    %c0_4 = arith.constant 0 : index
    %4 = vector.load %arg1[%c0_2, %c0_3, %c0_4] : memref<1x2x2560xbf16, #tpu.memory_space<vmem>>, vector<1x2x2560xbf16>
    %5 = vector.shape_cast %4 : vector<1x2x2560xbf16> to vector<2x2560xbf16>
    %c0_5 = arith.constant 0 : index
    %c0_6 = arith.constant 0 : index
    %c0_7 = arith.constant 0 : index
    %6 = vector.load %arg2[%c0_5, %c0_6, %c0_7] : memref<1x2560x128xbf16, #tpu.memory_space<vmem>>, vector<1x2560x128xbf16>
    %7 = vector.shape_cast %6 : vector<1x2560x128xbf16> to vector<2560x128xbf16>
    %cst = arith.constant dense<0.000000e+00> : vector<2x128xf32>
    %8 = tpu.matmul %5, %7, %cst {dimension_numbers = #tpu.dot_dimension_numbers<[1], [0], [0], [1], [0, 0, 1, 1], [], []>} : vector<2x2560xbf16>, vector<2560x128xbf16>, vector<2x128xf32> -> vector<2x128xf32>
    %9 = arith.addf %3, %8 : vector<2x128xf32>
    %c0_8 = arith.constant 0 : index
    %c0_9 = arith.constant 0 : index
    %10 = vector.load %arg5[%c0_8, %c0_9] : memref<2x128xf32, #tpu.memory_space<vmem>>, vector<2x128xf32>
    tpu.vector_store %arg5[%c0_8, %c0_9], %9 {strides = array<i32>} : memref<2x128xf32, #tpu.memory_space<vmem>>, vector<2x128xf32>,
    %c2_i32 = arith.constant 2 : i32
    %11 = arith.cmpi eq, %arg0, %c2_i32 : i32
    %12 = arith.extui %11 : i1 to i32
    %c0_i32_10 = arith.constant 0 : i32
    %13 = arith.cmpi ne, %12, %c0_i32_10 : i32
    scf.if %13 {
      %c0_11 = arith.constant 0 : index
      %c0_12 = arith.constant 0 : index
      %14 = vector.load %arg5[%c0_11, %c0_12] : memref<2x128xf32, #tpu.memory_space<vmem>>, vector<2x128xf32>
      %c0_13 = arith.constant 0 : index
      %c0_14 = arith.constant 0 : index
      %15 = vector.load %arg3[%c0_13, %c0_14] : memref<1x128xf32, #tpu.memory_space<vmem>>, vector<1x128xf32>
      %16 = vector.broadcast %15 : vector<1x128xf32> to vector<2x128xf32>
      %17 = arith.addf %14, %16 : vector<2x128xf32>
      %c0_15 = arith.constant 0 : index
      %c0_16 = arith.constant 0 : index
      %18 = vector.load %arg4[%c0_15, %c0_16] : memref<2x128xf32, #tpu.memory_space<vmem>>, vector<2x128xf32>
      tpu.vector_store %arg4[%c0_15, %c0_16], %17 {strides = array<i32>} : memref<2x128xf32, #tpu.memory_space<vmem>>, vector<2x128xf32>,
    } else {
    }
    return
  }
  func.func @transform_0(%arg0: i32) -> (i32, i32, i32) {
    %c0_i32 = arith.constant 0 : i32
    %c0_i32_0 = arith.constant 0 : i32
    %c0_i32_1 = arith.constant 0 : i32
    return %arg0, %c0_i32, %c0_i32_0 : i32, i32, i32
  }
  func.func @transform_1(%arg0: i32) -> (i32, i32, i32) {
    %c0_i32 = arith.constant 0 : i32
    %c0_i32_0 = arith.constant 0 : i32
    %c0_i32_1 = arith.constant 0 : i32
    return %arg0, %c0_i32, %c0_i32_0 : i32, i32, i32
  }
  func.func @transform_2(%arg0: i32) -> (i32, i32) {
    %c0_i32 = arith.constant 0 : i32
    %c0_i32_0 = arith.constant 0 : i32
    %c0_i32_1 = arith.constant 0 : i32
    return %c0_i32, %c0_i32_0 : i32, i32
  }
  func.func @transform_3(%arg0: i32) -> (i32, i32) {
    %c0_i32 = arith.constant 0 : i32
    %c0_i32_0 = arith.constant 0 : i32
    %c0_i32_1 = arith.constant 0 : i32
    return %c0_i32, %c0_i32_0 : i32, i32
  }
}

module attributes {stable_mosaic.version = 11 : i64} {
  func.func @maglinear_kernel(%arg0: i32, %arg1: memref<2x1536xbf16, #tpu.memory_space<vmem>>, %arg2: memref<1536x512xbf16, #tpu.memory_space<vmem>>, %arg3: memref<2x512xf32, #tpu.memory_space<vmem>>) attributes {dimension_semantics = [#tpu.dimension_semantics<parallel>], iteration_bounds = array<i64: 1>, scalar_prefetch = 0 : i64, scratch_operands = 0 : i64, tpu.core_type = #tpu.core_type<tc>, window_params = [{pipeline_mode = #tpu.pipeline_mode<synchronous>, transform_indices = @transform_0, window_bounds = array<i64: 2, 1536>}, {transform_indices = @transform_1, window_bounds = array<i64: 1536, 512>}, {transform_indices = @transform_2, window_bounds = array<i64: 2, 512>}]} {
    %c0 = arith.constant 0 : index
    %c0_0 = arith.constant 0 : index
    %0 = vector.load %arg1[%c0, %c0_0] : memref<2x1536xbf16, #tpu.memory_space<vmem>>, vector<2x1536xbf16>
    %c0_1 = arith.constant 0 : index
    %c0_2 = arith.constant 0 : index
    %1 = vector.load %arg2[%c0_1, %c0_2] : memref<1536x512xbf16, #tpu.memory_space<vmem>>, vector<1536x512xbf16>
    %cst = arith.constant dense<0.000000e+00> : vector<2x512xf32>
    %2 = tpu.matmul %0, %1, %cst {dimension_numbers = #tpu.dot_dimension_numbers<[1], [0], [0], [1], [0, 0, 1, 1], [], []>} : vector<2x1536xbf16>, vector<1536x512xbf16>, vector<2x512xf32> -> vector<2x512xf32>
    %cst_3 = arith.constant -1.000000e+00 : f32
    %cst_4 = arith.constant 1.000000e+00 : f32
    %3 = vector.broadcast %cst_3 : f32 to vector<2x512xf32>
    %4 = arith.maximumf %3, %2 : vector<2x512xf32>
    %5 = vector.broadcast %cst_4 : f32 to vector<2x512xf32>
    %6 = arith.minimumf %5, %4 : vector<2x512xf32>
    %c0_5 = arith.constant 0 : index
    %c0_6 = arith.constant 0 : index
    %7 = vector.load %arg3[%c0_5, %c0_6] : memref<2x512xf32, #tpu.memory_space<vmem>>, vector<2x512xf32>
    tpu.vector_store %arg3[%c0_5, %c0_6], %6 {strides = array<i32>} : memref<2x512xf32, #tpu.memory_space<vmem>>, vector<2x512xf32>,
    return
  }
  func.func @transform_0(%arg0: i32) -> (i32, i32) {
    %c0_i32 = arith.constant 0 : i32
    %c0_i32_0 = arith.constant 0 : i32
    %c0_i32_1 = arith.constant 0 : i32
    return %c0_i32, %c0_i32_0 : i32, i32
  }
  func.func @transform_1(%arg0: i32) -> (i32, i32) {
    %c0_i32 = arith.constant 0 : i32
    %c0_i32_0 = arith.constant 0 : i32
    return %c0_i32, %arg0 : i32, i32
  }
  func.func @transform_2(%arg0: i32) -> (i32, i32) {
    %c0_i32 = arith.constant 0 : i32
    %c0_i32_0 = arith.constant 0 : i32
    return %c0_i32, %arg0 : i32, i32
  }
}

</mosaic_0001>

<llo_original>
// kernel: concat_mtl_forward.4
$region0: #{concat_mtl_forward.4}
  #allocation0 [shape = 'u32[]', space=smem, size = 0x4, offset = 0x4, fixed_abs, tag = 'smem constant byte address 0x4 - core index']
  #allocation1 [shape = 'u32[144,128]{1,0:T(1,128)}', space=vmem, size = 0x12000, scoped, tag = 'internal scratch']
  #allocation2 [shape = 'f32[2,128]{1,0:T(2,128)}', space=vmem, size = 0x400, scoped, tag = 'scratch operand']
  %s0 = inlined_call_operand.vmem [shape: bf16[3,2,3072], index: 0, kind: input, shape index: {}]
  %s1 = inlined_call_operand.vmem [shape: bf16[3,2560,128], index: 1, kind: input, shape index: {}]
  %s2 = inlined_call_operand.vmem [shape: f32[1,128], index: 2, kind: input, shape index: {}]
  %s3 = inlined_call_operand.vmem [shape: f32[2,128], index: 3, kind: output, shape index: {}]
  %s4 = sld [smem:[#allocation0]]
  $region53: #{concat_mtl_forward.4} parent=0
    _
  %s6 = ssub.s32 1, %s4
  %s7 = scalar_select 0, %s6, %s4
  loop: start=0, step=1, limit=5
  $region2: #{concat_mtl_forward.4} parent=0 // loop_pre_header
    _
  $region3: #{concat_mtl_forward.4} parent=0 // loop_header
    %s9 = sphi 0, %s13
    %p10 = scmp.ge.s32.totalorder %s9, 5
    %s19 = sphi 0, %s21
    %s22 = sphi 0, %s19
    %s23 = sphi 0, %s22
    %s39 = sphi 0, %s23
    %s45 = sphi 0, %s47
    %s48 = sphi 0, %s45
    %s49 = sphi 0, %s48
    %s65 = sphi 0, %s49
    %s69 = sphi 0, %s69
    %s71 = sphi 0, %s69
    %s72 = sphi 0, %s71
    %s86 = sphi 0, %s72
    %s90 = sphi 0, %s90
    %s92 = sphi 0, %s90
    %s93 = sphi 0, %s92
    %s107 = sphi 0, %s93
  $region4: #{concat_mtl_forward.4} parent=0 // loop_header_branch
    %12 = sbr.rel (%p10) target = $region8
  $region5: #{concat_mtl_forward.4} parent=0 // loop_body
    %s14 = ssub.s32 %s9, 1
    %s15 = ssub.s32 %s9, 2
    %s16 = sadd.s32 %s9, 1
    %s17 = ssub.s32 %s9, %s16
    %p18 = scmp.eq.s32.totalorder %s17, 0
    %s20 = sadd.s32 %s19, 1
    %s21 = scalar_select %p18, %s19, %s20
    %p24 = pneg %p18
    %p25 = scmp.eq.s32.totalorder %s9, 2
    %p26 = por %p24, %p25
    %p27 = scmp.ne.s32.totalorder %s19, %s22
    %p28 = scmp.eq.s32.totalorder %s9, 0
    %p29 = por %p27, %p28
    %p30 = scmp.ne.s32.totalorder %s19, %s22
    %p31 = scmp.eq.s32.totalorder %s14, 2
    %p32 = por %p30, %p31
    %p33 = scmp.ne.s32.totalorder %s22, %s23
    %p34 = scmp.eq.s32.totalorder %s14, 0
    %p35 = por %p33, %p34
    %p36 = scmp.ne.s32.totalorder %s22, %s23
    %p37 = scmp.eq.s32.totalorder %s15, 2
    %p38 = por %p36, %p37
    %p40 = scmp.ne.s32.totalorder %s23, %s39
    %p41 = scmp.eq.s32.totalorder %s15, 0
    %p42 = por %p40, %p41
    %s43 = ssub.s32 %s9, %s16
    %p44 = scmp.eq.s32.totalorder %s43, 0
    %s46 = sadd.s32 %s45, 1
    %s47 = scalar_select %p44, %s45, %s46
    %p50 = pneg %p44
    %p51 = scmp.eq.s32.totalorder %s9, 2
    %p52 = por %p50, %p51
    %p53 = scmp.ne.s32.totalorder %s45, %s48
    %p54 = scmp.eq.s32.totalorder %s9, 0
    %p55 = por %p53, %p54
    %p56 = scmp.ne.s32.totalorder %s45, %s48
    %p57 = scmp.eq.s32.totalorder %s14, 2
    %p58 = por %p56, %p57
    %p59 = scmp.ne.s32.totalorder %s48, %s49
    %p60 = scmp.eq.s32.totalorder %s14, 0
    %p61 = por %p59, %p60
    %p62 = scmp.ne.s32.totalorder %s48, %s49
    %p63 = scmp.eq.s32.totalorder %s15, 2
    %p64 = por %p62, %p63
    %p66 = scmp.ne.s32.totalorder %s49, %s65
    %p67 = scmp.eq.s32.totalorder %s15, 0
    %p68 = por %p66, %p67
    %s70 = sadd.s32 %s69, 1
    %p73 = scmp.eq.s32.totalorder %s9, 2
    %p74 = scmp.ne.s32.totalorder %s69, %s71
    %p75 = scmp.eq.s32.totalorder %s9, 0
    %p76 = por %p74, %p75
    %p77 = scmp.ne.s32.totalorder %s69, %s71
    %p78 = scmp.eq.s32.totalorder %s14, 2
    %p79 = por %p77, %p78
    %p80 = scmp.ne.s32.totalorder %s71, %s72
    %p81 = scmp.eq.s32.totalorder %s14, 0
    %p82 = por %p80, %p81
    %p83 = scmp.ne.s32.totalorder %s71, %s72
    %p84 = scmp.eq.s32.totalorder %s15, 2
    %p85 = por %p83, %p84
    %p87 = scmp.ne.s32.totalorder %s72, %s86
    %p88 = scmp.eq.s32.totalorder %s15, 0
    %p89 = por %p87, %p88
    %s91 = sadd.s32 %s90, 1
    %p94 = scmp.eq.s32.totalorder %s9, 2
    %p95 = scmp.ne.s32.totalorder %s90, %s92
    %p96 = scmp.eq.s32.totalorder %s9, 0
    %p97 = por %p95, %p96
    %p98 = scmp.ne.s32.totalorder %s90, %s92
    %p99 = scmp.eq.s32.totalorder %s14, 2
    %p100 = por %p98, %p99
    %p101 = scmp.ne.s32.totalorder %s92, %s93
    %p102 = scmp.eq.s32.totalorder %s14, 0
    %p103 = por %p101, %p102
    %p104 = scmp.ne.s32.totalorder %s92, %s93
    %p105 = scmp.eq.s32.totalorder %s15, 2
    %p106 = por %p104, %p105
    %p108 = scmp.ne.s32.totalorder %s93, %s107
    %p109 = scmp.eq.s32.totalorder %s15, 0
    %p110 = por %p108, %p109
    %p111 = scmp.le.s32.totalorder 1, %s9
    %p112 = scmp.lt.s32.totalorder %s9, 4
    %p113 = pnand %p111, %p112
    %p114 = pneg %p113
    // Predicated region
    $region9: #{concat_mtl_forward.4} parent=5 // pred_check
      _
    $region10: #{concat_mtl_forward.4} parent=5 // pred_check_branch
      %116 = sbr.rel (%p113) target = $region12
    $region11: #{concat_mtl_forward.4} parent=5 // pred_region
      %s117 = ssub.s32 %s9, 1
      // Predicated region
      $region13: #{concat_mtl_forward.4} parent=11 // pred_check
        %p118 = pneg %p82
      $region14: #{concat_mtl_forward.4} parent=11 // pred_check_branch
        %120 = sbr.rel (%p118) target = $region16
      $region15: #{concat_mtl_forward.4} parent=11 // pred_region
        _
      $region16: #{concat_mtl_forward.4} parent=11 // pred_fallthru
        _
    $region12: #{concat_mtl_forward.4} parent=5 // pred_fallthru
      _
    %p121 = scmp.lt.s32.totalorder %s9, 3
    // Predicated region
    $region17: #{concat_mtl_forward.4} parent=5 // pred_check
      %p122 = pneg %p121
    $region18: #{concat_mtl_forward.4} parent=5 // pred_check_branch
      %124 = sbr.rel (%p122) target = $region20
    $region19: #{concat_mtl_forward.4} parent=5 // pred_region
      // Predicated region
      $region21: #{concat_mtl_forward.4} parent=19 // pred_check
        %p125 = pneg %p29
      $region22: #{concat_mtl_forward.4} parent=19 // pred_check_branch
        %127 = sbr.rel (%p125) target = $region24
      $region23: #{concat_mtl_forward.4} parent=19 // pred_region
        %p128 = scmp.lt.s32.totalorder %s9, 2
        %s129 = scalar_select %p128, %s9, 2
        %s130 = smul.addr %s129, 24
        %s131 = scalar_lea.vmem %s0, %s130
      $region24: #{concat_mtl_forward.4} parent=19 // pred_fallthru
        _
      // Predicated region
      $region25: #{concat_mtl_forward.4} parent=19 // pred_check
        %p132 = pneg %p55
      $region26: #{concat_mtl_forward.4} parent=19 // pred_check_branch
        %134 = sbr.rel (%p132) target = $region28
      $region27: #{concat_mtl_forward.4} parent=19 // pred_region
        %p135 = scmp.lt.s32.totalorder %s9, 2
        %s136 = scalar_select %p135, %s9, 2
        %s137 = smul.addr %s136, 320
        %s138 = smul.addr %s137, 4
        %s139 = scalar_lea.vmem %s1, %s138
      $region28: #{concat_mtl_forward.4} parent=19 // pred_fallthru
        _
    $region20: #{concat_mtl_forward.4} parent=5 // pred_fallthru
      _
    %p140 = scmp.le.s32.totalorder 1, %s9
    %p141 = scmp.lt.s32.totalorder %s9, 4
    %p142 = pnand %p140, %p141
    %p143 = pneg %p142
    // Predicated region
    $region29: #{concat_mtl_forward.4} parent=5 // pred_check
      _
    $region30: #{concat_mtl_forward.4} parent=5 // pred_check_branch
      %145 = sbr.rel (%p142) target = $region32
    $region31: #{concat_mtl_forward.4} parent=5 // pred_region
      %s146 = ssub.s32 %s9, 1
      %p147 = scmp.lt.s32.totalorder %s14, 2
      %s148 = scalar_select %p147, %s14, 2
      %s149 = smul.addr %s148, 24
      %s150 = scalar_lea.vmem %s0, %s149
      %p151 = pneg %p35
      %p152 = pneg %p32
      %p153 = scmp.lt.s32.totalorder %s14, 2
      %s154 = scalar_select %p153, %s14, 2
      %s155 = smul.addr %s154, 320
      %s156 = smul.addr %s155, 4
      %s157 = scalar_lea.vmem %s1, %s156
      %p158 = pneg %p61
      %p159 = pneg %p58
      %p160 = pneg %p82
      %p161 = pneg %p79
      %p162 = pneg %p103
      %p163 = pneg %p100
      %p164 = scmp.lt.s32.totalorder %s14, 2
      %s165 = scalar_select %p164, %s14, 2
      %s166 = smul.addr %s165, 24
      %s167 = scalar_lea.vmem %s0, %s166
      %p168 = scmp.lt.s32.totalorder %s14, 2
      %s169 = scalar_select %p168, %s14, 2
      %s170 = smul.addr %s169, 320
      %s171 = smul.addr %s170, 4
      %s172 = scalar_lea.vmem %s1, %s171
      %p174 = scmp.eq.s32.totalorder %s14, 0
      // Predicated region
      $region33: #{concat_mtl_forward.4} parent=31 // pred_check
        %p175 = pneg %p174
      $region34: #{concat_mtl_forward.4} parent=31 // pred_check_branch
        %177 = sbr.rel (%p175) target = $region36
      $region35: #{concat_mtl_forward.4} parent=31 // pred_region
        %178 = vst [vmem:[#allocation2] sm:$0x3] 0.0
      $region36: #{concat_mtl_forward.4} parent=31 // pred_fallthru
        _
      %v179 = vld [vmem:[#allocation2] sm:$0x3]
      %v180 = vld [vmem:[%s167] sm:$0xff]
      %v181 = vld [vmem:[%s167 + $0x8] sm:$0xff]
      %v182 = vld [vmem:[%s167 + $0x10] sm:$0xf]
      %v183 = vld [vmem:[%s172] sm:$0xf]
      %v184 = vld [vmem:[%s172 + $0x4] sm:$0xf]
      %v185 = vld [vmem:[%s172 + $0x8] sm:$0xf]
      %v186 = vld [vmem:[%s172 + $0xc] sm:$0xf]
      %v187 = vld [vmem:[%s172 + $0x10] sm:$0xf]
      %v188 = vld [vmem:[%s172 + $0x14] sm:$0xf]
      %v189 = vld [vmem:[%s172 + $0x18] sm:$0xf]
      %v190 = vld [vmem:[%s172 + $0x1c] sm:$0xf]
      %v191 = vld [vmem:[%s172 + $0x20] sm:$0xf]
      %v192 = vld [vmem:[%s172 + $0x24] sm:$0xf]
      %v193 = vld [vmem:[%s172 + $0x28] sm:$0xf]
      %v194 = vld [vmem:[%s172 + $0x2c] sm:$0xf]
      %v195 = vld [vmem:[%s172 + $0x30] sm:$0xf]
      %v196 = vld [vmem:[%s172 + $0x34] sm:$0xf]
      %v197 = vld [vmem:[%s172 + $0x38] sm:$0xf]
      %v198 = vld [vmem:[%s172 + $0x3c] sm:$0xf]
      %v199 = vld [vmem:[%s172 + $0x40] sm:$0xf]
      %v200 = vld [vmem:[%s172 + $0x44] sm:$0xf]
      %v201 = vld [vmem:[%s172 + $0x48] sm:$0xf]
      %v202 = vld [vmem:[%s172 + $0x4c] sm:$0xf]
      %v203 = vld [vmem:[%s172 + $0x50] sm:$0xf]
      %v204 = vld [vmem:[%s172 + $0x54] sm:$0xf]
      %v205 = vld [vmem:[%s172 + $0x58] sm:$0xf]
      %v206 = vld [vmem:[%s172 + $0x5c] sm:$0xf]
      %v207 = vld [vmem:[%s172 + $0x60] sm:$0xf]
      %v208 = vld [vmem:[%s172 + $0x64] sm:$0xf]
      %v209 = vld [vmem:[%s172 + $0x68] sm:$0xf]
      %v210 = vld [vmem:[%s172 + $0x6c] sm:$0xf]
      %v211 = vld [vmem:[%s172 + $0x70] sm:$0xf]
      %v212 = vld [vmem:[%s172 + $0x74] sm:$0xf]
      %v213 = vld [vmem:[%s172 + $0x78] sm:$0xf]
      %v214 = vld [vmem:[%s172 + $0x7c] sm:$0xf]
      %v215 = vld [vmem:[%s172 + $0x80] sm:$0xf]
      %v216 = vld [vmem:[%s172 + $0x84] sm:$0xf]
      %v217 = vld [vmem:[%s172 + $0x88] sm:$0xf]
      %v218 = vld [vmem:[%s172 + $0x8c] sm:$0xf]
      %v219 = vld [vmem:[%s172 + $0x90] sm:$0xf]
      %v220 = vld [vmem:[%s172 + $0x94] sm:$0xf]
      %v221 = vld [vmem:[%s172 + $0x98] sm:$0xf]
      %v222 = vld [vmem:[%s172 + $0x9c] sm:$0xf]
      %v223 = vld [vmem:[%s172 + $0xa0] sm:$0xf]
      %v224 = vld [vmem:[%s172 + $0xa4] sm:$0xf]
      %v225 = vld [vmem:[%s172 + $0xa8] sm:$0xf]
      %v226 = vld [vmem:[%s172 + $0xac] sm:$0xf]
      %v227 = vld [vmem:[%s172 + $0xb0] sm:$0xf]
      %v228 = vld [vmem:[%s172 + $0xb4] sm:$0xf]
      %v229 = vld [vmem:[%s172 + $0xb8] sm:$0xf]
      %v230 = vld [vmem:[%s172 + $0xbc] sm:$0xf]
      %v231 = vld [vmem:[%s172 + $0xc0] sm:$0xf]
      %v232 = vld [vmem:[%s172 + $0xc4] sm:$0xf]
      %v233 = vld [vmem:[%s172 + $0xc8] sm:$0xf]
      %v234 = vld [vmem:[%s172 + $0xcc] sm:$0xf]
      %v235 = vld [vmem:[%s172 + $0xd0] sm:$0xf]
      %v236 = vld [vmem:[%s172 + $0xd4] sm:$0xf]
      %v237 = vld [vmem:[%s172 + $0xd8] sm:$0xf]
      %v238 = vld [vmem:[%s172 + $0xdc] sm:$0xf]
      %v239 = vld [vmem:[%s172 + $0xe0] sm:$0xf]
      %v240 = vld [vmem:[%s172 + $0xe4] sm:$0xf]
      %v241 = vld [vmem:[%s172 + $0xe8] sm:$0xf]
      %v242 = vld [vmem:[%s172 + $0xec] sm:$0xf]
      %v243 = vld [vmem:[%s172 + $0xf0] sm:$0xf]
      %v244 = vld [vmem:[%s172 + $0xf4] sm:$0xf]
      %v245 = vld [vmem:[%s172 + $0xf8] sm:$0xf]
      %v246 = vld [vmem:[%s172 + $0xfc] sm:$0xf]
      %v247 = vld [vmem:[%s172 + $0x100] sm:$0xf]
      %v248 = vld [vmem:[%s172 + $0x104] sm:$0xf]
      %v249 = vld [vmem:[%s172 + $0x108] sm:$0xf]
      %v250 = vld [vmem:[%s172 + $0x10c] sm:$0xf]
      %v251 = vld [vmem:[%s172 + $0x110] sm:$0xf]
      %v252 = vld [vmem:[%s172 + $0x114] sm:$0xf]
      %v253 = vld [vmem:[%s172 + $0x118] sm:$0xf]
      %v254 = vld [vmem:[%s172 + $0x11c] sm:$0xf]
      %v255 = vld [vmem:[%s172 + $0x120] sm:$0xf]
      %v256 = vld [vmem:[%s172 + $0x124] sm:$0xf]
      %v257 = vld [vmem:[%s172 + $0x128] sm:$0xf]
      %v258 = vld [vmem:[%s172 + $0x12c] sm:$0xf]
      %v259 = vld [vmem:[%s172 + $0x130] sm:$0xf]
      %v260 = vld [vmem:[%s172 + $0x134] sm:$0xf]
      %v261 = vld [vmem:[%s172 + $0x138] sm:$0xf]
      %v262 = vld [vmem:[%s172 + $0x13c] sm:$0xf]
      %v263 = vld [vmem:[%s172 + $0x140] sm:$0xf]
      %v264 = vld [vmem:[%s172 + $0x144] sm:$0xf]
      %v265 = vld [vmem:[%s172 + $0x148] sm:$0xf]
      %v266 = vld [vmem:[%s172 + $0x14c] sm:$0xf]
      %v267 = vld [vmem:[%s172 + $0x150] sm:$0xf]
      %v268 = vld [vmem:[%s172 + $0x154] sm:$0xf]
      %v269 = vld [vmem:[%s172 + $0x158] sm:$0xf]
      %v270 = vld [vmem:[%s172 + $0x15c] sm:$0xf]
      %v271 = vld [vmem:[%s172 + $0x160] sm:$0xf]
      %v272 = vld [vmem:[%s172 + $0x164] sm:$0xf]
      %v273 = vld [vmem:[%s172 + $0x168] sm:$0xf]
      %v274 = vld [vmem:[%s172 + $0x16c] sm:$0xf]
      %v275 = vld [vmem:[%s172 + $0x170] sm:$0xf]
      %v276 = vld [vmem:[%s172 + $0x174] sm:$0xf]
      %v277 = vld [vmem:[%s172 + $0x178] sm:$0xf]
      %v278 = vld [vmem:[%s172 + $0x17c] sm:$0xf]
      %v279 = vld [vmem:[%s172 + $0x180] sm:$0xf]
      %v280 = vld [vmem:[%s172 + $0x184] sm:$0xf]
      %v281 = vld [vmem:[%s172 + $0x188] sm:$0xf]
      %v282 = vld [vmem:[%s172 + $0x18c] sm:$0xf]
      %v283 = vld [vmem:[%s172 + $0x190] sm:$0xf]
      %v284 = vld [vmem:[%s172 + $0x194] sm:$0xf]
      %v285 = vld [vmem:[%s172 + $0x198] sm:$0xf]
      %v286 = vld [vmem:[%s172 + $0x19c] sm:$0xf]
      %v287 = vld [vmem:[%s172 + $0x1a0] sm:$0xf]
      %v288 = vld [vmem:[%s172 + $0x1a4] sm:$0xf]
      %v289 = vld [vmem:[%s172 + $0x1a8] sm:$0xf]
      %v290 = vld [vmem:[%s172 + $0x1ac] sm:$0xf]
      %v291 = vld [vmem:[%s172 + $0x1b0] sm:$0xf]
      %v292 = vld [vmem:[%s172 + $0x1b4] sm:$0xf]
      %v293 = vld [vmem:[%s172 + $0x1b8] sm:$0xf]
      %v294 = vld [vmem:[%s172 + $0x1bc] sm:$0xf]
      %v295 = vld [vmem:[%s172 + $0x1c0] sm:$0xf]
      %v296 = vld [vmem:[%s172 + $0x1c4] sm:$0xf]
      %v297 = vld [vmem:[%s172 + $0x1c8] sm:$0xf]
      %v298 = vld [vmem:[%s172 + $0x1cc] sm:$0xf]
      %v299 = vld [vmem:[%s172 + $0x1d0] sm:$0xf]
      %v300 = vld [vmem:[%s172 + $0x1d4] sm:$0xf]
      %v301 = vld [vmem:[%s172 + $0x1d8] sm:$0xf]
      %v302 = vld [vmem:[%s172 + $0x1dc] sm:$0xf]
      %v303 = vld [vmem:[%s172 + $0x1e0] sm:$0xf]
      %v304 = vld [vmem:[%s172 + $0x1e4] sm:$0xf]
      %v305 = vld [vmem:[%s172 + $0x1e8] sm:$0xf]
      %v306 = vld [vmem:[%s172 + $0x1ec] sm:$0xf]
      %v307 = vld [vmem:[%s172 + $0x1f0] sm:$0xf]
      %v308 = vld [vmem:[%s172 + $0x1f4] sm:$0xf]
      %v309 = vld [vmem:[%s172 + $0x1f8] sm:$0xf]
      %v310 = vld [vmem:[%s172 + $0x1fc] sm:$0xf]
      %v311 = vld [vmem:[%s172 + $0x200] sm:$0xf]
      %v312 = vld [vmem:[%s172 + $0x204] sm:$0xf]
      %v313 = vld [vmem:[%s172 + $0x208] sm:$0xf]
      %v314 = vld [vmem:[%s172 + $0x20c] sm:$0xf]
      %v315 = vld [vmem:[%s172 + $0x210] sm:$0xf]
      %v316 = vld [vmem:[%s172 + $0x214] sm:$0xf]
      %v317 = vld [vmem:[%s172 + $0x218] sm:$0xf]
      %v318 = vld [vmem:[%s172 + $0x21c] sm:$0xf]
      %v319 = vld [vmem:[%s172 + $0x220] sm:$0xf]
      %v320 = vld [vmem:[%s172 + $0x224] sm:$0xf]
      %v321 = vld [vmem:[%s172 + $0x228] sm:$0xf]
      %v322 = vld [vmem:[%s172 + $0x22c] sm:$0xf]
      %v323 = vld [vmem:[%s172 + $0x230] sm:$0xf]
      %v324 = vld [vmem:[%s172 + $0x234] sm:$0xf]
      %v325 = vld [vmem:[%s172 + $0x238] sm:$0xf]
      %v326 = vld [vmem:[%s172 + $0x23c] sm:$0xf]
      %v327 = vld [vmem:[%s172 + $0x240] sm:$0xf]
      %v328 = vld [vmem:[%s172 + $0x244] sm:$0xf]
      %v329 = vld [vmem:[%s172 + $0x248] sm:$0xf]
      %v330 = vld [vmem:[%s172 + $0x24c] sm:$0xf]
      %v331 = vld [vmem:[%s172 + $0x250] sm:$0xf]
      %v332 = vld [vmem:[%s172 + $0x254] sm:$0xf]
      %v333 = vld [vmem:[%s172 + $0x258] sm:$0xf]
      %v334 = vld [vmem:[%s172 + $0x25c] sm:$0xf]
      %v335 = vld [vmem:[%s172 + $0x260] sm:$0xf]
      %v336 = vld [vmem:[%s172 + $0x264] sm:$0xf]
      %v337 = vld [vmem:[%s172 + $0x268] sm:$0xf]
      %v338 = vld [vmem:[%s172 + $0x26c] sm:$0xf]
      %v339 = vld [vmem:[%s172 + $0x270] sm:$0xf]
      %v340 = vld [vmem:[%s172 + $0x274] sm:$0xf]
      %v341 = vld [vmem:[%s172 + $0x278] sm:$0xf]
      %v342 = vld [vmem:[%s172 + $0x27c] sm:$0xf]
      %v343 = vld [vmem:[%s172 + $0x280] sm:$0xf]
      %v344 = vld [vmem:[%s172 + $0x284] sm:$0xf]
      %v345 = vld [vmem:[%s172 + $0x288] sm:$0xf]
      %v346 = vld [vmem:[%s172 + $0x28c] sm:$0xf]
      %v347 = vld [vmem:[%s172 + $0x290] sm:$0xf]
      %v348 = vld [vmem:[%s172 + $0x294] sm:$0xf]
      %v349 = vld [vmem:[%s172 + $0x298] sm:$0xf]
      %v350 = vld [vmem:[%s172 + $0x29c] sm:$0xf]
      %v351 = vld [vmem:[%s172 + $0x2a0] sm:$0xf]
      %v352 = vld [vmem:[%s172 + $0x2a4] sm:$0xf]
      %v353 = vld [vmem:[%s172 + $0x2a8] sm:$0xf]
      %v354 = vld [vmem:[%s172 + $0x2ac] sm:$0xf]
      %v355 = vld [vmem:[%s172 + $0x2b0] sm:$0xf]
      %v356 = vld [vmem:[%s172 + $0x2b4] sm:$0xf]
      %v357 = vld [vmem:[%s172 + $0x2b8] sm:$0xf]
      %v358 = vld [vmem:[%s172 + $0x2bc] sm:$0xf]
      %v359 = vld [vmem:[%s172 + $0x2c0] sm:$0xf]
      %v360 = vld [vmem:[%s172 + $0x2c4] sm:$0xf]
      %v361 = vld [vmem:[%s172 + $0x2c8] sm:$0xf]
      %v362 = vld [vmem:[%s172 + $0x2cc] sm:$0xf]
      %v363 = vld [vmem:[%s172 + $0x2d0] sm:$0xf]
      %v364 = vld [vmem:[%s172 + $0x2d4] sm:$0xf]
      %v365 = vld [vmem:[%s172 + $0x2d8] sm:$0xf]
      %v366 = vld [vmem:[%s172 + $0x2dc] sm:$0xf]
      %v367 = vld [vmem:[%s172 + $0x2e0] sm:$0xf]
      %v368 = vld [vmem:[%s172 + $0x2e4] sm:$0xf]
      %v369 = vld [vmem:[%s172 + $0x2e8] sm:$0xf]
      %v370 = vld [vmem:[%s172 + $0x2ec] sm:$0xf]
      %v371 = vld [vmem:[%s172 + $0x2f0] sm:$0xf]
      %v372 = vld [vmem:[%s172 + $0x2f4] sm:$0xf]
      %v373 = vld [vmem:[%s172 + $0x2f8] sm:$0xf]
      %v374 = vld [vmem:[%s172 + $0x2fc] sm:$0xf]
      %v375 = vld [vmem:[%s172 + $0x300] sm:$0xf]
      %v376 = vld [vmem:[%s172 + $0x304] sm:$0xf]
      %v377 = vld [vmem:[%s172 + $0x308] sm:$0xf]
      %v378 = vld [vmem:[%s172 + $0x30c] sm:$0xf]
      %v379 = vld [vmem:[%s172 + $0x310] sm:$0xf]
      %v380 = vld [vmem:[%s172 + $0x314] sm:$0xf]
      %v381 = vld [vmem:[%s172 + $0x318] sm:$0xf]
      %v382 = vld [vmem:[%s172 + $0x31c] sm:$0xf]
      %v383 = vld [vmem:[%s172 + $0x320] sm:$0xf]
      %v384 = vld [vmem:[%s172 + $0x324] sm:$0xf]
      %v385 = vld [vmem:[%s172 + $0x328] sm:$0xf]
      %v386 = vld [vmem:[%s172 + $0x32c] sm:$0xf]
      %v387 = vld [vmem:[%s172 + $0x330] sm:$0xf]
      %v388 = vld [vmem:[%s172 + $0x334] sm:$0xf]
      %v389 = vld [vmem:[%s172 + $0x338] sm:$0xf]
      %v390 = vld [vmem:[%s172 + $0x33c] sm:$0xf]
      %v391 = vld [vmem:[%s172 + $0x340] sm:$0xf]
      %v392 = vld [vmem:[%s172 + $0x344] sm:$0xf]
      %v393 = vld [vmem:[%s172 + $0x348] sm:$0xf]
      %v394 = vld [vmem:[%s172 + $0x34c] sm:$0xf]
      %v395 = vld [vmem:[%s172 + $0x350] sm:$0xf]
      %v396 = vld [vmem:[%s172 + $0x354] sm:$0xf]
      %v397 = vld [vmem:[%s172 + $0x358] sm:$0xf]
      %v398 = vld [vmem:[%s172 + $0x35c] sm:$0xf]
      %v399 = vld [vmem:[%s172 + $0x360] sm:$0xf]
      %v400 = vld [vmem:[%s172 + $0x364] sm:$0xf]
      %v401 = vld [vmem:[%s172 + $0x368] sm:$0xf]
      %v402 = vld [vmem:[%s172 + $0x36c] sm:$0xf]
      %v403 = vld [vmem:[%s172 + $0x370] sm:$0xf]
      %v404 = vld [vmem:[%s172 + $0x374] sm:$0xf]
      %v405 = vld [vmem:[%s172 + $0x378] sm:$0xf]
      %v406 = vld [vmem:[%s172 + $0x37c] sm:$0xf]
      %v407 = vld [vmem:[%s172 + $0x380] sm:$0xf]
      %v408 = vld [vmem:[%s172 + $0x384] sm:$0xf]
      %v409 = vld [vmem:[%s172 + $0x388] sm:$0xf]
      %v410 = vld [vmem:[%s172 + $0x38c] sm:$0xf]
      %v411 = vld [vmem:[%s172 + $0x390] sm:$0xf]
      %v412 = vld [vmem:[%s172 + $0x394] sm:$0xf]
      %v413 = vld [vmem:[%s172 + $0x398] sm:$0xf]
      %v414 = vld [vmem:[%s172 + $0x39c] sm:$0xf]
      %v415 = vld [vmem:[%s172 + $0x3a0] sm:$0xf]
      %v416 = vld [vmem:[%s172 + $0x3a4] sm:$0xf]
      %v417 = vld [vmem:[%s172 + $0x3a8] sm:$0xf]
      %v418 = vld [vmem:[%s172 + $0x3ac] sm:$0xf]
      %v419 = vld [vmem:[%s172 + $0x3b0] sm:$0xf]
      %v420 = vld [vmem:[%s172 + $0x3b4] sm:$0xf]
      %v421 = vld [vmem:[%s172 + $0x3b8] sm:$0xf]
      %v422 = vld [vmem:[%s172 + $0x3bc] sm:$0xf]
      %v423 = vld [vmem:[%s172 + $0x3c0] sm:$0xf]
      %v424 = vld [vmem:[%s172 + $0x3c4] sm:$0xf]
      %v425 = vld [vmem:[%s172 + $0x3c8] sm:$0xf]
      %v426 = vld [vmem:[%s172 + $0x3cc] sm:$0xf]
      %v427 = vld [vmem:[%s172 + $0x3d0] sm:$0xf]
      %v428 = vld [vmem:[%s172 + $0x3d4] sm:$0xf]
      %v429 = vld [vmem:[%s172 + $0x3d8] sm:$0xf]
      %v430 = vld [vmem:[%s172 + $0x3dc] sm:$0xf]
      %v431 = vld [vmem:[%s172 + $0x3e0] sm:$0xf]
      %v432 = vld [vmem:[%s172 + $0x3e4] sm:$0xf]
      %v433 = vld [vmem:[%s172 + $0x3e8] sm:$0xf]
      %v434 = vld [vmem:[%s172 + $0x3ec] sm:$0xf]
      %v435 = vld [vmem:[%s172 + $0x3f0] sm:$0xf]
      %v436 = vld [vmem:[%s172 + $0x3f4] sm:$0xf]
      %v437 = vld [vmem:[%s172 + $0x3f8] sm:$0xf]
      %v438 = vld [vmem:[%s172 + $0x3fc] sm:$0xf]
      %v439 = vld [vmem:[%s172 + $0x400] sm:$0xf]
      %v440 = vld [vmem:[%s172 + $0x404] sm:$0xf]
      %v441 = vld [vmem:[%s172 + $0x408] sm:$0xf]
      %v442 = vld [vmem:[%s172 + $0x40c] sm:$0xf]
      %v443 = vld [vmem:[%s172 + $0x410] sm:$0xf]
      %v444 = vld [vmem:[%s172 + $0x414] sm:$0xf]
      %v445 = vld [vmem:[%s172 + $0x418] sm:$0xf]
      %v446 = vld [vmem:[%s172 + $0x41c] sm:$0xf]
      %v447 = vld [vmem:[%s172 + $0x420] sm:$0xf]
      %v448 = vld [vmem:[%s172 + $0x424] sm:$0xf]
      %v449 = vld [vmem:[%s172 + $0x428] sm:$0xf]
      %v450 = vld [vmem:[%s172 + $0x42c] sm:$0xf]
      %v451 = vld [vmem:[%s172 + $0x430] sm:$0xf]
      %v452 = vld [vmem:[%s172 + $0x434] sm:$0xf]
      %v453 = vld [vmem:[%s172 + $0x438] sm:$0xf]
      %v454 = vld [vmem:[%s172 + $0x43c] sm:$0xf]
      %v455 = vld [vmem:[%s172 + $0x440] sm:$0xf]
      %v456 = vld [vmem:[%s172 + $0x444] sm:$0xf]
      %v457 = vld [vmem:[%s172 + $0x448] sm:$0xf]
      %v458 = vld [vmem:[%s172 + $0x44c] sm:$0xf]
      %v459 = vld [vmem:[%s172 + $0x450] sm:$0xf]
      %v460 = vld [vmem:[%s172 + $0x454] sm:$0xf]
      %v461 = vld [vmem:[%s172 + $0x458] sm:$0xf]
      %v462 = vld [vmem:[%s172 + $0x45c] sm:$0xf]
      %v463 = vld [vmem:[%s172 + $0x460] sm:$0xf]
      %v464 = vld [vmem:[%s172 + $0x464] sm:$0xf]
      %v465 = vld [vmem:[%s172 + $0x468] sm:$0xf]
      %v466 = vld [vmem:[%s172 + $0x46c] sm:$0xf]
      %v467 = vld [vmem:[%s172 + $0x470] sm:$0xf]
      %v468 = vld [vmem:[%s172 + $0x474] sm:$0xf]
      %v469 = vld [vmem:[%s172 + $0x478] sm:$0xf]
      %v470 = vld [vmem:[%s172 + $0x47c] sm:$0xf]
      %v471 = vld [vmem:[%s172 + $0x480] sm:$0xf]
      %v472 = vld [vmem:[%s172 + $0x484] sm:$0xf]
      %v473 = vld [vmem:[%s172 + $0x488] sm:$0xf]
      %v474 = vld [vmem:[%s172 + $0x48c] sm:$0xf]
      %v475 = vld [vmem:[%s172 + $0x490] sm:$0xf]
      %v476 = vld [vmem:[%s172 + $0x494] sm:$0xf]
      %v477 = vld [vmem:[%s172 + $0x498] sm:$0xf]
      %v478 = vld [vmem:[%s172 + $0x49c] sm:$0xf]
      %v479 = vld [vmem:[%s172 + $0x4a0] sm:$0xf]
      %v480 = vld [vmem:[%s172 + $0x4a4] sm:$0xf]
      %v481 = vld [vmem:[%s172 + $0x4a8] sm:$0xf]
      %v482 = vld [vmem:[%s172 + $0x4ac] sm:$0xf]
      %v483 = vld [vmem:[%s172 + $0x4b0] sm:$0xf]
      %v484 = vld [vmem:[%s172 + $0x4b4] sm:$0xf]
      %v485 = vld [vmem:[%s172 + $0x4b8] sm:$0xf]
      %v486 = vld [vmem:[%s172 + $0x4bc] sm:$0xf]
      %v487 = vld [vmem:[%s172 + $0x4c0] sm:$0xf]
      %v488 = vld [vmem:[%s172 + $0x4c4] sm:$0xf]
      %v489 = vld [vmem:[%s172 + $0x4c8] sm:$0xf]
      %v490 = vld [vmem:[%s172 + $0x4cc] sm:$0xf]
      %v491 = vld [vmem:[%s172 + $0x4d0] sm:$0xf]
      %v492 = vld [vmem:[%s172 + $0x4d4] sm:$0xf]
      %v493 = vld [vmem:[%s172 + $0x4d8] sm:$0xf]
      %v494 = vld [vmem:[%s172 + $0x4dc] sm:$0xf]
      %v495 = vld [vmem:[%s172 + $0x4e0] sm:$0xf]
      %v496 = vld [vmem:[%s172 + $0x4e4] sm:$0xf]
      %v497 = vld [vmem:[%s172 + $0x4e8] sm:$0xf]
      %v498 = vld [vmem:[%s172 + $0x4ec] sm:$0xf]
      %v499 = vld [vmem:[%s172 + $0x4f0] sm:$0xf]
      %v500 = vld [vmem:[%s172 + $0x4f4] sm:$0xf]
      %v501 = vld [vmem:[%s172 + $0x4f8] sm:$0xf]
      %v502 = vld [vmem:[%s172 + $0x4fc] sm:$0xf]
      %v506 = vcombine.high %v180, %v180
      %v508 = vunpack.c.l.s4 1966171168
      %v509 = vunpack.c.0.s8 %v508
      %v510 = vlaneseq
      %v511 = vshrl.u32 %v510, 7
      %v512 = vsub.s32 %v509, %v511
      %v513 = vrot.slane %v180, %v512
      %v515 = vunpack.c.l.s4 1966171168
      %v516 = vunpack.c.0.s8 %v515
      %v517 = vlaneseq
      %v518 = vshrl.u32 %v517, 7
      %v519 = vsub.s32 %v516, %v518
      %v520 = vrot.slane %v506, %v519
      %v521 = vcombine.high %v513, %v513
      %v522 = vcombine.high %v520, %v520
      %v524 = vunpack.c.l.s4 1966171168
      %v525 = vunpack.c.0.s8 %v524
      %v526 = vlaneseq
      %v527 = vshrl.u32 %v526, 7
      %v528 = vsub.s32 %v525, %v527
      %v529 = vrot.slane %v513, %v528
      %v531 = vunpack.c.l.s4 1966171168
      %v532 = vunpack.c.0.s8 %v531
      %v533 = vlaneseq
      %v534 = vshrl.u32 %v533, 7
      %v535 = vsub.s32 %v532, %v534
      %v536 = vrot.slane %v520, %v535
      %v538 = vunpack.c.l.s4 1966171168
      %v539 = vunpack.c.0.s8 %v538
      %v540 = vlaneseq
      %v541 = vshrl.u32 %v540, 7
      %v542 = vsub.s32 %v539, %v541
      %v543 = vrot.slane %v521, %v542
      %v545 = vunpack.c.l.s4 1966171168
      %v546 = vunpack.c.0.s8 %v545
      %v547 = vlaneseq
      %v548 = vshrl.u32 %v547, 7
      %v549 = vsub.s32 %v546, %v548
      %v550 = vrot.slane %v522, %v549
      %v551 = vcombine.high %v529, %v529
      %v552 = vcombine.high %v536, %v536
      %v553 = vcombine.high %v543, %v543
      %v554 = vcombine.high %v550, %v550
      %v555 = vcombine.high %v181, %v181
      %v557 = vunpack.c.l.s4 1966171168
      %v558 = vunpack.c.0.s8 %v557
      %v559 = vlaneseq
      %v560 = vshrl.u32 %v559, 7
      %v561 = vsub.s32 %v558, %v560
      %v562 = vrot.slane %v181, %v561
      %v564 = vunpack.c.l.s4 1966171168
      %v565 = vunpack.c.0.s8 %v564
      %v566 = vlaneseq
      %v567 = vshrl.u32 %v566, 7
      %v568 = vsub.s32 %v565, %v567
      %v569 = vrot.slane %v555, %v568
      %v570 = vcombine.high %v562, %v562
      %v571 = vcombine.high %v569, %v569
      %v573 = vunpack.c.l.s4 1966171168
      %v574 = vunpack.c.0.s8 %v573
      %v575 = vlaneseq
      %v576 = vshrl.u32 %v575, 7
      %v577 = vsub.s32 %v574, %v576
      %v578 = vrot.slane %v562, %v577
      %v580 = vunpack.c.l.s4 1966171168
      %v581 = vunpack.c.0.s8 %v580
      %v582 = vlaneseq
      %v583 = vshrl.u32 %v582, 7
      %v584 = vsub.s32 %v581, %v583
      %v585 = vrot.slane %v569, %v584
      %v587 = vunpack.c.l.s4 1966171168
      %v588 = vunpack.c.0.s8 %v587
      %v589 = vlaneseq
      %v590 = vshrl.u32 %v589, 7
      %v591 = vsub.s32 %v588, %v590
      %v592 = vrot.slane %v570, %v591
      %v594 = vunpack.c.l.s4 1966171168
      %v595 = vunpack.c.0.s8 %v594
      %v596 = vlaneseq
      %v597 = vshrl.u32 %v596, 7
      %v598 = vsub.s32 %v595, %v597
      %v599 = vrot.slane %v571, %v598
      %v600 = vcombine.high %v578, %v578
      %v601 = vcombine.high %v585, %v585
      %v602 = vcombine.high %v592, %v592
      %v603 = vcombine.high %v599, %v599
      %v605 = vunpack.c.l.s4 1966171168
      %v606 = vunpack.c.0.s8 %v605
      %v607 = vlaneseq
      %v608 = vshrl.u32 %v607, 7
      %v609 = vsub.s32 %v606, %v608
      %v610 = vrot.slane %v182, %v609
      %v611 = vcombine.high %v610, %v610
      %v613 = vunpack.c.l.s4 1966171168
      %v614 = vunpack.c.0.s8 %v613
      %v615 = vlaneseq
      %v616 = vshrl.u32 %v615, 7
      %v617 = vsub.s32 %v614, %v616
      %v618 = vrot.slane %v610, %v617
      %v620 = vunpack.c.l.s4 1966171168
      %v621 = vunpack.c.0.s8 %v620
      %v622 = vlaneseq
      %v623 = vshrl.u32 %v622, 7
      %v624 = vsub.s32 %v621, %v623
      %v625 = vrot.slane %v611, %v624
      %v626 = vcombine.high %v618, %v618
      %v627 = vcombine.high %v625, %v625
      %v968 = vunpack.c.l.b16 %v183
      %v969 = vunpack.c.l.b16 %v184
      %v970 = vunpack.c.l.b16 %v185
      %v971 = vunpack.c.l.b16 %v186
      %v972 = vunpack.c.l.b16 %v187
      %v973 = vunpack.c.l.b16 %v188
      %v974 = vunpack.c.l.b16 %v189
      %v975 = vunpack.c.l.b16 %v190
      %v976 = vunpack.c.l.b16 %v191
      %v977 = vunpack.c.l.b16 %v192
      %v978 = vunpack.c.l.b16 %v193
      %v979 = vunpack.c.l.b16 %v194
      %v980 = vunpack.c.l.b16 %v195
      %v981 = vunpack.c.l.b16 %v196
      %v982 = vunpack.c.l.b16 %v197
      %v983 = vunpack.c.l.b16 %v198
      %v984 = vunpack.c.l.b16 %v199
      %v985 = vunpack.c.l.b16 %v200
      %v986 = vunpack.c.l.b16 %v201
      %v987 = vunpack.c.l.b16 %v202
      %v988 = vunpack.c.l.b16 %v203
      %v989 = vunpack.c.l.b16 %v204
      %v990 = vunpack.c.l.b16 %v205
      %v991 = vunpack.c.l.b16 %v206
      %v992 = vunpack.c.l.b16 %v207
      %v993 = vunpack.c.l.b16 %v208
      %v994 = vunpack.c.l.b16 %v209
      %v995 = vunpack.c.l.b16 %v210
      %v996 = vunpack.c.l.b16 %v211
      %v997 = vunpack.c.l.b16 %v212
      %v998 = vunpack.c.l.b16 %v213
      %v999 = vunpack.c.l.b16 %v214
      %v1000 = vunpack.c.l.b16 %v215
      %v1001 = vunpack.c.l.b16 %v216
      %v1002 = vunpack.c.l.b16 %v217
      %v1003 = vunpack.c.l.b16 %v218
      %v1004 = vunpack.c.l.b16 %v219
      %v1005 = vunpack.c.l.b16 %v220
      %v1006 = vunpack.c.l.b16 %v221
      %v1007 = vunpack.c.l.b16 %v222
      %v1008 = vunpack.c.l.b16 %v223
      %v1009 = vunpack.c.l.b16 %v224
      %v1010 = vunpack.c.l.b16 %v225
      %v1011 = vunpack.c.l.b16 %v226
      %v1012 = vunpack.c.l.b16 %v227
      %v1013 = vunpack.c.l.b16 %v228
      %v1014 = vunpack.c.l.b16 %v229
      %v1015 = vunpack.c.l.b16 %v230
      %v1016 = vunpack.c.l.b16 %v231
      %v1017 = vunpack.c.l.b16 %v232
      %v1018 = vunpack.c.l.b16 %v233
      %v1019 = vunpack.c.l.b16 %v234
      %v1020 = vunpack.c.l.b16 %v235
      %v1021 = vunpack.c.l.b16 %v236
      %v1022 = vunpack.c.l.b16 %v237
      %v1023 = vunpack.c.l.b16 %v238
      %v1024 = vunpack.c.l.b16 %v239
      %v1025 = vunpack.c.l.b16 %v240
      %v1026 = vunpack.c.l.b16 %v241
      %v1027 = vunpack.c.l.b16 %v242
      %v1028 = vunpack.c.l.b16 %v243
      %v1029 = vunpack.c.l.b16 %v244
      %v1030 = vunpack.c.l.b16 %v245
      %v1031 = vunpack.c.l.b16 %v246
      %v1032 = vunpack.c.l.b16 %v247
      %v1033 = vunpack.c.l.b16 %v248
      %v1034 = vunpack.c.l.b16 %v249
      %v1035 = vunpack.c.l.b16 %v250
      %v1036 = vunpack.c.l.b16 %v251
      %v1037 = vunpack.c.l.b16 %v252
      %v1038 = vunpack.c.l.b16 %v253
      %v1039 = vunpack.c.l.b16 %v254
      %v1040 = vunpack.c.l.b16 %v255
      %v1041 = vunpack.c.l.b16 %v256
      %v1042 = vunpack.c.l.b16 %v257
      %v1043 = vunpack.c.l.b16 %v258
      %v1044 = vunpack.c.l.b16 %v259
      %v1045 = vunpack.c.l.b16 %v260
      %v1046 = vunpack.c.l.b16 %v261
      %v1047 = vunpack.c.l.b16 %v262
      %v1048 = vunpack.c.l.b16 %v263
      %v1049 = vunpack.c.l.b16 %v264
      %v1050 = vunpack.c.l.b16 %v265
      %v1051 = vunpack.c.l.b16 %v266
      %v1052 = vunpack.c.l.b16 %v267
      %v1053 = vunpack.c.l.b16 %v268
      %v1054 = vunpack.c.l.b16 %v269
      %v1055 = vunpack.c.l.b16 %v270
      %v1056 = vunpack.c.l.b16 %v271
      %v1057 = vunpack.c.l.b16 %v272
      %v1058 = vunpack.c.l.b16 %v273
      %v1059 = vunpack.c.l.b16 %v274
      %v1060 = vunpack.c.l.b16 %v275
      %v1061 = vunpack.c.l.b16 %v276
      %v1062 = vunpack.c.l.b16 %v277
      %v1063 = vunpack.c.l.b16 %v278
      %v1064 = vunpack.c.l.b16 %v279
      %v1065 = vunpack.c.l.b16 %v280
      %v1066 = vunpack.c.l.b16 %v281
      %v1067 = vunpack.c.l.b16 %v282
      %v1068 = vunpack.c.l.b16 %v283
      %v1069 = vunpack.c.l.b16 %v284
      %v1070 = vunpack.c.l.b16 %v285
      %v1071 = vunpack.c.l.b16 %v286
      %v1072 = vunpack.c.l.b16 %v287
      %v1073 = vunpack.c.l.b16 %v288
      %v1074 = vunpack.c.l.b16 %v289
      %v1075 = vunpack.c.l.b16 %v290
      %v1076 = vunpack.c.l.b16 %v291
      %v1077 = vunpack.c.l.b16 %v292
      %v1078 = vunpack.c.l.b16 %v293
      %v1079 = vunpack.c.l.b16 %v294
      %v1080 = vunpack.c.l.b16 %v295
      %v1081 = vunpack.c.l.b16 %v296
      %v1082 = vunpack.c.l.b16 %v297
      %v1083 = vunpack.c.l.b16 %v298
      %v1084 = vunpack.c.l.b16 %v299
      %v1085 = vunpack.c.l.b16 %v300
      %v1086 = vunpack.c.l.b16 %v301
      %v1087 = vunpack.c.l.b16 %v302
      %v1088 = vunpack.c.l.b16 %v303
      %v1089 = vunpack.c.l.b16 %v304
      %v1090 = vunpack.c.l.b16 %v305
      %v1091 = vunpack.c.l.b16 %v306
      %v1092 = vunpack.c.l.b16 %v307
      %v1093 = vunpack.c.l.b16 %v308
      %v1094 = vunpack.c.l.b16 %v309
      %v1095 = vunpack.c.l.b16 %v310
      %v1096 = vunpack.c.l.b16 %v311
      %v1097 = vunpack.c.l.b16 %v312
      %v1098 = vunpack.c.l.b16 %v313
      %v1099 = vunpack.c.l.b16 %v314
      %v1100 = vunpack.c.l.b16 %v315
      %v1101 = vunpack.c.l.b16 %v316
      %v1102 = vunpack.c.l.b16 %v317
      %v1103 = vunpack.c.l.b16 %v318
      %v1104 = vunpack.c.l.b16 %v319
      %v1105 = vunpack.c.l.b16 %v320
      %v1106 = vunpack.c.l.b16 %v321
      %v1107 = vunpack.c.l.b16 %v322
      %v1108 = vunpack.c.l.b16 %v323
      %v1109 = vunpack.c.l.b16 %v324
      %v1110 = vunpack.c.l.b16 %v325
      %v1111 = vunpack.c.l.b16 %v326
      %v1112 = vunpack.c.l.b16 %v327
      %v1113 = vunpack.c.l.b16 %v328
      %v1114 = vunpack.c.l.b16 %v329
      %v1115 = vunpack.c.l.b16 %v330
      %v1116 = vunpack.c.l.b16 %v331
      %v1117 = vunpack.c.l.b16 %v332
      %v1118 = vunpack.c.l.b16 %v333
      %v1119 = vunpack.c.l.b16 %v334
      %v1120 = vunpack.c.l.b16 %v335
      %v1121 = vunpack.c.l.b16 %v336
      %v1122 = vunpack.c.l.b16 %v337
      %v1123 = vunpack.c.l.b16 %v338
      %v1124 = vunpack.c.l.b16 %v339
      %v1125 = vunpack.c.l.b16 %v340
      %v1126 = vunpack.c.l.b16 %v341
      %v1127 = vunpack.c.l.b16 %v342
      %v1128 = vunpack.c.l.b16 %v343
      %v1129 = vunpack.c.l.b16 %v344
      %v1130 = vunpack.c.l.b16 %v345
      %v1131 = vunpack.c.l.b16 %v346
      %v1132 = vunpack.c.l.b16 %v347
      %v1133 = vunpack.c.l.b16 %v348
      %v1134 = vunpack.c.l.b16 %v349
      %v1135 = vunpack.c.l.b16 %v350
      %v1136 = vunpack.c.l.b16 %v351
      %v1137 = vunpack.c.l.b16 %v352
      %v1138 = vunpack.c.l.b16 %v353
      %v1139 = vunpack.c.l.b16 %v354
      %v1140 = vunpack.c.l.b16 %v355
      %v1141 = vunpack.c.l.b16 %v356
      %v1142 = vunpack.c.l.b16 %v357
      %v1143 = vunpack.c.l.b16 %v358
      %v1144 = vunpack.c.l.b16 %v359
      %v1145 = vunpack.c.l.b16 %v360
      %v1146 = vunpack.c.l.b16 %v361
      %v1147 = vunpack.c.l.b16 %v362
      %v1148 = vunpack.c.l.b16 %v363
      %v1149 = vunpack.c.l.b16 %v364
      %v1150 = vunpack.c.l.b16 %v365
      %v1151 = vunpack.c.l.b16 %v366
      %v1152 = vunpack.c.l.b16 %v367
      %v1153 = vunpack.c.l.b16 %v368
      %v1154 = vunpack.c.l.b16 %v369
      %v1155 = vunpack.c.l.b16 %v370
      %v1156 = vunpack.c.l.b16 %v371
      %v1157 = vunpack.c.l.b16 %v372
      %v1158 = vunpack.c.l.b16 %v373
      %v1159 = vunpack.c.l.b16 %v374
      %v1160 = vunpack.c.l.b16 %v375
      %v1161 = vunpack.c.l.b16 %v376
      %v1162 = vunpack.c.l.b16 %v377
      %v1163 = vunpack.c.l.b16 %v378
      %v1164 = vunpack.c.l.b16 %v379
      %v1165 = vunpack.c.l.b16 %v380
      %v1166 = vunpack.c.l.b16 %v381
      %v1167 = vunpack.c.l.b16 %v382
      %v1168 = vunpack.c.l.b16 %v383
      %v1169 = vunpack.c.l.b16 %v384
      %v1170 = vunpack.c.l.b16 %v385
      %v1171 = vunpack.c.l.b16 %v386
      %v1172 = vunpack.c.l.b16 %v387
      %v1173 = vunpack.c.l.b16 %v388
      %v1174 = vunpack.c.l.b16 %v389
      %v1175 = vunpack.c.l.b16 %v390
      %v1176 = vunpack.c.l.b16 %v391
      %v1177 = vunpack.c.l.b16 %v392
      %v1178 = vunpack.c.l.b16 %v393
      %v1179 = vunpack.c.l.b16 %v394
      %v1180 = vunpack.c.l.b16 %v395
      %v1181 = vunpack.c.l.b16 %v396
      %v1182 = vunpack.c.l.b16 %v397
      %v1183 = vunpack.c.l.b16 %v398
      %v1184 = vunpack.c.l.b16 %v399
      %v1185 = vunpack.c.l.b16 %v400
      %v1186 = vunpack.c.l.b16 %v401
      %v1187 = vunpack.c.l.b16 %v402
      %v1188 = vunpack.c.l.b16 %v403
      %v1189 = vunpack.c.l.b16 %v404
      %v1190 = vunpack.c.l.b16 %v405
      %v1191 = vunpack.c.l.b16 %v406
      %v1192 = vunpack.c.l.b16 %v407
      %v1193 = vunpack.c.l.b16 %v408
      %v1194 = vunpack.c.l.b16 %v409
      %v1195 = vunpack.c.l.b16 %v410
      %v1196 = vunpack.c.l.b16 %v411
      %v1197 = vunpack.c.l.b16 %v412
      %v1198 = vunpack.c.l.b16 %v413
      %v1199 = vunpack.c.l.b16 %v414
      %v1200 = vunpack.c.l.b16 %v415
      %v1201 = vunpack.c.l.b16 %v416
      %v1202 = vunpack.c.l.b16 %v417
      %v1203 = vunpack.c.l.b16 %v418
      %v1204 = vunpack.c.l.b16 %v419
      %v1205 = vunpack.c.l.b16 %v420
      %v1206 = vunpack.c.l.b16 %v421
      %v1207 = vunpack.c.l.b16 %v422
      %v1208 = vunpack.c.l.b16 %v423
      %v1209 = vunpack.c.l.b16 %v424
      %v1210 = vunpack.c.l.b16 %v425
      %v1211 = vunpack.c.l.b16 %v426
      %v1212 = vunpack.c.l.b16 %v427
      %v1213 = vunpack.c.l.b16 %v428
      %v1214 = vunpack.c.l.b16 %v429
      %v1215 = vunpack.c.l.b16 %v430
      %v1216 = vunpack.c.l.b16 %v431
      %v1217 = vunpack.c.l.b16 %v432
      %v1218 = vunpack.c.l.b16 %v433
      %v1219 = vunpack.c.l.b16 %v434
      %v1220 = vunpack.c.l.b16 %v435
      %v1221 = vunpack.c.l.b16 %v436
      %v1222 = vunpack.c.l.b16 %v437
      %v1223 = vunpack.c.l.b16 %v438
      %v1224 = vunpack.c.l.b16 %v439
      %v1225 = vunpack.c.l.b16 %v440
      %v1226 = vunpack.c.l.b16 %v441
      %v1227 = vunpack.c.l.b16 %v442
      %v1228 = vunpack.c.l.b16 %v443
      %v1229 = vunpack.c.l.b16 %v444
      %v1230 = vunpack.c.l.b16 %v445
      %v1231 = vunpack.c.l.b16 %v446
      %v1232 = vunpack.c.l.b16 %v447
      %v1233 = vunpack.c.l.b16 %v448
      %v1234 = vunpack.c.l.b16 %v449
      %v1235 = vunpack.c.l.b16 %v450
      %v1236 = vunpack.c.l.b16 %v451
      %v1237 = vunpack.c.l.b16 %v452
      %v1238 = vunpack.c.l.b16 %v453
      %v1239 = vunpack.c.l.b16 %v454
      %v1240 = vunpack.c.l.b16 %v455
      %v1241 = vunpack.c.l.b16 %v456
      %v1242 = vunpack.c.l.b16 %v457
      %v1243 = vunpack.c.l.b16 %v458
      %v1244 = vunpack.c.l.b16 %v459
      %v1245 = vunpack.c.l.b16 %v460
      %v1246 = vunpack.c.l.b16 %v461
      %v1247 = vunpack.c.l.b16 %v462
      %v1248 = vunpack.c.l.b16 %v463
      %v1249 = vunpack.c.l.b16 %v464
      %v1250 = vunpack.c.l.b16 %v465
      %v1251 = vunpack.c.l.b16 %v466
      %v1252 = vunpack.c.l.b16 %v467
      %v1253 = vunpack.c.l.b16 %v468
      %v1254 = vunpack.c.l.b16 %v469
      %v1255 = vunpack.c.l.b16 %v470
      %v1256 = vunpack.c.l.b16 %v471
      %v1257 = vunpack.c.l.b16 %v472
      %v1258 = vunpack.c.l.b16 %v473
      %v1259 = vunpack.c.l.b16 %v474
      %v1260 = vunpack.c.l.b16 %v475
      %v1261 = vunpack.c.l.b16 %v476
      %v1262 = vunpack.c.l.b16 %v477
      %v1263 = vunpack.c.l.b16 %v478
      %v1264 = vunpack.c.l.b16 %v479
      %v1265 = vunpack.c.l.b16 %v480
      %v1266 = vunpack.c.l.b16 %v481
      %v1267 = vunpack.c.l.b16 %v482
      %v1268 = vunpack.c.l.b16 %v483
      %v1269 = vunpack.c.l.b16 %v484
      %v1270 = vunpack.c.l.b16 %v485
      %v1271 = vunpack.c.l.b16 %v486
      %v1272 = vunpack.c.l.b16 %v487
      %v1273 = vunpack.c.l.b16 %v488
      %v1274 = vunpack.c.l.b16 %v489
      %v1275 = vunpack.c.l.b16 %v490
      %v1276 = vunpack.c.l.b16 %v491
      %v1277 = vunpack.c.l.b16 %v492
      %v1278 = vunpack.c.l.b16 %v493
      %v1279 = vunpack.c.l.b16 %v494
      %v1280 = vunpack.c.l.b16 %v495
      %v1281 = vunpack.c.l.b16 %v496
      %v1282 = vunpack.c.l.b16 %v497
      %v1283 = vunpack.c.l.b16 %v498
      %v1284 = vunpack.c.l.b16 %v499
      %v1285 = vunpack.c.l.b16 %v500
      %v1286 = vunpack.c.l.b16 %v501
      %v1287 = vunpack.c.l.b16 %v502
      %v1288 = vpack.c.b16 %v969, %v968
      %v1289 = vpack.c.b16 %v971, %v970
      %v1290 = vpack.c.b16 %v973, %v972
      %v1291 = vpack.c.b16 %v975, %v974
      %v1292 = vpack.c.b16 %v977, %v976
      %v1293 = vpack.c.b16 %v979, %v978
      %v1294 = vpack.c.b16 %v981, %v980
      %v1295 = vpack.c.b16 %v983, %v982
      %v1296 = vpack.c.b16 %v985, %v984
      %v1297 = vpack.c.b16 %v987, %v986
      %v1298 = vpack.c.b16 %v989, %v988
      %v1299 = vpack.c.b16 %v991, %v990
      %v1300 = vpack.c.b16 %v993, %v992
      %v1301 = vpack.c.b16 %v995, %v994
      %v1302 = vpack.c.b16 %v997, %v996
      %v1303 = vpack.c.b16 %v999, %v998
      %v1304 = vpack.c.b16 %v1001, %v1000
      %v1305 = vpack.c.b16 %v1003, %v1002
      %v1306 = vpack.c.b16 %v1005, %v1004
      %v1307 = vpack.c.b16 %v1007, %v1006
      %v1308 = vpack.c.b16 %v1009, %v1008
      %v1309 = vpack.c.b16 %v1011, %v1010
      %v1310 = vpack.c.b16 %v1013, %v1012
      %v1311 = vpack.c.b16 %v1015, %v1014
      %v1312 = vpack.c.b16 %v1017, %v1016
      %v1313 = vpack.c.b16 %v1019, %v1018
      %v1314 = vpack.c.b16 %v1021, %v1020
      %v1315 = vpack.c.b16 %v1023, %v1022
      %v1316 = vpack.c.b16 %v1025, %v1024
      %v1317 = vpack.c.b16 %v1027, %v1026
      %v1318 = vpack.c.b16 %v1029, %v1028
      %v1319 = vpack.c.b16 %v1031, %v1030
      %v1320 = vpack.c.b16 %v1033, %v1032
      %v1321 = vpack.c.b16 %v1035, %v1034
      %v1322 = vpack.c.b16 %v1037, %v1036
      %v1323 = vpack.c.b16 %v1039, %v1038
      %v1324 = vpack.c.b16 %v1041, %v1040
      %v1325 = vpack.c.b16 %v1043, %v1042
      %v1326 = vpack.c.b16 %v1045, %v1044
      %v1327 = vpack.c.b16 %v1047, %v1046
      %v1328 = vpack.c.b16 %v1049, %v1048
      %v1329 = vpack.c.b16 %v1051, %v1050
      %v1330 = vpack.c.b16 %v1053, %v1052
      %v1331 = vpack.c.b16 %v1055, %v1054
      %v1332 = vpack.c.b16 %v1057, %v1056
      %v1333 = vpack.c.b16 %v1059, %v1058
      %v1334 = vpack.c.b16 %v1061, %v1060
      %v1335 = vpack.c.b16 %v1063, %v1062
      %v1336 = vpack.c.b16 %v1065, %v1064
      %v1337 = vpack.c.b16 %v1067, %v1066
      %v1338 = vpack.c.b16 %v1069, %v1068
      %v1339 = vpack.c.b16 %v1071, %v1070
      %v1340 = vpack.c.b16 %v1073, %v1072
      %v1341 = vpack.c.b16 %v1075, %v1074
      %v1342 = vpack.c.b16 %v1077, %v1076
      %v1343 = vpack.c.b16 %v1079, %v1078
      %v1344 = vpack.c.b16 %v1081, %v1080
      %v1345 = vpack.c.b16 %v1083, %v1082
      %v1346 = vpack.c.b16 %v1085, %v1084
      %v1347 = vpack.c.b16 %v1087, %v1086
      %v1348 = vpack.c.b16 %v1089, %v1088
      %v1349 = vpack.c.b16 %v1091, %v1090
      %v1350 = vpack.c.b16 %v1093, %v1092
      %v1351 = vpack.c.b16 %v1095, %v1094
      %v1352 = vpack.c.b16 %v1097, %v1096
      %v1353 = vpack.c.b16 %v1099, %v1098
      %v1354 = vpack.c.b16 %v1101, %v1100
      %v1355 = vpack.c.b16 %v1103, %v1102
      %v1356 = vpack.c.b16 %v1105, %v1104
      %v1357 = vpack.c.b16 %v1107, %v1106
      %v1358 = vpack.c.b16 %v1109, %v1108
      %v1359 = vpack.c.b16 %v1111, %v1110
      %v1360 = vpack.c.b16 %v1113, %v1112
      %v1361 = vpack.c.b16 %v1115, %v1114
      %v1362 = vpack.c.b16 %v1117, %v1116
      %v1363 = vpack.c.b16 %v1119, %v1118
      %v1364 = vpack.c.b16 %v1121, %v1120
      %v1365 = vpack.c.b16 %v1123, %v1122
      %v1366 = vpack.c.b16 %v1125, %v1124
      %v1367 = vpack.c.b16 %v1127, %v1126
      %v1368 = vpack.c.b16 %v1129, %v1128
      %v1369 = vpack.c.b16 %v1131, %v1130
      %v1370 = vpack.c.b16 %v1133, %v1132
      %v1371 = vpack.c.b16 %v1135, %v1134
      %v1372 = vpack.c.b16 %v1137, %v1136
      %v1373 = vpack.c.b16 %v1139, %v1138
      %v1374 = vpack.c.b16 %v1141, %v1140
      %v1375 = vpack.c.b16 %v1143, %v1142
      %v1376 = vpack.c.b16 %v1145, %v1144
      %v1377 = vpack.c.b16 %v1147, %v1146
      %v1378 = vpack.c.b16 %v1149, %v1148
      %v1379 = vpack.c.b16 %v1151, %v1150
      %v1380 = vpack.c.b16 %v1153, %v1152
      %v1381 = vpack.c.b16 %v1155, %v1154
      %v1382 = vpack.c.b16 %v1157, %v1156
      %v1383 = vpack.c.b16 %v1159, %v1158
      %v1384 = vpack.c.b16 %v1161, %v1160
      %v1385 = vpack.c.b16 %v1163, %v1162
      %v1386 = vpack.c.b16 %v1165, %v1164
      %v1387 = vpack.c.b16 %v1167, %v1166
      %v1388 = vpack.c.b16 %v1169, %v1168
      %v1389 = vpack.c.b16 %v1171, %v1170
      %v1390 = vpack.c.b16 %v1173, %v1172
      %v1391 = vpack.c.b16 %v1175, %v1174
      %v1392 = vpack.c.b16 %v1177, %v1176
      %v1393 = vpack.c.b16 %v1179, %v1178
      %v1394 = vpack.c.b16 %v1181, %v1180
      %v1395 = vpack.c.b16 %v1183, %v1182
      %v1396 = vpack.c.b16 %v1185, %v1184
      %v1397 = vpack.c.b16 %v1187, %v1186
      %v1398 = vpack.c.b16 %v1189, %v1188
      %v1399 = vpack.c.b16 %v1191, %v1190
      %v1400 = vpack.c.b16 %v1193, %v1192
      %v1401 = vpack.c.b16 %v1195, %v1194
      %v1402 = vpack.c.b16 %v1197, %v1196
      %v1403 = vpack.c.b16 %v1199, %v1198
      %v1404 = vpack.c.b16 %v1201, %v1200
      %v1405 = vpack.c.b16 %v1203, %v1202
      %v1406 = vpack.c.b16 %v1205, %v1204
      %v1407 = vpack.c.b16 %v1207, %v1206
      %v1408 = vpack.c.b16 %v1209, %v1208
      %v1409 = vpack.c.b16 %v1211, %v1210
      %v1410 = vpack.c.b16 %v1213, %v1212
      %v1411 = vpack.c.b16 %v1215, %v1214
      %v1412 = vpack.c.b16 %v1217, %v1216
      %v1413 = vpack.c.b16 %v1219, %v1218
      %v1414 = vpack.c.b16 %v1221, %v1220
      %v1415 = vpack.c.b16 %v1223, %v1222
      %v1416 = vpack.c.b16 %v1225, %v1224
      %v1417 = vpack.c.b16 %v1227, %v1226
      %v1418 = vpack.c.b16 %v1229, %v1228
      %v1419 = vpack.c.b16 %v1231, %v1230
      %v1420 = vpack.c.b16 %v1233, %v1232
      %v1421 = vpack.c.b16 %v1235, %v1234
      %v1422 = vpack.c.b16 %v1237, %v1236
      %v1423 = vpack.c.b16 %v1239, %v1238
      %v1424 = vpack.c.b16 %v1241, %v1240
      %v1425 = vpack.c.b16 %v1243, %v1242
      %v1426 = vpack.c.b16 %v1245, %v1244
      %v1427 = vpack.c.b16 %v1247, %v1246
      %v1428 = vpack.c.b16 %v1249, %v1248
      %v1429 = vpack.c.b16 %v1251, %v1250
      %v1430 = vpack.c.b16 %v1253, %v1252
      %v1431 = vpack.c.b16 %v1255, %v1254
      %v1432 = vpack.c.b16 %v1257, %v1256
      %v1433 = vpack.c.b16 %v1259, %v1258
      %v1434 = vpack.c.b16 %v1261, %v1260
      %v1435 = vpack.c.b16 %v1263, %v1262
      %v1436 = vpack.c.b16 %v1265, %v1264
      %v1437 = vpack.c.b16 %v1267, %v1266
      %v1438 = vpack.c.b16 %v1269, %v1268
      %v1439 = vpack.c.b16 %v1271, %v1270
      %v1440 = vpack.c.b16 %v1273, %v1272
      %v1441 = vpack.c.b16 %v1275, %v1274
      %v1442 = vpack.c.b16 %v1277, %v1276
      %v1443 = vpack.c.b16 %v1279, %v1278
      %v1444 = vpack.c.b16 %v1281, %v1280
      %v1445 = vpack.c.b16 %v1283, %v1282
      %v1446 = vpack.c.b16 %v1285, %v1284
      %v1447 = vpack.c.b16 %v1287, %v1286
      %1608 = vmatprep.subr.bf16.mxu0 0
      %1609 = vmatpush1.bf16.msra.mxu0 %v1288
      %1610 = vmatprep.subr.bf16.mxu0 0
      %1611 = vmatpush1.bf16.msra.mxu0 %v1289
      %1612 = vmatprep.subr.bf16.mxu0 0
      %1613 = vmatpush1.bf16.msra.mxu0 %v1290
      %1614 = vmatprep.subr.bf16.mxu0 0
      %1615 = vmatpush1.bf16.msra.mxu0 %v1291
      %1616 = vmatprep.subr.bf16.mxu0 0
      %1617 = vmatpush1.bf16.msra.mxu0 %v1292
      %1618 = vmatprep.subr.bf16.mxu0 0
      %1619 = vmatpush1.bf16.msra.mxu0 %v1293
      %1620 = vmatprep.subr.bf16.mxu0 0
      %1621 = vmatpush1.bf16.msra.mxu0 %v1294
      %1622 = vmatprep.subr.bf16.mxu0 0
      %1623 = vmatpush1.bf16.msra.mxu0 %v1295
      %1624 = vmatprep.subr.bf16.mxu0 0
      %1625 = vmatpush1.bf16.msra.mxu0 %v1296
      %1626 = vmatprep.subr.bf16.mxu0 0
      %1627 = vmatpush1.bf16.msra.mxu0 %v1297
      %1628 = vmatprep.subr.bf16.mxu0 0
      %1629 = vmatpush1.bf16.msra.mxu0 %v1298
      %1630 = vmatprep.subr.bf16.mxu0 0
      %1631 = vmatpush1.bf16.msra.mxu0 %v1299
      %1632 = vmatprep.subr.bf16.mxu0 0
      %1633 = vmatpush1.bf16.msra.mxu0 %v1300
      %1634 = vmatprep.subr.bf16.mxu0 0
      %1635 = vmatpush1.bf16.msra.mxu0 %v1301
      %1636 = vmatprep.subr.bf16.mxu0 0
      %1637 = vmatpush1.bf16.msra.mxu0 %v1302
      %1638 = vmatprep.subr.bf16.mxu0 0
      %1639 = vmatpush1.bf16.msra.mxu0 %v1303
      %1640 = vmatprep.mubr.bf16.mxu0 %v543
      %1641 = vmatmul.mubr.bf16.gmra.mrb[0].mxu0 %v529
      %v1642 = vpop.f32.mrb[0].mxu0
      %v1643 = vadd.f32 0.0, %v1642
      %v1644 = vpop.f32.mrb[0].mxu0
      %v1645 = vpop.f32.mrb[0].mxu0
      %v1646 = vpop.f32.mrb[0].mxu0
      %1647 = vdwg.mxu0
      %1648 = vmatprep.subr.bf16.mxu0 0
      %1649 = vmatpush1.bf16.msra.mxu0 %v1304
      %1650 = vmatprep.subr.bf16.mxu0 0
      %1651 = vmatpush1.bf16.msra.mxu0 %v1305
      %1652 = vmatprep.subr.bf16.mxu0 0
      %1653 = vmatpush1.bf16.msra.mxu0 %v1306
      %1654 = vmatprep.subr.bf16.mxu0 0
      %1655 = vmatpush1.bf16.msra.mxu0 %v1307
      %1656 = vmatprep.subr.bf16.mxu0 0
      %1657 = vmatpush1.bf16.msra.mxu0 %v1308
      %1658 = vmatprep.subr.bf16.mxu0 0
      %1659 = vmatpush1.bf16.msra.mxu0 %v1309
      %1660 = vmatprep.subr.bf16.mxu0 0
      %1661 = vmatpush1.bf16.msra.mxu0 %v1310
      %1662 = vmatprep.subr.bf16.mxu0 0
      %1663 = vmatpush1.bf16.msra.mxu0 %v1311
      %1664 = vmatprep.subr.bf16.mxu0 0
      %1665 = vmatpush1.bf16.msra.mxu0 %v1312
      %1666 = vmatprep.subr.bf16.mxu0 0
      %1667 = vmatpush1.bf16.msra.mxu0 %v1313
      %1668 = vmatprep.subr.bf16.mxu0 0
      %1669 = vmatpush1.bf16.msra.mxu0 %v1314
      %1670 = vmatprep.subr.bf16.mxu0 0
      %1671 = vmatpush1.bf16.msra.mxu0 %v1315
      %1672 = vmatprep.subr.bf16.mxu0 0
      %1673 = vmatpush1.bf16.msra.mxu0 %v1316
      %1674 = vmatprep.subr.bf16.mxu0 0
      %1675 = vmatpush1.bf16.msra.mxu0 %v1317
      %1676 = vmatprep.subr.bf16.mxu0 0
      %1677 = vmatpush1.bf16.msra.mxu0 %v1318
      %1678 = vmatprep.subr.bf16.mxu0 0
      %1679 = vmatpush1.bf16.msra.mxu0 %v1319
      %1680 = vmatprep.mubr.bf16.mxu0 %v553
      %1681 = vmatmul.mubr.bf16.gmra.mrb[0].mxu0 %v551
      %v1682 = vpop.f32.mrb[0].mxu0
      %v1683 = vadd.f32 %v1643, %v1682
      %v1684 = vpop.f32.mrb[0].mxu0
      %v1685 = vpop.f32.mrb[0].mxu0
      %v1686 = vpop.f32.mrb[0].mxu0
      %1687 = vdwg.mxu0
      %1688 = vmatprep.subr.bf16.mxu0 0
      %1689 = vmatpush1.bf16.msra.mxu0 %v1320
      %1690 = vmatprep.subr.bf16.mxu0 0
      %1691 = vmatpush1.bf16.msra.mxu0 %v1321
      %1692 = vmatprep.subr.bf16.mxu0 0
      %1693 = vmatpush1.bf16.msra.mxu0 %v1322
      %1694 = vmatprep.subr.bf16.mxu0 0
      %1695 = vmatpush1.bf16.msra.mxu0 %v1323
      %1696 = vmatprep.subr.bf16.mxu0 0
      %1697 = vmatpush1.bf16.msra.mxu0 %v1324
      %1698 = vmatprep.subr.bf16.mxu0 0
      %1699 = vmatpush1.bf16.msra.mxu0 %v1325
      %1700 = vmatprep.subr.bf16.mxu0 0
      %1701 = vmatpush1.bf16.msra.mxu0 %v1326
      %1702 = vmatprep.subr.bf16.mxu0 0
      %1703 = vmatpush1.bf16.msra.mxu0 %v1327
      %1704 = vmatprep.subr.bf16.mxu0 0
      %1705 = vmatpush1.bf16.msra.mxu0 %v1328
      %1706 = vmatprep.subr.bf16.mxu0 0
      %1707 = vmatpush1.bf16.msra.mxu0 %v1329
      %1708 = vmatprep.subr.bf16.mxu0 0
      %1709 = vmatpush1.bf16.msra.mxu0 %v1330
      %1710 = vmatprep.subr.bf16.mxu0 0
      %1711 = vmatpush1.bf16.msra.mxu0 %v1331
      %1712 = vmatprep.subr.bf16.mxu0 0
      %1713 = vmatpush1.bf16.msra.mxu0 %v1332
      %1714 = vmatprep.subr.bf16.mxu0 0
      %1715 = vmatpush1.bf16.msra.mxu0 %v1333
      %1716 = vmatprep.subr.bf16.mxu0 0
      %1717 = vmatpush1.bf16.msra.mxu0 %v1334
      %1718 = vmatprep.subr.bf16.mxu0 0
      %1719 = vmatpush1.bf16.msra.mxu0 %v1335
      %1720 = vmatprep.mubr.bf16.mxu0 %v550
      %1721 = vmatmul.mubr.bf16.gmra.mrb[0].mxu0 %v536
      %v1722 = vpop.f32.mrb[0].mxu0
      %v1723 = vadd.f32 %v1683, %v1722
      %v1724 = vpop.f32.mrb[0].mxu0
      %v1725 = vpop.f32.mrb[0].mxu0
      %v1726 = vpop.f32.mrb[0].mxu0
      %1727 = vdwg.mxu0
      %1728 = vmatprep.subr.bf16.mxu0 0
      %1729 = vmatpush1.bf16.msra.mxu0 %v1336
      %1730 = vmatprep.subr.bf16.mxu0 0
      %1731 = vmatpush1.bf16.msra.mxu0 %v1337
      %1732 = vmatprep.subr.bf16.mxu0 0
      %1733 = vmatpush1.bf16.msra.mxu0 %v1338
      %1734 = vmatprep.subr.bf16.mxu0 0
      %1735 = vmatpush1.bf16.msra.mxu0 %v1339
      %1736 = vmatprep.subr.bf16.mxu0 0
      %1737 = vmatpush1.bf16.msra.mxu0 %v1340
      %1738 = vmatprep.subr.bf16.mxu0 0
      %1739 = vmatpush1.bf16.msra.mxu0 %v1341
      %1740 = vmatprep.subr.bf16.mxu0 0
      %1741 = vmatpush1.bf16.msra.mxu0 %v1342
      %1742 = vmatprep.subr.bf16.mxu0 0
      %1743 = vmatpush1.bf16.msra.mxu0 %v1343
      %1744 = vmatprep.subr.bf16.mxu0 0
      %1745 = vmatpush1.bf16.msra.mxu0 %v1344
      %1746 = vmatprep.subr.bf16.mxu0 0
      %1747 = vmatpush1.bf16.msra.mxu0 %v1345
      %1748 = vmatprep.subr.bf16.mxu0 0
      %1749 = vmatpush1.bf16.msra.mxu0 %v1346
      %1750 = vmatprep.subr.bf16.mxu0 0
      %1751 = vmatpush1.bf16.msra.mxu0 %v1347
      %1752 = vmatprep.subr.bf16.mxu0 0
      %1753 = vmatpush1.bf16.msra.mxu0 %v1348
      %1754 = vmatprep.subr.bf16.mxu0 0
      %1755 = vmatpush1.bf16.msra.mxu0 %v1349
      %1756 = vmatprep.subr.bf16.mxu0 0
      %1757 = vmatpush1.bf16.msra.mxu0 %v1350
      %1758 = vmatprep.subr.bf16.mxu0 0
      %1759 = vmatpush1.bf16.msra.mxu0 %v1351
      %1760 = vmatprep.mubr.bf16.mxu0 %v554
      %1761 = vmatmul.mubr.bf16.gmra.mrb[0].mxu0 %v552
      %v1762 = vpop.f32.mrb[0].mxu0
      %v1763 = vadd.f32 %v1723, %v1762
      %v1764 = vpop.f32.mrb[0].mxu0
      %v1765 = vpop.f32.mrb[0].mxu0
      %v1766 = vpop.f32.mrb[0].mxu0
      %1767 = vdwg.mxu0
      %1768 = vmatprep.subr.bf16.mxu0 0
      %1769 = vmatpush1.bf16.msra.mxu0 %v1352
      %1770 = vmatprep.subr.bf16.mxu0 0
      %1771 = vmatpush1.bf16.msra.mxu0 %v1353
      %1772 = vmatprep.subr.bf16.mxu0 0
      %1773 = vmatpush1.bf16.msra.mxu0 %v1354
      %1774 = vmatprep.subr.bf16.mxu0 0
      %1775 = vmatpush1.bf16.msra.mxu0 %v1355
      %1776 = vmatprep.subr.bf16.mxu0 0
      %1777 = vmatpush1.bf16.msra.mxu0 %v1356
      %1778 = vmatprep.subr.bf16.mxu0 0
      %1779 = vmatpush1.bf16.msra.mxu0 %v1357
      %1780 = vmatprep.subr.bf16.mxu0 0
      %1781 = vmatpush1.bf16.msra.mxu0 %v1358
      %1782 = vmatprep.subr.bf16.mxu0 0
      %1783 = vmatpush1.bf16.msra.mxu0 %v1359
      %1784 = vmatprep.subr.bf16.mxu0 0
      %1785 = vmatpush1.bf16.msra.mxu0 %v1360
      %1786 = vmatprep.subr.bf16.mxu0 0
      %1787 = vmatpush1.bf16.msra.mxu0 %v1361
      %1788 = vmatprep.subr.bf16.mxu0 0
      %1789 = vmatpush1.bf16.msra.mxu0 %v1362
      %1790 = vmatprep.subr.bf16.mxu0 0
      %1791 = vmatpush1.bf16.msra.mxu0 %v1363
      %1792 = vmatprep.subr.bf16.mxu0 0
      %1793 = vmatpush1.bf16.msra.mxu0 %v1364
      %1794 = vmatprep.subr.bf16.mxu0 0
      %1795 = vmatpush1.bf16.msra.mxu0 %v1365
      %1796 = vmatprep.subr.bf16.mxu0 0
      %1797 = vmatpush1.bf16.msra.mxu0 %v1366
      %1798 = vmatprep.subr.bf16.mxu0 0
      %1799 = vmatpush1.bf16.msra.mxu0 %v1367
      %1800 = vmatprep.mubr.bf16.mxu0 %v592
      %1801 = vmatmul.mubr.bf16.gmra.mrb[0].mxu0 %v578
      %v1802 = vpop.f32.mrb[0].mxu0
      %v1803 = vadd.f32 %v1763, %v1802
      %v1804 = vpop.f32.mrb[0].mxu0
      %v1805 = vpop.f32.mrb[0].mxu0
      %v1806 = vpop.f32.mrb[0].mxu0
      %1807 = vdwg.mxu0
      %1808 = vmatprep.subr.bf16.mxu0 0
      %1809 = vmatpush1.bf16.msra.mxu0 %v1368
      %1810 = vmatprep.subr.bf16.mxu0 0
      %1811 = vmatpush1.bf16.msra.mxu0 %v1369
      %1812 = vmatprep.subr.bf16.mxu0 0
      %1813 = vmatpush1.bf16.msra.mxu0 %v1370
      %1814 = vmatprep.subr.bf16.mxu0 0
      %1815 = vmatpush1.bf16.msra.mxu0 %v1371
      %1816 = vmatprep.subr.bf16.mxu0 0
      %1817 = vmatpush1.bf16.msra.mxu0 %v1372
      %1818 = vmatprep.subr.bf16.mxu0 0
      %1819 = vmatpush1.bf16.msra.mxu0 %v1373
      %1820 = vmatprep.subr.bf16.mxu0 0
      %1821 = vmatpush1.bf16.msra.mxu0 %v1374
      %1822 = vmatprep.subr.bf16.mxu0 0
      %1823 = vmatpush1.bf16.msra.mxu0 %v1375
      %1824 = vmatprep.subr.bf16.mxu0 0
      %1825 = vmatpush1.bf16.msra.mxu0 %v1376
      %1826 = vmatprep.subr.bf16.mxu0 0
      %1827 = vmatpush1.bf16.msra.mxu0 %v1377
      %1828 = vmatprep.subr.bf16.mxu0 0
      %1829 = vmatpush1.bf16.msra.mxu0 %v1378
      %1830 = vmatprep.subr.bf16.mxu0 0
      %1831 = vmatpush1.bf16.msra.mxu0 %v1379
      %1832 = vmatprep.subr.bf16.mxu0 0
      %1833 = vmatpush1.bf16.msra.mxu0 %v1380
      %1834 = vmatprep.subr.bf16.mxu0 0
      %1835 = vmatpush1.bf16.msra.mxu0 %v1381
      %1836 = vmatprep.subr.bf16.mxu0 0
      %1837 = vmatpush1.bf16.msra.mxu0 %v1382
      %1838 = vmatprep.subr.bf16.mxu0 0
      %1839 = vmatpush1.bf16.msra.mxu0 %v1383
      %1840 = vmatprep.mubr.bf16.mxu0 %v602
      %1841 = vmatmul.mubr.bf16.gmra.mrb[0].mxu0 %v600
      %v1842 = vpop.f32.mrb[0].mxu0
      %v1843 = vadd.f32 %v1803, %v1842
      %v1844 = vpop.f32.mrb[0].mxu0
      %v1845 = vpop.f32.mrb[0].mxu0
      %v1846 = vpop.f32.mrb[0].mxu0
      %1847 = vdwg.mxu0
      %1848 = vmatprep.subr.bf16.mxu0 0
      %1849 = vmatpush1.bf16.msra.mxu0 %v1384
      %1850 = vmatprep.subr.bf16.mxu0 0
      %1851 = vmatpush1.bf16.msra.mxu0 %v1385
      %1852 = vmatprep.subr.bf16.mxu0 0
      %1853 = vmatpush1.bf16.msra.mxu0 %v1386
      %1854 = vmatprep.subr.bf16.mxu0 0
      %1855 = vmatpush1.bf16.msra.mxu0 %v1387
      %1856 = vmatprep.subr.bf16.mxu0 0
      %1857 = vmatpush1.bf16.msra.mxu0 %v1388
      %1858 = vmatprep.subr.bf16.mxu0 0
      %1859 = vmatpush1.bf16.msra.mxu0 %v1389
      %1860 = vmatprep.subr.bf16.mxu0 0
      %1861 = vmatpush1.bf16.msra.mxu0 %v1390
      %1862 = vmatprep.subr.bf16.mxu0 0
      %1863 = vmatpush1.bf16.msra.mxu0 %v1391
      %1864 = vmatprep.subr.bf16.mxu0 0
      %1865 = vmatpush1.bf16.msra.mxu0 %v1392
      %1866 = vmatprep.subr.bf16.mxu0 0
      %1867 = vmatpush1.bf16.msra.mxu0 %v1393
      %1868 = vmatprep.subr.bf16.mxu0 0
      %1869 = vmatpush1.bf16.msra.mxu0 %v1394
      %1870 = vmatprep.subr.bf16.mxu0 0
      %1871 = vmatpush1.bf16.msra.mxu0 %v1395
      %1872 = vmatprep.subr.bf16.mxu0 0
      %1873 = vmatpush1.bf16.msra.mxu0 %v1396
      %1874 = vmatprep.subr.bf16.mxu0 0
      %1875 = vmatpush1.bf16.msra.mxu0 %v1397
      %1876 = vmatprep.subr.bf16.mxu0 0
      %1877 = vmatpush1.bf16.msra.mxu0 %v1398
      %1878 = vmatprep.subr.bf16.mxu0 0
      %1879 = vmatpush1.bf16.msra.mxu0 %v1399
      %1880 = vmatprep.mubr.bf16.mxu0 %v599
      %1881 = vmatmul.mubr.bf16.gmra.mrb[0].mxu0 %v585
      %v1882 = vpop.f32.mrb[0].mxu0
      %v1883 = vadd.f32 %v1843, %v1882
      %v1884 = vpop.f32.mrb[0].mxu0
      %v1885 = vpop.f32.mrb[0].mxu0
      %v1886 = vpop.f32.mrb[0].mxu0
      %1887 = vdwg.mxu0
      %1888 = vmatprep.subr.bf16.mxu0 0
      %1889 = vmatpush1.bf16.msra.mxu0 %v1400
      %1890 = vmatprep.subr.bf16.mxu0 0
      %1891 = vmatpush1.bf16.msra.mxu0 %v1401
      %1892 = vmatprep.subr.bf16.mxu0 0
      %1893 = vmatpush1.bf16.msra.mxu0 %v1402
      %1894 = vmatprep.subr.bf16.mxu0 0
      %1895 = vmatpush1.bf16.msra.mxu0 %v1403
      %1896 = vmatprep.subr.bf16.mxu0 0
      %1897 = vmatpush1.bf16.msra.mxu0 %v1404
      %1898 = vmatprep.subr.bf16.mxu0 0
      %1899 = vmatpush1.bf16.msra.mxu0 %v1405
      %1900 = vmatprep.subr.bf16.mxu0 0
      %1901 = vmatpush1.bf16.msra.mxu0 %v1406
      %1902 = vmatprep.subr.bf16.mxu0 0
      %1903 = vmatpush1.bf16.msra.mxu0 %v1407
      %1904 = vmatprep.subr.bf16.mxu0 0
      %1905 = vmatpush1.bf16.msra.mxu0 %v1408
      %1906 = vmatprep.subr.bf16.mxu0 0
      %1907 = vmatpush1.bf16.msra.mxu0 %v1409
      %1908 = vmatprep.subr.bf16.mxu0 0
      %1909 = vmatpush1.bf16.msra.mxu0 %v1410
      %1910 = vmatprep.subr.bf16.mxu0 0
      %1911 = vmatpush1.bf16.msra.mxu0 %v1411
      %1912 = vmatprep.subr.bf16.mxu0 0
      %1913 = vmatpush1.bf16.msra.mxu0 %v1412
      %1914 = vmatprep.subr.bf16.mxu0 0
      %1915 = vmatpush1.bf16.msra.mxu0 %v1413
      %1916 = vmatprep.subr.bf16.mxu0 0
      %1917 = vmatpush1.bf16.msra.mxu0 %v1414
      %1918 = vmatprep.subr.bf16.mxu0 0
      %1919 = vmatpush1.bf16.msra.mxu0 %v1415
      %1920 = vmatprep.mubr.bf16.mxu0 %v603
      %1921 = vmatmul.mubr.bf16.gmra.mrb[0].mxu0 %v601
      %v1922 = vpop.f32.mrb[0].mxu0
      %v1923 = vadd.f32 %v1883, %v1922
      %v1924 = vpop.f32.mrb[0].mxu0
      %v1925 = vpop.f32.mrb[0].mxu0
      %v1926 = vpop.f32.mrb[0].mxu0
      %1927 = vdwg.mxu0
      %1928 = vmatprep.subr.bf16.mxu0 0
      %1929 = vmatpush1.bf16.msra.mxu0 %v1416
      %1930 = vmatprep.subr.bf16.mxu0 0
      %1931 = vmatpush1.bf16.msra.mxu0 %v1417
      %1932 = vmatprep.subr.bf16.mxu0 0
      %1933 = vmatpush1.bf16.msra.mxu0 %v1418
      %1934 = vmatprep.subr.bf16.mxu0 0
      %1935 = vmatpush1.bf16.msra.mxu0 %v1419
      %1936 = vmatprep.subr.bf16.mxu0 0
      %1937 = vmatpush1.bf16.msra.mxu0 %v1420
      %1938 = vmatprep.subr.bf16.mxu0 0
      %1939 = vmatpush1.bf16.msra.mxu0 %v1421
      %1940 = vmatprep.subr.bf16.mxu0 0
      %1941 = vmatpush1.bf16.msra.mxu0 %v1422
      %1942 = vmatprep.subr.bf16.mxu0 0
      %1943 = vmatpush1.bf16.msra.mxu0 %v1423
      %1944 = vmatprep.subr.bf16.mxu0 0
      %1945 = vmatpush1.bf16.msra.mxu0 %v1424
      %1946 = vmatprep.subr.bf16.mxu0 0
      %1947 = vmatpush1.bf16.msra.mxu0 %v1425
      %1948 = vmatprep.subr.bf16.mxu0 0
      %1949 = vmatpush1.bf16.msra.mxu0 %v1426
      %1950 = vmatprep.subr.bf16.mxu0 0
      %1951 = vmatpush1.bf16.msra.mxu0 %v1427
      %1952 = vmatprep.subr.bf16.mxu0 0
      %1953 = vmatpush1.bf16.msra.mxu0 %v1428
      %1954 = vmatprep.subr.bf16.mxu0 0
      %1955 = vmatpush1.bf16.msra.mxu0 %v1429
      %1956 = vmatprep.subr.bf16.mxu0 0
      %1957 = vmatpush1.bf16.msra.mxu0 %v1430
      %1958 = vmatprep.subr.bf16.mxu0 0
      %1959 = vmatpush1.bf16.msra.mxu0 %v1431
      %1960 = vmatprep.mubr.bf16.mxu0 %v625
      %1961 = vmatmul.mubr.bf16.gmra.mrb[0].mxu0 %v618
      %v1962 = vpop.f32.mrb[0].mxu0
      %v1963 = vadd.f32 %v1923, %v1962
      %v1964 = vpop.f32.mrb[0].mxu0
      %v1965 = vpop.f32.mrb[0].mxu0
      %v1966 = vpop.f32.mrb[0].mxu0
      %1967 = vdwg.mxu0
      %1968 = vmatprep.subr.bf16.mxu0 0
      %1969 = vmatpush1.bf16.msra.mxu0 %v1432
      %1970 = vmatprep.subr.bf16.mxu0 0
      %1971 = vmatpush1.bf16.msra.mxu0 %v1433
      %1972 = vmatprep.subr.bf16.mxu0 0
      %1973 = vmatpush1.bf16.msra.mxu0 %v1434
      %1974 = vmatprep.subr.bf16.mxu0 0
      %1975 = vmatpush1.bf16.msra.mxu0 %v1435
      %1976 = vmatprep.subr.bf16.mxu0 0
      %1977 = vmatpush1.bf16.msra.mxu0 %v1436
      %1978 = vmatprep.subr.bf16.mxu0 0
      %1979 = vmatpush1.bf16.msra.mxu0 %v1437
      %1980 = vmatprep.subr.bf16.mxu0 0
      %1981 = vmatpush1.bf16.msra.mxu0 %v1438
      %1982 = vmatprep.subr.bf16.mxu0 0
      %1983 = vmatpush1.bf16.msra.mxu0 %v1439
      %1984 = vmatprep.subr.bf16.mxu0 0
      %1985 = vmatpush1.bf16.msra.mxu0 %v1440
      %1986 = vmatprep.subr.bf16.mxu0 0
      %1987 = vmatpush1.bf16.msra.mxu0 %v1441
      %1988 = vmatprep.subr.bf16.mxu0 0
      %1989 = vmatpush1.bf16.msra.mxu0 %v1442
      %1990 = vmatprep.subr.bf16.mxu0 0
      %1991 = vmatpush1.bf16.msra.mxu0 %v1443
      %1992 = vmatprep.subr.bf16.mxu0 0
      %1993 = vmatpush1.bf16.msra.mxu0 %v1444
      %1994 = vmatprep.subr.bf16.mxu0 0
      %1995 = vmatpush1.bf16.msra.mxu0 %v1445
      %1996 = vmatprep.subr.bf16.mxu0 0
      %1997 = vmatpush1.bf16.msra.mxu0 %v1446
      %1998 = vmatprep.subr.bf16.mxu0 0
      %1999 = vmatpush1.bf16.msra.mxu0 %v1447
      %2000 = vmatprep.mubr.bf16.mxu0 %v627
      %2001 = vmatmul.mubr.bf16.gmra.mrb[0].mxu0 %v626
      %v2002 = vpop.f32.mrb[0].mxu0
      %v2003 = vadd.f32 %v1963, %v2002
      %v2004 = vpop.f32.mrb[0].mxu0
      %v2005 = vpop.f32.mrb[0].mxu0
      %v2006 = vpop.f32.mrb[0].mxu0
      %2007 = vdwg.mxu0
      %v2008 = vadd.f32 %v179, %v2003
      %2009 = vst [vmem:[#allocation2] sm:$0x3] %v2008
      %p2010 = scmp.eq.s32.totalorder %s14, 2
      // Predicated region
      $region37: #{concat_mtl_forward.4} parent=31 // pred_check
        %p2011 = pneg %p2010
      $region38: #{concat_mtl_forward.4} parent=31 // pred_check_branch
        %2013 = sbr.rel (%p2011) target = $region40
      $region39: #{concat_mtl_forward.4} parent=31 // pred_region
        %v2014 = vld [vmem:[#allocation2] sm:$0x3]
        %v2015 = vld [vmem:[%s2] sm:$0x1]
        %v2017 = vlaneseq
        %v2018 = vshrl.u32 %v2017, 7
        %v2019 = vsub.s32 0, %v2018
        %v2020 = vrot.slane %v2015, %v2019
        %v2022 = vadd.f32 %v2014, %v2020
        %2023 = vst [vmem:[%s3] sm:$0x3] %v2022
      $region40: #{concat_mtl_forward.4} parent=31 // pred_fallthru
        _
      // Predicated region
      $region41: #{concat_mtl_forward.4} parent=31 // pred_check
        %p2024 = pneg %p100
      $region42: #{concat_mtl_forward.4} parent=31 // pred_check_branch
        %2026 = sbr.rel (%p2024) target = $region44
      $region43: #{concat_mtl_forward.4} parent=31 // pred_region
        _
      $region44: #{concat_mtl_forward.4} parent=31 // pred_fallthru
        _
      // Predicated region
      $region45: #{concat_mtl_forward.4} parent=31 // pred_check
        %p2027 = pneg %p100
      $region46: #{concat_mtl_forward.4} parent=31 // pred_check_branch
        %2029 = sbr.rel (%p2027) target = $region48
      $region47: #{concat_mtl_forward.4} parent=31 // pred_region
        _
      $region48: #{concat_mtl_forward.4} parent=31 // pred_fallthru
        _
    $region32: #{concat_mtl_forward.4} parent=5 // pred_fallthru
      _
    %p2030 = scmp.le.s32.totalorder 2, %s9
    // Predicated region
    $region49: #{concat_mtl_forward.4} parent=5 // pred_check
      %p2031 = pneg %p2030
    $region50: #{concat_mtl_forward.4} parent=5 // pred_check_branch
      %2033 = sbr.rel (%p2031) target = $region52
    $region51: #{concat_mtl_forward.4} parent=5 // pred_region
      %s2034 = ssub.s32 %s9, 2
    $region52: #{concat_mtl_forward.4} parent=5 // pred_fallthru
      _
  $region6: #{concat_mtl_forward.4} parent=0 // loop_footer
    %s13 = sadd.s32 1, %s9
  $region7: #{concat_mtl_forward.4} parent=0 // loop_footer_branch
    %8 = sbr.rel target = $region3
  $region8: #{concat_mtl_forward.4} parent=0 // loop_exit
    _

// kernel: concat_mtl_forward.5
$region0: #{concat_mtl_forward.5}
  #allocation0 [shape = 'u32[]', space=smem, size = 0x4, offset = 0x4, fixed_abs, tag = 'smem constant byte address 0x4 - core index']
  #allocation1 [shape = 'u32[144,128]{1,0:T(1,128)}', space=vmem, size = 0x12000, scoped, tag = 'internal scratch']
  %s0 = inlined_call_operand.vmem [shape: bf16[2,1536], index: 0, kind: input, shape index: {}]
  %s1 = inlined_call_operand.vmem [shape: bf16[1536,512], index: 1, kind: input, shape index: {}]
  %s2 = inlined_call_operand.hbm [shape: f32[2,512], index: 2, kind: output, shape index: {}]
  %s3 = sld [smem:[#allocation0]]
  $region18: #{concat_mtl_forward.5} parent=0
    _
  %s5 = ssub.s32 1, %s3
  %s6 = scalar_select 0, %s5, %s3
  $region1: #{concat_mtl_forward.5} parent=0
    #allocation2 [shape = 'u8[4096]{0}', space=vmem, size = 0x1000, scoped, tag = 'output window, operand 0, single buffered']
    #allocation3 [shape = 's32[1]{0}', space=sflag, size = 0x4, scoped, tag = 'scoped memory for concat_mtl_forward.5']
    %7 = vsyncpa [#allocation3], 0
    // Predicated region
    $region2: #{concat_mtl_forward.5} parent=1 // pred_check
      _
    $region3: #{concat_mtl_forward.5} parent=1 // pred_check_branch
      %9 = sbr.rel (0) target = $region5
    $region4: #{concat_mtl_forward.5} parent=1 // pred_region
      _
    $region5: #{concat_mtl_forward.5} parent=1 // pred_fallthru
      _
    // Predicated region
    $region6: #{concat_mtl_forward.5} parent=1 // pred_check
      _
    $region7: #{concat_mtl_forward.5} parent=1 // pred_check_branch
      %11 = sbr.rel (0) target = $region9
    $region8: #{concat_mtl_forward.5} parent=1 // pred_region
      _
    $region9: #{concat_mtl_forward.5} parent=1 // pred_fallthru
      _
    %v12 = vld [vmem:[%s0] sm:$0xff]
    %v13 = vld [vmem:[%s0 + $0x8] sm:$0xf]
    %v14 = vld [vmem:[%s1] sm:$0xff]
    %v15 = vld [vmem:[%s1 + $0x8] sm:$0xff]
    %v16 = vld [vmem:[%s1 + $0x10] sm:$0xff]
    %v17 = vld [vmem:[%s1 + $0x18] sm:$0xff]
    %v18 = vld [vmem:[%s1 + $0x20] sm:$0xff]
    %v19 = vld [vmem:[%s1 + $0x28] sm:$0xff]
    %v20 = vld [vmem:[%s1 + $0x30] sm:$0xff]
    %v21 = vld [vmem:[%s1 + $0x38] sm:$0xff]
    %v22 = vld [vmem:[%s1 + $0x40] sm:$0xff]
    %v23 = vld [vmem:[%s1 + $0x48] sm:$0xff]
    %v24 = vld [vmem:[%s1 + $0x50] sm:$0xff]
    %v25 = vld [vmem:[%s1 + $0x58] sm:$0xff]
    %v26 = vld [vmem:[%s1 + $0x60] sm:$0xff]
    %v27 = vld [vmem:[%s1 + $0x68] sm:$0xff]
    %v28 = vld [vmem:[%s1 + $0x70] sm:$0xff]
    %v29 = vld [vmem:[%s1 + $0x78] sm:$0xff]
    %v30 = vld [vmem:[%s1 + $0x80] sm:$0xff]
    %v31 = vld [vmem:[%s1 + $0x88] sm:$0xff]
    %v32 = vld [vmem:[%s1 + $0x90] sm:$0xff]
    %v33 = vld [vmem:[%s1 + $0x98] sm:$0xff]
    %v34 = vld [vmem:[%s1 + $0xa0] sm:$0xff]
    %v35 = vld [vmem:[%s1 + $0xa8] sm:$0xff]
    %v36 = vld [vmem:[%s1 + $0xb0] sm:$0xff]
    %v37 = vld [vmem:[%s1 + $0xb8] sm:$0xff]
    %v38 = vld [vmem:[%s1 + $0xc0] sm:$0xff]
    %v39 = vld [vmem:[%s1 + $0xc8] sm:$0xff]
    %v40 = vld [vmem:[%s1 + $0xd0] sm:$0xff]
    %v41 = vld [vmem:[%s1 + $0xd8] sm:$0xff]
    %v42 = vld [vmem:[%s1 + $0xe0] sm:$0xff]
    %v43 = vld [vmem:[%s1 + $0xe8] sm:$0xff]
    %v44 = vld [vmem:[%s1 + $0xf0] sm:$0xff]
    %v45 = vld [vmem:[%s1 + $0xf8] sm:$0xff]
    %v46 = vld [vmem:[%s1 + $0x100] sm:$0xff]
    %v47 = vld [vmem:[%s1 + $0x108] sm:$0xff]
    %v48 = vld [vmem:[%s1 + $0x110] sm:$0xff]
    %v49 = vld [vmem:[%s1 + $0x118] sm:$0xff]
    %v50 = vld [vmem:[%s1 + $0x120] sm:$0xff]
    %v51 = vld [vmem:[%s1 + $0x128] sm:$0xff]
    %v52 = vld [vmem:[%s1 + $0x130] sm:$0xff]
    %v53 = vld [vmem:[%s1 + $0x138] sm:$0xff]
    %v54 = vld [vmem:[%s1 + $0x140] sm:$0xff]
    %v55 = vld [vmem:[%s1 + $0x148] sm:$0xff]
    %v56 = vld [vmem:[%s1 + $0x150] sm:$0xff]
    %v57 = vld [vmem:[%s1 + $0x158] sm:$0xff]
    %v58 = vld [vmem:[%s1 + $0x160] sm:$0xff]
    %v59 = vld [vmem:[%s1 + $0x168] sm:$0xff]
    %v60 = vld [vmem:[%s1 + $0x170] sm:$0xff]
    %v61 = vld [vmem:[%s1 + $0x178] sm:$0xff]
    %v62 = vld [vmem:[%s1 + $0x180] sm:$0xff]
    %v63 = vld [vmem:[%s1 + $0x188] sm:$0xff]
    %v64 = vld [vmem:[%s1 + $0x190] sm:$0xff]
    %v65 = vld [vmem:[%s1 + $0x198] sm:$0xff]
    %v66 = vld [vmem:[%s1 + $0x1a0] sm:$0xff]
    %v67 = vld [vmem:[%s1 + $0x1a8] sm:$0xff]
    %v68 = vld [vmem:[%s1 + $0x1b0] sm:$0xff]
    %v69 = vld [vmem:[%s1 + $0x1b8] sm:$0xff]
    %v70 = vld [vmem:[%s1 + $0x1c0] sm:$0xff]
    %v71 = vld [vmem:[%s1 + $0x1c8] sm:$0xff]
    %v72 = vld [vmem:[%s1 + $0x1d0] sm:$0xff]
    %v73 = vld [vmem:[%s1 + $0x1d8] sm:$0xff]
    %v74 = vld [vmem:[%s1 + $0x1e0] sm:$0xff]
    %v75 = vld [vmem:[%s1 + $0x1e8] sm:$0xff]
    %v76 = vld [vmem:[%s1 + $0x1f0] sm:$0xff]
    %v77 = vld [vmem:[%s1 + $0x1f8] sm:$0xff]
    %v78 = vld [vmem:[%s1 + $0x200] sm:$0xff]
    %v79 = vld [vmem:[%s1 + $0x208] sm:$0xff]
    %v80 = vld [vmem:[%s1 + $0x210] sm:$0xff]
    %v81 = vld [vmem:[%s1 + $0x218] sm:$0xff]
    %v82 = vld [vmem:[%s1 + $0x220] sm:$0xff]
    %v83 = vld [vmem:[%s1 + $0x228] sm:$0xff]
    %v84 = vld [vmem:[%s1 + $0x230] sm:$0xff]
    %v85 = vld [vmem:[%s1 + $0x238] sm:$0xff]
    %v86 = vld [vmem:[%s1 + $0x240] sm:$0xff]
    %v87 = vld [vmem:[%s1 + $0x248] sm:$0xff]
    %v88 = vld [vmem:[%s1 + $0x250] sm:$0xff]
    %v89 = vld [vmem:[%s1 + $0x258] sm:$0xff]
    %v90 = vld [vmem:[%s1 + $0x260] sm:$0xff]
    %v91 = vld [vmem:[%s1 + $0x268] sm:$0xff]
    %v92 = vld [vmem:[%s1 + $0x270] sm:$0xff]
    %v93 = vld [vmem:[%s1 + $0x278] sm:$0xff]
    %v94 = vld [vmem:[%s1 + $0x280] sm:$0xff]
    %v95 = vld [vmem:[%s1 + $0x288] sm:$0xff]
    %v96 = vld [vmem:[%s1 + $0x290] sm:$0xff]
    %v97 = vld [vmem:[%s1 + $0x298] sm:$0xff]
    %v98 = vld [vmem:[%s1 + $0x2a0] sm:$0xff]
    %v99 = vld [vmem:[%s1 + $0x2a8] sm:$0xff]
    %v100 = vld [vmem:[%s1 + $0x2b0] sm:$0xff]
    %v101 = vld [vmem:[%s1 + $0x2b8] sm:$0xff]
    %v102 = vld [vmem:[%s1 + $0x2c0] sm:$0xff]
    %v103 = vld [vmem:[%s1 + $0x2c8] sm:$0xff]
    %v104 = vld [vmem:[%s1 + $0x2d0] sm:$0xff]
    %v105 = vld [vmem:[%s1 + $0x2d8] sm:$0xff]
    %v106 = vld [vmem:[%s1 + $0x2e0] sm:$0xff]
    %v107 = vld [vmem:[%s1 + $0x2e8] sm:$0xff]
    %v108 = vld [vmem:[%s1 + $0x2f0] sm:$0xff]
    %v109 = vld [vmem:[%s1 + $0x2f8] sm:$0xff]
    %v110 = vld [vmem:[%s1 + $0x300] sm:$0xff]
    %v111 = vld [vmem:[%s1 + $0x308] sm:$0xff]
    %v112 = vld [vmem:[%s1 + $0x310] sm:$0xff]
    %v113 = vld [vmem:[%s1 + $0x318] sm:$0xff]
    %v114 = vld [vmem:[%s1 + $0x320] sm:$0xff]
    %v115 = vld [vmem:[%s1 + $0x328] sm:$0xff]
    %v116 = vld [vmem:[%s1 + $0x330] sm:$0xff]
    %v117 = vld [vmem:[%s1 + $0x338] sm:$0xff]
    %v118 = vld [vmem:[%s1 + $0x340] sm:$0xff]
    %v119 = vld [vmem:[%s1 + $0x348] sm:$0xff]
    %v120 = vld [vmem:[%s1 + $0x350] sm:$0xff]
    %v121 = vld [vmem:[%s1 + $0x358] sm:$0xff]
    %v122 = vld [vmem:[%s1 + $0x360] sm:$0xff]
    %v123 = vld [vmem:[%s1 + $0x368] sm:$0xff]
    %v124 = vld [vmem:[%s1 + $0x370] sm:$0xff]
    %v125 = vld [vmem:[%s1 + $0x378] sm:$0xff]
    %v126 = vld [vmem:[%s1 + $0x380] sm:$0xff]
    %v127 = vld [vmem:[%s1 + $0x388] sm:$0xff]
    %v128 = vld [vmem:[%s1 + $0x390] sm:$0xff]
    %v129 = vld [vmem:[%s1 + $0x398] sm:$0xff]
    %v130 = vld [vmem:[%s1 + $0x3a0] sm:$0xff]
    %v131 = vld [vmem:[%s1 + $0x3a8] sm:$0xff]
    %v132 = vld [vmem:[%s1 + $0x3b0] sm:$0xff]
    %v133 = vld [vmem:[%s1 + $0x3b8] sm:$0xff]
    %v134 = vld [vmem:[%s1 + $0x3c0] sm:$0xff]
    %v135 = vld [vmem:[%s1 + $0x3c8] sm:$0xff]
    %v136 = vld [vmem:[%s1 + $0x3d0] sm:$0xff]
    %v137 = vld [vmem:[%s1 + $0x3d8] sm:$0xff]
    %v138 = vld [vmem:[%s1 + $0x3e0] sm:$0xff]
    %v139 = vld [vmem:[%s1 + $0x3e8] sm:$0xff]
    %v140 = vld [vmem:[%s1 + $0x3f0] sm:$0xff]
    %v141 = vld [vmem:[%s1 + $0x3f8] sm:$0xff]
    %v142 = vld [vmem:[%s1 + $0x400] sm:$0xff]
    %v143 = vld [vmem:[%s1 + $0x408] sm:$0xff]
    %v144 = vld [vmem:[%s1 + $0x410] sm:$0xff]
    %v145 = vld [vmem:[%s1 + $0x418] sm:$0xff]
    %v146 = vld [vmem:[%s1 + $0x420] sm:$0xff]
    %v147 = vld [vmem:[%s1 + $0x428] sm:$0xff]
    %v148 = vld [vmem:[%s1 + $0x430] sm:$0xff]
    %v149 = vld [vmem:[%s1 + $0x438] sm:$0xff]
    %v150 = vld [vmem:[%s1 + $0x440] sm:$0xff]
    %v151 = vld [vmem:[%s1 + $0x448] sm:$0xff]
    %v152 = vld [vmem:[%s1 + $0x450] sm:$0xff]
    %v153 = vld [vmem:[%s1 + $0x458] sm:$0xff]
    %v154 = vld [vmem:[%s1 + $0x460] sm:$0xff]
    %v155 = vld [vmem:[%s1 + $0x468] sm:$0xff]
    %v156 = vld [vmem:[%s1 + $0x470] sm:$0xff]
    %v157 = vld [vmem:[%s1 + $0x478] sm:$0xff]
    %v158 = vld [vmem:[%s1 + $0x480] sm:$0xff]
    %v159 = vld [vmem:[%s1 + $0x488] sm:$0xff]
    %v160 = vld [vmem:[%s1 + $0x490] sm:$0xff]
    %v161 = vld [vmem:[%s1 + $0x498] sm:$0xff]
    %v162 = vld [vmem:[%s1 + $0x4a0] sm:$0xff]
    %v163 = vld [vmem:[%s1 + $0x4a8] sm:$0xff]
    %v164 = vld [vmem:[%s1 + $0x4b0] sm:$0xff]
    %v165 = vld [vmem:[%s1 + $0x4b8] sm:$0xff]
    %v166 = vld [vmem:[%s1 + $0x4c0] sm:$0xff]
    %v167 = vld [vmem:[%s1 + $0x4c8] sm:$0xff]
    %v168 = vld [vmem:[%s1 + $0x4d0] sm:$0xff]
    %v169 = vld [vmem:[%s1 + $0x4d8] sm:$0xff]
    %v170 = vld [vmem:[%s1 + $0x4e0] sm:$0xff]
    %v171 = vld [vmem:[%s1 + $0x4e8] sm:$0xff]
    %v172 = vld [vmem:[%s1 + $0x4f0] sm:$0xff]
    %v173 = vld [vmem:[%s1 + $0x4f8] sm:$0xff]
    %v174 = vld [vmem:[%s1 + $0x500] sm:$0xff]
    %v175 = vld [vmem:[%s1 + $0x508] sm:$0xff]
    %v176 = vld [vmem:[%s1 + $0x510] sm:$0xff]
    %v177 = vld [vmem:[%s1 + $0x518] sm:$0xff]
    %v178 = vld [vmem:[%s1 + $0x520] sm:$0xff]
    %v179 = vld [vmem:[%s1 + $0x528] sm:$0xff]
    %v180 = vld [vmem:[%s1 + $0x530] sm:$0xff]
    %v181 = vld [vmem:[%s1 + $0x538] sm:$0xff]
    %v182 = vld [vmem:[%s1 + $0x540] sm:$0xff]
    %v183 = vld [vmem:[%s1 + $0x548] sm:$0xff]
    %v184 = vld [vmem:[%s1 + $0x550] sm:$0xff]
    %v185 = vld [vmem:[%s1 + $0x558] sm:$0xff]
    %v186 = vld [vmem:[%s1 + $0x560] sm:$0xff]
    %v187 = vld [vmem:[%s1 + $0x568] sm:$0xff]
    %v188 = vld [vmem:[%s1 + $0x570] sm:$0xff]
    %v189 = vld [vmem:[%s1 + $0x578] sm:$0xff]
    %v190 = vld [vmem:[%s1 + $0x580] sm:$0xff]
    %v191 = vld [vmem:[%s1 + $0x588] sm:$0xff]
    %v192 = vld [vmem:[%s1 + $0x590] sm:$0xff]
    %v193 = vld [vmem:[%s1 + $0x598] sm:$0xff]
    %v194 = vld [vmem:[%s1 + $0x5a0] sm:$0xff]
    %v195 = vld [vmem:[%s1 + $0x5a8] sm:$0xff]
    %v196 = vld [vmem:[%s1 + $0x5b0] sm:$0xff]
    %v197 = vld [vmem:[%s1 + $0x5b8] sm:$0xff]
    %v198 = vld [vmem:[%s1 + $0x5c0] sm:$0xff]
    %v199 = vld [vmem:[%s1 + $0x5c8] sm:$0xff]
    %v200 = vld [vmem:[%s1 + $0x5d0] sm:$0xff]
    %v201 = vld [vmem:[%s1 + $0x5d8] sm:$0xff]
    %v202 = vld [vmem:[%s1 + $0x5e0] sm:$0xff]
    %v203 = vld [vmem:[%s1 + $0x5e8] sm:$0xff]
    %v204 = vld [vmem:[%s1 + $0x5f0] sm:$0xff]
    %v205 = vld [vmem:[%s1 + $0x5f8] sm:$0xff]
    %v206 = vld [vmem:[%s1 + $0x600] sm:$0xff]
    %v207 = vld [vmem:[%s1 + $0x608] sm:$0xff]
    %v208 = vld [vmem:[%s1 + $0x610] sm:$0xff]
    %v209 = vld [vmem:[%s1 + $0x618] sm:$0xff]
    %v210 = vld [vmem:[%s1 + $0x620] sm:$0xff]
    %v211 = vld [vmem:[%s1 + $0x628] sm:$0xff]
    %v212 = vld [vmem:[%s1 + $0x630] sm:$0xff]
    %v213 = vld [vmem:[%s1 + $0x638] sm:$0xff]
    %v214 = vld [vmem:[%s1 + $0x640] sm:$0xff]
    %v215 = vld [vmem:[%s1 + $0x648] sm:$0xff]
    %v216 = vld [vmem:[%s1 + $0x650] sm:$0xff]
    %v217 = vld [vmem:[%s1 + $0x658] sm:$0xff]
    %v218 = vld [vmem:[%s1 + $0x660] sm:$0xff]
    %v219 = vld [vmem:[%s1 + $0x668] sm:$0xff]
    %v220 = vld [vmem:[%s1 + $0x670] sm:$0xff]
    %v221 = vld [vmem:[%s1 + $0x678] sm:$0xff]
    %v222 = vld [vmem:[%s1 + $0x680] sm:$0xff]
    %v223 = vld [vmem:[%s1 + $0x688] sm:$0xff]
    %v224 = vld [vmem:[%s1 + $0x690] sm:$0xff]
    %v225 = vld [vmem:[%s1 + $0x698] sm:$0xff]
    %v226 = vld [vmem:[%s1 + $0x6a0] sm:$0xff]
    %v227 = vld [vmem:[%s1 + $0x6a8] sm:$0xff]
    %v228 = vld [vmem:[%s1 + $0x6b0] sm:$0xff]
    %v229 = vld [vmem:[%s1 + $0x6b8] sm:$0xff]
    %v230 = vld [vmem:[%s1 + $0x6c0] sm:$0xff]
    %v231 = vld [vmem:[%s1 + $0x6c8] sm:$0xff]
    %v232 = vld [vmem:[%s1 + $0x6d0] sm:$0xff]
    %v233 = vld [vmem:[%s1 + $0x6d8] sm:$0xff]
    %v234 = vld [vmem:[%s1 + $0x6e0] sm:$0xff]
    %v235 = vld [vmem:[%s1 + $0x6e8] sm:$0xff]
    %v236 = vld [vmem:[%s1 + $0x6f0] sm:$0xff]
    %v237 = vld [vmem:[%s1 + $0x6f8] sm:$0xff]
    %v238 = vld [vmem:[%s1 + $0x700] sm:$0xff]
    %v239 = vld [vmem:[%s1 + $0x708] sm:$0xff]
    %v240 = vld [vmem:[%s1 + $0x710] sm:$0xff]
    %v241 = vld [vmem:[%s1 + $0x718] sm:$0xff]
    %v242 = vld [vmem:[%s1 + $0x720] sm:$0xff]
    %v243 = vld [vmem:[%s1 + $0x728] sm:$0xff]
    %v244 = vld [vmem:[%s1 + $0x730] sm:$0xff]
    %v245 = vld [vmem:[%s1 + $0x738] sm:$0xff]
    %v246 = vld [vmem:[%s1 + $0x740] sm:$0xff]
    %v247 = vld [vmem:[%s1 + $0x748] sm:$0xff]
    %v248 = vld [vmem:[%s1 + $0x750] sm:$0xff]
    %v249 = vld [vmem:[%s1 + $0x758] sm:$0xff]
    %v250 = vld [vmem:[%s1 + $0x760] sm:$0xff]
    %v251 = vld [vmem:[%s1 + $0x768] sm:$0xff]
    %v252 = vld [vmem:[%s1 + $0x770] sm:$0xff]
    %v253 = vld [vmem:[%s1 + $0x778] sm:$0xff]
    %v254 = vld [vmem:[%s1 + $0x780] sm:$0xff]
    %v255 = vld [vmem:[%s1 + $0x788] sm:$0xff]
    %v256 = vld [vmem:[%s1 + $0x790] sm:$0xff]
    %v257 = vld [vmem:[%s1 + $0x798] sm:$0xff]
    %v258 = vld [vmem:[%s1 + $0x7a0] sm:$0xff]
    %v259 = vld [vmem:[%s1 + $0x7a8] sm:$0xff]
    %v260 = vld [vmem:[%s1 + $0x7b0] sm:$0xff]
    %v261 = vld [vmem:[%s1 + $0x7b8] sm:$0xff]
    %v262 = vld [vmem:[%s1 + $0x7c0] sm:$0xff]
    %v263 = vld [vmem:[%s1 + $0x7c8] sm:$0xff]
    %v264 = vld [vmem:[%s1 + $0x7d0] sm:$0xff]
    %v265 = vld [vmem:[%s1 + $0x7d8] sm:$0xff]
    %v266 = vld [vmem:[%s1 + $0x7e0] sm:$0xff]
    %v267 = vld [vmem:[%s1 + $0x7e8] sm:$0xff]
    %v268 = vld [vmem:[%s1 + $0x7f0] sm:$0xff]
    %v269 = vld [vmem:[%s1 + $0x7f8] sm:$0xff]
    %v270 = vld [vmem:[%s1 + $0x800] sm:$0xff]
    %v271 = vld [vmem:[%s1 + $0x808] sm:$0xff]
    %v272 = vld [vmem:[%s1 + $0x810] sm:$0xff]
    %v273 = vld [vmem:[%s1 + $0x818] sm:$0xff]
    %v274 = vld [vmem:[%s1 + $0x820] sm:$0xff]
    %v275 = vld [vmem:[%s1 + $0x828] sm:$0xff]
    %v276 = vld [vmem:[%s1 + $0x830] sm:$0xff]
    %v277 = vld [vmem:[%s1 + $0x838] sm:$0xff]
    %v278 = vld [vmem:[%s1 + $0x840] sm:$0xff]
    %v279 = vld [vmem:[%s1 + $0x848] sm:$0xff]
    %v280 = vld [vmem:[%s1 + $0x850] sm:$0xff]
    %v281 = vld [vmem:[%s1 + $0x858] sm:$0xff]
    %v282 = vld [vmem:[%s1 + $0x860] sm:$0xff]
    %v283 = vld [vmem:[%s1 + $0x868] sm:$0xff]
    %v284 = vld [vmem:[%s1 + $0x870] sm:$0xff]
    %v285 = vld [vmem:[%s1 + $0x878] sm:$0xff]
    %v286 = vld [vmem:[%s1 + $0x880] sm:$0xff]
    %v287 = vld [vmem:[%s1 + $0x888] sm:$0xff]
    %v288 = vld [vmem:[%s1 + $0x890] sm:$0xff]
    %v289 = vld [vmem:[%s1 + $0x898] sm:$0xff]
    %v290 = vld [vmem:[%s1 + $0x8a0] sm:$0xff]
    %v291 = vld [vmem:[%s1 + $0x8a8] sm:$0xff]
    %v292 = vld [vmem:[%s1 + $0x8b0] sm:$0xff]
    %v293 = vld [vmem:[%s1 + $0x8b8] sm:$0xff]
    %v294 = vld [vmem:[%s1 + $0x8c0] sm:$0xff]
    %v295 = vld [vmem:[%s1 + $0x8c8] sm:$0xff]
    %v296 = vld [vmem:[%s1 + $0x8d0] sm:$0xff]
    %v297 = vld [vmem:[%s1 + $0x8d8] sm:$0xff]
    %v298 = vld [vmem:[%s1 + $0x8e0] sm:$0xff]
    %v299 = vld [vmem:[%s1 + $0x8e8] sm:$0xff]
    %v300 = vld [vmem:[%s1 + $0x8f0] sm:$0xff]
    %v301 = vld [vmem:[%s1 + $0x8f8] sm:$0xff]
    %v302 = vld [vmem:[%s1 + $0x900] sm:$0xff]
    %v303 = vld [vmem:[%s1 + $0x908] sm:$0xff]
    %v304 = vld [vmem:[%s1 + $0x910] sm:$0xff]
    %v305 = vld [vmem:[%s1 + $0x918] sm:$0xff]
    %v306 = vld [vmem:[%s1 + $0x920] sm:$0xff]
    %v307 = vld [vmem:[%s1 + $0x928] sm:$0xff]
    %v308 = vld [vmem:[%s1 + $0x930] sm:$0xff]
    %v309 = vld [vmem:[%s1 + $0x938] sm:$0xff]
    %v310 = vld [vmem:[%s1 + $0x940] sm:$0xff]
    %v311 = vld [vmem:[%s1 + $0x948] sm:$0xff]
    %v312 = vld [vmem:[%s1 + $0x950] sm:$0xff]
    %v313 = vld [vmem:[%s1 + $0x958] sm:$0xff]
    %v314 = vld [vmem:[%s1 + $0x960] sm:$0xff]
    %v315 = vld [vmem:[%s1 + $0x968] sm:$0xff]
    %v316 = vld [vmem:[%s1 + $0x970] sm:$0xff]
    %v317 = vld [vmem:[%s1 + $0x978] sm:$0xff]
    %v318 = vld [vmem:[%s1 + $0x980] sm:$0xff]
    %v319 = vld [vmem:[%s1 + $0x988] sm:$0xff]
    %v320 = vld [vmem:[%s1 + $0x990] sm:$0xff]
    %v321 = vld [vmem:[%s1 + $0x998] sm:$0xff]
    %v322 = vld [vmem:[%s1 + $0x9a0] sm:$0xff]
    %v323 = vld [vmem:[%s1 + $0x9a8] sm:$0xff]
    %v324 = vld [vmem:[%s1 + $0x9b0] sm:$0xff]
    %v325 = vld [vmem:[%s1 + $0x9b8] sm:$0xff]
    %v326 = vld [vmem:[%s1 + $0x9c0] sm:$0xff]
    %v327 = vld [vmem:[%s1 + $0x9c8] sm:$0xff]
    %v328 = vld [vmem:[%s1 + $0x9d0] sm:$0xff]
    %v329 = vld [vmem:[%s1 + $0x9d8] sm:$0xff]
    %v330 = vld [vmem:[%s1 + $0x9e0] sm:$0xff]
    %v331 = vld [vmem:[%s1 + $0x9e8] sm:$0xff]
    %v332 = vld [vmem:[%s1 + $0x9f0] sm:$0xff]
    %v333 = vld [vmem:[%s1 + $0x9f8] sm:$0xff]
    %v334 = vld [vmem:[%s1 + $0xa00] sm:$0xff]
    %v335 = vld [vmem:[%s1 + $0xa08] sm:$0xff]
    %v336 = vld [vmem:[%s1 + $0xa10] sm:$0xff]
    %v337 = vld [vmem:[%s1 + $0xa18] sm:$0xff]
    %v338 = vld [vmem:[%s1 + $0xa20] sm:$0xff]
    %v339 = vld [vmem:[%s1 + $0xa28] sm:$0xff]
    %v340 = vld [vmem:[%s1 + $0xa30] sm:$0xff]
    %v341 = vld [vmem:[%s1 + $0xa38] sm:$0xff]
    %v342 = vld [vmem:[%s1 + $0xa40] sm:$0xff]
    %v343 = vld [vmem:[%s1 + $0xa48] sm:$0xff]
    %v344 = vld [vmem:[%s1 + $0xa50] sm:$0xff]
    %v345 = vld [vmem:[%s1 + $0xa58] sm:$0xff]
    %v346 = vld [vmem:[%s1 + $0xa60] sm:$0xff]
    %v347 = vld [vmem:[%s1 + $0xa68] sm:$0xff]
    %v348 = vld [vmem:[%s1 + $0xa70] sm:$0xff]
    %v349 = vld [vmem:[%s1 + $0xa78] sm:$0xff]
    %v350 = vld [vmem:[%s1 + $0xa80] sm:$0xff]
    %v351 = vld [vmem:[%s1 + $0xa88] sm:$0xff]
    %v352 = vld [vmem:[%s1 + $0xa90] sm:$0xff]
    %v353 = vld [vmem:[%s1 + $0xa98] sm:$0xff]
    %v354 = vld [vmem:[%s1 + $0xaa0] sm:$0xff]
    %v355 = vld [vmem:[%s1 + $0xaa8] sm:$0xff]
    %v356 = vld [vmem:[%s1 + $0xab0] sm:$0xff]
    %v357 = vld [vmem:[%s1 + $0xab8] sm:$0xff]
    %v358 = vld [vmem:[%s1 + $0xac0] sm:$0xff]
    %v359 = vld [vmem:[%s1 + $0xac8] sm:$0xff]
    %v360 = vld [vmem:[%s1 + $0xad0] sm:$0xff]
    %v361 = vld [vmem:[%s1 + $0xad8] sm:$0xff]
    %v362 = vld [vmem:[%s1 + $0xae0] sm:$0xff]
    %v363 = vld [vmem:[%s1 + $0xae8] sm:$0xff]
    %v364 = vld [vmem:[%s1 + $0xaf0] sm:$0xff]
    %v365 = vld [vmem:[%s1 + $0xaf8] sm:$0xff]
    %v366 = vld [vmem:[%s1 + $0xb00] sm:$0xff]
    %v367 = vld [vmem:[%s1 + $0xb08] sm:$0xff]
    %v368 = vld [vmem:[%s1 + $0xb10] sm:$0xff]
    %v369 = vld [vmem:[%s1 + $0xb18] sm:$0xff]
    %v370 = vld [vmem:[%s1 + $0xb20] sm:$0xff]
    %v371 = vld [vmem:[%s1 + $0xb28] sm:$0xff]
    %v372 = vld [vmem:[%s1 + $0xb30] sm:$0xff]
    %v373 = vld [vmem:[%s1 + $0xb38] sm:$0xff]
    %v374 = vld [vmem:[%s1 + $0xb40] sm:$0xff]
    %v375 = vld [vmem:[%s1 + $0xb48] sm:$0xff]
    %v376 = vld [vmem:[%s1 + $0xb50] sm:$0xff]
    %v377 = vld [vmem:[%s1 + $0xb58] sm:$0xff]
    %v378 = vld [vmem:[%s1 + $0xb60] sm:$0xff]
    %v379 = vld [vmem:[%s1 + $0xb68] sm:$0xff]
    %v380 = vld [vmem:[%s1 + $0xb70] sm:$0xff]
    %v381 = vld [vmem:[%s1 + $0xb78] sm:$0xff]
    %v382 = vld [vmem:[%s1 + $0xb80] sm:$0xff]
    %v383 = vld [vmem:[%s1 + $0xb88] sm:$0xff]
    %v384 = vld [vmem:[%s1 + $0xb90] sm:$0xff]
    %v385 = vld [vmem:[%s1 + $0xb98] sm:$0xff]
    %v386 = vld [vmem:[%s1 + $0xba0] sm:$0xff]
    %v387 = vld [vmem:[%s1 + $0xba8] sm:$0xff]
    %v388 = vld [vmem:[%s1 + $0xbb0] sm:$0xff]
    %v389 = vld [vmem:[%s1 + $0xbb8] sm:$0xff]
    %v390 = vld [vmem:[%s1 + $0xbc0] sm:$0xff]
    %v391 = vld [vmem:[%s1 + $0xbc8] sm:$0xff]
    %v392 = vld [vmem:[%s1 + $0xbd0] sm:$0xff]
    %v393 = vld [vmem:[%s1 + $0xbd8] sm:$0xff]
    %v394 = vld [vmem:[%s1 + $0xbe0] sm:$0xff]
    %v395 = vld [vmem:[%s1 + $0xbe8] sm:$0xff]
    %v396 = vld [vmem:[%s1 + $0xbf0] sm:$0xff]
    %v397 = vld [vmem:[%s1 + $0xbf8] sm:$0xff]
    %v400 = vcombine.high %v12, %v12
    %v402 = vunpack.c.l.s4 1966171168
    %v403 = vunpack.c.0.s8 %v402
    %v404 = vlaneseq
    %v405 = vshrl.u32 %v404, 7
    %v406 = vsub.s32 %v403, %v405
    %v407 = vrot.slane %v12, %v406
    %v409 = vunpack.c.l.s4 1966171168
    %v410 = vunpack.c.0.s8 %v409
    %v411 = vlaneseq
    %v412 = vshrl.u32 %v411, 7
    %v413 = vsub.s32 %v410, %v412
    %v414 = vrot.slane %v400, %v413
    %v415 = vcombine.high %v407, %v407
    %v416 = vcombine.high %v414, %v414
    %v418 = vunpack.c.l.s4 1966171168
    %v419 = vunpack.c.0.s8 %v418
    %v420 = vlaneseq
    %v421 = vshrl.u32 %v420, 7
    %v422 = vsub.s32 %v419, %v421
    %v423 = vrot.slane %v407, %v422
    %v425 = vunpack.c.l.s4 1966171168
    %v426 = vunpack.c.0.s8 %v425
    %v427 = vlaneseq
    %v428 = vshrl.u32 %v427, 7
    %v429 = vsub.s32 %v426, %v428
    %v430 = vrot.slane %v414, %v429
    %v432 = vunpack.c.l.s4 1966171168
    %v433 = vunpack.c.0.s8 %v432
    %v434 = vlaneseq
    %v435 = vshrl.u32 %v434, 7
    %v436 = vsub.s32 %v433, %v435
    %v437 = vrot.slane %v415, %v436
    %v439 = vunpack.c.l.s4 1966171168
    %v440 = vunpack.c.0.s8 %v439
    %v441 = vlaneseq
    %v442 = vshrl.u32 %v441, 7
    %v443 = vsub.s32 %v440, %v442
    %v444 = vrot.slane %v416, %v443
    %v445 = vcombine.high %v423, %v423
    %v446 = vcombine.high %v430, %v430
    %v447 = vcombine.high %v437, %v437
    %v448 = vcombine.high %v444, %v444
    %v450 = vunpack.c.l.s4 1966171168
    %v451 = vunpack.c.0.s8 %v450
    %v452 = vlaneseq
    %v453 = vshrl.u32 %v452, 7
    %v454 = vsub.s32 %v451, %v453
    %v455 = vrot.slane %v13, %v454
    %v456 = vcombine.high %v455, %v455
    %v458 = vunpack.c.l.s4 1966171168
    %v459 = vunpack.c.0.s8 %v458
    %v460 = vlaneseq
    %v461 = vshrl.u32 %v460, 7
    %v462 = vsub.s32 %v459, %v461
    %v463 = vrot.slane %v455, %v462
    %v465 = vunpack.c.l.s4 1966171168
    %v466 = vunpack.c.0.s8 %v465
    %v467 = vlaneseq
    %v468 = vshrl.u32 %v467, 7
    %v469 = vsub.s32 %v466, %v468
    %v470 = vrot.slane %v456, %v469
    %v471 = vcombine.high %v463, %v463
    %v472 = vcombine.high %v470, %v470
    %v869 = vunpack.c.l.b16 %v14
    %v870 = vunpack.c.h.b16 %v14
    %v871 = vunpack.c.l.b16 %v15
    %v872 = vunpack.c.h.b16 %v15
    %v873 = vunpack.c.l.b16 %v16
    %v874 = vunpack.c.h.b16 %v16
    %v875 = vunpack.c.l.b16 %v17
    %v876 = vunpack.c.h.b16 %v17
    %v877 = vunpack.c.l.b16 %v18
    %v878 = vunpack.c.h.b16 %v18
    %v879 = vunpack.c.l.b16 %v19
    %v880 = vunpack.c.h.b16 %v19
    %v881 = vunpack.c.l.b16 %v20
    %v882 = vunpack.c.h.b16 %v20
    %v883 = vunpack.c.l.b16 %v21
    %v884 = vunpack.c.h.b16 %v21
    %v885 = vunpack.c.l.b16 %v22
    %v886 = vunpack.c.h.b16 %v22
    %v887 = vunpack.c.l.b16 %v23
    %v888 = vunpack.c.h.b16 %v23
    %v889 = vunpack.c.l.b16 %v24
    %v890 = vunpack.c.h.b16 %v24
    %v891 = vunpack.c.l.b16 %v25
    %v892 = vunpack.c.h.b16 %v25
    %v893 = vunpack.c.l.b16 %v26
    %v894 = vunpack.c.h.b16 %v26
    %v895 = vunpack.c.l.b16 %v27
    %v896 = vunpack.c.h.b16 %v27
    %v897 = vunpack.c.l.b16 %v28
    %v898 = vunpack.c.h.b16 %v28
    %v899 = vunpack.c.l.b16 %v29
    %v900 = vunpack.c.h.b16 %v29
    %v901 = vunpack.c.l.b16 %v30
    %v902 = vunpack.c.h.b16 %v30
    %v903 = vunpack.c.l.b16 %v31
    %v904 = vunpack.c.h.b16 %v31
    %v905 = vunpack.c.l.b16 %v32
    %v906 = vunpack.c.h.b16 %v32
    %v907 = vunpack.c.l.b16 %v33
    %v908 = vunpack.c.h.b16 %v33
    %v909 = vunpack.c.l.b16 %v34
    %v910 = vunpack.c.h.b16 %v34
    %v911 = vunpack.c.l.b16 %v35
    %v912 = vunpack.c.h.b16 %v35
    %v913 = vunpack.c.l.b16 %v36
    %v914 = vunpack.c.h.b16 %v36
    %v915 = vunpack.c.l.b16 %v37
    %v916 = vunpack.c.h.b16 %v37
    %v917 = vunpack.c.l.b16 %v38
    %v918 = vunpack.c.h.b16 %v38
    %v919 = vunpack.c.l.b16 %v39
    %v920 = vunpack.c.h.b16 %v39
    %v921 = vunpack.c.l.b16 %v40
    %v922 = vunpack.c.h.b16 %v40
    %v923 = vunpack.c.l.b16 %v41
    %v924 = vunpack.c.h.b16 %v41
    %v925 = vunpack.c.l.b16 %v42
    %v926 = vunpack.c.h.b16 %v42
    %v927 = vunpack.c.l.b16 %v43
    %v928 = vunpack.c.h.b16 %v43
    %v929 = vunpack.c.l.b16 %v44
    %v930 = vunpack.c.h.b16 %v44
    %v931 = vunpack.c.l.b16 %v45
    %v932 = vunpack.c.h.b16 %v45
    %v933 = vunpack.c.l.b16 %v46
    %v934 = vunpack.c.h.b16 %v46
    %v935 = vunpack.c.l.b16 %v47
    %v936 = vunpack.c.h.b16 %v47
    %v937 = vunpack.c.l.b16 %v48
    %v938 = vunpack.c.h.b16 %v48
    %v939 = vunpack.c.l.b16 %v49
    %v940 = vunpack.c.h.b16 %v49
    %v941 = vunpack.c.l.b16 %v50
    %v942 = vunpack.c.h.b16 %v50
    %v943 = vunpack.c.l.b16 %v51
    %v944 = vunpack.c.h.b16 %v51
    %v945 = vunpack.c.l.b16 %v52
    %v946 = vunpack.c.h.b16 %v52
    %v947 = vunpack.c.l.b16 %v53
    %v948 = vunpack.c.h.b16 %v53
    %v949 = vunpack.c.l.b16 %v54
    %v950 = vunpack.c.h.b16 %v54
    %v951 = vunpack.c.l.b16 %v55
    %v952 = vunpack.c.h.b16 %v55
    %v953 = vunpack.c.l.b16 %v56
    %v954 = vunpack.c.h.b16 %v56
    %v955 = vunpack.c.l.b16 %v57
    %v956 = vunpack.c.h.b16 %v57
    %v957 = vunpack.c.l.b16 %v58
    %v958 = vunpack.c.h.b16 %v58
    %v959 = vunpack.c.l.b16 %v59
    %v960 = vunpack.c.h.b16 %v59
    %v961 = vunpack.c.l.b16 %v60
    %v962 = vunpack.c.h.b16 %v60
    %v963 = vunpack.c.l.b16 %v61
    %v964 = vunpack.c.h.b16 %v61
    %v965 = vunpack.c.l.b16 %v62
    %v966 = vunpack.c.h.b16 %v62
    %v967 = vunpack.c.l.b16 %v63
    %v968 = vunpack.c.h.b16 %v63
    %v969 = vunpack.c.l.b16 %v64
    %v970 = vunpack.c.h.b16 %v64
    %v971 = vunpack.c.l.b16 %v65
    %v972 = vunpack.c.h.b16 %v65
    %v973 = vunpack.c.l.b16 %v66
    %v974 = vunpack.c.h.b16 %v66
    %v975 = vunpack.c.l.b16 %v67
    %v976 = vunpack.c.h.b16 %v67
    %v977 = vunpack.c.l.b16 %v68
    %v978 = vunpack.c.h.b16 %v68
    %v979 = vunpack.c.l.b16 %v69
    %v980 = vunpack.c.h.b16 %v69
    %v981 = vunpack.c.l.b16 %v70
    %v982 = vunpack.c.h.b16 %v70
    %v983 = vunpack.c.l.b16 %v71
    %v984 = vunpack.c.h.b16 %v71
    %v985 = vunpack.c.l.b16 %v72
    %v986 = vunpack.c.h.b16 %v72
    %v987 = vunpack.c.l.b16 %v73
    %v988 = vunpack.c.h.b16 %v73
    %v989 = vunpack.c.l.b16 %v74
    %v990 = vunpack.c.h.b16 %v74
    %v991 = vunpack.c.l.b16 %v75
    %v992 = vunpack.c.h.b16 %v75
    %v993 = vunpack.c.l.b16 %v76
    %v994 = vunpack.c.h.b16 %v76
    %v995 = vunpack.c.l.b16 %v77
    %v996 = vunpack.c.h.b16 %v77
    %v997 = vunpack.c.l.b16 %v78
    %v998 = vunpack.c.h.b16 %v78
    %v999 = vunpack.c.l.b16 %v79
    %v1000 = vunpack.c.h.b16 %v79
    %v1001 = vunpack.c.l.b16 %v80
    %v1002 = vunpack.c.h.b16 %v80
    %v1003 = vunpack.c.l.b16 %v81
    %v1004 = vunpack.c.h.b16 %v81
    %v1005 = vunpack.c.l.b16 %v82
    %v1006 = vunpack.c.h.b16 %v82
    %v1007 = vunpack.c.l.b16 %v83
    %v1008 = vunpack.c.h.b16 %v83
    %v1009 = vunpack.c.l.b16 %v84
    %v1010 = vunpack.c.h.b16 %v84
    %v1011 = vunpack.c.l.b16 %v85
    %v1012 = vunpack.c.h.b16 %v85
    %v1013 = vunpack.c.l.b16 %v86
    %v1014 = vunpack.c.h.b16 %v86
    %v1015 = vunpack.c.l.b16 %v87
    %v1016 = vunpack.c.h.b16 %v87
    %v1017 = vunpack.c.l.b16 %v88
    %v1018 = vunpack.c.h.b16 %v88
    %v1019 = vunpack.c.l.b16 %v89
    %v1020 = vunpack.c.h.b16 %v89
    %v1021 = vunpack.c.l.b16 %v90
    %v1022 = vunpack.c.h.b16 %v90
    %v1023 = vunpack.c.l.b16 %v91
    %v1024 = vunpack.c.h.b16 %v91
    %v1025 = vunpack.c.l.b16 %v92
    %v1026 = vunpack.c.h.b16 %v92
    %v1027 = vunpack.c.l.b16 %v93
    %v1028 = vunpack.c.h.b16 %v93
    %v1029 = vunpack.c.l.b16 %v94
    %v1030 = vunpack.c.h.b16 %v94
    %v1031 = vunpack.c.l.b16 %v95
    %v1032 = vunpack.c.h.b16 %v95
    %v1033 = vunpack.c.l.b16 %v96
    %v1034 = vunpack.c.h.b16 %v96
    %v1035 = vunpack.c.l.b16 %v97
    %v1036 = vunpack.c.h.b16 %v97
    %v1037 = vunpack.c.l.b16 %v98
    %v1038 = vunpack.c.h.b16 %v98
    %v1039 = vunpack.c.l.b16 %v99
    %v1040 = vunpack.c.h.b16 %v99
    %v1041 = vunpack.c.l.b16 %v100
    %v1042 = vunpack.c.h.b16 %v100
    %v1043 = vunpack.c.l.b16 %v101
    %v1044 = vunpack.c.h.b16 %v101
    %v1045 = vunpack.c.l.b16 %v102
    %v1046 = vunpack.c.h.b16 %v102
    %v1047 = vunpack.c.l.b16 %v103
    %v1048 = vunpack.c.h.b16 %v103
    %v1049 = vunpack.c.l.b16 %v104
    %v1050 = vunpack.c.h.b16 %v104
    %v1051 = vunpack.c.l.b16 %v105
    %v1052 = vunpack.c.h.b16 %v105
    %v1053 = vunpack.c.l.b16 %v106
    %v1054 = vunpack.c.h.b16 %v106
    %v1055 = vunpack.c.l.b16 %v107
    %v1056 = vunpack.c.h.b16 %v107
    %v1057 = vunpack.c.l.b16 %v108
    %v1058 = vunpack.c.h.b16 %v108
    %v1059 = vunpack.c.l.b16 %v109
    %v1060 = vunpack.c.h.b16 %v109
    %v1061 = vunpack.c.l.b16 %v110
    %v1062 = vunpack.c.h.b16 %v110
    %v1063 = vunpack.c.l.b16 %v111
    %v1064 = vunpack.c.h.b16 %v111
    %v1065 = vunpack.c.l.b16 %v112
    %v1066 = vunpack.c.h.b16 %v112
    %v1067 = vunpack.c.l.b16 %v113
    %v1068 = vunpack.c.h.b16 %v113
    %v1069 = vunpack.c.l.b16 %v114
    %v1070 = vunpack.c.h.b16 %v114
    %v1071 = vunpack.c.l.b16 %v115
    %v1072 = vunpack.c.h.b16 %v115
    %v1073 = vunpack.c.l.b16 %v116
    %v1074 = vunpack.c.h.b16 %v116
    %v1075 = vunpack.c.l.b16 %v117
    %v1076 = vunpack.c.h.b16 %v117
    %v1077 = vunpack.c.l.b16 %v118
    %v1078 = vunpack.c.h.b16 %v118
    %v1079 = vunpack.c.l.b16 %v119
    %v1080 = vunpack.c.h.b16 %v119
    %v1081 = vunpack.c.l.b16 %v120
    %v1082 = vunpack.c.h.b16 %v120
    %v1083 = vunpack.c.l.b16 %v121
    %v1084 = vunpack.c.h.b16 %v121
    %v1085 = vunpack.c.l.b16 %v122
    %v1086 = vunpack.c.h.b16 %v122
    %v1087 = vunpack.c.l.b16 %v123
    %v1088 = vunpack.c.h.b16 %v123
    %v1089 = vunpack.c.l.b16 %v124
    %v1090 = vunpack.c.h.b16 %v124
    %v1091 = vunpack.c.l.b16 %v125
    %v1092 = vunpack.c.h.b16 %v125
    %v1093 = vunpack.c.l.b16 %v126
    %v1094 = vunpack.c.h.b16 %v126
    %v1095 = vunpack.c.l.b16 %v127
    %v1096 = vunpack.c.h.b16 %v127
    %v1097 = vunpack.c.l.b16 %v128
    %v1098 = vunpack.c.h.b16 %v128
    %v1099 = vunpack.c.l.b16 %v129
    %v1100 = vunpack.c.h.b16 %v129
    %v1101 = vunpack.c.l.b16 %v130
    %v1102 = vunpack.c.h.b16 %v130
    %v1103 = vunpack.c.l.b16 %v131
    %v1104 = vunpack.c.h.b16 %v131
    %v1105 = vunpack.c.l.b16 %v132
    %v1106 = vunpack.c.h.b16 %v132
    %v1107 = vunpack.c.l.b16 %v133
    %v1108 = vunpack.c.h.b16 %v133
    %v1109 = vunpack.c.l.b16 %v134
    %v1110 = vunpack.c.h.b16 %v134
    %v1111 = vunpack.c.l.b16 %v135
    %v1112 = vunpack.c.h.b16 %v135
    %v1113 = vunpack.c.l.b16 %v136
    %v1114 = vunpack.c.h.b16 %v136
    %v1115 = vunpack.c.l.b16 %v137
    %v1116 = vunpack.c.h.b16 %v137
    %v1117 = vunpack.c.l.b16 %v138
    %v1118 = vunpack.c.h.b16 %v138
    %v1119 = vunpack.c.l.b16 %v139
    %v1120 = vunpack.c.h.b16 %v139
    %v1121 = vunpack.c.l.b16 %v140
    %v1122 = vunpack.c.h.b16 %v140
    %v1123 = vunpack.c.l.b16 %v141
    %v1124 = vunpack.c.h.b16 %v141
    %v1125 = vunpack.c.l.b16 %v142
    %v1126 = vunpack.c.h.b16 %v142
    %v1127 = vunpack.c.l.b16 %v143
    %v1128 = vunpack.c.h.b16 %v143
    %v1129 = vunpack.c.l.b16 %v144
    %v1130 = vunpack.c.h.b16 %v144
    %v1131 = vunpack.c.l.b16 %v145
    %v1132 = vunpack.c.h.b16 %v145
    %v1133 = vunpack.c.l.b16 %v146
    %v1134 = vunpack.c.h.b16 %v146
    %v1135 = vunpack.c.l.b16 %v147
    %v1136 = vunpack.c.h.b16 %v147
    %v1137 = vunpack.c.l.b16 %v148
    %v1138 = vunpack.c.h.b16 %v148
    %v1139 = vunpack.c.l.b16 %v149
    %v1140 = vunpack.c.h.b16 %v149
    %v1141 = vunpack.c.l.b16 %v150
    %v1142 = vunpack.c.h.b16 %v150
    %v1143 = vunpack.c.l.b16 %v151
    %v1144 = vunpack.c.h.b16 %v151
    %v1145 = vunpack.c.l.b16 %v152
    %v1146 = vunpack.c.h.b16 %v152
    %v1147 = vunpack.c.l.b16 %v153
    %v1148 = vunpack.c.h.b16 %v153
    %v1149 = vunpack.c.l.b16 %v154
    %v1150 = vunpack.c.h.b16 %v154
    %v1151 = vunpack.c.l.b16 %v155
    %v1152 = vunpack.c.h.b16 %v155
    %v1153 = vunpack.c.l.b16 %v156
    %v1154 = vunpack.c.h.b16 %v156
    %v1155 = vunpack.c.l.b16 %v157
    %v1156 = vunpack.c.h.b16 %v157
    %v1157 = vunpack.c.l.b16 %v158
    %v1158 = vunpack.c.h.b16 %v158
    %v1159 = vunpack.c.l.b16 %v159
    %v1160 = vunpack.c.h.b16 %v159
    %v1161 = vunpack.c.l.b16 %v160
    %v1162 = vunpack.c.h.b16 %v160
    %v1163 = vunpack.c.l.b16 %v161
    %v1164 = vunpack.c.h.b16 %v161
    %v1165 = vunpack.c.l.b16 %v162
    %v1166 = vunpack.c.h.b16 %v162
    %v1167 = vunpack.c.l.b16 %v163
    %v1168 = vunpack.c.h.b16 %v163
    %v1169 = vunpack.c.l.b16 %v164
    %v1170 = vunpack.c.h.b16 %v164
    %v1171 = vunpack.c.l.b16 %v165
    %v1172 = vunpack.c.h.b16 %v165
    %v1173 = vunpack.c.l.b16 %v166
    %v1174 = vunpack.c.h.b16 %v166
    %v1175 = vunpack.c.l.b16 %v167
    %v1176 = vunpack.c.h.b16 %v167
    %v1177 = vunpack.c.l.b16 %v168
    %v1178 = vunpack.c.h.b16 %v168
    %v1179 = vunpack.c.l.b16 %v169
    %v1180 = vunpack.c.h.b16 %v169
    %v1181 = vunpack.c.l.b16 %v170
    %v1182 = vunpack.c.h.b16 %v170
    %v1183 = vunpack.c.l.b16 %v171
    %v1184 = vunpack.c.h.b16 %v171
    %v1185 = vunpack.c.l.b16 %v172
    %v1186 = vunpack.c.h.b16 %v172
    %v1187 = vunpack.c.l.b16 %v173
    %v1188 = vunpack.c.h.b16 %v173
    %v1189 = vunpack.c.l.b16 %v174
    %v1190 = vunpack.c.h.b16 %v174
    %v1191 = vunpack.c.l.b16 %v175
    %v1192 = vunpack.c.h.b16 %v175
    %v1193 = vunpack.c.l.b16 %v176
    %v1194 = vunpack.c.h.b16 %v176
    %v1195 = vunpack.c.l.b16 %v177
    %v1196 = vunpack.c.h.b16 %v177
    %v1197 = vunpack.c.l.b16 %v178
    %v1198 = vunpack.c.h.b16 %v178
    %v1199 = vunpack.c.l.b16 %v179
    %v1200 = vunpack.c.h.b16 %v179
    %v1201 = vunpack.c.l.b16 %v180
    %v1202 = vunpack.c.h.b16 %v180
    %v1203 = vunpack.c.l.b16 %v181
    %v1204 = vunpack.c.h.b16 %v181
    %v1205 = vunpack.c.l.b16 %v182
    %v1206 = vunpack.c.h.b16 %v182
    %v1207 = vunpack.c.l.b16 %v183
    %v1208 = vunpack.c.h.b16 %v183
    %v1209 = vunpack.c.l.b16 %v184
    %v1210 = vunpack.c.h.b16 %v184
    %v1211 = vunpack.c.l.b16 %v185
    %v1212 = vunpack.c.h.b16 %v185
    %v1213 = vunpack.c.l.b16 %v186
    %v1214 = vunpack.c.h.b16 %v186
    %v1215 = vunpack.c.l.b16 %v187
    %v1216 = vunpack.c.h.b16 %v187
    %v1217 = vunpack.c.l.b16 %v188
    %v1218 = vunpack.c.h.b16 %v188
    %v1219 = vunpack.c.l.b16 %v189
    %v1220 = vunpack.c.h.b16 %v189
    %v1221 = vunpack.c.l.b16 %v190
    %v1222 = vunpack.c.h.b16 %v190
    %v1223 = vunpack.c.l.b16 %v191
    %v1224 = vunpack.c.h.b16 %v191
    %v1225 = vunpack.c.l.b16 %v192
    %v1226 = vunpack.c.h.b16 %v192
    %v1227 = vunpack.c.l.b16 %v193
    %v1228 = vunpack.c.h.b16 %v193
    %v1229 = vunpack.c.l.b16 %v194
    %v1230 = vunpack.c.h.b16 %v194
    %v1231 = vunpack.c.l.b16 %v195
    %v1232 = vunpack.c.h.b16 %v195
    %v1233 = vunpack.c.l.b16 %v196
    %v1234 = vunpack.c.h.b16 %v196
    %v1235 = vunpack.c.l.b16 %v197
    %v1236 = vunpack.c.h.b16 %v197
    %v1237 = vunpack.c.l.b16 %v198
    %v1238 = vunpack.c.h.b16 %v198
    %v1239 = vunpack.c.l.b16 %v199
    %v1240 = vunpack.c.h.b16 %v199
    %v1241 = vunpack.c.l.b16 %v200
    %v1242 = vunpack.c.h.b16 %v200
    %v1243 = vunpack.c.l.b16 %v201
    %v1244 = vunpack.c.h.b16 %v201
    %v1245 = vunpack.c.l.b16 %v202
    %v1246 = vunpack.c.h.b16 %v202
    %v1247 = vunpack.c.l.b16 %v203
    %v1248 = vunpack.c.h.b16 %v203
    %v1249 = vunpack.c.l.b16 %v204
    %v1250 = vunpack.c.h.b16 %v204
    %v1251 = vunpack.c.l.b16 %v205
    %v1252 = vunpack.c.h.b16 %v205
    %v1253 = vunpack.c.l.b16 %v206
    %v1254 = vunpack.c.h.b16 %v206
    %v1255 = vunpack.c.l.b16 %v207
    %v1256 = vunpack.c.h.b16 %v207
    %v1257 = vunpack.c.l.b16 %v208
    %v1258 = vunpack.c.h.b16 %v208
    %v1259 = vunpack.c.l.b16 %v209
    %v1260 = vunpack.c.h.b16 %v209
    %v1261 = vunpack.c.l.b16 %v210
    %v1262 = vunpack.c.h.b16 %v210
    %v1263 = vunpack.c.l.b16 %v211
    %v1264 = vunpack.c.h.b16 %v211
    %v1265 = vunpack.c.l.b16 %v212
    %v1266 = vunpack.c.h.b16 %v212
    %v1267 = vunpack.c.l.b16 %v213
    %v1268 = vunpack.c.h.b16 %v213
    %v1269 = vunpack.c.l.b16 %v214
    %v1270 = vunpack.c.h.b16 %v214
    %v1271 = vunpack.c.l.b16 %v215
    %v1272 = vunpack.c.h.b16 %v215
    %v1273 = vunpack.c.l.b16 %v216
    %v1274 = vunpack.c.h.b16 %v216
    %v1275 = vunpack.c.l.b16 %v217
    %v1276 = vunpack.c.h.b16 %v217
    %v1277 = vunpack.c.l.b16 %v218
    %v1278 = vunpack.c.h.b16 %v218
    %v1279 = vunpack.c.l.b16 %v219
    %v1280 = vunpack.c.h.b16 %v219
    %v1281 = vunpack.c.l.b16 %v220
    %v1282 = vunpack.c.h.b16 %v220
    %v1283 = vunpack.c.l.b16 %v221
    %v1284 = vunpack.c.h.b16 %v221
    %v1285 = vunpack.c.l.b16 %v222
    %v1286 = vunpack.c.h.b16 %v222
    %v1287 = vunpack.c.l.b16 %v223
    %v1288 = vunpack.c.h.b16 %v223
    %v1289 = vunpack.c.l.b16 %v224
    %v1290 = vunpack.c.h.b16 %v224
    %v1291 = vunpack.c.l.b16 %v225
    %v1292 = vunpack.c.h.b16 %v225
    %v1293 = vunpack.c.l.b16 %v226
    %v1294 = vunpack.c.h.b16 %v226
    %v1295 = vunpack.c.l.b16 %v227
    %v1296 = vunpack.c.h.b16 %v227
    %v1297 = vunpack.c.l.b16 %v228
    %v1298 = vunpack.c.h.b16 %v228
    %v1299 = vunpack.c.l.b16 %v229
    %v1300 = vunpack.c.h.b16 %v229
    %v1301 = vunpack.c.l.b16 %v230
    %v1302 = vunpack.c.h.b16 %v230
    %v1303 = vunpack.c.l.b16 %v231
    %v1304 = vunpack.c.h.b16 %v231
    %v1305 = vunpack.c.l.b16 %v232
    %v1306 = vunpack.c.h.b16 %v232
    %v1307 = vunpack.c.l.b16 %v233
    %v1308 = vunpack.c.h.b16 %v233
    %v1309 = vunpack.c.l.b16 %v234
    %v1310 = vunpack.c.h.b16 %v234
    %v1311 = vunpack.c.l.b16 %v235
    %v1312 = vunpack.c.h.b16 %v235
    %v1313 = vunpack.c.l.b16 %v236
    %v1314 = vunpack.c.h.b16 %v236
    %v1315 = vunpack.c.l.b16 %v237
    %v1316 = vunpack.c.h.b16 %v237
    %v1317 = vunpack.c.l.b16 %v238
    %v1318 = vunpack.c.h.b16 %v238
    %v1319 = vunpack.c.l.b16 %v239
    %v1320 = vunpack.c.h.b16 %v239
    %v1321 = vunpack.c.l.b16 %v240
    %v1322 = vunpack.c.h.b16 %v240
    %v1323 = vunpack.c.l.b16 %v241
    %v1324 = vunpack.c.h.b16 %v241
    %v1325 = vunpack.c.l.b16 %v242
    %v1326 = vunpack.c.h.b16 %v242
    %v1327 = vunpack.c.l.b16 %v243
    %v1328 = vunpack.c.h.b16 %v243
    %v1329 = vunpack.c.l.b16 %v244
    %v1330 = vunpack.c.h.b16 %v244
    %v1331 = vunpack.c.l.b16 %v245
    %v1332 = vunpack.c.h.b16 %v245
    %v1333 = vunpack.c.l.b16 %v246
    %v1334 = vunpack.c.h.b16 %v246
    %v1335 = vunpack.c.l.b16 %v247
    %v1336 = vunpack.c.h.b16 %v247
    %v1337 = vunpack.c.l.b16 %v248
    %v1338 = vunpack.c.h.b16 %v248
    %v1339 = vunpack.c.l.b16 %v249
    %v1340 = vunpack.c.h.b16 %v249
    %v1341 = vunpack.c.l.b16 %v250
    %v1342 = vunpack.c.h.b16 %v250
    %v1343 = vunpack.c.l.b16 %v251
    %v1344 = vunpack.c.h.b16 %v251
    %v1345 = vunpack.c.l.b16 %v252
    %v1346 = vunpack.c.h.b16 %v252
    %v1347 = vunpack.c.l.b16 %v253
    %v1348 = vunpack.c.h.b16 %v253
    %v1349 = vunpack.c.l.b16 %v254
    %v1350 = vunpack.c.h.b16 %v254
    %v1351 = vunpack.c.l.b16 %v255
    %v1352 = vunpack.c.h.b16 %v255
    %v1353 = vunpack.c.l.b16 %v256
    %v1354 = vunpack.c.h.b16 %v256
    %v1355 = vunpack.c.l.b16 %v257
    %v1356 = vunpack.c.h.b16 %v257
    %v1357 = vunpack.c.l.b16 %v258
    %v1358 = vunpack.c.h.b16 %v258
    %v1359 = vunpack.c.l.b16 %v259
    %v1360 = vunpack.c.h.b16 %v259
    %v1361 = vunpack.c.l.b16 %v260
    %v1362 = vunpack.c.h.b16 %v260
    %v1363 = vunpack.c.l.b16 %v261
    %v1364 = vunpack.c.h.b16 %v261
    %v1365 = vunpack.c.l.b16 %v262
    %v1366 = vunpack.c.h.b16 %v262
    %v1367 = vunpack.c.l.b16 %v263
    %v1368 = vunpack.c.h.b16 %v263
    %v1369 = vunpack.c.l.b16 %v264
    %v1370 = vunpack.c.h.b16 %v264
    %v1371 = vunpack.c.l.b16 %v265
    %v1372 = vunpack.c.h.b16 %v265
    %v1373 = vunpack.c.l.b16 %v266
    %v1374 = vunpack.c.h.b16 %v266
    %v1375 = vunpack.c.l.b16 %v267
    %v1376 = vunpack.c.h.b16 %v267
    %v1377 = vunpack.c.l.b16 %v268
    %v1378 = vunpack.c.h.b16 %v268
    %v1379 = vunpack.c.l.b16 %v269
    %v1380 = vunpack.c.h.b16 %v269
    %v1381 = vunpack.c.l.b16 %v270
    %v1382 = vunpack.c.h.b16 %v270
    %v1383 = vunpack.c.l.b16 %v271
    %v1384 = vunpack.c.h.b16 %v271
    %v1385 = vunpack.c.l.b16 %v272
    %v1386 = vunpack.c.h.b16 %v272
    %v1387 = vunpack.c.l.b16 %v273
    %v1388 = vunpack.c.h.b16 %v273
    %v1389 = vunpack.c.l.b16 %v274
    %v1390 = vunpack.c.h.b16 %v274
    %v1391 = vunpack.c.l.b16 %v275
    %v1392 = vunpack.c.h.b16 %v275
    %v1393 = vunpack.c.l.b16 %v276
    %v1394 = vunpack.c.h.b16 %v276
    %v1395 = vunpack.c.l.b16 %v277
    %v1396 = vunpack.c.h.b16 %v277
    %v1397 = vunpack.c.l.b16 %v278
    %v1398 = vunpack.c.h.b16 %v278
    %v1399 = vunpack.c.l.b16 %v279
    %v1400 = vunpack.c.h.b16 %v279
    %v1401 = vunpack.c.l.b16 %v280
    %v1402 = vunpack.c.h.b16 %v280
    %v1403 = vunpack.c.l.b16 %v281
    %v1404 = vunpack.c.h.b16 %v281
    %v1405 = vunpack.c.l.b16 %v282
    %v1406 = vunpack.c.h.b16 %v282
    %v1407 = vunpack.c.l.b16 %v283
    %v1408 = vunpack.c.h.b16 %v283
    %v1409 = vunpack.c.l.b16 %v284
    %v1410 = vunpack.c.h.b16 %v284
    %v1411 = vunpack.c.l.b16 %v285
    %v1412 = vunpack.c.h.b16 %v285
    %v1413 = vunpack.c.l.b16 %v286
    %v1414 = vunpack.c.h.b16 %v286
    %v1415 = vunpack.c.l.b16 %v287
    %v1416 = vunpack.c.h.b16 %v287
    %v1417 = vunpack.c.l.b16 %v288
    %v1418 = vunpack.c.h.b16 %v288
    %v1419 = vunpack.c.l.b16 %v289
    %v1420 = vunpack.c.h.b16 %v289
    %v1421 = vunpack.c.l.b16 %v290
    %v1422 = vunpack.c.h.b16 %v290
    %v1423 = vunpack.c.l.b16 %v291
    %v1424 = vunpack.c.h.b16 %v291
    %v1425 = vunpack.c.l.b16 %v292
    %v1426 = vunpack.c.h.b16 %v292
    %v1427 = vunpack.c.l.b16 %v293
    %v1428 = vunpack.c.h.b16 %v293
    %v1429 = vunpack.c.l.b16 %v294
    %v1430 = vunpack.c.h.b16 %v294
    %v1431 = vunpack.c.l.b16 %v295
    %v1432 = vunpack.c.h.b16 %v295
    %v1433 = vunpack.c.l.b16 %v296
    %v1434 = vunpack.c.h.b16 %v296
    %v1435 = vunpack.c.l.b16 %v297
    %v1436 = vunpack.c.h.b16 %v297
    %v1437 = vunpack.c.l.b16 %v298
    %v1438 = vunpack.c.h.b16 %v298
    %v1439 = vunpack.c.l.b16 %v299
    %v1440 = vunpack.c.h.b16 %v299
    %v1441 = vunpack.c.l.b16 %v300
    %v1442 = vunpack.c.h.b16 %v300
    %v1443 = vunpack.c.l.b16 %v301
    %v1444 = vunpack.c.h.b16 %v301
    %v1445 = vunpack.c.l.b16 %v302
    %v1446 = vunpack.c.h.b16 %v302
    %v1447 = vunpack.c.l.b16 %v303
    %v1448 = vunpack.c.h.b16 %v303
    %v1449 = vunpack.c.l.b16 %v304
    %v1450 = vunpack.c.h.b16 %v304
    %v1451 = vunpack.c.l.b16 %v305
    %v1452 = vunpack.c.h.b16 %v305
    %v1453 = vunpack.c.l.b16 %v306
    %v1454 = vunpack.c.h.b16 %v306
    %v1455 = vunpack.c.l.b16 %v307
    %v1456 = vunpack.c.h.b16 %v307
    %v1457 = vunpack.c.l.b16 %v308
    %v1458 = vunpack.c.h.b16 %v308
    %v1459 = vunpack.c.l.b16 %v309
    %v1460 = vunpack.c.h.b16 %v309
    %v1461 = vunpack.c.l.b16 %v310
    %v1462 = vunpack.c.h.b16 %v310
    %v1463 = vunpack.c.l.b16 %v311
    %v1464 = vunpack.c.h.b16 %v311
    %v1465 = vunpack.c.l.b16 %v312
    %v1466 = vunpack.c.h.b16 %v312
    %v1467 = vunpack.c.l.b16 %v313
    %v1468 = vunpack.c.h.b16 %v313
    %v1469 = vunpack.c.l.b16 %v314
    %v1470 = vunpack.c.h.b16 %v314
    %v1471 = vunpack.c.l.b16 %v315
    %v1472 = vunpack.c.h.b16 %v315
    %v1473 = vunpack.c.l.b16 %v316
    %v1474 = vunpack.c.h.b16 %v316
    %v1475 = vunpack.c.l.b16 %v317
    %v1476 = vunpack.c.h.b16 %v317
    %v1477 = vunpack.c.l.b16 %v318
    %v1478 = vunpack.c.h.b16 %v318
    %v1479 = vunpack.c.l.b16 %v319
    %v1480 = vunpack.c.h.b16 %v319
    %v1481 = vunpack.c.l.b16 %v320
    %v1482 = vunpack.c.h.b16 %v320
    %v1483 = vunpack.c.l.b16 %v321
    %v1484 = vunpack.c.h.b16 %v321
    %v1485 = vunpack.c.l.b16 %v322
    %v1486 = vunpack.c.h.b16 %v322
    %v1487 = vunpack.c.l.b16 %v323
    %v1488 = vunpack.c.h.b16 %v323
    %v1489 = vunpack.c.l.b16 %v324
    %v1490 = vunpack.c.h.b16 %v324
    %v1491 = vunpack.c.l.b16 %v325
    %v1492 = vunpack.c.h.b16 %v325
    %v1493 = vunpack.c.l.b16 %v326
    %v1494 = vunpack.c.h.b16 %v326
    %v1495 = vunpack.c.l.b16 %v327
    %v1496 = vunpack.c.h.b16 %v327
    %v1497 = vunpack.c.l.b16 %v328
    %v1498 = vunpack.c.h.b16 %v328
    %v1499 = vunpack.c.l.b16 %v329
    %v1500 = vunpack.c.h.b16 %v329
    %v1501 = vunpack.c.l.b16 %v330
    %v1502 = vunpack.c.h.b16 %v330
    %v1503 = vunpack.c.l.b16 %v331
    %v1504 = vunpack.c.h.b16 %v331
    %v1505 = vunpack.c.l.b16 %v332
    %v1506 = vunpack.c.h.b16 %v332
    %v1507 = vunpack.c.l.b16 %v333
    %v1508 = vunpack.c.h.b16 %v333
    %v1509 = vunpack.c.l.b16 %v334
    %v1510 = vunpack.c.h.b16 %v334
    %v1511 = vunpack.c.l.b16 %v335
    %v1512 = vunpack.c.h.b16 %v335
    %v1513 = vunpack.c.l.b16 %v336
    %v1514 = vunpack.c.h.b16 %v336
    %v1515 = vunpack.c.l.b16 %v337
    %v1516 = vunpack.c.h.b16 %v337
    %v1517 = vunpack.c.l.b16 %v338
    %v1518 = vunpack.c.h.b16 %v338
    %v1519 = vunpack.c.l.b16 %v339
    %v1520 = vunpack.c.h.b16 %v339
    %v1521 = vunpack.c.l.b16 %v340
    %v1522 = vunpack.c.h.b16 %v340
    %v1523 = vunpack.c.l.b16 %v341
    %v1524 = vunpack.c.h.b16 %v341
    %v1525 = vunpack.c.l.b16 %v342
    %v1526 = vunpack.c.h.b16 %v342
    %v1527 = vunpack.c.l.b16 %v343
    %v1528 = vunpack.c.h.b16 %v343
    %v1529 = vunpack.c.l.b16 %v344
    %v1530 = vunpack.c.h.b16 %v344
    %v1531 = vunpack.c.l.b16 %v345
    %v1532 = vunpack.c.h.b16 %v345
    %v1533 = vunpack.c.l.b16 %v346
    %v1534 = vunpack.c.h.b16 %v346
    %v1535 = vunpack.c.l.b16 %v347
    %v1536 = vunpack.c.h.b16 %v347
    %v1537 = vunpack.c.l.b16 %v348
    %v1538 = vunpack.c.h.b16 %v348
    %v1539 = vunpack.c.l.b16 %v349
    %v1540 = vunpack.c.h.b16 %v349
    %v1541 = vunpack.c.l.b16 %v350
    %v1542 = vunpack.c.h.b16 %v350
    %v1543 = vunpack.c.l.b16 %v351
    %v1544 = vunpack.c.h.b16 %v351
    %v1545 = vunpack.c.l.b16 %v352
    %v1546 = vunpack.c.h.b16 %v352
    %v1547 = vunpack.c.l.b16 %v353
    %v1548 = vunpack.c.h.b16 %v353
    %v1549 = vunpack.c.l.b16 %v354
    %v1550 = vunpack.c.h.b16 %v354
    %v1551 = vunpack.c.l.b16 %v355
    %v1552 = vunpack.c.h.b16 %v355
    %v1553 = vunpack.c.l.b16 %v356
    %v1554 = vunpack.c.h.b16 %v356
    %v1555 = vunpack.c.l.b16 %v357
    %v1556 = vunpack.c.h.b16 %v357
    %v1557 = vunpack.c.l.b16 %v358
    %v1558 = vunpack.c.h.b16 %v358
    %v1559 = vunpack.c.l.b16 %v359
    %v1560 = vunpack.c.h.b16 %v359
    %v1561 = vunpack.c.l.b16 %v360
    %v1562 = vunpack.c.h.b16 %v360
    %v1563 = vunpack.c.l.b16 %v361
    %v1564 = vunpack.c.h.b16 %v361
    %v1565 = vunpack.c.l.b16 %v362
    %v1566 = vunpack.c.h.b16 %v362
    %v1567 = vunpack.c.l.b16 %v363
    %v1568 = vunpack.c.h.b16 %v363
    %v1569 = vunpack.c.l.b16 %v364
    %v1570 = vunpack.c.h.b16 %v364
    %v1571 = vunpack.c.l.b16 %v365
    %v1572 = vunpack.c.h.b16 %v365
    %v1573 = vunpack.c.l.b16 %v366
    %v1574 = vunpack.c.h.b16 %v366
    %v1575 = vunpack.c.l.b16 %v367
    %v1576 = vunpack.c.h.b16 %v367
    %v1577 = vunpack.c.l.b16 %v368
    %v1578 = vunpack.c.h.b16 %v368
    %v1579 = vunpack.c.l.b16 %v369
    %v1580 = vunpack.c.h.b16 %v369
    %v1581 = vunpack.c.l.b16 %v370
    %v1582 = vunpack.c.h.b16 %v370
    %v1583 = vunpack.c.l.b16 %v371
    %v1584 = vunpack.c.h.b16 %v371
    %v1585 = vunpack.c.l.b16 %v372
    %v1586 = vunpack.c.h.b16 %v372
    %v1587 = vunpack.c.l.b16 %v373
    %v1588 = vunpack.c.h.b16 %v373
    %v1589 = vunpack.c.l.b16 %v374
    %v1590 = vunpack.c.h.b16 %v374
    %v1591 = vunpack.c.l.b16 %v375
    %v1592 = vunpack.c.h.b16 %v375
    %v1593 = vunpack.c.l.b16 %v376
    %v1594 = vunpack.c.h.b16 %v376
    %v1595 = vunpack.c.l.b16 %v377
    %v1596 = vunpack.c.h.b16 %v377
    %v1597 = vunpack.c.l.b16 %v378
    %v1598 = vunpack.c.h.b16 %v378
    %v1599 = vunpack.c.l.b16 %v379
    %v1600 = vunpack.c.h.b16 %v379
    %v1601 = vunpack.c.l.b16 %v380
    %v1602 = vunpack.c.h.b16 %v380
    %v1603 = vunpack.c.l.b16 %v381
    %v1604 = vunpack.c.h.b16 %v381
    %v1605 = vunpack.c.l.b16 %v382
    %v1606 = vunpack.c.h.b16 %v382
    %v1607 = vunpack.c.l.b16 %v383
    %v1608 = vunpack.c.h.b16 %v383
    %v1609 = vunpack.c.l.b16 %v384
    %v1610 = vunpack.c.h.b16 %v384
    %v1611 = vunpack.c.l.b16 %v385
    %v1612 = vunpack.c.h.b16 %v385
    %v1613 = vunpack.c.l.b16 %v386
    %v1614 = vunpack.c.h.b16 %v386
    %v1615 = vunpack.c.l.b16 %v387
    %v1616 = vunpack.c.h.b16 %v387
    %v1617 = vunpack.c.l.b16 %v388
    %v1618 = vunpack.c.h.b16 %v388
    %v1619 = vunpack.c.l.b16 %v389
    %v1620 = vunpack.c.h.b16 %v389
    %v1621 = vunpack.c.l.b16 %v390
    %v1622 = vunpack.c.h.b16 %v390
    %v1623 = vunpack.c.l.b16 %v391
    %v1624 = vunpack.c.h.b16 %v391
    %v1625 = vunpack.c.l.b16 %v392
    %v1626 = vunpack.c.h.b16 %v392
    %v1627 = vunpack.c.l.b16 %v393
    %v1628 = vunpack.c.h.b16 %v393
    %v1629 = vunpack.c.l.b16 %v394
    %v1630 = vunpack.c.h.b16 %v394
    %v1631 = vunpack.c.l.b16 %v395
    %v1632 = vunpack.c.h.b16 %v395
    %v1633 = vunpack.c.l.b16 %v396
    %v1634 = vunpack.c.h.b16 %v396
    %v1635 = vunpack.c.l.b16 %v397
    %v1636 = vunpack.c.h.b16 %v397
    %v1637 = vpack.c.b16 %v873, %v869
    %v1638 = vpack.c.b16 %v874, %v870
    %v1639 = vpack.c.b16 %v875, %v871
    %v1640 = vpack.c.b16 %v876, %v872
    %v1641 = vpack.c.b16 %v881, %v877
    %v1642 = vpack.c.b16 %v882, %v878
    %v1643 = vpack.c.b16 %v883, %v879
    %v1644 = vpack.c.b16 %v884, %v880
    %v1645 = vpack.c.b16 %v889, %v885
    %v1646 = vpack.c.b16 %v890, %v886
    %v1647 = vpack.c.b16 %v891, %v887
    %v1648 = vpack.c.b16 %v892, %v888
    %v1649 = vpack.c.b16 %v897, %v893
    %v1650 = vpack.c.b16 %v898, %v894
    %v1651 = vpack.c.b16 %v899, %v895
    %v1652 = vpack.c.b16 %v900, %v896
    %v1653 = vpack.c.b16 %v905, %v901
    %v1654 = vpack.c.b16 %v906, %v902
    %v1655 = vpack.c.b16 %v907, %v903
    %v1656 = vpack.c.b16 %v908, %v904
    %v1657 = vpack.c.b16 %v913, %v909
    %v1658 = vpack.c.b16 %v914, %v910
    %v1659 = vpack.c.b16 %v915, %v911
    %v1660 = vpack.c.b16 %v916, %v912
    %v1661 = vpack.c.b16 %v921, %v917
    %v1662 = vpack.c.b16 %v922, %v918
    %v1663 = vpack.c.b16 %v923, %v919
    %v1664 = vpack.c.b16 %v924, %v920
    %v1665 = vpack.c.b16 %v929, %v925
    %v1666 = vpack.c.b16 %v930, %v926
    %v1667 = vpack.c.b16 %v931, %v927
    %v1668 = vpack.c.b16 %v932, %v928
    %v1669 = vpack.c.b16 %v937, %v933
    %v1670 = vpack.c.b16 %v938, %v934
    %v1671 = vpack.c.b16 %v939, %v935
    %v1672 = vpack.c.b16 %v940, %v936
    %v1673 = vpack.c.b16 %v945, %v941
    %v1674 = vpack.c.b16 %v946, %v942
    %v1675 = vpack.c.b16 %v947, %v943
    %v1676 = vpack.c.b16 %v948, %v944
    %v1677 = vpack.c.b16 %v953, %v949
    %v1678 = vpack.c.b16 %v954, %v950
    %v1679 = vpack.c.b16 %v955, %v951
    %v1680 = vpack.c.b16 %v956, %v952
    %v1681 = vpack.c.b16 %v961, %v957
    %v1682 = vpack.c.b16 %v962, %v958
    %v1683 = vpack.c.b16 %v963, %v959
    %v1684 = vpack.c.b16 %v964, %v960
    %v1685 = vpack.c.b16 %v969, %v965
    %v1686 = vpack.c.b16 %v970, %v966
    %v1687 = vpack.c.b16 %v971, %v967
    %v1688 = vpack.c.b16 %v972, %v968
    %v1689 = vpack.c.b16 %v977, %v973
    %v1690 = vpack.c.b16 %v978, %v974
    %v1691 = vpack.c.b16 %v979, %v975
    %v1692 = vpack.c.b16 %v980, %v976
    %v1693 = vpack.c.b16 %v985, %v981
    %v1694 = vpack.c.b16 %v986, %v982
    %v1695 = vpack.c.b16 %v987, %v983
    %v1696 = vpack.c.b16 %v988, %v984
    %v1697 = vpack.c.b16 %v993, %v989
    %v1698 = vpack.c.b16 %v994, %v990
    %v1699 = vpack.c.b16 %v995, %v991
    %v1700 = vpack.c.b16 %v996, %v992
    %v1701 = vpack.c.b16 %v1001, %v997
    %v1702 = vpack.c.b16 %v1002, %v998
    %v1703 = vpack.c.b16 %v1003, %v999
    %v1704 = vpack.c.b16 %v1004, %v1000
    %v1705 = vpack.c.b16 %v1009, %v1005
    %v1706 = vpack.c.b16 %v1010, %v1006
    %v1707 = vpack.c.b16 %v1011, %v1007
    %v1708 = vpack.c.b16 %v1012, %v1008
    %v1709 = vpack.c.b16 %v1017, %v1013
    %v1710 = vpack.c.b16 %v1018, %v1014
    %v1711 = vpack.c.b16 %v1019, %v1015
    %v1712 = vpack.c.b16 %v1020, %v1016
    %v1713 = vpack.c.b16 %v1025, %v1021
    %v1714 = vpack.c.b16 %v1026, %v1022
    %v1715 = vpack.c.b16 %v1027, %v1023
    %v1716 = vpack.c.b16 %v1028, %v1024
    %v1717 = vpack.c.b16 %v1033, %v1029
    %v1718 = vpack.c.b16 %v1034, %v1030
    %v1719 = vpack.c.b16 %v1035, %v1031
    %v1720 = vpack.c.b16 %v1036, %v1032
    %v1721 = vpack.c.b16 %v1041, %v1037
    %v1722 = vpack.c.b16 %v1042, %v1038
    %v1723 = vpack.c.b16 %v1043, %v1039
    %v1724 = vpack.c.b16 %v1044, %v1040
    %v1725 = vpack.c.b16 %v1049, %v1045
    %v1726 = vpack.c.b16 %v1050, %v1046
    %v1727 = vpack.c.b16 %v1051, %v1047
    %v1728 = vpack.c.b16 %v1052, %v1048
    %v1729 = vpack.c.b16 %v1057, %v1053
    %v1730 = vpack.c.b16 %v1058, %v1054
    %v1731 = vpack.c.b16 %v1059, %v1055
    %v1732 = vpack.c.b16 %v1060, %v1056
    %v1733 = vpack.c.b16 %v1065, %v1061
    %v1734 = vpack.c.b16 %v1066, %v1062
    %v1735 = vpack.c.b16 %v1067, %v1063
    %v1736 = vpack.c.b16 %v1068, %v1064
    %v1737 = vpack.c.b16 %v1073, %v1069
    %v1738 = vpack.c.b16 %v1074, %v1070
    %v1739 = vpack.c.b16 %v1075, %v1071
    %v1740 = vpack.c.b16 %v1076, %v1072
    %v1741 = vpack.c.b16 %v1081, %v1077
    %v1742 = vpack.c.b16 %v1082, %v1078
    %v1743 = vpack.c.b16 %v1083, %v1079
    %v1744 = vpack.c.b16 %v1084, %v1080
    %v1745 = vpack.c.b16 %v1089, %v1085
    %v1746 = vpack.c.b16 %v1090, %v1086
    %v1747 = vpack.c.b16 %v1091, %v1087
    %v1748 = vpack.c.b16 %v1092, %v1088
    %v1749 = vpack.c.b16 %v1097, %v1093
    %v1750 = vpack.c.b16 %v1098, %v1094
    %v1751 = vpack.c.b16 %v1099, %v1095
    %v1752 = vpack.c.b16 %v1100, %v1096
    %v1753 = vpack.c.b16 %v1105, %v1101
    %v1754 = vpack.c.b16 %v1106, %v1102
    %v1755 = vpack.c.b16 %v1107, %v1103
    %v1756 = vpack.c.b16 %v1108, %v1104
    %v1757 = vpack.c.b16 %v1113, %v1109
    %v1758 = vpack.c.b16 %v1114, %v1110
    %v1759 = vpack.c.b16 %v1115, %v1111
    %v1760 = vpack.c.b16 %v1116, %v1112
    %v1761 = vpack.c.b16 %v1121, %v1117
    %v1762 = vpack.c.b16 %v1122, %v1118
    %v1763 = vpack.c.b16 %v1123, %v1119
    %v1764 = vpack.c.b16 %v1124, %v1120
    %v1765 = vpack.c.b16 %v1129, %v1125
    %v1766 = vpack.c.b16 %v1130, %v1126
    %v1767 = vpack.c.b16 %v1131, %v1127
    %v1768 = vpack.c.b16 %v1132, %v1128
    %v1769 = vpack.c.b16 %v1137, %v1133
    %v1770 = vpack.c.b16 %v1138, %v1134
    %v1771 = vpack.c.b16 %v1139, %v1135
    %v1772 = vpack.c.b16 %v1140, %v1136
    %v1773 = vpack.c.b16 %v1145, %v1141
    %v1774 = vpack.c.b16 %v1146, %v1142
    %v1775 = vpack.c.b16 %v1147, %v1143
    %v1776 = vpack.c.b16 %v1148, %v1144
    %v1777 = vpack.c.b16 %v1153, %v1149
    %v1778 = vpack.c.b16 %v1154, %v1150
    %v1779 = vpack.c.b16 %v1155, %v1151
    %v1780 = vpack.c.b16 %v1156, %v1152
    %v1781 = vpack.c.b16 %v1161, %v1157
    %v1782 = vpack.c.b16 %v1162, %v1158
    %v1783 = vpack.c.b16 %v1163, %v1159
    %v1784 = vpack.c.b16 %v1164, %v1160
    %v1785 = vpack.c.b16 %v1169, %v1165
    %v1786 = vpack.c.b16 %v1170, %v1166
    %v1787 = vpack.c.b16 %v1171, %v1167
    %v1788 = vpack.c.b16 %v1172, %v1168
    %v1789 = vpack.c.b16 %v1177, %v1173
    %v1790 = vpack.c.b16 %v1178, %v1174
    %v1791 = vpack.c.b16 %v1179, %v1175
    %v1792 = vpack.c.b16 %v1180, %v1176
    %v1793 = vpack.c.b16 %v1185, %v1181
    %v1794 = vpack.c.b16 %v1186, %v1182
    %v1795 = vpack.c.b16 %v1187, %v1183
    %v1796 = vpack.c.b16 %v1188, %v1184
    %v1797 = vpack.c.b16 %v1193, %v1189
    %v1798 = vpack.c.b16 %v1194, %v1190
    %v1799 = vpack.c.b16 %v1195, %v1191
    %v1800 = vpack.c.b16 %v1196, %v1192
    %v1801 = vpack.c.b16 %v1201, %v1197
    %v1802 = vpack.c.b16 %v1202, %v1198
    %v1803 = vpack.c.b16 %v1203, %v1199
    %v1804 = vpack.c.b16 %v1204, %v1200
    %v1805 = vpack.c.b16 %v1209, %v1205
    %v1806 = vpack.c.b16 %v1210, %v1206
    %v1807 = vpack.c.b16 %v1211, %v1207
    %v1808 = vpack.c.b16 %v1212, %v1208
    %v1809 = vpack.c.b16 %v1217, %v1213
    %v1810 = vpack.c.b16 %v1218, %v1214
    %v1811 = vpack.c.b16 %v1219, %v1215
    %v1812 = vpack.c.b16 %v1220, %v1216
    %v1813 = vpack.c.b16 %v1225, %v1221
    %v1814 = vpack.c.b16 %v1226, %v1222
    %v1815 = vpack.c.b16 %v1227, %v1223
    %v1816 = vpack.c.b16 %v1228, %v1224
    %v1817 = vpack.c.b16 %v1233, %v1229
    %v1818 = vpack.c.b16 %v1234, %v1230
    %v1819 = vpack.c.b16 %v1235, %v1231
    %v1820 = vpack.c.b16 %v1236, %v1232
    %v1821 = vpack.c.b16 %v1241, %v1237
    %v1822 = vpack.c.b16 %v1242, %v1238
    %v1823 = vpack.c.b16 %v1243, %v1239
    %v1824 = vpack.c.b16 %v1244, %v1240
    %v1825 = vpack.c.b16 %v1249, %v1245
    %v1826 = vpack.c.b16 %v1250, %v1246
    %v1827 = vpack.c.b16 %v1251, %v1247
    %v1828 = vpack.c.b16 %v1252, %v1248
    %v1829 = vpack.c.b16 %v1257, %v1253
    %v1830 = vpack.c.b16 %v1258, %v1254
    %v1831 = vpack.c.b16 %v1259, %v1255
    %v1832 = vpack.c.b16 %v1260, %v1256
    %v1833 = vpack.c.b16 %v1265, %v1261
    %v1834 = vpack.c.b16 %v1266, %v1262
    %v1835 = vpack.c.b16 %v1267, %v1263
    %v1836 = vpack.c.b16 %v1268, %v1264
    %v1837 = vpack.c.b16 %v1273, %v1269
    %v1838 = vpack.c.b16 %v1274, %v1270
    %v1839 = vpack.c.b16 %v1275, %v1271
    %v1840 = vpack.c.b16 %v1276, %v1272
    %v1841 = vpack.c.b16 %v1281, %v1277
    %v1842 = vpack.c.b16 %v1282, %v1278
    %v1843 = vpack.c.b16 %v1283, %v1279
    %v1844 = vpack.c.b16 %v1284, %v1280
    %v1845 = vpack.c.b16 %v1289, %v1285
    %v1846 = vpack.c.b16 %v1290, %v1286
    %v1847 = vpack.c.b16 %v1291, %v1287
    %v1848 = vpack.c.b16 %v1292, %v1288
    %v1849 = vpack.c.b16 %v1297, %v1293
    %v1850 = vpack.c.b16 %v1298, %v1294
    %v1851 = vpack.c.b16 %v1299, %v1295
    %v1852 = vpack.c.b16 %v1300, %v1296
    %v1853 = vpack.c.b16 %v1305, %v1301
    %v1854 = vpack.c.b16 %v1306, %v1302
    %v1855 = vpack.c.b16 %v1307, %v1303
    %v1856 = vpack.c.b16 %v1308, %v1304
    %v1857 = vpack.c.b16 %v1313, %v1309
    %v1858 = vpack.c.b16 %v1314, %v1310
    %v1859 = vpack.c.b16 %v1315, %v1311
    %v1860 = vpack.c.b16 %v1316, %v1312
    %v1861 = vpack.c.b16 %v1321, %v1317
    %v1862 = vpack.c.b16 %v1322, %v1318
    %v1863 = vpack.c.b16 %v1323, %v1319
    %v1864 = vpack.c.b16 %v1324, %v1320
    %v1865 = vpack.c.b16 %v1329, %v1325
    %v1866 = vpack.c.b16 %v1330, %v1326
    %v1867 = vpack.c.b16 %v1331, %v1327
    %v1868 = vpack.c.b16 %v1332, %v1328
    %v1869 = vpack.c.b16 %v1337, %v1333
    %v1870 = vpack.c.b16 %v1338, %v1334
    %v1871 = vpack.c.b16 %v1339, %v1335
    %v1872 = vpack.c.b16 %v1340, %v1336
    %v1873 = vpack.c.b16 %v1345, %v1341
    %v1874 = vpack.c.b16 %v1346, %v1342
    %v1875 = vpack.c.b16 %v1347, %v1343
    %v1876 = vpack.c.b16 %v1348, %v1344
    %v1877 = vpack.c.b16 %v1353, %v1349
    %v1878 = vpack.c.b16 %v1354, %v1350
    %v1879 = vpack.c.b16 %v1355, %v1351
    %v1880 = vpack.c.b16 %v1356, %v1352
    %v1881 = vpack.c.b16 %v1361, %v1357
    %v1882 = vpack.c.b16 %v1362, %v1358
    %v1883 = vpack.c.b16 %v1363, %v1359
    %v1884 = vpack.c.b16 %v1364, %v1360
    %v1885 = vpack.c.b16 %v1369, %v1365
    %v1886 = vpack.c.b16 %v1370, %v1366
    %v1887 = vpack.c.b16 %v1371, %v1367
    %v1888 = vpack.c.b16 %v1372, %v1368
    %v1889 = vpack.c.b16 %v1377, %v1373
    %v1890 = vpack.c.b16 %v1378, %v1374
    %v1891 = vpack.c.b16 %v1379, %v1375
    %v1892 = vpack.c.b16 %v1380, %v1376
    %v1893 = vpack.c.b16 %v1385, %v1381
    %v1894 = vpack.c.b16 %v1386, %v1382
    %v1895 = vpack.c.b16 %v1387, %v1383
    %v1896 = vpack.c.b16 %v1388, %v1384
    %v1897 = vpack.c.b16 %v1393, %v1389
    %v1898 = vpack.c.b16 %v1394, %v1390
    %v1899 = vpack.c.b16 %v1395, %v1391
    %v1900 = vpack.c.b16 %v1396, %v1392
    %v1901 = vpack.c.b16 %v1401, %v1397
    %v1902 = vpack.c.b16 %v1402, %v1398
    %v1903 = vpack.c.b16 %v1403, %v1399
    %v1904 = vpack.c.b16 %v1404, %v1400
    %v1905 = vpack.c.b16 %v1409, %v1405
    %v1906 = vpack.c.b16 %v1410, %v1406
    %v1907 = vpack.c.b16 %v1411, %v1407
    %v1908 = vpack.c.b16 %v1412, %v1408
    %v1909 = vpack.c.b16 %v1417, %v1413
    %v1910 = vpack.c.b16 %v1418, %v1414
    %v1911 = vpack.c.b16 %v1419, %v1415
    %v1912 = vpack.c.b16 %v1420, %v1416
    %v1913 = vpack.c.b16 %v1425, %v1421
    %v1914 = vpack.c.b16 %v1426, %v1422
    %v1915 = vpack.c.b16 %v1427, %v1423
    %v1916 = vpack.c.b16 %v1428, %v1424
    %v1917 = vpack.c.b16 %v1433, %v1429
    %v1918 = vpack.c.b16 %v1434, %v1430
    %v1919 = vpack.c.b16 %v1435, %v1431
    %v1920 = vpack.c.b16 %v1436, %v1432
    %v1921 = vpack.c.b16 %v1441, %v1437
    %v1922 = vpack.c.b16 %v1442, %v1438
    %v1923 = vpack.c.b16 %v1443, %v1439
    %v1924 = vpack.c.b16 %v1444, %v1440
    %v1925 = vpack.c.b16 %v1449, %v1445
    %v1926 = vpack.c.b16 %v1450, %v1446
    %v1927 = vpack.c.b16 %v1451, %v1447
    %v1928 = vpack.c.b16 %v1452, %v1448
    %v1929 = vpack.c.b16 %v1457, %v1453
    %v1930 = vpack.c.b16 %v1458, %v1454
    %v1931 = vpack.c.b16 %v1459, %v1455
    %v1932 = vpack.c.b16 %v1460, %v1456
    %v1933 = vpack.c.b16 %v1465, %v1461
    %v1934 = vpack.c.b16 %v1466, %v1462
    %v1935 = vpack.c.b16 %v1467, %v1463
    %v1936 = vpack.c.b16 %v1468, %v1464
    %v1937 = vpack.c.b16 %v1473, %v1469
    %v1938 = vpack.c.b16 %v1474, %v1470
    %v1939 = vpack.c.b16 %v1475, %v1471
    %v1940 = vpack.c.b16 %v1476, %v1472
    %v1941 = vpack.c.b16 %v1481, %v1477
    %v1942 = vpack.c.b16 %v1482, %v1478
    %v1943 = vpack.c.b16 %v1483, %v1479
    %v1944 = vpack.c.b16 %v1484, %v1480
    %v1945 = vpack.c.b16 %v1489, %v1485
    %v1946 = vpack.c.b16 %v1490, %v1486
    %v1947 = vpack.c.b16 %v1491, %v1487
    %v1948 = vpack.c.b16 %v1492, %v1488
    %v1949 = vpack.c.b16 %v1497, %v1493
    %v1950 = vpack.c.b16 %v1498, %v1494
    %v1951 = vpack.c.b16 %v1499, %v1495
    %v1952 = vpack.c.b16 %v1500, %v1496
    %v1953 = vpack.c.b16 %v1505, %v1501
    %v1954 = vpack.c.b16 %v1506, %v1502
    %v1955 = vpack.c.b16 %v1507, %v1503
    %v1956 = vpack.c.b16 %v1508, %v1504
    %v1957 = vpack.c.b16 %v1513, %v1509
    %v1958 = vpack.c.b16 %v1514, %v1510
    %v1959 = vpack.c.b16 %v1515, %v1511
    %v1960 = vpack.c.b16 %v1516, %v1512
    %v1961 = vpack.c.b16 %v1521, %v1517
    %v1962 = vpack.c.b16 %v1522, %v1518
    %v1963 = vpack.c.b16 %v1523, %v1519
    %v1964 = vpack.c.b16 %v1524, %v1520
    %v1965 = vpack.c.b16 %v1529, %v1525
    %v1966 = vpack.c.b16 %v1530, %v1526
    %v1967 = vpack.c.b16 %v1531, %v1527
    %v1968 = vpack.c.b16 %v1532, %v1528
    %v1969 = vpack.c.b16 %v1537, %v1533
    %v1970 = vpack.c.b16 %v1538, %v1534
    %v1971 = vpack.c.b16 %v1539, %v1535
    %v1972 = vpack.c.b16 %v1540, %v1536
    %v1973 = vpack.c.b16 %v1545, %v1541
    %v1974 = vpack.c.b16 %v1546, %v1542
    %v1975 = vpack.c.b16 %v1547, %v1543
    %v1976 = vpack.c.b16 %v1548, %v1544
    %v1977 = vpack.c.b16 %v1553, %v1549
    %v1978 = vpack.c.b16 %v1554, %v1550
    %v1979 = vpack.c.b16 %v1555, %v1551
    %v1980 = vpack.c.b16 %v1556, %v1552
    %v1981 = vpack.c.b16 %v1561, %v1557
    %v1982 = vpack.c.b16 %v1562, %v1558
    %v1983 = vpack.c.b16 %v1563, %v1559
    %v1984 = vpack.c.b16 %v1564, %v1560
    %v1985 = vpack.c.b16 %v1569, %v1565
    %v1986 = vpack.c.b16 %v1570, %v1566
    %v1987 = vpack.c.b16 %v1571, %v1567
    %v1988 = vpack.c.b16 %v1572, %v1568
    %v1989 = vpack.c.b16 %v1577, %v1573
    %v1990 = vpack.c.b16 %v1578, %v1574
    %v1991 = vpack.c.b16 %v1579, %v1575
    %v1992 = vpack.c.b16 %v1580, %v1576
    %v1993 = vpack.c.b16 %v1585, %v1581
    %v1994 = vpack.c.b16 %v1586, %v1582
    %v1995 = vpack.c.b16 %v1587, %v1583
    %v1996 = vpack.c.b16 %v1588, %v1584
    %v1997 = vpack.c.b16 %v1593, %v1589
    %v1998 = vpack.c.b16 %v1594, %v1590
    %v1999 = vpack.c.b16 %v1595, %v1591
    %v2000 = vpack.c.b16 %v1596, %v1592
    %v2001 = vpack.c.b16 %v1601, %v1597
    %v2002 = vpack.c.b16 %v1602, %v1598
    %v2003 = vpack.c.b16 %v1603, %v1599
    %v2004 = vpack.c.b16 %v1604, %v1600
    %v2005 = vpack.c.b16 %v1609, %v1605
    %v2006 = vpack.c.b16 %v1610, %v1606
    %v2007 = vpack.c.b16 %v1611, %v1607
    %v2008 = vpack.c.b16 %v1612, %v1608
    %v2009 = vpack.c.b16 %v1617, %v1613
    %v2010 = vpack.c.b16 %v1618, %v1614
    %v2011 = vpack.c.b16 %v1619, %v1615
    %v2012 = vpack.c.b16 %v1620, %v1616
    %v2013 = vpack.c.b16 %v1625, %v1621
    %v2014 = vpack.c.b16 %v1626, %v1622
    %v2015 = vpack.c.b16 %v1627, %v1623
    %v2016 = vpack.c.b16 %v1628, %v1624
    %v2017 = vpack.c.b16 %v1633, %v1629
    %v2018 = vpack.c.b16 %v1634, %v1630
    %v2019 = vpack.c.b16 %v1635, %v1631
    %v2020 = vpack.c.b16 %v1636, %v1632
    %2405 = vmatprep.subr.bf16.mxu0 %v1638
    %2406 = vmatpush1.bf16.msra.mxu0 %v1637
    %2407 = vmatprep.subr.bf16.mxu0 %v1642
    %2408 = vmatpush1.bf16.msra.mxu0 %v1641
    %2409 = vmatprep.subr.bf16.mxu0 %v1646
    %2410 = vmatpush1.bf16.msra.mxu0 %v1645
    %2411 = vmatprep.subr.bf16.mxu0 %v1650
    %2412 = vmatpush1.bf16.msra.mxu0 %v1649
    %2413 = vmatprep.subr.bf16.mxu0 %v1654
    %2414 = vmatpush1.bf16.msra.mxu0 %v1653
    %2415 = vmatprep.subr.bf16.mxu0 %v1658
    %2416 = vmatpush1.bf16.msra.mxu0 %v1657
    %2417 = vmatprep.subr.bf16.mxu0 %v1662
    %2418 = vmatpush1.bf16.msra.mxu0 %v1661
    %2419 = vmatprep.subr.bf16.mxu0 %v1666
    %2420 = vmatpush1.bf16.msra.mxu0 %v1665
    %2421 = vmatprep.subr.bf16.mxu0 %v1670
    %2422 = vmatpush1.bf16.msra.mxu0 %v1669
    %2423 = vmatprep.subr.bf16.mxu0 %v1674
    %2424 = vmatpush1.bf16.msra.mxu0 %v1673
    %2425 = vmatprep.subr.bf16.mxu0 %v1678
    %2426 = vmatpush1.bf16.msra.mxu0 %v1677
    %2427 = vmatprep.subr.bf16.mxu0 %v1682
    %2428 = vmatpush1.bf16.msra.mxu0 %v1681
    %2429 = vmatprep.subr.bf16.mxu0 %v1686
    %2430 = vmatpush1.bf16.msra.mxu0 %v1685
    %2431 = vmatprep.subr.bf16.mxu0 %v1690
    %2432 = vmatpush1.bf16.msra.mxu0 %v1689
    %2433 = vmatprep.subr.bf16.mxu0 %v1694
    %2434 = vmatpush1.bf16.msra.mxu0 %v1693
    %2435 = vmatprep.subr.bf16.mxu0 %v1698
    %2436 = vmatpush1.bf16.msra.mxu0 %v1697
    %2437 = vmatprep.mubr.bf16.mxu0 %v437
    %2438 = vmatmul.mubr.bf16.gmra.mrb[0].mxu0 %v423
    %v2439 = vpop.f32.mrb[0].mxu0
    %v2440 = vadd.f32 0.0, %v2439
    %v2441 = vpop.f32.mrb[0].mxu0
    %v2442 = vadd.f32 0.0, %v2441
    %v2443 = vpop.f32.mrb[0].mxu0
    %v2444 = vpop.f32.mrb[0].mxu0
    %2445 = vdwg.mxu0
    %2446 = vmatprep.subr.bf16.mxu0 %v1702
    %2447 = vmatpush1.bf16.msra.mxu0 %v1701
    %2448 = vmatprep.subr.bf16.mxu0 %v1706
    %2449 = vmatpush1.bf16.msra.mxu0 %v1705
    %2450 = vmatprep.subr.bf16.mxu0 %v1710
    %2451 = vmatpush1.bf16.msra.mxu0 %v1709
    %2452 = vmatprep.subr.bf16.mxu0 %v1714
    %2453 = vmatpush1.bf16.msra.mxu0 %v1713
    %2454 = vmatprep.subr.bf16.mxu0 %v1718
    %2455 = vmatpush1.bf16.msra.mxu0 %v1717
    %2456 = vmatprep.subr.bf16.mxu0 %v1722
    %2457 = vmatpush1.bf16.msra.mxu0 %v1721
    %2458 = vmatprep.subr.bf16.mxu0 %v1726
    %2459 = vmatpush1.bf16.msra.mxu0 %v1725
    %2460 = vmatprep.subr.bf16.mxu0 %v1730
    %2461 = vmatpush1.bf16.msra.mxu0 %v1729
    %2462 = vmatprep.subr.bf16.mxu0 %v1734
    %2463 = vmatpush1.bf16.msra.mxu0 %v1733
    %2464 = vmatprep.subr.bf16.mxu0 %v1738
    %2465 = vmatpush1.bf16.msra.mxu0 %v1737
    %2466 = vmatprep.subr.bf16.mxu0 %v1742
    %2467 = vmatpush1.bf16.msra.mxu0 %v1741
    %2468 = vmatprep.subr.bf16.mxu0 %v1746
    %2469 = vmatpush1.bf16.msra.mxu0 %v1745
    %2470 = vmatprep.subr.bf16.mxu0 %v1750
    %2471 = vmatpush1.bf16.msra.mxu0 %v1749
    %2472 = vmatprep.subr.bf16.mxu0 %v1754
    %2473 = vmatpush1.bf16.msra.mxu0 %v1753
    %2474 = vmatprep.subr.bf16.mxu0 %v1758
    %2475 = vmatpush1.bf16.msra.mxu0 %v1757
    %2476 = vmatprep.subr.bf16.mxu0 %v1762
    %2477 = vmatpush1.bf16.msra.mxu0 %v1761
    %2478 = vmatprep.mubr.bf16.mxu0 %v447
    %2479 = vmatmul.mubr.bf16.gmra.mrb[0].mxu0 %v445
    %v2480 = vpop.f32.mrb[0].mxu0
    %v2481 = vadd.f32 %v2440, %v2480
    %v2482 = vpop.f32.mrb[0].mxu0
    %v2483 = vadd.f32 %v2442, %v2482
    %v2484 = vpop.f32.mrb[0].mxu0
    %v2485 = vpop.f32.mrb[0].mxu0
    %2486 = vdwg.mxu0
    %2487 = vmatprep.subr.bf16.mxu0 %v1766
    %2488 = vmatpush1.bf16.msra.mxu0 %v1765
    %2489 = vmatprep.subr.bf16.mxu0 %v1770
    %2490 = vmatpush1.bf16.msra.mxu0 %v1769
    %2491 = vmatprep.subr.bf16.mxu0 %v1774
    %2492 = vmatpush1.bf16.msra.mxu0 %v1773
    %2493 = vmatprep.subr.bf16.mxu0 %v1778
    %2494 = vmatpush1.bf16.msra.mxu0 %v1777
    %2495 = vmatprep.subr.bf16.mxu0 %v1782
    %2496 = vmatpush1.bf16.msra.mxu0 %v1781
    %2497 = vmatprep.subr.bf16.mxu0 %v1786
    %2498 = vmatpush1.bf16.msra.mxu0 %v1785
    %2499 = vmatprep.subr.bf16.mxu0 %v1790
    %2500 = vmatpush1.bf16.msra.mxu0 %v1789
    %2501 = vmatprep.subr.bf16.mxu0 %v1794
    %2502 = vmatpush1.bf16.msra.mxu0 %v1793
    %2503 = vmatprep.subr.bf16.mxu0 %v1798
    %2504 = vmatpush1.bf16.msra.mxu0 %v1797
    %2505 = vmatprep.subr.bf16.mxu0 %v1802
    %2506 = vmatpush1.bf16.msra.mxu0 %v1801
    %2507 = vmatprep.subr.bf16.mxu0 %v1806
    %2508 = vmatpush1.bf16.msra.mxu0 %v1805
    %2509 = vmatprep.subr.bf16.mxu0 %v1810
    %2510 = vmatpush1.bf16.msra.mxu0 %v1809
    %2511 = vmatprep.subr.bf16.mxu0 %v1814
    %2512 = vmatpush1.bf16.msra.mxu0 %v1813
    %2513 = vmatprep.subr.bf16.mxu0 %v1818
    %2514 = vmatpush1.bf16.msra.mxu0 %v1817
    %2515 = vmatprep.subr.bf16.mxu0 %v1822
    %2516 = vmatpush1.bf16.msra.mxu0 %v1821
    %2517 = vmatprep.subr.bf16.mxu0 %v1826
    %2518 = vmatpush1.bf16.msra.mxu0 %v1825
    %2519 = vmatprep.mubr.bf16.mxu0 %v444
    %2520 = vmatmul.mubr.bf16.gmra.mrb[0].mxu0 %v430
    %v2521 = vpop.f32.mrb[0].mxu0
    %v2522 = vadd.f32 %v2481, %v2521
    %v2523 = vpop.f32.mrb[0].mxu0
    %v2524 = vadd.f32 %v2483, %v2523
    %v2525 = vpop.f32.mrb[0].mxu0
    %v2526 = vpop.f32.mrb[0].mxu0
    %2527 = vdwg.mxu0
    %2528 = vmatprep.subr.bf16.mxu0 %v1830
    %2529 = vmatpush1.bf16.msra.mxu0 %v1829
    %2530 = vmatprep.subr.bf16.mxu0 %v1834
    %2531 = vmatpush1.bf16.msra.mxu0 %v1833
    %2532 = vmatprep.subr.bf16.mxu0 %v1838
    %2533 = vmatpush1.bf16.msra.mxu0 %v1837
    %2534 = vmatprep.subr.bf16.mxu0 %v1842
    %2535 = vmatpush1.bf16.msra.mxu0 %v1841
    %2536 = vmatprep.subr.bf16.mxu0 %v1846
    %2537 = vmatpush1.bf16.msra.mxu0 %v1845
    %2538 = vmatprep.subr.bf16.mxu0 %v1850
    %2539 = vmatpush1.bf16.msra.mxu0 %v1849
    %2540 = vmatprep.subr.bf16.mxu0 %v1854
    %2541 = vmatpush1.bf16.msra.mxu0 %v1853
    %2542 = vmatprep.subr.bf16.mxu0 %v1858
    %2543 = vmatpush1.bf16.msra.mxu0 %v1857
    %2544 = vmatprep.subr.bf16.mxu0 %v1862
    %2545 = vmatpush1.bf16.msra.mxu0 %v1861
    %2546 = vmatprep.subr.bf16.mxu0 %v1866
    %2547 = vmatpush1.bf16.msra.mxu0 %v1865
    %2548 = vmatprep.subr.bf16.mxu0 %v1870
    %2549 = vmatpush1.bf16.msra.mxu0 %v1869
    %2550 = vmatprep.subr.bf16.mxu0 %v1874
    %2551 = vmatpush1.bf16.msra.mxu0 %v1873
    %2552 = vmatprep.subr.bf16.mxu0 %v1878
    %2553 = vmatpush1.bf16.msra.mxu0 %v1877
    %2554 = vmatprep.subr.bf16.mxu0 %v1882
    %2555 = vmatpush1.bf16.msra.mxu0 %v1881
    %2556 = vmatprep.subr.bf16.mxu0 %v1886
    %2557 = vmatpush1.bf16.msra.mxu0 %v1885
    %2558 = vmatprep.subr.bf16.mxu0 %v1890
    %2559 = vmatpush1.bf16.msra.mxu0 %v1889
    %2560 = vmatprep.mubr.bf16.mxu0 %v448
    %2561 = vmatmul.mubr.bf16.gmra.mrb[0].mxu0 %v446
    %v2562 = vpop.f32.mrb[0].mxu0
    %v2563 = vadd.f32 %v2522, %v2562
    %v2564 = vpop.f32.mrb[0].mxu0
    %v2565 = vadd.f32 %v2524, %v2564
    %v2566 = vpop.f32.mrb[0].mxu0
    %v2567 = vpop.f32.mrb[0].mxu0
    %2568 = vdwg.mxu0
    %2569 = vmatprep.subr.bf16.mxu0 %v1894
    %2570 = vmatpush1.bf16.msra.mxu0 %v1893
    %2571 = vmatprep.subr.bf16.mxu0 %v1898
    %2572 = vmatpush1.bf16.msra.mxu0 %v1897
    %2573 = vmatprep.subr.bf16.mxu0 %v1902
    %2574 = vmatpush1.bf16.msra.mxu0 %v1901
    %2575 = vmatprep.subr.bf16.mxu0 %v1906
    %2576 = vmatpush1.bf16.msra.mxu0 %v1905
    %2577 = vmatprep.subr.bf16.mxu0 %v1910
    %2578 = vmatpush1.bf16.msra.mxu0 %v1909
    %2579 = vmatprep.subr.bf16.mxu0 %v1914
    %2580 = vmatpush1.bf16.msra.mxu0 %v1913
    %2581 = vmatprep.subr.bf16.mxu0 %v1918
    %2582 = vmatpush1.bf16.msra.mxu0 %v1917
    %2583 = vmatprep.subr.bf16.mxu0 %v1922
    %2584 = vmatpush1.bf16.msra.mxu0 %v1921
    %2585 = vmatprep.subr.bf16.mxu0 %v1926
    %2586 = vmatpush1.bf16.msra.mxu0 %v1925
    %2587 = vmatprep.subr.bf16.mxu0 %v1930
    %2588 = vmatpush1.bf16.msra.mxu0 %v1929
    %2589 = vmatprep.subr.bf16.mxu0 %v1934
    %2590 = vmatpush1.bf16.msra.mxu0 %v1933
    %2591 = vmatprep.subr.bf16.mxu0 %v1938
    %2592 = vmatpush1.bf16.msra.mxu0 %v1937
    %2593 = vmatprep.subr.bf16.mxu0 %v1942
    %2594 = vmatpush1.bf16.msra.mxu0 %v1941
    %2595 = vmatprep.subr.bf16.mxu0 %v1946
    %2596 = vmatpush1.bf16.msra.mxu0 %v1945
    %2597 = vmatprep.subr.bf16.mxu0 %v1950
    %2598 = vmatpush1.bf16.msra.mxu0 %v1949
    %2599 = vmatprep.subr.bf16.mxu0 %v1954
    %2600 = vmatpush1.bf16.msra.mxu0 %v1953
    %2601 = vmatprep.mubr.bf16.mxu0 %v470
    %2602 = vmatmul.mubr.bf16.gmra.mrb[0].mxu0 %v463
    %v2603 = vpop.f32.mrb[0].mxu0
    %v2604 = vadd.f32 %v2563, %v2603
    %v2605 = vpop.f32.mrb[0].mxu0
    %v2606 = vadd.f32 %v2565, %v2605
    %v2607 = vpop.f32.mrb[0].mxu0
    %v2608 = vpop.f32.mrb[0].mxu0
    %2609 = vdwg.mxu0
    %2610 = vmatprep.subr.bf16.mxu0 %v1958
    %2611 = vmatpush1.bf16.msra.mxu0 %v1957
    %2612 = vmatprep.subr.bf16.mxu0 %v1962
    %2613 = vmatpush1.bf16.msra.mxu0 %v1961
    %2614 = vmatprep.subr.bf16.mxu0 %v1966
    %2615 = vmatpush1.bf16.msra.mxu0 %v1965
    %2616 = vmatprep.subr.bf16.mxu0 %v1970
    %2617 = vmatpush1.bf16.msra.mxu0 %v1969
    %2618 = vmatprep.subr.bf16.mxu0 %v1974
    %2619 = vmatpush1.bf16.msra.mxu0 %v1973
    %2620 = vmatprep.subr.bf16.mxu0 %v1978
    %2621 = vmatpush1.bf16.msra.mxu0 %v1977
    %2622 = vmatprep.subr.bf16.mxu0 %v1982
    %2623 = vmatpush1.bf16.msra.mxu0 %v1981
    %2624 = vmatprep.subr.bf16.mxu0 %v1986
    %2625 = vmatpush1.bf16.msra.mxu0 %v1985
    %2626 = vmatprep.subr.bf16.mxu0 %v1990
    %2627 = vmatpush1.bf16.msra.mxu0 %v1989
    %2628 = vmatprep.subr.bf16.mxu0 %v1994
    %2629 = vmatpush1.bf16.msra.mxu0 %v1993
    %2630 = vmatprep.subr.bf16.mxu0 %v1998
    %2631 = vmatpush1.bf16.msra.mxu0 %v1997
    %2632 = vmatprep.subr.bf16.mxu0 %v2002
    %2633 = vmatpush1.bf16.msra.mxu0 %v2001
    %2634 = vmatprep.subr.bf16.mxu0 %v2006
    %2635 = vmatpush1.bf16.msra.mxu0 %v2005
    %2636 = vmatprep.subr.bf16.mxu0 %v2010
    %2637 = vmatpush1.bf16.msra.mxu0 %v2009
    %2638 = vmatprep.subr.bf16.mxu0 %v2014
    %2639 = vmatpush1.bf16.msra.mxu0 %v2013
    %2640 = vmatprep.subr.bf16.mxu0 %v2018
    %2641 = vmatpush1.bf16.msra.mxu0 %v2017
    %2642 = vmatprep.mubr.bf16.mxu0 %v472
    %2643 = vmatmul.mubr.bf16.gmra.mrb[0].mxu0 %v471
    %v2644 = vpop.f32.mrb[0].mxu0
    %v2645 = vadd.f32 %v2604, %v2644
    %v2646 = vpop.f32.mrb[0].mxu0
    %v2647 = vadd.f32 %v2606, %v2646
    %v2648 = vpop.f32.mrb[0].mxu0
    %v2649 = vpop.f32.mrb[0].mxu0
    %2650 = vdwg.mxu0
    %2651 = vmatprep.subr.bf16.mxu0 %v1640
    %2652 = vmatpush1.bf16.msra.mxu0 %v1639
    %2653 = vmatprep.subr.bf16.mxu0 %v1644
    %2654 = vmatpush1.bf16.msra.mxu0 %v1643
    %2655 = vmatprep.subr.bf16.mxu0 %v1648
    %2656 = vmatpush1.bf16.msra.mxu0 %v1647
    %2657 = vmatprep.subr.bf16.mxu0 %v1652
    %2658 = vmatpush1.bf16.msra.mxu0 %v1651
    %2659 = vmatprep.subr.bf16.mxu0 %v1656
    %2660 = vmatpush1.bf16.msra.mxu0 %v1655
    %2661 = vmatprep.subr.bf16.mxu0 %v1660
    %2662 = vmatpush1.bf16.msra.mxu0 %v1659
    %2663 = vmatprep.subr.bf16.mxu0 %v1664
    %2664 = vmatpush1.bf16.msra.mxu0 %v1663
    %2665 = vmatprep.subr.bf16.mxu0 %v1668
    %2666 = vmatpush1.bf16.msra.mxu0 %v1667
    %2667 = vmatprep.subr.bf16.mxu0 %v1672
    %2668 = vmatpush1.bf16.msra.mxu0 %v1671
    %2669 = vmatprep.subr.bf16.mxu0 %v1676
    %2670 = vmatpush1.bf16.msra.mxu0 %v1675
    %2671 = vmatprep.subr.bf16.mxu0 %v1680
    %2672 = vmatpush1.bf16.msra.mxu0 %v1679
    %2673 = vmatprep.subr.bf16.mxu0 %v1684
    %2674 = vmatpush1.bf16.msra.mxu0 %v1683
    %2675 = vmatprep.subr.bf16.mxu0 %v1688
    %2676 = vmatpush1.bf16.msra.mxu0 %v1687
    %2677 = vmatprep.subr.bf16.mxu0 %v1692
    %2678 = vmatpush1.bf16.msra.mxu0 %v1691
    %2679 = vmatprep.subr.bf16.mxu0 %v1696
    %2680 = vmatpush1.bf16.msra.mxu0 %v1695
    %2681 = vmatprep.subr.bf16.mxu0 %v1700
    %2682 = vmatpush1.bf16.msra.mxu0 %v1699
    %2683 = vmatprep.mubr.bf16.mxu0 %v437
    %2684 = vmatmul.mubr.bf16.gmra.mrb[0].mxu0 %v423
    %v2685 = vpop.f32.mrb[0].mxu0
    %v2686 = vadd.f32 0.0, %v2685
    %v2687 = vpop.f32.mrb[0].mxu0
    %v2688 = vadd.f32 0.0, %v2687
    %v2689 = vpop.f32.mrb[0].mxu0
    %v2690 = vpop.f32.mrb[0].mxu0
    %2691 = vdwg.mxu0
    %2692 = vmatprep.subr.bf16.mxu0 %v1704
    %2693 = vmatpush1.bf16.msra.mxu0 %v1703
    %2694 = vmatprep.subr.bf16.mxu0 %v1708
    %2695 = vmatpush1.bf16.msra.mxu0 %v1707
    %2696 = vmatprep.subr.bf16.mxu0 %v1712
    %2697 = vmatpush1.bf16.msra.mxu0 %v1711
    %2698 = vmatprep.subr.bf16.mxu0 %v1716
    %2699 = vmatpush1.bf16.msra.mxu0 %v1715
    %2700 = vmatprep.subr.bf16.mxu0 %v1720
    %2701 = vmatpush1.bf16.msra.mxu0 %v1719
    %2702 = vmatprep.subr.bf16.mxu0 %v1724
    %2703 = vmatpush1.bf16.msra.mxu0 %v1723
    %2704 = vmatprep.subr.bf16.mxu0 %v1728
    %2705 = vmatpush1.bf16.msra.mxu0 %v1727
    %2706 = vmatprep.subr.bf16.mxu0 %v1732
    %2707 = vmatpush1.bf16.msra.mxu0 %v1731
    %2708 = vmatprep.subr.bf16.mxu0 %v1736
    %2709 = vmatpush1.bf16.msra.mxu0 %v1735
    %2710 = vmatprep.subr.bf16.mxu0 %v1740
    %2711 = vmatpush1.bf16.msra.mxu0 %v1739
    %2712 = vmatprep.subr.bf16.mxu0 %v1744
    %2713 = vmatpush1.bf16.msra.mxu0 %v1743
    %2714 = vmatprep.subr.bf16.mxu0 %v1748
    %2715 = vmatpush1.bf16.msra.mxu0 %v1747
    %2716 = vmatprep.subr.bf16.mxu0 %v1752
    %2717 = vmatpush1.bf16.msra.mxu0 %v1751
    %2718 = vmatprep.subr.bf16.mxu0 %v1756
    %2719 = vmatpush1.bf16.msra.mxu0 %v1755
    %2720 = vmatprep.subr.bf16.mxu0 %v1760
    %2721 = vmatpush1.bf16.msra.mxu0 %v1759
    %2722 = vmatprep.subr.bf16.mxu0 %v1764
    %2723 = vmatpush1.bf16.msra.mxu0 %v1763
    %2724 = vmatprep.mubr.bf16.mxu0 %v447
    %2725 = vmatmul.mubr.bf16.gmra.mrb[0].mxu0 %v445
    %v2726 = vpop.f32.mrb[0].mxu0
    %v2727 = vadd.f32 %v2686, %v2726
    %v2728 = vpop.f32.mrb[0].mxu0
    %v2729 = vadd.f32 %v2688, %v2728
    %v2730 = vpop.f32.mrb[0].mxu0
    %v2731 = vpop.f32.mrb[0].mxu0
    %2732 = vdwg.mxu0
    %2733 = vmatprep.subr.bf16.mxu0 %v1768
    %2734 = vmatpush1.bf16.msra.mxu0 %v1767
    %2735 = vmatprep.subr.bf16.mxu0 %v1772
    %2736 = vmatpush1.bf16.msra.mxu0 %v1771
    %2737 = vmatprep.subr.bf16.mxu0 %v1776
    %2738 = vmatpush1.bf16.msra.mxu0 %v1775
    %2739 = vmatprep.subr.bf16.mxu0 %v1780
    %2740 = vmatpush1.bf16.msra.mxu0 %v1779
    %2741 = vmatprep.subr.bf16.mxu0 %v1784
    %2742 = vmatpush1.bf16.msra.mxu0 %v1783
    %2743 = vmatprep.subr.bf16.mxu0 %v1788
    %2744 = vmatpush1.bf16.msra.mxu0 %v1787
    %2745 = vmatprep.subr.bf16.mxu0 %v1792
    %2746 = vmatpush1.bf16.msra.mxu0 %v1791
    %2747 = vmatprep.subr.bf16.mxu0 %v1796
    %2748 = vmatpush1.bf16.msra.mxu0 %v1795
    %2749 = vmatprep.subr.bf16.mxu0 %v1800
    %2750 = vmatpush1.bf16.msra.mxu0 %v1799
    %2751 = vmatprep.subr.bf16.mxu0 %v1804
    %2752 = vmatpush1.bf16.msra.mxu0 %v1803
    %2753 = vmatprep.subr.bf16.mxu0 %v1808
    %2754 = vmatpush1.bf16.msra.mxu0 %v1807
    %2755 = vmatprep.subr.bf16.mxu0 %v1812
    %2756 = vmatpush1.bf16.msra.mxu0 %v1811
    %2757 = vmatprep.subr.bf16.mxu0 %v1816
    %2758 = vmatpush1.bf16.msra.mxu0 %v1815
    %2759 = vmatprep.subr.bf16.mxu0 %v1820
    %2760 = vmatpush1.bf16.msra.mxu0 %v1819
    %2761 = vmatprep.subr.bf16.mxu0 %v1824
    %2762 = vmatpush1.bf16.msra.mxu0 %v1823
    %2763 = vmatprep.subr.bf16.mxu0 %v1828
    %2764 = vmatpush1.bf16.msra.mxu0 %v1827
    %2765 = vmatprep.mubr.bf16.mxu0 %v444
    %2766 = vmatmul.mubr.bf16.gmra.mrb[0].mxu0 %v430
    %v2767 = vpop.f32.mrb[0].mxu0
    %v2768 = vadd.f32 %v2727, %v2767
    %v2769 = vpop.f32.mrb[0].mxu0
    %v2770 = vadd.f32 %v2729, %v2769
    %v2771 = vpop.f32.mrb[0].mxu0
    %v2772 = vpop.f32.mrb[0].mxu0
    %2773 = vdwg.mxu0
    %2774 = vmatprep.subr.bf16.mxu0 %v1832
    %2775 = vmatpush1.bf16.msra.mxu0 %v1831
    %2776 = vmatprep.subr.bf16.mxu0 %v1836
    %2777 = vmatpush1.bf16.msra.mxu0 %v1835
    %2778 = vmatprep.subr.bf16.mxu0 %v1840
    %2779 = vmatpush1.bf16.msra.mxu0 %v1839
    %2780 = vmatprep.subr.bf16.mxu0 %v1844
    %2781 = vmatpush1.bf16.msra.mxu0 %v1843
    %2782 = vmatprep.subr.bf16.mxu0 %v1848
    %2783 = vmatpush1.bf16.msra.mxu0 %v1847
    %2784 = vmatprep.subr.bf16.mxu0 %v1852
    %2785 = vmatpush1.bf16.msra.mxu0 %v1851
    %2786 = vmatprep.subr.bf16.mxu0 %v1856
    %2787 = vmatpush1.bf16.msra.mxu0 %v1855
    %2788 = vmatprep.subr.bf16.mxu0 %v1860
    %2789 = vmatpush1.bf16.msra.mxu0 %v1859
    %2790 = vmatprep.subr.bf16.mxu0 %v1864
    %2791 = vmatpush1.bf16.msra.mxu0 %v1863
    %2792 = vmatprep.subr.bf16.mxu0 %v1868
    %2793 = vmatpush1.bf16.msra.mxu0 %v1867
    %2794 = vmatprep.subr.bf16.mxu0 %v1872
    %2795 = vmatpush1.bf16.msra.mxu0 %v1871
    %2796 = vmatprep.subr.bf16.mxu0 %v1876
    %2797 = vmatpush1.bf16.msra.mxu0 %v1875
    %2798 = vmatprep.subr.bf16.mxu0 %v1880
    %2799 = vmatpush1.bf16.msra.mxu0 %v1879
    %2800 = vmatprep.subr.bf16.mxu0 %v1884
    %2801 = vmatpush1.bf16.msra.mxu0 %v1883
    %2802 = vmatprep.subr.bf16.mxu0 %v1888
    %2803 = vmatpush1.bf16.msra.mxu0 %v1887
    %2804 = vmatprep.subr.bf16.mxu0 %v1892
    %2805 = vmatpush1.bf16.msra.mxu0 %v1891
    %2806 = vmatprep.mubr.bf16.mxu0 %v448
    %2807 = vmatmul.mubr.bf16.gmra.mrb[0].mxu0 %v446
    %v2808 = vpop.f32.mrb[0].mxu0
    %v2809 = vadd.f32 %v2768, %v2808
    %v2810 = vpop.f32.mrb[0].mxu0
    %v2811 = vadd.f32 %v2770, %v2810
    %v2812 = vpop.f32.mrb[0].mxu0
    %v2813 = vpop.f32.mrb[0].mxu0
    %2814 = vdwg.mxu0
    %2815 = vmatprep.subr.bf16.mxu0 %v1896
    %2816 = vmatpush1.bf16.msra.mxu0 %v1895
    %2817 = vmatprep.subr.bf16.mxu0 %v1900
    %2818 = vmatpush1.bf16.msra.mxu0 %v1899
    %2819 = vmatprep.subr.bf16.mxu0 %v1904
    %2820 = vmatpush1.bf16.msra.mxu0 %v1903
    %2821 = vmatprep.subr.bf16.mxu0 %v1908
    %2822 = vmatpush1.bf16.msra.mxu0 %v1907
    %2823 = vmatprep.subr.bf16.mxu0 %v1912
    %2824 = vmatpush1.bf16.msra.mxu0 %v1911
    %2825 = vmatprep.subr.bf16.mxu0 %v1916
    %2826 = vmatpush1.bf16.msra.mxu0 %v1915
    %2827 = vmatprep.subr.bf16.mxu0 %v1920
    %2828 = vmatpush1.bf16.msra.mxu0 %v1919
    %2829 = vmatprep.subr.bf16.mxu0 %v1924
    %2830 = vmatpush1.bf16.msra.mxu0 %v1923
    %2831 = vmatprep.subr.bf16.mxu0 %v1928
    %2832 = vmatpush1.bf16.msra.mxu0 %v1927
    %2833 = vmatprep.subr.bf16.mxu0 %v1932
    %2834 = vmatpush1.bf16.msra.mxu0 %v1931
    %2835 = vmatprep.subr.bf16.mxu0 %v1936
    %2836 = vmatpush1.bf16.msra.mxu0 %v1935
    %2837 = vmatprep.subr.bf16.mxu0 %v1940
    %2838 = vmatpush1.bf16.msra.mxu0 %v1939
    %2839 = vmatprep.subr.bf16.mxu0 %v1944
    %2840 = vmatpush1.bf16.msra.mxu0 %v1943
    %2841 = vmatprep.subr.bf16.mxu0 %v1948
    %2842 = vmatpush1.bf16.msra.mxu0 %v1947
    %2843 = vmatprep.subr.bf16.mxu0 %v1952
    %2844 = vmatpush1.bf16.msra.mxu0 %v1951
    %2845 = vmatprep.subr.bf16.mxu0 %v1956
    %2846 = vmatpush1.bf16.msra.mxu0 %v1955
    %2847 = vmatprep.mubr.bf16.mxu0 %v470
    %2848 = vmatmul.mubr.bf16.gmra.mrb[0].mxu0 %v463
    %v2849 = vpop.f32.mrb[0].mxu0
    %v2850 = vadd.f32 %v2809, %v2849
    %v2851 = vpop.f32.mrb[0].mxu0
    %v2852 = vadd.f32 %v2811, %v2851
    %v2853 = vpop.f32.mrb[0].mxu0
    %v2854 = vpop.f32.mrb[0].mxu0
    %2855 = vdwg.mxu0
    %2856 = vmatprep.subr.bf16.mxu0 %v1960
    %2857 = vmatpush1.bf16.msra.mxu0 %v1959
    %2858 = vmatprep.subr.bf16.mxu0 %v1964
    %2859 = vmatpush1.bf16.msra.mxu0 %v1963
    %2860 = vmatprep.subr.bf16.mxu0 %v1968
    %2861 = vmatpush1.bf16.msra.mxu0 %v1967
    %2862 = vmatprep.subr.bf16.mxu0 %v1972
    %2863 = vmatpush1.bf16.msra.mxu0 %v1971
    %2864 = vmatprep.subr.bf16.mxu0 %v1976
    %2865 = vmatpush1.bf16.msra.mxu0 %v1975
    %2866 = vmatprep.subr.bf16.mxu0 %v1980
    %2867 = vmatpush1.bf16.msra.mxu0 %v1979
    %2868 = vmatprep.subr.bf16.mxu0 %v1984
    %2869 = vmatpush1.bf16.msra.mxu0 %v1983
    %2870 = vmatprep.subr.bf16.mxu0 %v1988
    %2871 = vmatpush1.bf16.msra.mxu0 %v1987
    %2872 = vmatprep.subr.bf16.mxu0 %v1992
    %2873 = vmatpush1.bf16.msra.mxu0 %v1991
    %2874 = vmatprep.subr.bf16.mxu0 %v1996
    %2875 = vmatpush1.bf16.msra.mxu0 %v1995
    %2876 = vmatprep.subr.bf16.mxu0 %v2000
    %2877 = vmatpush1.bf16.msra.mxu0 %v1999
    %2878 = vmatprep.subr.bf16.mxu0 %v2004
    %2879 = vmatpush1.bf16.msra.mxu0 %v2003
    %2880 = vmatprep.subr.bf16.mxu0 %v2008
    %2881 = vmatpush1.bf16.msra.mxu0 %v2007
    %2882 = vmatprep.subr.bf16.mxu0 %v2012
    %2883 = vmatpush1.bf16.msra.mxu0 %v2011
    %2884 = vmatprep.subr.bf16.mxu0 %v2016
    %2885 = vmatpush1.bf16.msra.mxu0 %v2015
    %2886 = vmatprep.subr.bf16.mxu0 %v2020
    %2887 = vmatpush1.bf16.msra.mxu0 %v2019
    %2888 = vmatprep.mubr.bf16.mxu0 %v472
    %2889 = vmatmul.mubr.bf16.gmra.mrb[0].mxu0 %v471
    %v2890 = vpop.f32.mrb[0].mxu0
    %v2891 = vadd.f32 %v2850, %v2890
    %v2892 = vpop.f32.mrb[0].mxu0
    %v2893 = vadd.f32 %v2852, %v2892
    %v2894 = vpop.f32.mrb[0].mxu0
    %v2895 = vpop.f32.mrb[0].mxu0
    %2896 = vdwg.mxu0
    %v2897 = vmax.f32 %v2645, -1.0
    %v2898 = vmax.f32 %v2647, -1.0
    %v2899 = vmax.f32 %v2891, -1.0
    %v2900 = vmax.f32 %v2893, -1.0
    %v2901 = vmin.f32 %v2897, 1.0
    %v2902 = vmin.f32 %v2898, 1.0
    %v2903 = vmin.f32 %v2899, 1.0
    %v2904 = vmin.f32 %v2900, 1.0
    %v2909 = vcombine.low %v2901, %v2902
    %v2910 = vcombine.low %v2903, %v2904
    %v2912 = vunpack.c.l.s4 1983009808
    %v2913 = vunpack.c.0.s8 %v2912
    %v2914 = vlaneseq
    %v2915 = vshrl.u32 %v2914, 7
    %v2916 = vsub.s32 %v2913, %v2915
    %v2917 = vrot.slane %v2909, %v2916
    %v2919 = vunpack.c.l.s4 1983009808
    %v2920 = vunpack.c.0.s8 %v2919
    %v2921 = vlaneseq
    %v2922 = vshrl.u32 %v2921, 7
    %v2923 = vsub.s32 %v2920, %v2922
    %v2924 = vrot.slane %v2910, %v2923
    %v2925 = vcombine.low %v2917, %v2924
    %2927 = vst [vmem:[#allocation2] sm:$0xff] %v2925
    // Predicated region
    $region10: #{concat_mtl_forward.5} parent=1 // pred_check
      _
    $region11: #{concat_mtl_forward.5} parent=1 // pred_check_branch
      %2929 = sbr.rel (0) target = $region13
    $region12: #{concat_mtl_forward.5} parent=1 // pred_region
      %s2931 = ssub.s32 128, 128
      %2932 = vsyncadd [#allocation3], %s2931
      %s2934 = sshll.u32 [#allocation2], 4
      %s2935 = int_to_ptr.vmem [resolvable:$true] %s2934
      %2937 = dma.vmem_to_hbm [thread:$0]  %s2935, 128, %s2, [#allocation3]
    $region13: #{concat_mtl_forward.5} parent=1 // pred_fallthru
      _
    // Predicated region
    $region14: #{concat_mtl_forward.5} parent=1 // pred_check
      _
    $region15: #{concat_mtl_forward.5} parent=1 // pred_check_branch
      %2939 = sbr.rel (0) target = $region17
    $region16: #{concat_mtl_forward.5} parent=1 // pred_region
      %2940 = dma.done [#allocation3], 128
    $region17: #{concat_mtl_forward.5} parent=1 // pred_fallthru
      _
    %2941 = vsyncpa [#allocation3], 1

// kernel: concat_mtl_forward.3
$region0: #{concat_mtl_forward.3}
  #allocation0 [shape = 'u32[]', space=smem, size = 0x4, offset = 0x4, fixed_abs, tag = 'smem constant byte address 0x4 - core index']
  #allocation1 [shape = 'u32[144,128]{1,0:T(1,128)}', space=vmem, size = 0x12000, scoped, tag = 'internal scratch']
  #allocation2 [shape = 'f32[2,1024]{1,0:T(2,128)}', space=vmem, size = 0x2000, scoped, tag = 'scratch operand']
  %s0 = inlined_call_operand.vmem [shape: f32[2,3072], index: 0, kind: input, shape index: {}]
  %s1 = inlined_call_operand.hbm [shape: bf16[3,1024,3072], index: 1, kind: input, shape index: {}]
  %s2 = inlined_call_operand.hbm [shape: f32[3,1,3072], index: 2, kind: input, shape index: {}]
  %s3 = inlined_call_operand.vmem [shape: bf16[3,2,3072], index: 3, kind: output, shape index: {}]
  %s4 = sld [smem:[#allocation0]]
  $region61: #{concat_mtl_forward.3} parent=0
    _
  %s6 = ssub.s32 1, %s4
  %s7 = scalar_select 0, %s6, %s4
  $region1: #{concat_mtl_forward.3} parent=0
    #allocation3 [shape = 'u8[4194304]{0}', space=vmem, size = 0x400000, scoped, tag = 'input window, operand 1']
    #allocation4 [shape = 's32[2]{0}', space=sflag, size = 0x8, scoped, tag = 'scoped memory for concat_mtl_forward.3']
    #allocation5 [shape = 'u8[8192]{0}', space=vmem, size = 0x2000, scoped, tag = 'input window, operand 2']
    #allocation6 [shape = 's32[2]{0}', space=sflag, size = 0x8, scoped, tag = 'scoped memory for concat_mtl_forward.3']
    %8 = vsyncpa [#allocation4], 0
    %s9 = scalar_lea.sflag [#allocation4], 1
    %10 = vsyncpa %s9, 0
    %11 = vsyncpa [#allocation6], 0
    %s12 = scalar_lea.sflag [#allocation6], 1
    %13 = vsyncpa %s12, 0
    loop: start=0, step=1, limit=11
    $region2: #{concat_mtl_forward.3} parent=1 // loop_pre_header
      _
    $region3: #{concat_mtl_forward.3} parent=1 // loop_header
      %s15 = sphi 0, %s19
      %p16 = scmp.ge.s32.totalorder %s15, 11
      %s22 = sphi 0, %s41
      %s23 = sphi 0, %s37
      %s24 = sphi 0, %s33
      %s25 = sphi 0, %s22
      %s26 = sphi 0, %s23
      %s27 = sphi 0, %s24
      %s28 = sphi 0, %s25
      %s29 = sphi 0, %s26
      %s30 = sphi 0, %s27
      %s46 = sphi 0, %s48
      %s49 = sphi 0, %s46
      %s50 = sphi 0, %s49
      %s66 = sphi 0, %s50
      %s76 = sphi 0, %s78
      %s79 = sphi 0, %s76
      %s80 = sphi 0, %s79
      %s96 = sphi 0, %s80
      %s104 = sphi 0, %s106
      %s107 = sphi 0, %s104
      %s108 = sphi 0, %s107
      %s124 = sphi 0, %s108
      %s132 = sphi 0, %s134
      %s135 = sphi 0, %s132
      %s136 = sphi 0, %s135
      %s152 = sphi 0, %s136
    $region4: #{concat_mtl_forward.3} parent=1 // loop_header_branch
      %18 = sbr.rel (%p16) target = $region8
    $region5: #{concat_mtl_forward.3} parent=1 // loop_body
      %s20 = ssub.s32 %s15, 1
      %s21 = ssub.s32 %s15, 2
      %s31 = sadd.s32 1, %s24
      %p32 = scmp.ge.s32.totalorder %s31, 1
      %s33 = scalar_select %p32, 0, %s31
      %s34 = sadd.s32 1, %s23
      %s35 = scalar_select %p32, %s34, %s23
      %p36 = scmp.ge.s32.totalorder %s35, 3
      %s37 = scalar_select %p36, 0, %s35
      %s38 = sadd.s32 1, %s22
      %s39 = scalar_select %p36, %s38, %s22
      %p40 = scmp.ge.s32.totalorder %s39, 3
      %s41 = scalar_select %p40, 0, %s39
      %s42 = sadd.s32 %s22, %s24
      %s43 = sadd.s32 %s41, %s33
      %s44 = ssub.s32 %s42, %s43
      %p45 = scmp.eq.s32.totalorder %s44, 0
      %s47 = sadd.s32 %s46, 1
      %s48 = scalar_select %p45, %s46, %s47
      %p51 = pneg %p45
      %p52 = scmp.eq.s32.totalorder %s15, 8
      %p53 = por %p51, %p52
      %p54 = scmp.ne.s32.totalorder %s46, %s49
      %p55 = scmp.eq.s32.totalorder %s15, 0
      %p56 = por %p54, %p55
      %p57 = scmp.ne.s32.totalorder %s46, %s49
      %p58 = scmp.eq.s32.totalorder %s20, 8
      %p59 = por %p57, %p58
      %p60 = scmp.ne.s32.totalorder %s49, %s50
      %p61 = scmp.eq.s32.totalorder %s20, 0
      %p62 = por %p60, %p61
      %p63 = scmp.ne.s32.totalorder %s49, %s50
      %p64 = scmp.eq.s32.totalorder %s21, 8
      %p65 = por %p63, %p64
      %p67 = scmp.ne.s32.totalorder %s50, %s66
      %p68 = scmp.eq.s32.totalorder %s21, 0
      %p69 = por %p67, %p68
      %s70 = ssub.s32 %s22, %s41
      %s71 = ssub.s32 %s24, %s33
      %s72 = sor.u32 %s70, %s71
      %s73 = ssub.s32 %s23, %s37
      %s74 = sor.u32 %s72, %s73
      %p75 = scmp.eq.s32.totalorder %s74, 0
      %s77 = sadd.s32 %s76, 1
      %s78 = scalar_select %p75, %s76, %s77
      %p81 = pneg %p75
      %p82 = scmp.eq.s32.totalorder %s15, 8
      %p83 = por %p81, %p82
      %p84 = scmp.ne.s32.totalorder %s76, %s79
      %p85 = scmp.eq.s32.totalorder %s15, 0
      %p86 = por %p84, %p85
      %p87 = scmp.ne.s32.totalorder %s76, %s79
      %p88 = scmp.eq.s32.totalorder %s20, 8
      %p89 = por %p87, %p88
      %p90 = scmp.ne.s32.totalorder %s79, %s80
      %p91 = scmp.eq.s32.totalorder %s20, 0
      %p92 = por %p90, %p91
      %p93 = scmp.ne.s32.totalorder %s79, %s80
      %p94 = scmp.eq.s32.totalorder %s21, 8
      %p95 = por %p93, %p94
      %p97 = scmp.ne.s32.totalorder %s80, %s96
      %p98 = scmp.eq.s32.totalorder %s21, 0
      %p99 = por %p97, %p98
      %s100 = ssub.s32 %s22, %s41
      %s101 = ssub.s32 %s23, %s37
      %s102 = sor.u32 %s100, %s101
      %p103 = scmp.eq.s32.totalorder %s102, 0
      %s105 = sadd.s32 %s104, 1
      %s106 = scalar_select %p103, %s104, %s105
      %p109 = pneg %p103
      %p110 = scmp.eq.s32.totalorder %s15, 8
      %p111 = por %p109, %p110
      %p112 = scmp.ne.s32.totalorder %s104, %s107
      %p113 = scmp.eq.s32.totalorder %s15, 0
      %p114 = por %p112, %p113
      %p115 = scmp.ne.s32.totalorder %s104, %s107
      %p116 = scmp.eq.s32.totalorder %s20, 8
      %p117 = por %p115, %p116
      %p118 = scmp.ne.s32.totalorder %s107, %s108
      %p119 = scmp.eq.s32.totalorder %s20, 0
      %p120 = por %p118, %p119
      %p121 = scmp.ne.s32.totalorder %s107, %s108
      %p122 = scmp.eq.s32.totalorder %s21, 8
      %p123 = por %p121, %p122
      %p125 = scmp.ne.s32.totalorder %s108, %s124
      %p126 = scmp.eq.s32.totalorder %s21, 0
      %p127 = por %p125, %p126
      %s128 = ssub.s32 %s22, %s41
      %s129 = ssub.s32 %s23, %s37
      %s130 = sor.u32 %s128, %s129
      %p131 = scmp.eq.s32.totalorder %s130, 0
      %s133 = sadd.s32 %s132, 1
      %s134 = scalar_select %p131, %s132, %s133
      %p137 = pneg %p131
      %p138 = scmp.eq.s32.totalorder %s15, 8
      %p139 = por %p137, %p138
      %p140 = scmp.ne.s32.totalorder %s132, %s135
      %p141 = scmp.eq.s32.totalorder %s15, 0
      %p142 = por %p140, %p141
      %p143 = scmp.ne.s32.totalorder %s132, %s135
      %p144 = scmp.eq.s32.totalorder %s20, 8
      %p145 = por %p143, %p144
      %p146 = scmp.ne.s32.totalorder %s135, %s136
      %p147 = scmp.eq.s32.totalorder %s20, 0
      %p148 = por %p146, %p147
      %p149 = scmp.ne.s32.totalorder %s135, %s136
      %p150 = scmp.eq.s32.totalorder %s21, 8
      %p151 = por %p149, %p150
      %p153 = scmp.ne.s32.totalorder %s136, %s152
      %p154 = scmp.eq.s32.totalorder %s21, 0
      %p155 = por %p153, %p154
      %p156 = scmp.le.s32.totalorder 1, %s15
      %p157 = scmp.lt.s32.totalorder %s15, 10
      %p158 = pnand %p156, %p157
      %p159 = pneg %p158
      // Predicated region
      $region9: #{concat_mtl_forward.3} parent=5 // pred_check
        _
      $region10: #{concat_mtl_forward.3} parent=5 // pred_check_branch
        %161 = sbr.rel (%p158) target = $region12
      $region11: #{concat_mtl_forward.3} parent=5 // pred_region
        %s162 = ssub.s32 %s15, 1
      $region12: #{concat_mtl_forward.3} parent=5 // pred_fallthru
        _
      %p163 = scmp.lt.s32.totalorder %s15, 9
      // Predicated region
      $region13: #{concat_mtl_forward.3} parent=5 // pred_check
        %p164 = pneg %p163
      $region14: #{concat_mtl_forward.3} parent=5 // pred_check_branch
        %166 = sbr.rel (%p164) target = $region16
      $region15: #{concat_mtl_forward.3} parent=5 // pred_region
        // Predicated region
        $region17: #{concat_mtl_forward.3} parent=15 // pred_check
          %p167 = pneg %p56
        $region18: #{concat_mtl_forward.3} parent=15 // pred_check_branch
          %169 = sbr.rel (%p167) target = $region20
        $region19: #{concat_mtl_forward.3} parent=15 // pred_region
          %s170 = sadd.s32 %s22, %s24
          %s171 = smul.u32 8, %s170
          %p172 = scmp.lt.s32.totalorder %s171, 23
          %s173 = scalar_select %p172, %s171, 23
          %s174 = smul.addr %s173, 2
          %s175 = scalar_lea.vmem %s0, %s174
          %s176 = sadd.s32 %s22, %s24
          %s177 = smul.u32 8, %s176
        $region20: #{concat_mtl_forward.3} parent=15 // pred_fallthru
          _
        // Predicated region
        $region21: #{concat_mtl_forward.3} parent=15 // pred_check
          %p178 = pneg %p86
        $region22: #{concat_mtl_forward.3} parent=15 // pred_check_branch
          %180 = sbr.rel (%p178) target = $region24
        $region23: #{concat_mtl_forward.3} parent=15 // pred_region
          %s181 = sand.u32 %s76, 1
          %s182 = scalar_lea.sflag [#allocation4], %s181
          %s183 = sand.u32 %s76, 1
          %s184 = smul.addr %s183, 4096
          %s185 = scalar_lea.vmem [#allocation3], %s184
          %s186 = smul.u32 128, %s24
          %s187 = smul.u32 8, %s23
          %s189 = ssub.s32 65536, 65536
          %190 = vsyncadd %s182, %s189
          %s191 = smul.addr %s186, 24
          %s192 = sadd.s32 %s187, %s191
          %s193 = smul.addr %s22, 3072
          %s194 = sadd.s32 %s192, %s193
          %s195 = smul.addr %s194, 64
          %s196 = scalar_lea.hbm %s1, %s195
          %s197 = sshll.u32 %s185, 4
          %s198 = int_to_ptr.vmem [resolvable:$true] %s197
          %203 = dma.hbm_to_vmem [thread:$0]  %s196, 65536, %s198, %s182, 1536, 512, 32
        $region24: #{concat_mtl_forward.3} parent=15 // pred_fallthru
          _
        // Predicated region
        $region25: #{concat_mtl_forward.3} parent=15 // pred_check
          %p204 = pneg %p114
        $region26: #{concat_mtl_forward.3} parent=15 // pred_check_branch
          %206 = sbr.rel (%p204) target = $region28
        $region27: #{concat_mtl_forward.3} parent=15 // pred_region
          %s207 = sand.u32 %s104, 1
          %s208 = scalar_lea.sflag [#allocation6], %s207
          %s209 = sand.u32 %s104, 1
          %s210 = smul.addr %s209, 8
          %s211 = scalar_lea.vmem [#allocation5], %s210
          %s212 = smul.u32 8, %s23
          %s214 = ssub.s32 128, 128
          %215 = vsyncadd %s208, %s214
          %s216 = smul.addr %s22, 24
          %s217 = sadd.s32 %s212, %s216
          %s218 = smul.addr %s217, 16
          %s219 = scalar_lea.hbm %s2, %s218
          %s221 = sshll.u32 %s211, 4
          %s222 = int_to_ptr.vmem [resolvable:$true] %s221
          %224 = dma.hbm_to_vmem [thread:$0]  %s219, 128, %s222, %s208
        $region28: #{concat_mtl_forward.3} parent=15 // pred_fallthru
          _
      $region16: #{concat_mtl_forward.3} parent=5 // pred_fallthru
        _
      %p225 = scmp.le.s32.totalorder 1, %s15
      %p226 = scmp.lt.s32.totalorder %s15, 10
      %p227 = pnand %p225, %p226
      %p228 = pneg %p227
      // Predicated region
      $region29: #{concat_mtl_forward.3} parent=5 // pred_check
        _
      $region30: #{concat_mtl_forward.3} parent=5 // pred_check_branch
        %230 = sbr.rel (%p227) target = $region32
      $region31: #{concat_mtl_forward.3} parent=5 // pred_region
        %s231 = ssub.s32 %s15, 1
        %s232 = sand.u32 %s79, 1
        %s233 = scalar_lea.sflag [#allocation4], %s232
        %s234 = sand.u32 %s79, 1
        %s235 = smul.addr %s234, 4096
        %s236 = scalar_lea.vmem [#allocation3], %s235
        // Predicated region
        $region33: #{concat_mtl_forward.3} parent=31 // pred_check
          %p237 = pneg %p92
        $region34: #{concat_mtl_forward.3} parent=31 // pred_check_branch
          %239 = sbr.rel (%p237) target = $region36
        $region35: #{concat_mtl_forward.3} parent=31 // pred_region
          %240 = dma.done %s233, 65536
        $region36: #{concat_mtl_forward.3} parent=31 // pred_fallthru
          _
        %s241 = sand.u32 %s107, 1
        %s242 = scalar_lea.sflag [#allocation6], %s241
        %s243 = sand.u32 %s107, 1
        %s244 = smul.addr %s243, 8
        %s245 = scalar_lea.vmem [#allocation5], %s244
        // Predicated region
        $region37: #{concat_mtl_forward.3} parent=31 // pred_check
          %p246 = pneg %p120
        $region38: #{concat_mtl_forward.3} parent=31 // pred_check_branch
          %248 = sbr.rel (%p246) target = $region40
        $region39: #{concat_mtl_forward.3} parent=31 // pred_region
          %249 = dma.done %s242, 128
        $region40: #{concat_mtl_forward.3} parent=31 // pred_fallthru
          _
        %s250 = sadd.s32 %s25, %s27
        %s251 = smul.u32 8, %s250
        %p252 = scmp.lt.s32.totalorder %s251, 23
        %s253 = scalar_select %p252, %s251, 23
        %s254 = smul.addr %s253, 2
        %s255 = scalar_lea.vmem %s0, %s254
        %p256 = pneg %p62
        %p257 = pneg %p59
        %s258 = sand.u32 %s79, 1
        %s259 = scalar_lea.sflag [#allocation4], %s258
        %s260 = sand.u32 %s79, 1
        %s261 = smul.addr %s260, 4096
        %s262 = scalar_lea.vmem [#allocation3], %s261
        %p263 = pneg %p92
        %p264 = pneg %p89
        %s265 = sand.u32 %s107, 1
        %s266 = scalar_lea.sflag [#allocation6], %s265
        %s267 = sand.u32 %s107, 1
        %s268 = smul.addr %s267, 8
        %s269 = scalar_lea.vmem [#allocation5], %s268
        %p270 = pneg %p120
        %p271 = pneg %p117
        %p272 = pneg %p148
        %p273 = pneg %p145
        %s274 = smul.u32 8, %s26
        %p275 = scmp.lt.s32.totalorder %s25, 2
        %s276 = scalar_select %p275, %s25, 2
        %p277 = scmp.lt.s32.totalorder %s274, 23
        %s278 = scalar_select %p277, %s274, 23
        %s279 = smul.addr %s276, 24
        %s280 = sadd.s32 %s278, %s279
        %s281 = scalar_lea.vmem %s3, %s280
        %s282 = sadd.s32 %s25, %s27
        %s283 = smul.u32 8, %s282
        %p284 = scmp.lt.s32.totalorder %s283, 23
        %s285 = scalar_select %p284, %s283, 23
        %s286 = smul.addr %s285, 2
        %s287 = scalar_lea.vmem %s0, %s286
        %s288 = sadd.s32 %s25, %s27
        %s289 = smul.u32 8, %s288
        %s290 = smul.u32 128, %s27
        %s291 = smul.u32 8, %s26
        %s292 = smul.u32 8, %s26
        %s293 = smul.u32 8, %s26
        %p294 = scmp.lt.s32.totalorder %s25, 2
        %s295 = scalar_select %p294, %s25, 2
        %p296 = scmp.lt.s32.totalorder %s293, 23
        %s297 = scalar_select %p296, %s293, 23
        %s298 = smul.addr %s295, 24
        %s299 = sadd.s32 %s297, %s298
        %s300 = scalar_lea.vmem %s3, %s299
        %s301 = smul.u32 8, %s26
        %p302 = scmp.eq.s32.totalorder %s27, 0
        // Predicated region
        $region41: #{concat_mtl_forward.3} parent=31 // pred_check
          %p303 = pneg %p302
        $region42: #{concat_mtl_forward.3} parent=31 // pred_check_branch
          %305 = sbr.rel (%p303) target = $region44
        $region43: #{concat_mtl_forward.3} parent=31 // pred_region
          %306 = vst [vmem:[#allocation2] sm:$0xff] 0.0
          %307 = vst [vmem:[#allocation2 + $0x8] sm:$0xff] 0.0
        $region44: #{concat_mtl_forward.3} parent=31 // pred_fallthru
          _
        %v308 = vld [vmem:[#allocation2] sm:$0xff]
        %v309 = vld [vmem:[#allocation2 + $0x8] sm:$0xff]
        %v310 = vld [vmem:[%s287] sm:$0xff]
        %v311 = vld [vmem:[%s287 + $0x8] sm:$0xff]
        %v314 = vcombine.high %v310, %v310
        %v316 = vunpack.c.l.s4 1983009808
        %v317 = vunpack.c.0.s8 %v316
        %v318 = vlaneseq
        %v319 = vshrl.u32 %v318, 7
        %v320 = vsub.s32 %v317, %v319
        %v321 = vrot.slane %v310, %v320
        %v323 = vunpack.c.l.s4 1983009808
        %v324 = vunpack.c.0.s8 %v323
        %v325 = vlaneseq
        %v326 = vshrl.u32 %v325, 7
        %v327 = vsub.s32 %v324, %v326
        %v328 = vrot.slane %v314, %v327
        %v329 = vcombine.high %v321, %v321
        %v330 = vcombine.high %v328, %v328
        %v331 = vcombine.high %v311, %v311
        %v333 = vunpack.c.l.s4 1983009808
        %v334 = vunpack.c.0.s8 %v333
        %v335 = vlaneseq
        %v336 = vshrl.u32 %v335, 7
        %v337 = vsub.s32 %v334, %v336
        %v338 = vrot.slane %v311, %v337
        %v340 = vunpack.c.l.s4 1983009808
        %v341 = vunpack.c.0.s8 %v340
        %v342 = vlaneseq
        %v343 = vshrl.u32 %v342, 7
        %v344 = vsub.s32 %v341, %v343
        %v345 = vrot.slane %v331, %v344
        %v346 = vcombine.high %v338, %v338
        %v347 = vcombine.high %v345, %v345
        %v356 = vpack.c.bf16 %v321, %v321
        %v357 = vpack.c.bf16 %v329, %v329
        %v358 = vpack.c.bf16 %v328, %v328
        %v359 = vpack.c.bf16 %v330, %v330
        %v360 = vpack.c.bf16 %v338, %v338
        %v361 = vpack.c.bf16 %v346, %v346
        %v362 = vpack.c.bf16 %v345, %v345
        %v363 = vpack.c.bf16 %v347, %v347
        %v364 = vld [vmem:[%s236] sm:$0xff]
        %v365 = vld [vmem:[%s236 + $0x8] sm:$0xff]
        %v366 = vld [vmem:[%s236 + $0x10] sm:$0xff]
        %v367 = vld [vmem:[%s236 + $0x18] sm:$0xff]
        %v368 = vld [vmem:[%s236 + $0x20] sm:$0xff]
        %v369 = vld [vmem:[%s236 + $0x28] sm:$0xff]
        %v370 = vld [vmem:[%s236 + $0x30] sm:$0xff]
        %v371 = vld [vmem:[%s236 + $0x38] sm:$0xff]
        %v372 = vld [vmem:[%s236 + $0x40] sm:$0xff]
        %v373 = vld [vmem:[%s236 + $0x48] sm:$0xff]
        %v374 = vld [vmem:[%s236 + $0x50] sm:$0xff]
        %v375 = vld [vmem:[%s236 + $0x58] sm:$0xff]
        %v376 = vld [vmem:[%s236 + $0x60] sm:$0xff]
        %v377 = vld [vmem:[%s236 + $0x68] sm:$0xff]
        %v378 = vld [vmem:[%s236 + $0x70] sm:$0xff]
        %v379 = vld [vmem:[%s236 + $0x78] sm:$0xff]
        %v380 = vld [vmem:[%s236 + $0x80] sm:$0xff]
        %v381 = vld [vmem:[%s236 + $0x88] sm:$0xff]
        %v382 = vld [vmem:[%s236 + $0x90] sm:$0xff]
        %v383 = vld [vmem:[%s236 + $0x98] sm:$0xff]
        %v384 = vld [vmem:[%s236 + $0xa0] sm:$0xff]
        %v385 = vld [vmem:[%s236 + $0xa8] sm:$0xff]
        %v386 = vld [vmem:[%s236 + $0xb0] sm:$0xff]
        %v387 = vld [vmem:[%s236 + $0xb8] sm:$0xff]
        %v388 = vld [vmem:[%s236 + $0xc0] sm:$0xff]
        %v389 = vld [vmem:[%s236 + $0xc8] sm:$0xff]
        %v390 = vld [vmem:[%s236 + $0xd0] sm:$0xff]
        %v391 = vld [vmem:[%s236 + $0xd8] sm:$0xff]
        %v392 = vld [vmem:[%s236 + $0xe0] sm:$0xff]
        %v393 = vld [vmem:[%s236 + $0xe8] sm:$0xff]
        %v394 = vld [vmem:[%s236 + $0xf0] sm:$0xff]
        %v395 = vld [vmem:[%s236 + $0xf8] sm:$0xff]
        %v396 = vld [vmem:[%s236 + $0x100] sm:$0xff]
        %v397 = vld [vmem:[%s236 + $0x108] sm:$0xff]
        %v398 = vld [vmem:[%s236 + $0x110] sm:$0xff]
        %v399 = vld [vmem:[%s236 + $0x118] sm:$0xff]
        %v400 = vld [vmem:[%s236 + $0x120] sm:$0xff]
        %v401 = vld [vmem:[%s236 + $0x128] sm:$0xff]
        %v402 = vld [vmem:[%s236 + $0x130] sm:$0xff]
        %v403 = vld [vmem:[%s236 + $0x138] sm:$0xff]
        %v404 = vld [vmem:[%s236 + $0x140] sm:$0xff]
        %v405 = vld [vmem:[%s236 + $0x148] sm:$0xff]
        %v406 = vld [vmem:[%s236 + $0x150] sm:$0xff]
        %v407 = vld [vmem:[%s236 + $0x158] sm:$0xff]
        %v408 = vld [vmem:[%s236 + $0x160] sm:$0xff]
        %v409 = vld [vmem:[%s236 + $0x168] sm:$0xff]
        %v410 = vld [vmem:[%s236 + $0x170] sm:$0xff]
        %v411 = vld [vmem:[%s236 + $0x178] sm:$0xff]
        %v412 = vld [vmem:[%s236 + $0x180] sm:$0xff]
        %v413 = vld [vmem:[%s236 + $0x188] sm:$0xff]
        %v414 = vld [vmem:[%s236 + $0x190] sm:$0xff]
        %v415 = vld [vmem:[%s236 + $0x198] sm:$0xff]
        %v416 = vld [vmem:[%s236 + $0x1a0] sm:$0xff]
        %v417 = vld [vmem:[%s236 + $0x1a8] sm:$0xff]
        %v418 = vld [vmem:[%s236 + $0x1b0] sm:$0xff]
        %v419 = vld [vmem:[%s236 + $0x1b8] sm:$0xff]
        %v420 = vld [vmem:[%s236 + $0x1c0] sm:$0xff]
        %v421 = vld [vmem:[%s236 + $0x1c8] sm:$0xff]
        %v422 = vld [vmem:[%s236 + $0x1d0] sm:$0xff]
        %v423 = vld [vmem:[%s236 + $0x1d8] sm:$0xff]
        %v424 = vld [vmem:[%s236 + $0x1e0] sm:$0xff]
        %v425 = vld [vmem:[%s236 + $0x1e8] sm:$0xff]
        %v426 = vld [vmem:[%s236 + $0x1f0] sm:$0xff]
        %v427 = vld [vmem:[%s236 + $0x1f8] sm:$0xff]
        %v428 = vld [vmem:[%s236 + $0x200] sm:$0xff]
        %v429 = vld [vmem:[%s236 + $0x208] sm:$0xff]
        %v430 = vld [vmem:[%s236 + $0x210] sm:$0xff]
        %v431 = vld [vmem:[%s236 + $0x218] sm:$0xff]
        %v432 = vld [vmem:[%s236 + $0x220] sm:$0xff]
        %v433 = vld [vmem:[%s236 + $0x228] sm:$0xff]
        %v434 = vld [vmem:[%s236 + $0x230] sm:$0xff]
        %v435 = vld [vmem:[%s236 + $0x238] sm:$0xff]
        %v436 = vld [vmem:[%s236 + $0x240] sm:$0xff]
        %v437 = vld [vmem:[%s236 + $0x248] sm:$0xff]
        %v438 = vld [vmem:[%s236 + $0x250] sm:$0xff]
        %v439 = vld [vmem:[%s236 + $0x258] sm:$0xff]
        %v440 = vld [vmem:[%s236 + $0x260] sm:$0xff]
        %v441 = vld [vmem:[%s236 + $0x268] sm:$0xff]
        %v442 = vld [vmem:[%s236 + $0x270] sm:$0xff]
        %v443 = vld [vmem:[%s236 + $0x278] sm:$0xff]
        %v444 = vld [vmem:[%s236 + $0x280] sm:$0xff]
        %v445 = vld [vmem:[%s236 + $0x288] sm:$0xff]
        %v446 = vld [vmem:[%s236 + $0x290] sm:$0xff]
        %v447 = vld [vmem:[%s236 + $0x298] sm:$0xff]
        %v448 = vld [vmem:[%s236 + $0x2a0] sm:$0xff]
        %v449 = vld [vmem:[%s236 + $0x2a8] sm:$0xff]
        %v450 = vld [vmem:[%s236 + $0x2b0] sm:$0xff]
        %v451 = vld [vmem:[%s236 + $0x2b8] sm:$0xff]
        %v452 = vld [vmem:[%s236 + $0x2c0] sm:$0xff]
        %v453 = vld [vmem:[%s236 + $0x2c8] sm:$0xff]
        %v454 = vld [vmem:[%s236 + $0x2d0] sm:$0xff]
        %v455 = vld [vmem:[%s236 + $0x2d8] sm:$0xff]
        %v456 = vld [vmem:[%s236 + $0x2e0] sm:$0xff]
        %v457 = vld [vmem:[%s236 + $0x2e8] sm:$0xff]
        %v458 = vld [vmem:[%s236 + $0x2f0] sm:$0xff]
        %v459 = vld [vmem:[%s236 + $0x2f8] sm:$0xff]
        %v460 = vld [vmem:[%s236 + $0x300] sm:$0xff]
        %v461 = vld [vmem:[%s236 + $0x308] sm:$0xff]
        %v462 = vld [vmem:[%s236 + $0x310] sm:$0xff]
        %v463 = vld [vmem:[%s236 + $0x318] sm:$0xff]
        %v464 = vld [vmem:[%s236 + $0x320] sm:$0xff]
        %v465 = vld [vmem:[%s236 + $0x328] sm:$0xff]
        %v466 = vld [vmem:[%s236 + $0x330] sm:$0xff]
        %v467 = vld [vmem:[%s236 + $0x338] sm:$0xff]
        %v468 = vld [vmem:[%s236 + $0x340] sm:$0xff]
        %v469 = vld [vmem:[%s236 + $0x348] sm:$0xff]
        %v470 = vld [vmem:[%s236 + $0x350] sm:$0xff]
        %v471 = vld [vmem:[%s236 + $0x358] sm:$0xff]
        %v472 = vld [vmem:[%s236 + $0x360] sm:$0xff]
        %v473 = vld [vmem:[%s236 + $0x368] sm:$0xff]
        %v474 = vld [vmem:[%s236 + $0x370] sm:$0xff]
        %v475 = vld [vmem:[%s236 + $0x378] sm:$0xff]
        %v476 = vld [vmem:[%s236 + $0x380] sm:$0xff]
        %v477 = vld [vmem:[%s236 + $0x388] sm:$0xff]
        %v478 = vld [vmem:[%s236 + $0x390] sm:$0xff]
        %v479 = vld [vmem:[%s236 + $0x398] sm:$0xff]
        %v480 = vld [vmem:[%s236 + $0x3a0] sm:$0xff]
        %v481 = vld [vmem:[%s236 + $0x3a8] sm:$0xff]
        %v482 = vld [vmem:[%s236 + $0x3b0] sm:$0xff]
        %v483 = vld [vmem:[%s236 + $0x3b8] sm:$0xff]
        %v484 = vld [vmem:[%s236 + $0x3c0] sm:$0xff]
        %v485 = vld [vmem:[%s236 + $0x3c8] sm:$0xff]
        %v486 = vld [vmem:[%s236 + $0x3d0] sm:$0xff]
        %v487 = vld [vmem:[%s236 + $0x3d8] sm:$0xff]
        %v488 = vld [vmem:[%s236 + $0x3e0] sm:$0xff]
        %v489 = vld [vmem:[%s236 + $0x3e8] sm:$0xff]
        %v490 = vld [vmem:[%s236 + $0x3f0] sm:$0xff]
        %v491 = vld [vmem:[%s236 + $0x3f8] sm:$0xff]
        %v492 = vld [vmem:[%s236 + $0x400] sm:$0xff]
        %v493 = vld [vmem:[%s236 + $0x408] sm:$0xff]
        %v494 = vld [vmem:[%s236 + $0x410] sm:$0xff]
        %v495 = vld [vmem:[%s236 + $0x418] sm:$0xff]
        %v496 = vld [vmem:[%s236 + $0x420] sm:$0xff]
        %v497 = vld [vmem:[%s236 + $0x428] sm:$0xff]
        %v498 = vld [vmem:[%s236 + $0x430] sm:$0xff]
        %v499 = vld [vmem:[%s236 + $0x438] sm:$0xff]
        %v500 = vld [vmem:[%s236 + $0x440] sm:$0xff]
        %v501 = vld [vmem:[%s236 + $0x448] sm:$0xff]
        %v502 = vld [vmem:[%s236 + $0x450] sm:$0xff]
        %v503 = vld [vmem:[%s236 + $0x458] sm:$0xff]
        %v504 = vld [vmem:[%s236 + $0x460] sm:$0xff]
        %v505 = vld [vmem:[%s236 + $0x468] sm:$0xff]
        %v506 = vld [vmem:[%s236 + $0x470] sm:$0xff]
        %v507 = vld [vmem:[%s236 + $0x478] sm:$0xff]
        %v508 = vld [vmem:[%s236 + $0x480] sm:$0xff]
        %v509 = vld [vmem:[%s236 + $0x488] sm:$0xff]
        %v510 = vld [vmem:[%s236 + $0x490] sm:$0xff]
        %v511 = vld [vmem:[%s236 + $0x498] sm:$0xff]
        %v512 = vld [vmem:[%s236 + $0x4a0] sm:$0xff]
        %v513 = vld [vmem:[%s236 + $0x4a8] sm:$0xff]
        %v514 = vld [vmem:[%s236 + $0x4b0] sm:$0xff]
        %v515 = vld [vmem:[%s236 + $0x4b8] sm:$0xff]
        %v516 = vld [vmem:[%s236 + $0x4c0] sm:$0xff]
        %v517 = vld [vmem:[%s236 + $0x4c8] sm:$0xff]
        %v518 = vld [vmem:[%s236 + $0x4d0] sm:$0xff]
        %v519 = vld [vmem:[%s236 + $0x4d8] sm:$0xff]
        %v520 = vld [vmem:[%s236 + $0x4e0] sm:$0xff]
        %v521 = vld [vmem:[%s236 + $0x4e8] sm:$0xff]
        %v522 = vld [vmem:[%s236 + $0x4f0] sm:$0xff]
        %v523 = vld [vmem:[%s236 + $0x4f8] sm:$0xff]
        %v524 = vld [vmem:[%s236 + $0x500] sm:$0xff]
        %v525 = vld [vmem:[%s236 + $0x508] sm:$0xff]
        %v526 = vld [vmem:[%s236 + $0x510] sm:$0xff]
        %v527 = vld [vmem:[%s236 + $0x518] sm:$0xff]
        %v528 = vld [vmem:[%s236 + $0x520] sm:$0xff]
        %v529 = vld [vmem:[%s236 + $0x528] sm:$0xff]
        %v530 = vld [vmem:[%s236 + $0x530] sm:$0xff]
        %v531 = vld [vmem:[%s236 + $0x538] sm:$0xff]
        %v532 = vld [vmem:[%s236 + $0x540] sm:$0xff]
        %v533 = vld [vmem:[%s236 + $0x548] sm:$0xff]
        %v534 = vld [vmem:[%s236 + $0x550] sm:$0xff]
        %v535 = vld [vmem:[%s236 + $0x558] sm:$0xff]
        %v536 = vld [vmem:[%s236 + $0x560] sm:$0xff]
        %v537 = vld [vmem:[%s236 + $0x568] sm:$0xff]
        %v538 = vld [vmem:[%s236 + $0x570] sm:$0xff]
        %v539 = vld [vmem:[%s236 + $0x578] sm:$0xff]
        %v540 = vld [vmem:[%s236 + $0x580] sm:$0xff]
        %v541 = vld [vmem:[%s236 + $0x588] sm:$0xff]
        %v542 = vld [vmem:[%s236 + $0x590] sm:$0xff]
        %v543 = vld [vmem:[%s236 + $0x598] sm:$0xff]
        %v544 = vld [vmem:[%s236 + $0x5a0] sm:$0xff]
        %v545 = vld [vmem:[%s236 + $0x5a8] sm:$0xff]
        %v546 = vld [vmem:[%s236 + $0x5b0] sm:$0xff]
        %v547 = vld [vmem:[%s236 + $0x5b8] sm:$0xff]
        %v548 = vld [vmem:[%s236 + $0x5c0] sm:$0xff]
        %v549 = vld [vmem:[%s236 + $0x5c8] sm:$0xff]
        %v550 = vld [vmem:[%s236 + $0x5d0] sm:$0xff]
        %v551 = vld [vmem:[%s236 + $0x5d8] sm:$0xff]
        %v552 = vld [vmem:[%s236 + $0x5e0] sm:$0xff]
        %v553 = vld [vmem:[%s236 + $0x5e8] sm:$0xff]
        %v554 = vld [vmem:[%s236 + $0x5f0] sm:$0xff]
        %v555 = vld [vmem:[%s236 + $0x5f8] sm:$0xff]
        %v556 = vld [vmem:[%s236 + $0x600] sm:$0xff]
        %v557 = vld [vmem:[%s236 + $0x608] sm:$0xff]
        %v558 = vld [vmem:[%s236 + $0x610] sm:$0xff]
        %v559 = vld [vmem:[%s236 + $0x618] sm:$0xff]
        %v560 = vld [vmem:[%s236 + $0x620] sm:$0xff]
        %v561 = vld [vmem:[%s236 + $0x628] sm:$0xff]
        %v562 = vld [vmem:[%s236 + $0x630] sm:$0xff]
        %v563 = vld [vmem:[%s236 + $0x638] sm:$0xff]
        %v564 = vld [vmem:[%s236 + $0x640] sm:$0xff]
        %v565 = vld [vmem:[%s236 + $0x648] sm:$0xff]
        %v566 = vld [vmem:[%s236 + $0x650] sm:$0xff]
        %v567 = vld [vmem:[%s236 + $0x658] sm:$0xff]
        %v568 = vld [vmem:[%s236 + $0x660] sm:$0xff]
        %v569 = vld [vmem:[%s236 + $0x668] sm:$0xff]
        %v570 = vld [vmem:[%s236 + $0x670] sm:$0xff]
        %v571 = vld [vmem:[%s236 + $0x678] sm:$0xff]
        %v572 = vld [vmem:[%s236 + $0x680] sm:$0xff]
        %v573 = vld [vmem:[%s236 + $0x688] sm:$0xff]
        %v574 = vld [vmem:[%s236 + $0x690] sm:$0xff]
        %v575 = vld [vmem:[%s236 + $0x698] sm:$0xff]
        %v576 = vld [vmem:[%s236 + $0x6a0] sm:$0xff]
        %v577 = vld [vmem:[%s236 + $0x6a8] sm:$0xff]
        %v578 = vld [vmem:[%s236 + $0x6b0] sm:$0xff]
        %v579 = vld [vmem:[%s236 + $0x6b8] sm:$0xff]
        %v580 = vld [vmem:[%s236 + $0x6c0] sm:$0xff]
        %v581 = vld [vmem:[%s236 + $0x6c8] sm:$0xff]
        %v582 = vld [vmem:[%s236 + $0x6d0] sm:$0xff]
        %v583 = vld [vmem:[%s236 + $0x6d8] sm:$0xff]
        %v584 = vld [vmem:[%s236 + $0x6e0] sm:$0xff]
        %v585 = vld [vmem:[%s236 + $0x6e8] sm:$0xff]
        %v586 = vld [vmem:[%s236 + $0x6f0] sm:$0xff]
        %v587 = vld [vmem:[%s236 + $0x6f8] sm:$0xff]
        %v588 = vld [vmem:[%s236 + $0x700] sm:$0xff]
        %v589 = vld [vmem:[%s236 + $0x708] sm:$0xff]
        %v590 = vld [vmem:[%s236 + $0x710] sm:$0xff]
        %v591 = vld [vmem:[%s236 + $0x718] sm:$0xff]
        %v592 = vld [vmem:[%s236 + $0x720] sm:$0xff]
        %v593 = vld [vmem:[%s236 + $0x728] sm:$0xff]
        %v594 = vld [vmem:[%s236 + $0x730] sm:$0xff]
        %v595 = vld [vmem:[%s236 + $0x738] sm:$0xff]
        %v596 = vld [vmem:[%s236 + $0x740] sm:$0xff]
        %v597 = vld [vmem:[%s236 + $0x748] sm:$0xff]
        %v598 = vld [vmem:[%s236 + $0x750] sm:$0xff]
        %v599 = vld [vmem:[%s236 + $0x758] sm:$0xff]
        %v600 = vld [vmem:[%s236 + $0x760] sm:$0xff]
        %v601 = vld [vmem:[%s236 + $0x768] sm:$0xff]
        %v602 = vld [vmem:[%s236 + $0x770] sm:$0xff]
        %v603 = vld [vmem:[%s236 + $0x778] sm:$0xff]
        %v604 = vld [vmem:[%s236 + $0x780] sm:$0xff]
        %v605 = vld [vmem:[%s236 + $0x788] sm:$0xff]
        %v606 = vld [vmem:[%s236 + $0x790] sm:$0xff]
        %v607 = vld [vmem:[%s236 + $0x798] sm:$0xff]
        %v608 = vld [vmem:[%s236 + $0x7a0] sm:$0xff]
        %v609 = vld [vmem:[%s236 + $0x7a8] sm:$0xff]
        %v610 = vld [vmem:[%s236 + $0x7b0] sm:$0xff]
        %v611 = vld [vmem:[%s236 + $0x7b8] sm:$0xff]
        %v612 = vld [vmem:[%s236 + $0x7c0] sm:$0xff]
        %v613 = vld [vmem:[%s236 + $0x7c8] sm:$0xff]
        %v614 = vld [vmem:[%s236 + $0x7d0] sm:$0xff]
        %v615 = vld [vmem:[%s236 + $0x7d8] sm:$0xff]
        %v616 = vld [vmem:[%s236 + $0x7e0] sm:$0xff]
        %v617 = vld [vmem:[%s236 + $0x7e8] sm:$0xff]
        %v618 = vld [vmem:[%s236 + $0x7f0] sm:$0xff]
        %v619 = vld [vmem:[%s236 + $0x7f8] sm:$0xff]
        %v620 = vld [vmem:[%s236 + $0x800] sm:$0xff]
        %v621 = vld [vmem:[%s236 + $0x808] sm:$0xff]
        %v622 = vld [vmem:[%s236 + $0x810] sm:$0xff]
        %v623 = vld [vmem:[%s236 + $0x818] sm:$0xff]
        %v624 = vld [vmem:[%s236 + $0x820] sm:$0xff]
        %v625 = vld [vmem:[%s236 + $0x828] sm:$0xff]
        %v626 = vld [vmem:[%s236 + $0x830] sm:$0xff]
        %v627 = vld [vmem:[%s236 + $0x838] sm:$0xff]
        %v628 = vld [vmem:[%s236 + $0x840] sm:$0xff]
        %v629 = vld [vmem:[%s236 + $0x848] sm:$0xff]
        %v630 = vld [vmem:[%s236 + $0x850] sm:$0xff]
        %v631 = vld [vmem:[%s236 + $0x858] sm:$0xff]
        %v632 = vld [vmem:[%s236 + $0x860] sm:$0xff]
        %v633 = vld [vmem:[%s236 + $0x868] sm:$0xff]
        %v634 = vld [vmem:[%s236 + $0x870] sm:$0xff]
        %v635 = vld [vmem:[%s236 + $0x878] sm:$0xff]
        %v636 = vld [vmem:[%s236 + $0x880] sm:$0xff]
        %v637 = vld [vmem:[%s236 + $0x888] sm:$0xff]
        %v638 = vld [vmem:[%s236 + $0x890] sm:$0xff]
        %v639 = vld [vmem:[%s236 + $0x898] sm:$0xff]
        %v640 = vld [vmem:[%s236 + $0x8a0] sm:$0xff]
        %v641 = vld [vmem:[%s236 + $0x8a8] sm:$0xff]
        %v642 = vld [vmem:[%s236 + $0x8b0] sm:$0xff]
        %v643 = vld [vmem:[%s236 + $0x8b8] sm:$0xff]
        %v644 = vld [vmem:[%s236 + $0x8c0] sm:$0xff]
        %v645 = vld [vmem:[%s236 + $0x8c8] sm:$0xff]
        %v646 = vld [vmem:[%s236 + $0x8d0] sm:$0xff]
        %v647 = vld [vmem:[%s236 + $0x8d8] sm:$0xff]
        %v648 = vld [vmem:[%s236 + $0x8e0] sm:$0xff]
        %v649 = vld [vmem:[%s236 + $0x8e8] sm:$0xff]
        %v650 = vld [vmem:[%s236 + $0x8f0] sm:$0xff]
        %v651 = vld [vmem:[%s236 + $0x8f8] sm:$0xff]
        %v652 = vld [vmem:[%s236 + $0x900] sm:$0xff]
        %v653 = vld [vmem:[%s236 + $0x908] sm:$0xff]
        %v654 = vld [vmem:[%s236 + $0x910] sm:$0xff]
        %v655 = vld [vmem:[%s236 + $0x918] sm:$0xff]
        %v656 = vld [vmem:[%s236 + $0x920] sm:$0xff]
        %v657 = vld [vmem:[%s236 + $0x928] sm:$0xff]
        %v658 = vld [vmem:[%s236 + $0x930] sm:$0xff]
        %v659 = vld [vmem:[%s236 + $0x938] sm:$0xff]
        %v660 = vld [vmem:[%s236 + $0x940] sm:$0xff]
        %v661 = vld [vmem:[%s236 + $0x948] sm:$0xff]
        %v662 = vld [vmem:[%s236 + $0x950] sm:$0xff]
        %v663 = vld [vmem:[%s236 + $0x958] sm:$0xff]
        %v664 = vld [vmem:[%s236 + $0x960] sm:$0xff]
        %v665 = vld [vmem:[%s236 + $0x968] sm:$0xff]
        %v666 = vld [vmem:[%s236 + $0x970] sm:$0xff]
        %v667 = vld [vmem:[%s236 + $0x978] sm:$0xff]
        %v668 = vld [vmem:[%s236 + $0x980] sm:$0xff]
        %v669 = vld [vmem:[%s236 + $0x988] sm:$0xff]
        %v670 = vld [vmem:[%s236 + $0x990] sm:$0xff]
        %v671 = vld [vmem:[%s236 + $0x998] sm:$0xff]
        %v672 = vld [vmem:[%s236 + $0x9a0] sm:$0xff]
        %v673 = vld [vmem:[%s236 + $0x9a8] sm:$0xff]
        %v674 = vld [vmem:[%s236 + $0x9b0] sm:$0xff]
        %v675 = vld [vmem:[%s236 + $0x9b8] sm:$0xff]
        %v676 = vld [vmem:[%s236 + $0x9c0] sm:$0xff]
        %v677 = vld [vmem:[%s236 + $0x9c8] sm:$0xff]
        %v678 = vld [vmem:[%s236 + $0x9d0] sm:$0xff]
        %v679 = vld [vmem:[%s236 + $0x9d8] sm:$0xff]
        %v680 = vld [vmem:[%s236 + $0x9e0] sm:$0xff]
        %v681 = vld [vmem:[%s236 + $0x9e8] sm:$0xff]
        %v682 = vld [vmem:[%s236 + $0x9f0] sm:$0xff]
        %v683 = vld [vmem:[%s236 + $0x9f8] sm:$0xff]
        %v684 = vld [vmem:[%s236 + $0xa00] sm:$0xff]
        %v685 = vld [vmem:[%s236 + $0xa08] sm:$0xff]
        %v686 = vld [vmem:[%s236 + $0xa10] sm:$0xff]
        %v687 = vld [vmem:[%s236 + $0xa18] sm:$0xff]
        %v688 = vld [vmem:[%s236 + $0xa20] sm:$0xff]
        %v689 = vld [vmem:[%s236 + $0xa28] sm:$0xff]
        %v690 = vld [vmem:[%s236 + $0xa30] sm:$0xff]
        %v691 = vld [vmem:[%s236 + $0xa38] sm:$0xff]
        %v692 = vld [vmem:[%s236 + $0xa40] sm:$0xff]
        %v693 = vld [vmem:[%s236 + $0xa48] sm:$0xff]
        %v694 = vld [vmem:[%s236 + $0xa50] sm:$0xff]
        %v695 = vld [vmem:[%s236 + $0xa58] sm:$0xff]
        %v696 = vld [vmem:[%s236 + $0xa60] sm:$0xff]
        %v697 = vld [vmem:[%s236 + $0xa68] sm:$0xff]
        %v698 = vld [vmem:[%s236 + $0xa70] sm:$0xff]
        %v699 = vld [vmem:[%s236 + $0xa78] sm:$0xff]
        %v700 = vld [vmem:[%s236 + $0xa80] sm:$0xff]
        %v701 = vld [vmem:[%s236 + $0xa88] sm:$0xff]
        %v702 = vld [vmem:[%s236 + $0xa90] sm:$0xff]
        %v703 = vld [vmem:[%s236 + $0xa98] sm:$0xff]
        %v704 = vld [vmem:[%s236 + $0xaa0] sm:$0xff]
        %v705 = vld [vmem:[%s236 + $0xaa8] sm:$0xff]
        %v706 = vld [vmem:[%s236 + $0xab0] sm:$0xff]
        %v707 = vld [vmem:[%s236 + $0xab8] sm:$0xff]
        %v708 = vld [vmem:[%s236 + $0xac0] sm:$0xff]
        %v709 = vld [vmem:[%s236 + $0xac8] sm:$0xff]
        %v710 = vld [vmem:[%s236 + $0xad0] sm:$0xff]
        %v711 = vld [vmem:[%s236 + $0xad8] sm:$0xff]
        %v712 = vld [vmem:[%s236 + $0xae0] sm:$0xff]
        %v713 = vld [vmem:[%s236 + $0xae8] sm:$0xff]
        %v714 = vld [vmem:[%s236 + $0xaf0] sm:$0xff]
        %v715 = vld [vmem:[%s236 + $0xaf8] sm:$0xff]
        %v716 = vld [vmem:[%s236 + $0xb00] sm:$0xff]
        %v717 = vld [vmem:[%s236 + $0xb08] sm:$0xff]
        %v718 = vld [vmem:[%s236 + $0xb10] sm:$0xff]
        %v719 = vld [vmem:[%s236 + $0xb18] sm:$0xff]
        %v720 = vld [vmem:[%s236 + $0xb20] sm:$0xff]
        %v721 = vld [vmem:[%s236 + $0xb28] sm:$0xff]
        %v722 = vld [vmem:[%s236 + $0xb30] sm:$0xff]
        %v723 = vld [vmem:[%s236 + $0xb38] sm:$0xff]
        %v724 = vld [vmem:[%s236 + $0xb40] sm:$0xff]
        %v725 = vld [vmem:[%s236 + $0xb48] sm:$0xff]
        %v726 = vld [vmem:[%s236 + $0xb50] sm:$0xff]
        %v727 = vld [vmem:[%s236 + $0xb58] sm:$0xff]
        %v728 = vld [vmem:[%s236 + $0xb60] sm:$0xff]
        %v729 = vld [vmem:[%s236 + $0xb68] sm:$0xff]
        %v730 = vld [vmem:[%s236 + $0xb70] sm:$0xff]
        %v731 = vld [vmem:[%s236 + $0xb78] sm:$0xff]
        %v732 = vld [vmem:[%s236 + $0xb80] sm:$0xff]
        %v733 = vld [vmem:[%s236 + $0xb88] sm:$0xff]
        %v734 = vld [vmem:[%s236 + $0xb90] sm:$0xff]
        %v735 = vld [vmem:[%s236 + $0xb98] sm:$0xff]
        %v736 = vld [vmem:[%s236 + $0xba0] sm:$0xff]
        %v737 = vld [vmem:[%s236 + $0xba8] sm:$0xff]
        %v738 = vld [vmem:[%s236 + $0xbb0] sm:$0xff]
        %v739 = vld [vmem:[%s236 + $0xbb8] sm:$0xff]
        %v740 = vld [vmem:[%s236 + $0xbc0] sm:$0xff]
        %v741 = vld [vmem:[%s236 + $0xbc8] sm:$0xff]
        %v742 = vld [vmem:[%s236 + $0xbd0] sm:$0xff]
        %v743 = vld [vmem:[%s236 + $0xbd8] sm:$0xff]
        %v744 = vld [vmem:[%s236 + $0xbe0] sm:$0xff]
        %v745 = vld [vmem:[%s236 + $0xbe8] sm:$0xff]
        %v746 = vld [vmem:[%s236 + $0xbf0] sm:$0xff]
        %v747 = vld [vmem:[%s236 + $0xbf8] sm:$0xff]
        %v748 = vld [vmem:[%s236 + $0xc00] sm:$0xff]
        %v749 = vld [vmem:[%s236 + $0xc08] sm:$0xff]
        %v750 = vld [vmem:[%s236 + $0xc10] sm:$0xff]
        %v751 = vld [vmem:[%s236 + $0xc18] sm:$0xff]
        %v752 = vld [vmem:[%s236 + $0xc20] sm:$0xff]
        %v753 = vld [vmem:[%s236 + $0xc28] sm:$0xff]
        %v754 = vld [vmem:[%s236 + $0xc30] sm:$0xff]
        %v755 = vld [vmem:[%s236 + $0xc38] sm:$0xff]
        %v756 = vld [vmem:[%s236 + $0xc40] sm:$0xff]
        %v757 = vld [vmem:[%s236 + $0xc48] sm:$0xff]
        %v758 = vld [vmem:[%s236 + $0xc50] sm:$0xff]
        %v759 = vld [vmem:[%s236 + $0xc58] sm:$0xff]
        %v760 = vld [vmem:[%s236 + $0xc60] sm:$0xff]
        %v761 = vld [vmem:[%s236 + $0xc68] sm:$0xff]
        %v762 = vld [vmem:[%s236 + $0xc70] sm:$0xff]
        %v763 = vld [vmem:[%s236 + $0xc78] sm:$0xff]
        %v764 = vld [vmem:[%s236 + $0xc80] sm:$0xff]
        %v765 = vld [vmem:[%s236 + $0xc88] sm:$0xff]
        %v766 = vld [vmem:[%s236 + $0xc90] sm:$0xff]
        %v767 = vld [vmem:[%s236 + $0xc98] sm:$0xff]
        %v768 = vld [vmem:[%s236 + $0xca0] sm:$0xff]
        %v769 = vld [vmem:[%s236 + $0xca8] sm:$0xff]
        %v770 = vld [vmem:[%s236 + $0xcb0] sm:$0xff]
        %v771 = vld [vmem:[%s236 + $0xcb8] sm:$0xff]
        %v772 = vld [vmem:[%s236 + $0xcc0] sm:$0xff]
        %v773 = vld [vmem:[%s236 + $0xcc8] sm:$0xff]
        %v774 = vld [vmem:[%s236 + $0xcd0] sm:$0xff]
        %v775 = vld [vmem:[%s236 + $0xcd8] sm:$0xff]
        %v776 = vld [vmem:[%s236 + $0xce0] sm:$0xff]
        %v777 = vld [vmem:[%s236 + $0xce8] sm:$0xff]
        %v778 = vld [vmem:[%s236 + $0xcf0] sm:$0xff]
        %v779 = vld [vmem:[%s236 + $0xcf8] sm:$0xff]
        %v780 = vld [vmem:[%s236 + $0xd00] sm:$0xff]
        %v781 = vld [vmem:[%s236 + $0xd08] sm:$0xff]
        %v782 = vld [vmem:[%s236 + $0xd10] sm:$0xff]
        %v783 = vld [vmem:[%s236 + $0xd18] sm:$0xff]
        %v784 = vld [vmem:[%s236 + $0xd20] sm:$0xff]
        %v785 = vld [vmem:[%s236 + $0xd28] sm:$0xff]
        %v786 = vld [vmem:[%s236 + $0xd30] sm:$0xff]
        %v787 = vld [vmem:[%s236 + $0xd38] sm:$0xff]
        %v788 = vld [vmem:[%s236 + $0xd40] sm:$0xff]
        %v789 = vld [vmem:[%s236 + $0xd48] sm:$0xff]
        %v790 = vld [vmem:[%s236 + $0xd50] sm:$0xff]
        %v791 = vld [vmem:[%s236 + $0xd58] sm:$0xff]
        %v792 = vld [vmem:[%s236 + $0xd60] sm:$0xff]
        %v793 = vld [vmem:[%s236 + $0xd68] sm:$0xff]
        %v794 = vld [vmem:[%s236 + $0xd70] sm:$0xff]
        %v795 = vld [vmem:[%s236 + $0xd78] sm:$0xff]
        %v796 = vld [vmem:[%s236 + $0xd80] sm:$0xff]
        %v797 = vld [vmem:[%s236 + $0xd88] sm:$0xff]
        %v798 = vld [vmem:[%s236 + $0xd90] sm:$0xff]
        %v799 = vld [vmem:[%s236 + $0xd98] sm:$0xff]
        %v800 = vld [vmem:[%s236 + $0xda0] sm:$0xff]
        %v801 = vld [vmem:[%s236 + $0xda8] sm:$0xff]
        %v802 = vld [vmem:[%s236 + $0xdb0] sm:$0xff]
        %v803 = vld [vmem:[%s236 + $0xdb8] sm:$0xff]
        %v804 = vld [vmem:[%s236 + $0xdc0] sm:$0xff]
        %v805 = vld [vmem:[%s236 + $0xdc8] sm:$0xff]
        %v806 = vld [vmem:[%s236 + $0xdd0] sm:$0xff]
        %v807 = vld [vmem:[%s236 + $0xdd8] sm:$0xff]
        %v808 = vld [vmem:[%s236 + $0xde0] sm:$0xff]
        %v809 = vld [vmem:[%s236 + $0xde8] sm:$0xff]
        %v810 = vld [vmem:[%s236 + $0xdf0] sm:$0xff]
        %v811 = vld [vmem:[%s236 + $0xdf8] sm:$0xff]
        %v812 = vld [vmem:[%s236 + $0xe00] sm:$0xff]
        %v813 = vld [vmem:[%s236 + $0xe08] sm:$0xff]
        %v814 = vld [vmem:[%s236 + $0xe10] sm:$0xff]
        %v815 = vld [vmem:[%s236 + $0xe18] sm:$0xff]
        %v816 = vld [vmem:[%s236 + $0xe20] sm:$0xff]
        %v817 = vld [vmem:[%s236 + $0xe28] sm:$0xff]
        %v818 = vld [vmem:[%s236 + $0xe30] sm:$0xff]
        %v819 = vld [vmem:[%s236 + $0xe38] sm:$0xff]
        %v820 = vld [vmem:[%s236 + $0xe40] sm:$0xff]
        %v821 = vld [vmem:[%s236 + $0xe48] sm:$0xff]
        %v822 = vld [vmem:[%s236 + $0xe50] sm:$0xff]
        %v823 = vld [vmem:[%s236 + $0xe58] sm:$0xff]
        %v824 = vld [vmem:[%s236 + $0xe60] sm:$0xff]
        %v825 = vld [vmem:[%s236 + $0xe68] sm:$0xff]
        %v826 = vld [vmem:[%s236 + $0xe70] sm:$0xff]
        %v827 = vld [vmem:[%s236 + $0xe78] sm:$0xff]
        %v828 = vld [vmem:[%s236 + $0xe80] sm:$0xff]
        %v829 = vld [vmem:[%s236 + $0xe88] sm:$0xff]
        %v830 = vld [vmem:[%s236 + $0xe90] sm:$0xff]
        %v831 = vld [vmem:[%s236 + $0xe98] sm:$0xff]
        %v832 = vld [vmem:[%s236 + $0xea0] sm:$0xff]
        %v833 = vld [vmem:[%s236 + $0xea8] sm:$0xff]
        %v834 = vld [vmem:[%s236 + $0xeb0] sm:$0xff]
        %v835 = vld [vmem:[%s236 + $0xeb8] sm:$0xff]
        %v836 = vld [vmem:[%s236 + $0xec0] sm:$0xff]
        %v837 = vld [vmem:[%s236 + $0xec8] sm:$0xff]
        %v838 = vld [vmem:[%s236 + $0xed0] sm:$0xff]
        %v839 = vld [vmem:[%s236 + $0xed8] sm:$0xff]
        %v840 = vld [vmem:[%s236 + $0xee0] sm:$0xff]
        %v841 = vld [vmem:[%s236 + $0xee8] sm:$0xff]
        %v842 = vld [vmem:[%s236 + $0xef0] sm:$0xff]
        %v843 = vld [vmem:[%s236 + $0xef8] sm:$0xff]
        %v844 = vld [vmem:[%s236 + $0xf00] sm:$0xff]
        %v845 = vld [vmem:[%s236 + $0xf08] sm:$0xff]
        %v846 = vld [vmem:[%s236 + $0xf10] sm:$0xff]
        %v847 = vld [vmem:[%s236 + $0xf18] sm:$0xff]
        %v848 = vld [vmem:[%s236 + $0xf20] sm:$0xff]
        %v849 = vld [vmem:[%s236 + $0xf28] sm:$0xff]
        %v850 = vld [vmem:[%s236 + $0xf30] sm:$0xff]
        %v851 = vld [vmem:[%s236 + $0xf38] sm:$0xff]
        %v852 = vld [vmem:[%s236 + $0xf40] sm:$0xff]
        %v853 = vld [vmem:[%s236 + $0xf48] sm:$0xff]
        %v854 = vld [vmem:[%s236 + $0xf50] sm:$0xff]
        %v855 = vld [vmem:[%s236 + $0xf58] sm:$0xff]
        %v856 = vld [vmem:[%s236 + $0xf60] sm:$0xff]
        %v857 = vld [vmem:[%s236 + $0xf68] sm:$0xff]
        %v858 = vld [vmem:[%s236 + $0xf70] sm:$0xff]
        %v859 = vld [vmem:[%s236 + $0xf78] sm:$0xff]
        %v860 = vld [vmem:[%s236 + $0xf80] sm:$0xff]
        %v861 = vld [vmem:[%s236 + $0xf88] sm:$0xff]
        %v862 = vld [vmem:[%s236 + $0xf90] sm:$0xff]
        %v863 = vld [vmem:[%s236 + $0xf98] sm:$0xff]
        %v864 = vld [vmem:[%s236 + $0xfa0] sm:$0xff]
        %v865 = vld [vmem:[%s236 + $0xfa8] sm:$0xff]
        %v866 = vld [vmem:[%s236 + $0xfb0] sm:$0xff]
        %v867 = vld [vmem:[%s236 + $0xfb8] sm:$0xff]
        %v868 = vld [vmem:[%s236 + $0xfc0] sm:$0xff]
        %v869 = vld [vmem:[%s236 + $0xfc8] sm:$0xff]
        %v870 = vld [vmem:[%s236 + $0xfd0] sm:$0xff]
        %v871 = vld [vmem:[%s236 + $0xfd8] sm:$0xff]
        %v872 = vld [vmem:[%s236 + $0xfe0] sm:$0xff]
        %v873 = vld [vmem:[%s236 + $0xfe8] sm:$0xff]
        %v874 = vld [vmem:[%s236 + $0xff0] sm:$0xff]
        %v875 = vld [vmem:[%s236 + $0xff8] sm:$0xff]
        %v1388 = vunpack.c.l.b16 %v364
        %v1389 = vunpack.c.h.b16 %v364
        %v1390 = vunpack.c.l.b16 %v365
        %v1391 = vunpack.c.h.b16 %v365
        %v1392 = vunpack.c.l.b16 %v366
        %v1393 = vunpack.c.h.b16 %v366
        %v1394 = vunpack.c.l.b16 %v367
        %v1395 = vunpack.c.h.b16 %v367
        %v1396 = vunpack.c.l.b16 %v368
        %v1397 = vunpack.c.h.b16 %v368
        %v1398 = vunpack.c.l.b16 %v369
        %v1399 = vunpack.c.h.b16 %v369
        %v1400 = vunpack.c.l.b16 %v370
        %v1401 = vunpack.c.h.b16 %v370
        %v1402 = vunpack.c.l.b16 %v371
        %v1403 = vunpack.c.h.b16 %v371
        %v1404 = vunpack.c.l.b16 %v372
        %v1405 = vunpack.c.h.b16 %v372
        %v1406 = vunpack.c.l.b16 %v373
        %v1407 = vunpack.c.h.b16 %v373
        %v1408 = vunpack.c.l.b16 %v374
        %v1409 = vunpack.c.h.b16 %v374
        %v1410 = vunpack.c.l.b16 %v375
        %v1411 = vunpack.c.h.b16 %v375
        %v1412 = vunpack.c.l.b16 %v376
        %v1413 = vunpack.c.h.b16 %v376
        %v1414 = vunpack.c.l.b16 %v377
        %v1415 = vunpack.c.h.b16 %v377
        %v1416 = vunpack.c.l.b16 %v378
        %v1417 = vunpack.c.h.b16 %v378
        %v1418 = vunpack.c.l.b16 %v379
        %v1419 = vunpack.c.h.b16 %v379
        %v1420 = vunpack.c.l.b16 %v380
        %v1421 = vunpack.c.h.b16 %v380
        %v1422 = vunpack.c.l.b16 %v381
        %v1423 = vunpack.c.h.b16 %v381
        %v1424 = vunpack.c.l.b16 %v382
        %v1425 = vunpack.c.h.b16 %v382
        %v1426 = vunpack.c.l.b16 %v383
        %v1427 = vunpack.c.h.b16 %v383
        %v1428 = vunpack.c.l.b16 %v384
        %v1429 = vunpack.c.h.b16 %v384
        %v1430 = vunpack.c.l.b16 %v385
        %v1431 = vunpack.c.h.b16 %v385
        %v1432 = vunpack.c.l.b16 %v386
        %v1433 = vunpack.c.h.b16 %v386
        %v1434 = vunpack.c.l.b16 %v387
        %v1435 = vunpack.c.h.b16 %v387
        %v1436 = vunpack.c.l.b16 %v388
        %v1437 = vunpack.c.h.b16 %v388
        %v1438 = vunpack.c.l.b16 %v389
        %v1439 = vunpack.c.h.b16 %v389
        %v1440 = vunpack.c.l.b16 %v390
        %v1441 = vunpack.c.h.b16 %v390
        %v1442 = vunpack.c.l.b16 %v391
        %v1443 = vunpack.c.h.b16 %v391
        %v1444 = vunpack.c.l.b16 %v392
        %v1445 = vunpack.c.h.b16 %v392
        %v1446 = vunpack.c.l.b16 %v393
        %v1447 = vunpack.c.h.b16 %v393
        %v1448 = vunpack.c.l.b16 %v394
        %v1449 = vunpack.c.h.b16 %v394
        %v1450 = vunpack.c.l.b16 %v395
        %v1451 = vunpack.c.h.b16 %v395
        %v1452 = vunpack.c.l.b16 %v396
        %v1453 = vunpack.c.h.b16 %v396
        %v1454 = vunpack.c.l.b16 %v397
        %v1455 = vunpack.c.h.b16 %v397
        %v1456 = vunpack.c.l.b16 %v398
        %v1457 = vunpack.c.h.b16 %v398
        %v1458 = vunpack.c.l.b16 %v399
        %v1459 = vunpack.c.h.b16 %v399
        %v1460 = vunpack.c.l.b16 %v400
        %v1461 = vunpack.c.h.b16 %v400
        %v1462 = vunpack.c.l.b16 %v401
        %v1463 = vunpack.c.h.b16 %v401
        %v1464 = vunpack.c.l.b16 %v402
        %v1465 = vunpack.c.h.b16 %v402
        %v1466 = vunpack.c.l.b16 %v403
        %v1467 = vunpack.c.h.b16 %v403
        %v1468 = vunpack.c.l.b16 %v404
        %v1469 = vunpack.c.h.b16 %v404
        %v1470 = vunpack.c.l.b16 %v405
        %v1471 = vunpack.c.h.b16 %v405
        %v1472 = vunpack.c.l.b16 %v406
        %v1473 = vunpack.c.h.b16 %v406
        %v1474 = vunpack.c.l.b16 %v407
        %v1475 = vunpack.c.h.b16 %v407
        %v1476 = vunpack.c.l.b16 %v408
        %v1477 = vunpack.c.h.b16 %v408
        %v1478 = vunpack.c.l.b16 %v409
        %v1479 = vunpack.c.h.b16 %v409
        %v1480 = vunpack.c.l.b16 %v410
        %v1481 = vunpack.c.h.b16 %v410
        %v1482 = vunpack.c.l.b16 %v411
        %v1483 = vunpack.c.h.b16 %v411
        %v1484 = vunpack.c.l.b16 %v412
        %v1485 = vunpack.c.h.b16 %v412
        %v1486 = vunpack.c.l.b16 %v413
        %v1487 = vunpack.c.h.b16 %v413
        %v1488 = vunpack.c.l.b16 %v414
        %v1489 = vunpack.c.h.b16 %v414
        %v1490 = vunpack.c.l.b16 %v415
        %v1491 = vunpack.c.h.b16 %v415
        %v1492 = vunpack.c.l.b16 %v416
        %v1493 = vunpack.c.h.b16 %v416
        %v1494 = vunpack.c.l.b16 %v417
        %v1495 = vunpack.c.h.b16 %v417
        %v1496 = vunpack.c.l.b16 %v418
        %v1497 = vunpack.c.h.b16 %v418
        %v1498 = vunpack.c.l.b16 %v419
        %v1499 = vunpack.c.h.b16 %v419
        %v1500 = vunpack.c.l.b16 %v420
        %v1501 = vunpack.c.h.b16 %v420
        %v1502 = vunpack.c.l.b16 %v421
        %v1503 = vunpack.c.h.b16 %v421
        %v1504 = vunpack.c.l.b16 %v422
        %v1505 = vunpack.c.h.b16 %v422
        %v1506 = vunpack.c.l.b16 %v423
        %v1507 = vunpack.c.h.b16 %v423
        %v1508 = vunpack.c.l.b16 %v424
        %v1509 = vunpack.c.h.b16 %v424
        %v1510 = vunpack.c.l.b16 %v425
        %v1511 = vunpack.c.h.b16 %v425
        %v1512 = vunpack.c.l.b16 %v426
        %v1513 = vunpack.c.h.b16 %v426
        %v1514 = vunpack.c.l.b16 %v427
        %v1515 = vunpack.c.h.b16 %v427
        %v1516 = vunpack.c.l.b16 %v428
        %v1517 = vunpack.c.h.b16 %v428
        %v1518 = vunpack.c.l.b16 %v429
        %v1519 = vunpack.c.h.b16 %v429
        %v1520 = vunpack.c.l.b16 %v430
        %v1521 = vunpack.c.h.b16 %v430
        %v1522 = vunpack.c.l.b16 %v431
        %v1523 = vunpack.c.h.b16 %v431
        %v1524 = vunpack.c.l.b16 %v432
        %v1525 = vunpack.c.h.b16 %v432
        %v1526 = vunpack.c.l.b16 %v433
        %v1527 = vunpack.c.h.b16 %v433
        %v1528 = vunpack.c.l.b16 %v434
        %v1529 = vunpack.c.h.b16 %v434
        %v1530 = vunpack.c.l.b16 %v435
        %v1531 = vunpack.c.h.b16 %v435
        %v1532 = vunpack.c.l.b16 %v436
        %v1533 = vunpack.c.h.b16 %v436
        %v1534 = vunpack.c.l.b16 %v437
        %v1535 = vunpack.c.h.b16 %v437
        %v1536 = vunpack.c.l.b16 %v438
        %v1537 = vunpack.c.h.b16 %v438
        %v1538 = vunpack.c.l.b16 %v439
        %v1539 = vunpack.c.h.b16 %v439
        %v1540 = vunpack.c.l.b16 %v440
        %v1541 = vunpack.c.h.b16 %v440
        %v1542 = vunpack.c.l.b16 %v441
        %v1543 = vunpack.c.h.b16 %v441
        %v1544 = vunpack.c.l.b16 %v442
        %v1545 = vunpack.c.h.b16 %v442
        %v1546 = vunpack.c.l.b16 %v443
        %v1547 = vunpack.c.h.b16 %v443
        %v1548 = vunpack.c.l.b16 %v444
        %v1549 = vunpack.c.h.b16 %v444
        %v1550 = vunpack.c.l.b16 %v445
        %v1551 = vunpack.c.h.b16 %v445
        %v1552 = vunpack.c.l.b16 %v446
        %v1553 = vunpack.c.h.b16 %v446
        %v1554 = vunpack.c.l.b16 %v447
        %v1555 = vunpack.c.h.b16 %v447
        %v1556 = vunpack.c.l.b16 %v448
        %v1557 = vunpack.c.h.b16 %v448
        %v1558 = vunpack.c.l.b16 %v449
        %v1559 = vunpack.c.h.b16 %v449
        %v1560 = vunpack.c.l.b16 %v450
        %v1561 = vunpack.c.h.b16 %v450
        %v1562 = vunpack.c.l.b16 %v451
        %v1563 = vunpack.c.h.b16 %v451
        %v1564 = vunpack.c.l.b16 %v452
        %v1565 = vunpack.c.h.b16 %v452
        %v1566 = vunpack.c.l.b16 %v453
        %v1567 = vunpack.c.h.b16 %v453
        %v1568 = vunpack.c.l.b16 %v454
        %v1569 = vunpack.c.h.b16 %v454
        %v1570 = vunpack.c.l.b16 %v455
        %v1571 = vunpack.c.h.b16 %v455
        %v1572 = vunpack.c.l.b16 %v456
        %v1573 = vunpack.c.h.b16 %v456
        %v1574 = vunpack.c.l.b16 %v457
        %v1575 = vunpack.c.h.b16 %v457
        %v1576 = vunpack.c.l.b16 %v458
        %v1577 = vunpack.c.h.b16 %v458
        %v1578 = vunpack.c.l.b16 %v459
        %v1579 = vunpack.c.h.b16 %v459
        %v1580 = vunpack.c.l.b16 %v460
        %v1581 = vunpack.c.h.b16 %v460
        %v1582 = vunpack.c.l.b16 %v461
        %v1583 = vunpack.c.h.b16 %v461
        %v1584 = vunpack.c.l.b16 %v462
        %v1585 = vunpack.c.h.b16 %v462
        %v1586 = vunpack.c.l.b16 %v463
        %v1587 = vunpack.c.h.b16 %v463
        %v1588 = vunpack.c.l.b16 %v464
        %v1589 = vunpack.c.h.b16 %v464
        %v1590 = vunpack.c.l.b16 %v465
        %v1591 = vunpack.c.h.b16 %v465
        %v1592 = vunpack.c.l.b16 %v466
        %v1593 = vunpack.c.h.b16 %v466
        %v1594 = vunpack.c.l.b16 %v467
        %v1595 = vunpack.c.h.b16 %v467
        %v1596 = vunpack.c.l.b16 %v468
        %v1597 = vunpack.c.h.b16 %v468
        %v1598 = vunpack.c.l.b16 %v469
        %v1599 = vunpack.c.h.b16 %v469
        %v1600 = vunpack.c.l.b16 %v470
        %v1601 = vunpack.c.h.b16 %v470
        %v1602 = vunpack.c.l.b16 %v471
        %v1603 = vunpack.c.h.b16 %v471
        %v1604 = vunpack.c.l.b16 %v472
        %v1605 = vunpack.c.h.b16 %v472
        %v1606 = vunpack.c.l.b16 %v473
        %v1607 = vunpack.c.h.b16 %v473
        %v1608 = vunpack.c.l.b16 %v474
        %v1609 = vunpack.c.h.b16 %v474
        %v1610 = vunpack.c.l.b16 %v475
        %v1611 = vunpack.c.h.b16 %v475
        %v1612 = vunpack.c.l.b16 %v476
        %v1613 = vunpack.c.h.b16 %v476
        %v1614 = vunpack.c.l.b16 %v477
        %v1615 = vunpack.c.h.b16 %v477
        %v1616 = vunpack.c.l.b16 %v478
        %v1617 = vunpack.c.h.b16 %v478
        %v1618 = vunpack.c.l.b16 %v479
        %v1619 = vunpack.c.h.b16 %v479
        %v1620 = vunpack.c.l.b16 %v480
        %v1621 = vunpack.c.h.b16 %v480
        %v1622 = vunpack.c.l.b16 %v481
        %v1623 = vunpack.c.h.b16 %v481
        %v1624 = vunpack.c.l.b16 %v482
        %v1625 = vunpack.c.h.b16 %v482
        %v1626 = vunpack.c.l.b16 %v483
        %v1627 = vunpack.c.h.b16 %v483
        %v1628 = vunpack.c.l.b16 %v484
        %v1629 = vunpack.c.h.b16 %v484
        %v1630 = vunpack.c.l.b16 %v485
        %v1631 = vunpack.c.h.b16 %v485
        %v1632 = vunpack.c.l.b16 %v486
        %v1633 = vunpack.c.h.b16 %v486
        %v1634 = vunpack.c.l.b16 %v487
        %v1635 = vunpack.c.h.b16 %v487
        %v1636 = vunpack.c.l.b16 %v488
        %v1637 = vunpack.c.h.b16 %v488
        %v1638 = vunpack.c.l.b16 %v489
        %v1639 = vunpack.c.h.b16 %v489
        %v1640 = vunpack.c.l.b16 %v490
        %v1641 = vunpack.c.h.b16 %v490
        %v1642 = vunpack.c.l.b16 %v491
        %v1643 = vunpack.c.h.b16 %v491
        %v1644 = vunpack.c.l.b16 %v492
        %v1645 = vunpack.c.h.b16 %v492
        %v1646 = vunpack.c.l.b16 %v493
        %v1647 = vunpack.c.h.b16 %v493
        %v1648 = vunpack.c.l.b16 %v494
        %v1649 = vunpack.c.h.b16 %v494
        %v1650 = vunpack.c.l.b16 %v495
        %v1651 = vunpack.c.h.b16 %v495
        %v1652 = vunpack.c.l.b16 %v496
        %v1653 = vunpack.c.h.b16 %v496
        %v1654 = vunpack.c.l.b16 %v497
        %v1655 = vunpack.c.h.b16 %v497
        %v1656 = vunpack.c.l.b16 %v498
        %v1657 = vunpack.c.h.b16 %v498
        %v1658 = vunpack.c.l.b16 %v499
        %v1659 = vunpack.c.h.b16 %v499
        %v1660 = vunpack.c.l.b16 %v500
        %v1661 = vunpack.c.h.b16 %v500
        %v1662 = vunpack.c.l.b16 %v501
        %v1663 = vunpack.c.h.b16 %v501
        %v1664 = vunpack.c.l.b16 %v502
        %v1665 = vunpack.c.h.b16 %v502
        %v1666 = vunpack.c.l.b16 %v503
        %v1667 = vunpack.c.h.b16 %v503
        %v1668 = vunpack.c.l.b16 %v504
        %v1669 = vunpack.c.h.b16 %v504
        %v1670 = vunpack.c.l.b16 %v505
        %v1671 = vunpack.c.h.b16 %v505
        %v1672 = vunpack.c.l.b16 %v506
        %v1673 = vunpack.c.h.b16 %v506
        %v1674 = vunpack.c.l.b16 %v507
        %v1675 = vunpack.c.h.b16 %v507
        %v1676 = vunpack.c.l.b16 %v508
        %v1677 = vunpack.c.h.b16 %v508
        %v1678 = vunpack.c.l.b16 %v509
        %v1679 = vunpack.c.h.b16 %v509
        %v1680 = vunpack.c.l.b16 %v510
        %v1681 = vunpack.c.h.b16 %v510
        %v1682 = vunpack.c.l.b16 %v511
        %v1683 = vunpack.c.h.b16 %v511
        %v1684 = vunpack.c.l.b16 %v512
        %v1685 = vunpack.c.h.b16 %v512
        %v1686 = vunpack.c.l.b16 %v513
        %v1687 = vunpack.c.h.b16 %v513
        %v1688 = vunpack.c.l.b16 %v514
        %v1689 = vunpack.c.h.b16 %v514
        %v1690 = vunpack.c.l.b16 %v515
        %v1691 = vunpack.c.h.b16 %v515
        %v1692 = vunpack.c.l.b16 %v516
        %v1693 = vunpack.c.h.b16 %v516
        %v1694 = vunpack.c.l.b16 %v517
        %v1695 = vunpack.c.h.b16 %v517
        %v1696 = vunpack.c.l.b16 %v518
        %v1697 = vunpack.c.h.b16 %v518
        %v1698 = vunpack.c.l.b16 %v519
        %v1699 = vunpack.c.h.b16 %v519
        %v1700 = vunpack.c.l.b16 %v520
        %v1701 = vunpack.c.h.b16 %v520
        %v1702 = vunpack.c.l.b16 %v521
        %v1703 = vunpack.c.h.b16 %v521
        %v1704 = vunpack.c.l.b16 %v522
        %v1705 = vunpack.c.h.b16 %v522
        %v1706 = vunpack.c.l.b16 %v523
        %v1707 = vunpack.c.h.b16 %v523
        %v1708 = vunpack.c.l.b16 %v524
        %v1709 = vunpack.c.h.b16 %v524
        %v1710 = vunpack.c.l.b16 %v525
        %v1711 = vunpack.c.h.b16 %v525
        %v1712 = vunpack.c.l.b16 %v526
        %v1713 = vunpack.c.h.b16 %v526
        %v1714 = vunpack.c.l.b16 %v527
        %v1715 = vunpack.c.h.b16 %v527
        %v1716 = vunpack.c.l.b16 %v528
        %v1717 = vunpack.c.h.b16 %v528
        %v1718 = vunpack.c.l.b16 %v529
        %v1719 = vunpack.c.h.b16 %v529
        %v1720 = vunpack.c.l.b16 %v530
        %v1721 = vunpack.c.h.b16 %v530
        %v1722 = vunpack.c.l.b16 %v531
        %v1723 = vunpack.c.h.b16 %v531
        %v1724 = vunpack.c.l.b16 %v532
        %v1725 = vunpack.c.h.b16 %v532
        %v1726 = vunpack.c.l.b16 %v533
        %v1727 = vunpack.c.h.b16 %v533
        %v1728 = vunpack.c.l.b16 %v534
        %v1729 = vunpack.c.h.b16 %v534
        %v1730 = vunpack.c.l.b16 %v535
        %v1731 = vunpack.c.h.b16 %v535
        %v1732 = vunpack.c.l.b16 %v536
        %v1733 = vunpack.c.h.b16 %v536
        %v1734 = vunpack.c.l.b16 %v537
        %v1735 = vunpack.c.h.b16 %v537
        %v1736 = vunpack.c.l.b16 %v538
        %v1737 = vunpack.c.h.b16 %v538
        %v1738 = vunpack.c.l.b16 %v539
        %v1739 = vunpack.c.h.b16 %v539
        %v1740 = vunpack.c.l.b16 %v540
        %v1741 = vunpack.c.h.b16 %v540
        %v1742 = vunpack.c.l.b16 %v541
        %v1743 = vunpack.c.h.b16 %v541
        %v1744 = vunpack.c.l.b16 %v542
        %v1745 = vunpack.c.h.b16 %v542
        %v1746 = vunpack.c.l.b16 %v543
        %v1747 = vunpack.c.h.b16 %v543
        %v1748 = vunpack.c.l.b16 %v544
        %v1749 = vunpack.c.h.b16 %v544
        %v1750 = vunpack.c.l.b16 %v545
        %v1751 = vunpack.c.h.b16 %v545
        %v1752 = vunpack.c.l.b16 %v546
        %v1753 = vunpack.c.h.b16 %v546
        %v1754 = vunpack.c.l.b16 %v547
        %v1755 = vunpack.c.h.b16 %v547
        %v1756 = vunpack.c.l.b16 %v548
        %v1757 = vunpack.c.h.b16 %v548
        %v1758 = vunpack.c.l.b16 %v549
        %v1759 = vunpack.c.h.b16 %v549
        %v1760 = vunpack.c.l.b16 %v550
        %v1761 = vunpack.c.h.b16 %v550
        %v1762 = vunpack.c.l.b16 %v551
        %v1763 = vunpack.c.h.b16 %v551
        %v1764 = vunpack.c.l.b16 %v552
        %v1765 = vunpack.c.h.b16 %v552
        %v1766 = vunpack.c.l.b16 %v553
        %v1767 = vunpack.c.h.b16 %v553
        %v1768 = vunpack.c.l.b16 %v554
        %v1769 = vunpack.c.h.b16 %v554
        %v1770 = vunpack.c.l.b16 %v555
        %v1771 = vunpack.c.h.b16 %v555
        %v1772 = vunpack.c.l.b16 %v556
        %v1773 = vunpack.c.h.b16 %v556
        %v1774 = vunpack.c.l.b16 %v557
        %v1775 = vunpack.c.h.b16 %v557
        %v1776 = vunpack.c.l.b16 %v558
        %v1777 = vunpack.c.h.b16 %v558
        %v1778 = vunpack.c.l.b16 %v559
        %v1779 = vunpack.c.h.b16 %v559
        %v1780 = vunpack.c.l.b16 %v560
        %v1781 = vunpack.c.h.b16 %v560
        %v1782 = vunpack.c.l.b16 %v561
        %v1783 = vunpack.c.h.b16 %v561
        %v1784 = vunpack.c.l.b16 %v562
        %v1785 = vunpack.c.h.b16 %v562
        %v1786 = vunpack.c.l.b16 %v563
        %v1787 = vunpack.c.h.b16 %v563
        %v1788 = vunpack.c.l.b16 %v564
        %v1789 = vunpack.c.h.b16 %v564
        %v1790 = vunpack.c.l.b16 %v565
        %v1791 = vunpack.c.h.b16 %v565
        %v1792 = vunpack.c.l.b16 %v566
        %v1793 = vunpack.c.h.b16 %v566
        %v1794 = vunpack.c.l.b16 %v567
        %v1795 = vunpack.c.h.b16 %v567
        %v1796 = vunpack.c.l.b16 %v568
        %v1797 = vunpack.c.h.b16 %v568
        %v1798 = vunpack.c.l.b16 %v569
        %v1799 = vunpack.c.h.b16 %v569
        %v1800 = vunpack.c.l.b16 %v570
        %v1801 = vunpack.c.h.b16 %v570
        %v1802 = vunpack.c.l.b16 %v571
        %v1803 = vunpack.c.h.b16 %v571
        %v1804 = vunpack.c.l.b16 %v572
        %v1805 = vunpack.c.h.b16 %v572
        %v1806 = vunpack.c.l.b16 %v573
        %v1807 = vunpack.c.h.b16 %v573
        %v1808 = vunpack.c.l.b16 %v574
        %v1809 = vunpack.c.h.b16 %v574
        %v1810 = vunpack.c.l.b16 %v575
        %v1811 = vunpack.c.h.b16 %v575
        %v1812 = vunpack.c.l.b16 %v576
        %v1813 = vunpack.c.h.b16 %v576
        %v1814 = vunpack.c.l.b16 %v577
        %v1815 = vunpack.c.h.b16 %v577
        %v1816 = vunpack.c.l.b16 %v578
        %v1817 = vunpack.c.h.b16 %v578
        %v1818 = vunpack.c.l.b16 %v579
        %v1819 = vunpack.c.h.b16 %v579
        %v1820 = vunpack.c.l.b16 %v580
        %v1821 = vunpack.c.h.b16 %v580
        %v1822 = vunpack.c.l.b16 %v581
        %v1823 = vunpack.c.h.b16 %v581
        %v1824 = vunpack.c.l.b16 %v582
        %v1825 = vunpack.c.h.b16 %v582
        %v1826 = vunpack.c.l.b16 %v583
        %v1827 = vunpack.c.h.b16 %v583
        %v1828 = vunpack.c.l.b16 %v584
        %v1829 = vunpack.c.h.b16 %v584
        %v1830 = vunpack.c.l.b16 %v585
        %v1831 = vunpack.c.h.b16 %v585
        %v1832 = vunpack.c.l.b16 %v586
        %v1833 = vunpack.c.h.b16 %v586
        %v1834 = vunpack.c.l.b16 %v587
        %v1835 = vunpack.c.h.b16 %v587
        %v1836 = vunpack.c.l.b16 %v588
        %v1837 = vunpack.c.h.b16 %v588
        %v1838 = vunpack.c.l.b16 %v589
        %v1839 = vunpack.c.h.b16 %v589
        %v1840 = vunpack.c.l.b16 %v590
        %v1841 = vunpack.c.h.b16 %v590
        %v1842 = vunpack.c.l.b16 %v591
        %v1843 = vunpack.c.h.b16 %v591
        %v1844 = vunpack.c.l.b16 %v592
        %v1845 = vunpack.c.h.b16 %v592
        %v1846 = vunpack.c.l.b16 %v593
        %v1847 = vunpack.c.h.b16 %v593
        %v1848 = vunpack.c.l.b16 %v594
        %v1849 = vunpack.c.h.b16 %v594
        %v1850 = vunpack.c.l.b16 %v595
        %v1851 = vunpack.c.h.b16 %v595
        %v1852 = vunpack.c.l.b16 %v596
        %v1853 = vunpack.c.h.b16 %v596
        %v1854 = vunpack.c.l.b16 %v597
        %v1855 = vunpack.c.h.b16 %v597
        %v1856 = vunpack.c.l.b16 %v598
        %v1857 = vunpack.c.h.b16 %v598
        %v1858 = vunpack.c.l.b16 %v599
        %v1859 = vunpack.c.h.b16 %v599
        %v1860 = vunpack.c.l.b16 %v600
        %v1861 = vunpack.c.h.b16 %v600
        %v1862 = vunpack.c.l.b16 %v601
        %v1863 = vunpack.c.h.b16 %v601
        %v1864 = vunpack.c.l.b16 %v602
        %v1865 = vunpack.c.h.b16 %v602
        %v1866 = vunpack.c.l.b16 %v603
        %v1867 = vunpack.c.h.b16 %v603
        %v1868 = vunpack.c.l.b16 %v604
        %v1869 = vunpack.c.h.b16 %v604
        %v1870 = vunpack.c.l.b16 %v605
        %v1871 = vunpack.c.h.b16 %v605
        %v1872 = vunpack.c.l.b16 %v606
        %v1873 = vunpack.c.h.b16 %v606
        %v1874 = vunpack.c.l.b16 %v607
        %v1875 = vunpack.c.h.b16 %v607
        %v1876 = vunpack.c.l.b16 %v608
        %v1877 = vunpack.c.h.b16 %v608
        %v1878 = vunpack.c.l.b16 %v609
        %v1879 = vunpack.c.h.b16 %v609
        %v1880 = vunpack.c.l.b16 %v610
        %v1881 = vunpack.c.h.b16 %v610
        %v1882 = vunpack.c.l.b16 %v611
        %v1883 = vunpack.c.h.b16 %v611
        %v1884 = vunpack.c.l.b16 %v612
        %v1885 = vunpack.c.h.b16 %v612
        %v1886 = vunpack.c.l.b16 %v613
        %v1887 = vunpack.c.h.b16 %v613
        %v1888 = vunpack.c.l.b16 %v614
        %v1889 = vunpack.c.h.b16 %v614
        %v1890 = vunpack.c.l.b16 %v615
        %v1891 = vunpack.c.h.b16 %v615
        %v1892 = vunpack.c.l.b16 %v616
        %v1893 = vunpack.c.h.b16 %v616
        %v1894 = vunpack.c.l.b16 %v617
        %v1895 = vunpack.c.h.b16 %v617
        %v1896 = vunpack.c.l.b16 %v618
        %v1897 = vunpack.c.h.b16 %v618
        %v1898 = vunpack.c.l.b16 %v619
        %v1899 = vunpack.c.h.b16 %v619
        %v1900 = vunpack.c.l.b16 %v620
        %v1901 = vunpack.c.h.b16 %v620
        %v1902 = vunpack.c.l.b16 %v621
        %v1903 = vunpack.c.h.b16 %v621
        %v1904 = vunpack.c.l.b16 %v622
        %v1905 = vunpack.c.h.b16 %v622
        %v1906 = vunpack.c.l.b16 %v623
        %v1907 = vunpack.c.h.b16 %v623
        %v1908 = vunpack.c.l.b16 %v624
        %v1909 = vunpack.c.h.b16 %v624
        %v1910 = vunpack.c.l.b16 %v625
        %v1911 = vunpack.c.h.b16 %v625
        %v1912 = vunpack.c.l.b16 %v626
        %v1913 = vunpack.c.h.b16 %v626
        %v1914 = vunpack.c.l.b16 %v627
        %v1915 = vunpack.c.h.b16 %v627
        %v1916 = vunpack.c.l.b16 %v628
        %v1917 = vunpack.c.h.b16 %v628
        %v1918 = vunpack.c.l.b16 %v629
        %v1919 = vunpack.c.h.b16 %v629
        %v1920 = vunpack.c.l.b16 %v630
        %v1921 = vunpack.c.h.b16 %v630
        %v1922 = vunpack.c.l.b16 %v631
        %v1923 = vunpack.c.h.b16 %v631
        %v1924 = vunpack.c.l.b16 %v632
        %v1925 = vunpack.c.h.b16 %v632
        %v1926 = vunpack.c.l.b16 %v633
        %v1927 = vunpack.c.h.b16 %v633
        %v1928 = vunpack.c.l.b16 %v634
        %v1929 = vunpack.c.h.b16 %v634
        %v1930 = vunpack.c.l.b16 %v635
        %v1931 = vunpack.c.h.b16 %v635
        %v1932 = vunpack.c.l.b16 %v636
        %v1933 = vunpack.c.h.b16 %v636
        %v1934 = vunpack.c.l.b16 %v637
        %v1935 = vunpack.c.h.b16 %v637
        %v1936 = vunpack.c.l.b16 %v638
        %v1937 = vunpack.c.h.b16 %v638
        %v1938 = vunpack.c.l.b16 %v639
        %v1939 = vunpack.c.h.b16 %v639
        %v1940 = vunpack.c.l.b16 %v640
        %v1941 = vunpack.c.h.b16 %v640
        %v1942 = vunpack.c.l.b16 %v641
        %v1943 = vunpack.c.h.b16 %v641
        %v1944 = vunpack.c.l.b16 %v642
        %v1945 = vunpack.c.h.b16 %v642
        %v1946 = vunpack.c.l.b16 %v643
        %v1947 = vunpack.c.h.b16 %v643
        %v1948 = vunpack.c.l.b16 %v644
        %v1949 = vunpack.c.h.b16 %v644
        %v1950 = vunpack.c.l.b16 %v645
        %v1951 = vunpack.c.h.b16 %v645
        %v1952 = vunpack.c.l.b16 %v646
        %v1953 = vunpack.c.h.b16 %v646
        %v1954 = vunpack.c.l.b16 %v647
        %v1955 = vunpack.c.h.b16 %v647
        %v1956 = vunpack.c.l.b16 %v648
        %v1957 = vunpack.c.h.b16 %v648
        %v1958 = vunpack.c.l.b16 %v649
        %v1959 = vunpack.c.h.b16 %v649
        %v1960 = vunpack.c.l.b16 %v650
        %v1961 = vunpack.c.h.b16 %v650
        %v1962 = vunpack.c.l.b16 %v651
        %v1963 = vunpack.c.h.b16 %v651
        %v1964 = vunpack.c.l.b16 %v652
        %v1965 = vunpack.c.h.b16 %v652
        %v1966 = vunpack.c.l.b16 %v653
        %v1967 = vunpack.c.h.b16 %v653
        %v1968 = vunpack.c.l.b16 %v654
        %v1969 = vunpack.c.h.b16 %v654
        %v1970 = vunpack.c.l.b16 %v655
        %v1971 = vunpack.c.h.b16 %v655
        %v1972 = vunpack.c.l.b16 %v656
        %v1973 = vunpack.c.h.b16 %v656
        %v1974 = vunpack.c.l.b16 %v657
        %v1975 = vunpack.c.h.b16 %v657
        %v1976 = vunpack.c.l.b16 %v658
        %v1977 = vunpack.c.h.b16 %v658
        %v1978 = vunpack.c.l.b16 %v659
        %v1979 = vunpack.c.h.b16 %v659
        %v1980 = vunpack.c.l.b16 %v660
        %v1981 = vunpack.c.h.b16 %v660
        %v1982 = vunpack.c.l.b16 %v661
        %v1983 = vunpack.c.h.b16 %v661
        %v1984 = vunpack.c.l.b16 %v662
        %v1985 = vunpack.c.h.b16 %v662
        %v1986 = vunpack.c.l.b16 %v663
        %v1987 = vunpack.c.h.b16 %v663
        %v1988 = vunpack.c.l.b16 %v664
        %v1989 = vunpack.c.h.b16 %v664
        %v1990 = vunpack.c.l.b16 %v665
        %v1991 = vunpack.c.h.b16 %v665
        %v1992 = vunpack.c.l.b16 %v666
        %v1993 = vunpack.c.h.b16 %v666
        %v1994 = vunpack.c.l.b16 %v667
        %v1995 = vunpack.c.h.b16 %v667
        %v1996 = vunpack.c.l.b16 %v668
        %v1997 = vunpack.c.h.b16 %v668
        %v1998 = vunpack.c.l.b16 %v669
        %v1999 = vunpack.c.h.b16 %v669
        %v2000 = vunpack.c.l.b16 %v670
        %v2001 = vunpack.c.h.b16 %v670
        %v2002 = vunpack.c.l.b16 %v671
        %v2003 = vunpack.c.h.b16 %v671
        %v2004 = vunpack.c.l.b16 %v672
        %v2005 = vunpack.c.h.b16 %v672
        %v2006 = vunpack.c.l.b16 %v673
        %v2007 = vunpack.c.h.b16 %v673
        %v2008 = vunpack.c.l.b16 %v674
        %v2009 = vunpack.c.h.b16 %v674
        %v2010 = vunpack.c.l.b16 %v675
        %v2011 = vunpack.c.h.b16 %v675
        %v2012 = vunpack.c.l.b16 %v676
        %v2013 = vunpack.c.h.b16 %v676
        %v2014 = vunpack.c.l.b16 %v677
        %v2015 = vunpack.c.h.b16 %v677
        %v2016 = vunpack.c.l.b16 %v678
        %v2017 = vunpack.c.h.b16 %v678
        %v2018 = vunpack.c.l.b16 %v679
        %v2019 = vunpack.c.h.b16 %v679
        %v2020 = vunpack.c.l.b16 %v680
        %v2021 = vunpack.c.h.b16 %v680
        %v2022 = vunpack.c.l.b16 %v681
        %v2023 = vunpack.c.h.b16 %v681
        %v2024 = vunpack.c.l.b16 %v682
        %v2025 = vunpack.c.h.b16 %v682
        %v2026 = vunpack.c.l.b16 %v683
        %v2027 = vunpack.c.h.b16 %v683
        %v2028 = vunpack.c.l.b16 %v684
        %v2029 = vunpack.c.h.b16 %v684
        %v2030 = vunpack.c.l.b16 %v685
        %v2031 = vunpack.c.h.b16 %v685
        %v2032 = vunpack.c.l.b16 %v686
        %v2033 = vunpack.c.h.b16 %v686
        %v2034 = vunpack.c.l.b16 %v687
        %v2035 = vunpack.c.h.b16 %v687
        %v2036 = vunpack.c.l.b16 %v688
        %v2037 = vunpack.c.h.b16 %v688
        %v2038 = vunpack.c.l.b16 %v689
        %v2039 = vunpack.c.h.b16 %v689
        %v2040 = vunpack.c.l.b16 %v690
        %v2041 = vunpack.c.h.b16 %v690
        %v2042 = vunpack.c.l.b16 %v691
        %v2043 = vunpack.c.h.b16 %v691
        %v2044 = vunpack.c.l.b16 %v692
        %v2045 = vunpack.c.h.b16 %v692
        %v2046 = vunpack.c.l.b16 %v693
        %v2047 = vunpack.c.h.b16 %v693
        %v2048 = vunpack.c.l.b16 %v694
        %v2049 = vunpack.c.h.b16 %v694
        %v2050 = vunpack.c.l.b16 %v695
        %v2051 = vunpack.c.h.b16 %v695
        %v2052 = vunpack.c.l.b16 %v696
        %v2053 = vunpack.c.h.b16 %v696
        %v2054 = vunpack.c.l.b16 %v697
        %v2055 = vunpack.c.h.b16 %v697
        %v2056 = vunpack.c.l.b16 %v698
        %v2057 = vunpack.c.h.b16 %v698
        %v2058 = vunpack.c.l.b16 %v699
        %v2059 = vunpack.c.h.b16 %v699
        %v2060 = vunpack.c.l.b16 %v700
        %v2061 = vunpack.c.h.b16 %v700
        %v2062 = vunpack.c.l.b16 %v701
        %v2063 = vunpack.c.h.b16 %v701
        %v2064 = vunpack.c.l.b16 %v702
        %v2065 = vunpack.c.h.b16 %v702
        %v2066 = vunpack.c.l.b16 %v703
        %v2067 = vunpack.c.h.b16 %v703
        %v2068 = vunpack.c.l.b16 %v704
        %v2069 = vunpack.c.h.b16 %v704
        %v2070 = vunpack.c.l.b16 %v705
        %v2071 = vunpack.c.h.b16 %v705
        %v2072 = vunpack.c.l.b16 %v706
        %v2073 = vunpack.c.h.b16 %v706
        %v2074 = vunpack.c.l.b16 %v707
        %v2075 = vunpack.c.h.b16 %v707
        %v2076 = vunpack.c.l.b16 %v708
        %v2077 = vunpack.c.h.b16 %v708
        %v2078 = vunpack.c.l.b16 %v709
        %v2079 = vunpack.c.h.b16 %v709
        %v2080 = vunpack.c.l.b16 %v710
        %v2081 = vunpack.c.h.b16 %v710
        %v2082 = vunpack.c.l.b16 %v711
        %v2083 = vunpack.c.h.b16 %v711
        %v2084 = vunpack.c.l.b16 %v712
        %v2085 = vunpack.c.h.b16 %v712
        %v2086 = vunpack.c.l.b16 %v713
        %v2087 = vunpack.c.h.b16 %v713
        %v2088 = vunpack.c.l.b16 %v714
        %v2089 = vunpack.c.h.b16 %v714
        %v2090 = vunpack.c.l.b16 %v715
        %v2091 = vunpack.c.h.b16 %v715
        %v2092 = vunpack.c.l.b16 %v716
        %v2093 = vunpack.c.h.b16 %v716
        %v2094 = vunpack.c.l.b16 %v717
        %v2095 = vunpack.c.h.b16 %v717
        %v2096 = vunpack.c.l.b16 %v718
        %v2097 = vunpack.c.h.b16 %v718
        %v2098 = vunpack.c.l.b16 %v719
        %v2099 = vunpack.c.h.b16 %v719
        %v2100 = vunpack.c.l.b16 %v720
        %v2101 = vunpack.c.h.b16 %v720
        %v2102 = vunpack.c.l.b16 %v721
        %v2103 = vunpack.c.h.b16 %v721
        %v2104 = vunpack.c.l.b16 %v722
        %v2105 = vunpack.c.h.b16 %v722
        %v2106 = vunpack.c.l.b16 %v723
        %v2107 = vunpack.c.h.b16 %v723
        %v2108 = vunpack.c.l.b16 %v724
        %v2109 = vunpack.c.h.b16 %v724
        %v2110 = vunpack.c.l.b16 %v725
        %v2111 = vunpack.c.h.b16 %v725
        %v2112 = vunpack.c.l.b16 %v726
        %v2113 = vunpack.c.h.b16 %v726
        %v2114 = vunpack.c.l.b16 %v727
        %v2115 = vunpack.c.h.b16 %v727
        %v2116 = vunpack.c.l.b16 %v728
        %v2117 = vunpack.c.h.b16 %v728
        %v2118 = vunpack.c.l.b16 %v729
        %v2119 = vunpack.c.h.b16 %v729
        %v2120 = vunpack.c.l.b16 %v730
        %v2121 = vunpack.c.h.b16 %v730
        %v2122 = vunpack.c.l.b16 %v731
        %v2123 = vunpack.c.h.b16 %v731
        %v2124 = vunpack.c.l.b16 %v732
        %v2125 = vunpack.c.h.b16 %v732
        %v2126 = vunpack.c.l.b16 %v733
        %v2127 = vunpack.c.h.b16 %v733
        %v2128 = vunpack.c.l.b16 %v734
        %v2129 = vunpack.c.h.b16 %v734
        %v2130 = vunpack.c.l.b16 %v735
        %v2131 = vunpack.c.h.b16 %v735
        %v2132 = vunpack.c.l.b16 %v736
        %v2133 = vunpack.c.h.b16 %v736
        %v2134 = vunpack.c.l.b16 %v737
        %v2135 = vunpack.c.h.b16 %v737
        %v2136 = vunpack.c.l.b16 %v738
        %v2137 = vunpack.c.h.b16 %v738
        %v2138 = vunpack.c.l.b16 %v739
        %v2139 = vunpack.c.h.b16 %v739
        %v2140 = vunpack.c.l.b16 %v740
        %v2141 = vunpack.c.h.b16 %v740
        %v2142 = vunpack.c.l.b16 %v741
        %v2143 = vunpack.c.h.b16 %v741
        %v2144 = vunpack.c.l.b16 %v742
        %v2145 = vunpack.c.h.b16 %v742
        %v2146 = vunpack.c.l.b16 %v743
        %v2147 = vunpack.c.h.b16 %v743
        %v2148 = vunpack.c.l.b16 %v744
        %v2149 = vunpack.c.h.b16 %v744
        %v2150 = vunpack.c.l.b16 %v745
        %v2151 = vunpack.c.h.b16 %v745
        %v2152 = vunpack.c.l.b16 %v746
        %v2153 = vunpack.c.h.b16 %v746
        %v2154 = vunpack.c.l.b16 %v747
        %v2155 = vunpack.c.h.b16 %v747
        %v2156 = vunpack.c.l.b16 %v748
        %v2157 = vunpack.c.h.b16 %v748
        %v2158 = vunpack.c.l.b16 %v749
        %v2159 = vunpack.c.h.b16 %v749
        %v2160 = vunpack.c.l.b16 %v750
        %v2161 = vunpack.c.h.b16 %v750
        %v2162 = vunpack.c.l.b16 %v751
        %v2163 = vunpack.c.h.b16 %v751
        %v2164 = vunpack.c.l.b16 %v752
        %v2165 = vunpack.c.h.b16 %v752
        %v2166 = vunpack.c.l.b16 %v753
        %v2167 = vunpack.c.h.b16 %v753
        %v2168 = vunpack.c.l.b16 %v754
        %v2169 = vunpack.c.h.b16 %v754
        %v2170 = vunpack.c.l.b16 %v755
        %v2171 = vunpack.c.h.b16 %v755
        %v2172 = vunpack.c.l.b16 %v756
        %v2173 = vunpack.c.h.b16 %v756
        %v2174 = vunpack.c.l.b16 %v757
        %v2175 = vunpack.c.h.b16 %v757
        %v2176 = vunpack.c.l.b16 %v758
        %v2177 = vunpack.c.h.b16 %v758
        %v2178 = vunpack.c.l.b16 %v759
        %v2179 = vunpack.c.h.b16 %v759
        %v2180 = vunpack.c.l.b16 %v760
        %v2181 = vunpack.c.h.b16 %v760
        %v2182 = vunpack.c.l.b16 %v761
        %v2183 = vunpack.c.h.b16 %v761
        %v2184 = vunpack.c.l.b16 %v762
        %v2185 = vunpack.c.h.b16 %v762
        %v2186 = vunpack.c.l.b16 %v763
        %v2187 = vunpack.c.h.b16 %v763
        %v2188 = vunpack.c.l.b16 %v764
        %v2189 = vunpack.c.h.b16 %v764
        %v2190 = vunpack.c.l.b16 %v765
        %v2191 = vunpack.c.h.b16 %v765
        %v2192 = vunpack.c.l.b16 %v766
        %v2193 = vunpack.c.h.b16 %v766
        %v2194 = vunpack.c.l.b16 %v767
        %v2195 = vunpack.c.h.b16 %v767
        %v2196 = vunpack.c.l.b16 %v768
        %v2197 = vunpack.c.h.b16 %v768
        %v2198 = vunpack.c.l.b16 %v769
        %v2199 = vunpack.c.h.b16 %v769
        %v2200 = vunpack.c.l.b16 %v770
        %v2201 = vunpack.c.h.b16 %v770
        %v2202 = vunpack.c.l.b16 %v771
        %v2203 = vunpack.c.h.b16 %v771
        %v2204 = vunpack.c.l.b16 %v772
        %v2205 = vunpack.c.h.b16 %v772
        %v2206 = vunpack.c.l.b16 %v773
        %v2207 = vunpack.c.h.b16 %v773
        %v2208 = vunpack.c.l.b16 %v774
        %v2209 = vunpack.c.h.b16 %v774
        %v2210 = vunpack.c.l.b16 %v775
        %v2211 = vunpack.c.h.b16 %v775
        %v2212 = vunpack.c.l.b16 %v776
        %v2213 = vunpack.c.h.b16 %v776
        %v2214 = vunpack.c.l.b16 %v777
        %v2215 = vunpack.c.h.b16 %v777
        %v2216 = vunpack.c.l.b16 %v778
        %v2217 = vunpack.c.h.b16 %v778
        %v2218 = vunpack.c.l.b16 %v779
        %v2219 = vunpack.c.h.b16 %v779
        %v2220 = vunpack.c.l.b16 %v780
        %v2221 = vunpack.c.h.b16 %v780
        %v2222 = vunpack.c.l.b16 %v781
        %v2223 = vunpack.c.h.b16 %v781
        %v2224 = vunpack.c.l.b16 %v782
        %v2225 = vunpack.c.h.b16 %v782
        %v2226 = vunpack.c.l.b16 %v783
        %v2227 = vunpack.c.h.b16 %v783
        %v2228 = vunpack.c.l.b16 %v784
        %v2229 = vunpack.c.h.b16 %v784
        %v2230 = vunpack.c.l.b16 %v785
        %v2231 = vunpack.c.h.b16 %v785
        %v2232 = vunpack.c.l.b16 %v786
        %v2233 = vunpack.c.h.b16 %v786
        %v2234 = vunpack.c.l.b16 %v787
        %v2235 = vunpack.c.h.b16 %v787
        %v2236 = vunpack.c.l.b16 %v788
        %v2237 = vunpack.c.h.b16 %v788
        %v2238 = vunpack.c.l.b16 %v789
        %v2239 = vunpack.c.h.b16 %v789
        %v2240 = vunpack.c.l.b16 %v790
        %v2241 = vunpack.c.h.b16 %v790
        %v2242 = vunpack.c.l.b16 %v791
        %v2243 = vunpack.c.h.b16 %v791
        %v2244 = vunpack.c.l.b16 %v792
        %v2245 = vunpack.c.h.b16 %v792
        %v2246 = vunpack.c.l.b16 %v793
        %v2247 = vunpack.c.h.b16 %v793
        %v2248 = vunpack.c.l.b16 %v794
        %v2249 = vunpack.c.h.b16 %v794
        %v2250 = vunpack.c.l.b16 %v795
        %v2251 = vunpack.c.h.b16 %v795
        %v2252 = vunpack.c.l.b16 %v796
        %v2253 = vunpack.c.h.b16 %v796
        %v2254 = vunpack.c.l.b16 %v797
        %v2255 = vunpack.c.h.b16 %v797
        %v2256 = vunpack.c.l.b16 %v798
        %v2257 = vunpack.c.h.b16 %v798
        %v2258 = vunpack.c.l.b16 %v799
        %v2259 = vunpack.c.h.b16 %v799
        %v2260 = vunpack.c.l.b16 %v800
        %v2261 = vunpack.c.h.b16 %v800
        %v2262 = vunpack.c.l.b16 %v801
        %v2263 = vunpack.c.h.b16 %v801
        %v2264 = vunpack.c.l.b16 %v802
        %v2265 = vunpack.c.h.b16 %v802
        %v2266 = vunpack.c.l.b16 %v803
        %v2267 = vunpack.c.h.b16 %v803
        %v2268 = vunpack.c.l.b16 %v804
        %v2269 = vunpack.c.h.b16 %v804
        %v2270 = vunpack.c.l.b16 %v805
        %v2271 = vunpack.c.h.b16 %v805
        %v2272 = vunpack.c.l.b16 %v806
        %v2273 = vunpack.c.h.b16 %v806
        %v2274 = vunpack.c.l.b16 %v807
        %v2275 = vunpack.c.h.b16 %v807
        %v2276 = vunpack.c.l.b16 %v808
        %v2277 = vunpack.c.h.b16 %v808
        %v2278 = vunpack.c.l.b16 %v809
        %v2279 = vunpack.c.h.b16 %v809
        %v2280 = vunpack.c.l.b16 %v810
        %v2281 = vunpack.c.h.b16 %v810
        %v2282 = vunpack.c.l.b16 %v811
        %v2283 = vunpack.c.h.b16 %v811
        %v2284 = vunpack.c.l.b16 %v812
        %v2285 = vunpack.c.h.b16 %v812
        %v2286 = vunpack.c.l.b16 %v813
        %v2287 = vunpack.c.h.b16 %v813
        %v2288 = vunpack.c.l.b16 %v814
        %v2289 = vunpack.c.h.b16 %v814
        %v2290 = vunpack.c.l.b16 %v815
        %v2291 = vunpack.c.h.b16 %v815
        %v2292 = vunpack.c.l.b16 %v816
        %v2293 = vunpack.c.h.b16 %v816
        %v2294 = vunpack.c.l.b16 %v817
        %v2295 = vunpack.c.h.b16 %v817
        %v2296 = vunpack.c.l.b16 %v818
        %v2297 = vunpack.c.h.b16 %v818
        %v2298 = vunpack.c.l.b16 %v819
        %v2299 = vunpack.c.h.b16 %v819
        %v2300 = vunpack.c.l.b16 %v820
        %v2301 = vunpack.c.h.b16 %v820
        %v2302 = vunpack.c.l.b16 %v821
        %v2303 = vunpack.c.h.b16 %v821
        %v2304 = vunpack.c.l.b16 %v822
        %v2305 = vunpack.c.h.b16 %v822
        %v2306 = vunpack.c.l.b16 %v823
        %v2307 = vunpack.c.h.b16 %v823
        %v2308 = vunpack.c.l.b16 %v824
        %v2309 = vunpack.c.h.b16 %v824
        %v2310 = vunpack.c.l.b16 %v825
        %v2311 = vunpack.c.h.b16 %v825
        %v2312 = vunpack.c.l.b16 %v826
        %v2313 = vunpack.c.h.b16 %v826
        %v2314 = vunpack.c.l.b16 %v827
        %v2315 = vunpack.c.h.b16 %v827
        %v2316 = vunpack.c.l.b16 %v828
        %v2317 = vunpack.c.h.b16 %v828
        %v2318 = vunpack.c.l.b16 %v829
        %v2319 = vunpack.c.h.b16 %v829
        %v2320 = vunpack.c.l.b16 %v830
        %v2321 = vunpack.c.h.b16 %v830
        %v2322 = vunpack.c.l.b16 %v831
        %v2323 = vunpack.c.h.b16 %v831
        %v2324 = vunpack.c.l.b16 %v832
        %v2325 = vunpack.c.h.b16 %v832
        %v2326 = vunpack.c.l.b16 %v833
        %v2327 = vunpack.c.h.b16 %v833
        %v2328 = vunpack.c.l.b16 %v834
        %v2329 = vunpack.c.h.b16 %v834
        %v2330 = vunpack.c.l.b16 %v835
        %v2331 = vunpack.c.h.b16 %v835
        %v2332 = vunpack.c.l.b16 %v836
        %v2333 = vunpack.c.h.b16 %v836
        %v2334 = vunpack.c.l.b16 %v837
        %v2335 = vunpack.c.h.b16 %v837
        %v2336 = vunpack.c.l.b16 %v838
        %v2337 = vunpack.c.h.b16 %v838
        %v2338 = vunpack.c.l.b16 %v839
        %v2339 = vunpack.c.h.b16 %v839
        %v2340 = vunpack.c.l.b16 %v840
        %v2341 = vunpack.c.h.b16 %v840
        %v2342 = vunpack.c.l.b16 %v841
        %v2343 = vunpack.c.h.b16 %v841
        %v2344 = vunpack.c.l.b16 %v842
        %v2345 = vunpack.c.h.b16 %v842
        %v2346 = vunpack.c.l.b16 %v843
        %v2347 = vunpack.c.h.b16 %v843
        %v2348 = vunpack.c.l.b16 %v844
        %v2349 = vunpack.c.h.b16 %v844
        %v2350 = vunpack.c.l.b16 %v845
        %v2351 = vunpack.c.h.b16 %v845
        %v2352 = vunpack.c.l.b16 %v846
        %v2353 = vunpack.c.h.b16 %v846
        %v2354 = vunpack.c.l.b16 %v847
        %v2355 = vunpack.c.h.b16 %v847
        %v2356 = vunpack.c.l.b16 %v848
        %v2357 = vunpack.c.h.b16 %v848
        %v2358 = vunpack.c.l.b16 %v849
        %v2359 = vunpack.c.h.b16 %v849
        %v2360 = vunpack.c.l.b16 %v850
        %v2361 = vunpack.c.h.b16 %v850
        %v2362 = vunpack.c.l.b16 %v851
        %v2363 = vunpack.c.h.b16 %v851
        %v2364 = vunpack.c.l.b16 %v852
        %v2365 = vunpack.c.h.b16 %v852
        %v2366 = vunpack.c.l.b16 %v853
        %v2367 = vunpack.c.h.b16 %v853
        %v2368 = vunpack.c.l.b16 %v854
        %v2369 = vunpack.c.h.b16 %v854
        %v2370 = vunpack.c.l.b16 %v855
        %v2371 = vunpack.c.h.b16 %v855
        %v2372 = vunpack.c.l.b16 %v856
        %v2373 = vunpack.c.h.b16 %v856
        %v2374 = vunpack.c.l.b16 %v857
        %v2375 = vunpack.c.h.b16 %v857
        %v2376 = vunpack.c.l.b16 %v858
        %v2377 = vunpack.c.h.b16 %v858
        %v2378 = vunpack.c.l.b16 %v859
        %v2379 = vunpack.c.h.b16 %v859
        %v2380 = vunpack.c.l.b16 %v860
        %v2381 = vunpack.c.h.b16 %v860
        %v2382 = vunpack.c.l.b16 %v861
        %v2383 = vunpack.c.h.b16 %v861
        %v2384 = vunpack.c.l.b16 %v862
        %v2385 = vunpack.c.h.b16 %v862
        %v2386 = vunpack.c.l.b16 %v863
        %v2387 = vunpack.c.h.b16 %v863
        %v2388 = vunpack.c.l.b16 %v864
        %v2389 = vunpack.c.h.b16 %v864
        %v2390 = vunpack.c.l.b16 %v865
        %v2391 = vunpack.c.h.b16 %v865
        %v2392 = vunpack.c.l.b16 %v866
        %v2393 = vunpack.c.h.b16 %v866
        %v2394 = vunpack.c.l.b16 %v867
        %v2395 = vunpack.c.h.b16 %v867
        %v2396 = vunpack.c.l.b16 %v868
        %v2397 = vunpack.c.h.b16 %v868
        %v2398 = vunpack.c.l.b16 %v869
        %v2399 = vunpack.c.h.b16 %v869
        %v2400 = vunpack.c.l.b16 %v870
        %v2401 = vunpack.c.h.b16 %v870
        %v2402 = vunpack.c.l.b16 %v871
        %v2403 = vunpack.c.h.b16 %v871
        %v2404 = vunpack.c.l.b16 %v872
        %v2405 = vunpack.c.h.b16 %v872
        %v2406 = vunpack.c.l.b16 %v873
        %v2407 = vunpack.c.h.b16 %v873
        %v2408 = vunpack.c.l.b16 %v874
        %v2409 = vunpack.c.h.b16 %v874
        %v2410 = vunpack.c.l.b16 %v875
        %v2411 = vunpack.c.h.b16 %v875
        %v2412 = vpack.c.b16 %v1396, %v1388
        %v2413 = vpack.c.b16 %v1397, %v1389
        %v2414 = vpack.c.b16 %v1398, %v1390
        %v2415 = vpack.c.b16 %v1399, %v1391
        %v2416 = vpack.c.b16 %v1400, %v1392
        %v2417 = vpack.c.b16 %v1401, %v1393
        %v2418 = vpack.c.b16 %v1402, %v1394
        %v2419 = vpack.c.b16 %v1403, %v1395
        %v2420 = vpack.c.b16 %v1412, %v1404
        %v2421 = vpack.c.b16 %v1413, %v1405
        %v2422 = vpack.c.b16 %v1414, %v1406
        %v2423 = vpack.c.b16 %v1415, %v1407
        %v2424 = vpack.c.b16 %v1416, %v1408
        %v2425 = vpack.c.b16 %v1417, %v1409
        %v2426 = vpack.c.b16 %v1418, %v1410
        %v2427 = vpack.c.b16 %v1419, %v1411
        %v2428 = vpack.c.b16 %v1428, %v1420
        %v2429 = vpack.c.b16 %v1429, %v1421
        %v2430 = vpack.c.b16 %v1430, %v1422
        %v2431 = vpack.c.b16 %v1431, %v1423
        %v2432 = vpack.c.b16 %v1432, %v1424
        %v2433 = vpack.c.b16 %v1433, %v1425
        %v2434 = vpack.c.b16 %v1434, %v1426
        %v2435 = vpack.c.b16 %v1435, %v1427
        %v2436 = vpack.c.b16 %v1444, %v1436
        %v2437 = vpack.c.b16 %v1445, %v1437
        %v2438 = vpack.c.b16 %v1446, %v1438
        %v2439 = vpack.c.b16 %v1447, %v1439
        %v2440 = vpack.c.b16 %v1448, %v1440
        %v2441 = vpack.c.b16 %v1449, %v1441
        %v2442 = vpack.c.b16 %v1450, %v1442
        %v2443 = vpack.c.b16 %v1451, %v1443
        %v2444 = vpack.c.b16 %v1460, %v1452
        %v2445 = vpack.c.b16 %v1461, %v1453
        %v2446 = vpack.c.b16 %v1462, %v1454
        %v2447 = vpack.c.b16 %v1463, %v1455
        %v2448 = vpack.c.b16 %v1464, %v1456
        %v2449 = vpack.c.b16 %v1465, %v1457
        %v2450 = vpack.c.b16 %v1466, %v1458
        %v2451 = vpack.c.b16 %v1467, %v1459
        %v2452 = vpack.c.b16 %v1476, %v1468
        %v2453 = vpack.c.b16 %v1477, %v1469
        %v2454 = vpack.c.b16 %v1478, %v1470
        %v2455 = vpack.c.b16 %v1479, %v1471
        %v2456 = vpack.c.b16 %v1480, %v1472
        %v2457 = vpack.c.b16 %v1481, %v1473
        %v2458 = vpack.c.b16 %v1482, %v1474
        %v2459 = vpack.c.b16 %v1483, %v1475
        %v2460 = vpack.c.b16 %v1492, %v1484
        %v2461 = vpack.c.b16 %v1493, %v1485
        %v2462 = vpack.c.b16 %v1494, %v1486
        %v2463 = vpack.c.b16 %v1495, %v1487
        %v2464 = vpack.c.b16 %v1496, %v1488
        %v2465 = vpack.c.b16 %v1497, %v1489
        %v2466 = vpack.c.b16 %v1498, %v1490
        %v2467 = vpack.c.b16 %v1499, %v1491
        %v2468 = vpack.c.b16 %v1508, %v1500
        %v2469 = vpack.c.b16 %v1509, %v1501
        %v2470 = vpack.c.b16 %v1510, %v1502
        %v2471 = vpack.c.b16 %v1511, %v1503
        %v2472 = vpack.c.b16 %v1512, %v1504
        %v2473 = vpack.c.b16 %v1513, %v1505
        %v2474 = vpack.c.b16 %v1514, %v1506
        %v2475 = vpack.c.b16 %v1515, %v1507
        %v2476 = vpack.c.b16 %v1524, %v1516
        %v2477 = vpack.c.b16 %v1525, %v1517
        %v2478 = vpack.c.b16 %v1526, %v1518
        %v2479 = vpack.c.b16 %v1527, %v1519
        %v2480 = vpack.c.b16 %v1528, %v1520
        %v2481 = vpack.c.b16 %v1529, %v1521
        %v2482 = vpack.c.b16 %v1530, %v1522
        %v2483 = vpack.c.b16 %v1531, %v1523
        %v2484 = vpack.c.b16 %v1540, %v1532
        %v2485 = vpack.c.b16 %v1541, %v1533
        %v2486 = vpack.c.b16 %v1542, %v1534
        %v2487 = vpack.c.b16 %v1543, %v1535
        %v2488 = vpack.c.b16 %v1544, %v1536
        %v2489 = vpack.c.b16 %v1545, %v1537
        %v2490 = vpack.c.b16 %v1546, %v1538
        %v2491 = vpack.c.b16 %v1547, %v1539
        %v2492 = vpack.c.b16 %v1556, %v1548
        %v2493 = vpack.c.b16 %v1557, %v1549
        %v2494 = vpack.c.b16 %v1558, %v1550
        %v2495 = vpack.c.b16 %v1559, %v1551
        %v2496 = vpack.c.b16 %v1560, %v1552
        %v2497 = vpack.c.b16 %v1561, %v1553
        %v2498 = vpack.c.b16 %v1562, %v1554
        %v2499 = vpack.c.b16 %v1563, %v1555
        %v2500 = vpack.c.b16 %v1572, %v1564
        %v2501 = vpack.c.b16 %v1573, %v1565
        %v2502 = vpack.c.b16 %v1574, %v1566
        %v2503 = vpack.c.b16 %v1575, %v1567
        %v2504 = vpack.c.b16 %v1576, %v1568
        %v2505 = vpack.c.b16 %v1577, %v1569
        %v2506 = vpack.c.b16 %v1578, %v1570
        %v2507 = vpack.c.b16 %v1579, %v1571
        %v2508 = vpack.c.b16 %v1588, %v1580
        %v2509 = vpack.c.b16 %v1589, %v1581
        %v2510 = vpack.c.b16 %v1590, %v1582
        %v2511 = vpack.c.b16 %v1591, %v1583
        %v2512 = vpack.c.b16 %v1592, %v1584
        %v2513 = vpack.c.b16 %v1593, %v1585
        %v2514 = vpack.c.b16 %v1594, %v1586
        %v2515 = vpack.c.b16 %v1595, %v1587
        %v2516 = vpack.c.b16 %v1604, %v1596
        %v2517 = vpack.c.b16 %v1605, %v1597
        %v2518 = vpack.c.b16 %v1606, %v1598
        %v2519 = vpack.c.b16 %v1607, %v1599
        %v2520 = vpack.c.b16 %v1608, %v1600
        %v2521 = vpack.c.b16 %v1609, %v1601
        %v2522 = vpack.c.b16 %v1610, %v1602
        %v2523 = vpack.c.b16 %v1611, %v1603
        %v2524 = vpack.c.b16 %v1620, %v1612
        %v2525 = vpack.c.b16 %v1621, %v1613
        %v2526 = vpack.c.b16 %v1622, %v1614
        %v2527 = vpack.c.b16 %v1623, %v1615
        %v2528 = vpack.c.b16 %v1624, %v1616
        %v2529 = vpack.c.b16 %v1625, %v1617
        %v2530 = vpack.c.b16 %v1626, %v1618
        %v2531 = vpack.c.b16 %v1627, %v1619
        %v2532 = vpack.c.b16 %v1636, %v1628
        %v2533 = vpack.c.b16 %v1637, %v1629
        %v2534 = vpack.c.b16 %v1638, %v1630
        %v2535 = vpack.c.b16 %v1639, %v1631
        %v2536 = vpack.c.b16 %v1640, %v1632
        %v2537 = vpack.c.b16 %v1641, %v1633
        %v2538 = vpack.c.b16 %v1642, %v1634
        %v2539 = vpack.c.b16 %v1643, %v1635
        %v2540 = vpack.c.b16 %v1652, %v1644
        %v2541 = vpack.c.b16 %v1653, %v1645
        %v2542 = vpack.c.b16 %v1654, %v1646
        %v2543 = vpack.c.b16 %v1655, %v1647
        %v2544 = vpack.c.b16 %v1656, %v1648
        %v2545 = vpack.c.b16 %v1657, %v1649
        %v2546 = vpack.c.b16 %v1658, %v1650
        %v2547 = vpack.c.b16 %v1659, %v1651
        %v2548 = vpack.c.b16 %v1668, %v1660
        %v2549 = vpack.c.b16 %v1669, %v1661
        %v2550 = vpack.c.b16 %v1670, %v1662
        %v2551 = vpack.c.b16 %v1671, %v1663
        %v2552 = vpack.c.b16 %v1672, %v1664
        %v2553 = vpack.c.b16 %v1673, %v1665
        %v2554 = vpack.c.b16 %v1674, %v1666
        %v2555 = vpack.c.b16 %v1675, %v1667
        %v2556 = vpack.c.b16 %v1684, %v1676
        %v2557 = vpack.c.b16 %v1685, %v1677
        %v2558 = vpack.c.b16 %v1686, %v1678
        %v2559 = vpack.c.b16 %v1687, %v1679
        %v2560 = vpack.c.b16 %v1688, %v1680
        %v2561 = vpack.c.b16 %v1689, %v1681
        %v2562 = vpack.c.b16 %v1690, %v1682
        %v2563 = vpack.c.b16 %v1691, %v1683
        %v2564 = vpack.c.b16 %v1700, %v1692
        %v2565 = vpack.c.b16 %v1701, %v1693
        %v2566 = vpack.c.b16 %v1702, %v1694
        %v2567 = vpack.c.b16 %v1703, %v1695
        %v2568 = vpack.c.b16 %v1704, %v1696
        %v2569 = vpack.c.b16 %v1705, %v1697
        %v2570 = vpack.c.b16 %v1706, %v1698
        %v2571 = vpack.c.b16 %v1707, %v1699
        %v2572 = vpack.c.b16 %v1716, %v1708
        %v2573 = vpack.c.b16 %v1717, %v1709
        %v2574 = vpack.c.b16 %v1718, %v1710
        %v2575 = vpack.c.b16 %v1719, %v1711
        %v2576 = vpack.c.b16 %v1720, %v1712
        %v2577 = vpack.c.b16 %v1721, %v1713
        %v2578 = vpack.c.b16 %v1722, %v1714
        %v2579 = vpack.c.b16 %v1723, %v1715
        %v2580 = vpack.c.b16 %v1732, %v1724
        %v2581 = vpack.c.b16 %v1733, %v1725
        %v2582 = vpack.c.b16 %v1734, %v1726
        %v2583 = vpack.c.b16 %v1735, %v1727
        %v2584 = vpack.c.b16 %v1736, %v1728
        %v2585 = vpack.c.b16 %v1737, %v1729
        %v2586 = vpack.c.b16 %v1738, %v1730
        %v2587 = vpack.c.b16 %v1739, %v1731
        %v2588 = vpack.c.b16 %v1748, %v1740
        %v2589 = vpack.c.b16 %v1749, %v1741
        %v2590 = vpack.c.b16 %v1750, %v1742
        %v2591 = vpack.c.b16 %v1751, %v1743
        %v2592 = vpack.c.b16 %v1752, %v1744
        %v2593 = vpack.c.b16 %v1753, %v1745
        %v2594 = vpack.c.b16 %v1754, %v1746
        %v2595 = vpack.c.b16 %v1755, %v1747
        %v2596 = vpack.c.b16 %v1764, %v1756
        %v2597 = vpack.c.b16 %v1765, %v1757
        %v2598 = vpack.c.b16 %v1766, %v1758
        %v2599 = vpack.c.b16 %v1767, %v1759
        %v2600 = vpack.c.b16 %v1768, %v1760
        %v2601 = vpack.c.b16 %v1769, %v1761
        %v2602 = vpack.c.b16 %v1770, %v1762
        %v2603 = vpack.c.b16 %v1771, %v1763
        %v2604 = vpack.c.b16 %v1780, %v1772
        %v2605 = vpack.c.b16 %v1781, %v1773
        %v2606 = vpack.c.b16 %v1782, %v1774
        %v2607 = vpack.c.b16 %v1783, %v1775
        %v2608 = vpack.c.b16 %v1784, %v1776
        %v2609 = vpack.c.b16 %v1785, %v1777
        %v2610 = vpack.c.b16 %v1786, %v1778
        %v2611 = vpack.c.b16 %v1787, %v1779
        %v2612 = vpack.c.b16 %v1796, %v1788
        %v2613 = vpack.c.b16 %v1797, %v1789
        %v2614 = vpack.c.b16 %v1798, %v1790
        %v2615 = vpack.c.b16 %v1799, %v1791
        %v2616 = vpack.c.b16 %v1800, %v1792
        %v2617 = vpack.c.b16 %v1801, %v1793
        %v2618 = vpack.c.b16 %v1802, %v1794
        %v2619 = vpack.c.b16 %v1803, %v1795
        %v2620 = vpack.c.b16 %v1812, %v1804
        %v2621 = vpack.c.b16 %v1813, %v1805
        %v2622 = vpack.c.b16 %v1814, %v1806
        %v2623 = vpack.c.b16 %v1815, %v1807
        %v2624 = vpack.c.b16 %v1816, %v1808
        %v2625 = vpack.c.b16 %v1817, %v1809
        %v2626 = vpack.c.b16 %v1818, %v1810
        %v2627 = vpack.c.b16 %v1819, %v1811
        %v2628 = vpack.c.b16 %v1828, %v1820
        %v2629 = vpack.c.b16 %v1829, %v1821
        %v2630 = vpack.c.b16 %v1830, %v1822
        %v2631 = vpack.c.b16 %v1831, %v1823
        %v2632 = vpack.c.b16 %v1832, %v1824
        %v2633 = vpack.c.b16 %v1833, %v1825
        %v2634 = vpack.c.b16 %v1834, %v1826
        %v2635 = vpack.c.b16 %v1835, %v1827
        %v2636 = vpack.c.b16 %v1844, %v1836
        %v2637 = vpack.c.b16 %v1845, %v1837
        %v2638 = vpack.c.b16 %v1846, %v1838
        %v2639 = vpack.c.b16 %v1847, %v1839
        %v2640 = vpack.c.b16 %v1848, %v1840
        %v2641 = vpack.c.b16 %v1849, %v1841
        %v2642 = vpack.c.b16 %v1850, %v1842
        %v2643 = vpack.c.b16 %v1851, %v1843
        %v2644 = vpack.c.b16 %v1860, %v1852
        %v2645 = vpack.c.b16 %v1861, %v1853
        %v2646 = vpack.c.b16 %v1862, %v1854
        %v2647 = vpack.c.b16 %v1863, %v1855
        %v2648 = vpack.c.b16 %v1864, %v1856
        %v2649 = vpack.c.b16 %v1865, %v1857
        %v2650 = vpack.c.b16 %v1866, %v1858
        %v2651 = vpack.c.b16 %v1867, %v1859
        %v2652 = vpack.c.b16 %v1876, %v1868
        %v2653 = vpack.c.b16 %v1877, %v1869
        %v2654 = vpack.c.b16 %v1878, %v1870
        %v2655 = vpack.c.b16 %v1879, %v1871
        %v2656 = vpack.c.b16 %v1880, %v1872
        %v2657 = vpack.c.b16 %v1881, %v1873
        %v2658 = vpack.c.b16 %v1882, %v1874
        %v2659 = vpack.c.b16 %v1883, %v1875
        %v2660 = vpack.c.b16 %v1892, %v1884
        %v2661 = vpack.c.b16 %v1893, %v1885
        %v2662 = vpack.c.b16 %v1894, %v1886
        %v2663 = vpack.c.b16 %v1895, %v1887
        %v2664 = vpack.c.b16 %v1896, %v1888
        %v2665 = vpack.c.b16 %v1897, %v1889
        %v2666 = vpack.c.b16 %v1898, %v1890
        %v2667 = vpack.c.b16 %v1899, %v1891
        %v2668 = vpack.c.b16 %v1908, %v1900
        %v2669 = vpack.c.b16 %v1909, %v1901
        %v2670 = vpack.c.b16 %v1910, %v1902
        %v2671 = vpack.c.b16 %v1911, %v1903
        %v2672 = vpack.c.b16 %v1912, %v1904
        %v2673 = vpack.c.b16 %v1913, %v1905
        %v2674 = vpack.c.b16 %v1914, %v1906
        %v2675 = vpack.c.b16 %v1915, %v1907
        %v2676 = vpack.c.b16 %v1924, %v1916
        %v2677 = vpack.c.b16 %v1925, %v1917
        %v2678 = vpack.c.b16 %v1926, %v1918
        %v2679 = vpack.c.b16 %v1927, %v1919
        %v2680 = vpack.c.b16 %v1928, %v1920
        %v2681 = vpack.c.b16 %v1929, %v1921
        %v2682 = vpack.c.b16 %v1930, %v1922
        %v2683 = vpack.c.b16 %v1931, %v1923
        %v2684 = vpack.c.b16 %v1940, %v1932
        %v2685 = vpack.c.b16 %v1941, %v1933
        %v2686 = vpack.c.b16 %v1942, %v1934
        %v2687 = vpack.c.b16 %v1943, %v1935
        %v2688 = vpack.c.b16 %v1944, %v1936
        %v2689 = vpack.c.b16 %v1945, %v1937
        %v2690 = vpack.c.b16 %v1946, %v1938
        %v2691 = vpack.c.b16 %v1947, %v1939
        %v2692 = vpack.c.b16 %v1956, %v1948
        %v2693 = vpack.c.b16 %v1957, %v1949
        %v2694 = vpack.c.b16 %v1958, %v1950
        %v2695 = vpack.c.b16 %v1959, %v1951
        %v2696 = vpack.c.b16 %v1960, %v1952
        %v2697 = vpack.c.b16 %v1961, %v1953
        %v2698 = vpack.c.b16 %v1962, %v1954
        %v2699 = vpack.c.b16 %v1963, %v1955
        %v2700 = vpack.c.b16 %v1972, %v1964
        %v2701 = vpack.c.b16 %v1973, %v1965
        %v2702 = vpack.c.b16 %v1974, %v1966
        %v2703 = vpack.c.b16 %v1975, %v1967
        %v2704 = vpack.c.b16 %v1976, %v1968
        %v2705 = vpack.c.b16 %v1977, %v1969
        %v2706 = vpack.c.b16 %v1978, %v1970
        %v2707 = vpack.c.b16 %v1979, %v1971
        %v2708 = vpack.c.b16 %v1988, %v1980
        %v2709 = vpack.c.b16 %v1989, %v1981
        %v2710 = vpack.c.b16 %v1990, %v1982
        %v2711 = vpack.c.b16 %v1991, %v1983
        %v2712 = vpack.c.b16 %v1992, %v1984
        %v2713 = vpack.c.b16 %v1993, %v1985
        %v2714 = vpack.c.b16 %v1994, %v1986
        %v2715 = vpack.c.b16 %v1995, %v1987
        %v2716 = vpack.c.b16 %v2004, %v1996
        %v2717 = vpack.c.b16 %v2005, %v1997
        %v2718 = vpack.c.b16 %v2006, %v1998
        %v2719 = vpack.c.b16 %v2007, %v1999
        %v2720 = vpack.c.b16 %v2008, %v2000
        %v2721 = vpack.c.b16 %v2009, %v2001
        %v2722 = vpack.c.b16 %v2010, %v2002
        %v2723 = vpack.c.b16 %v2011, %v2003
        %v2724 = vpack.c.b16 %v2020, %v2012
        %v2725 = vpack.c.b16 %v2021, %v2013
        %v2726 = vpack.c.b16 %v2022, %v2014
        %v2727 = vpack.c.b16 %v2023, %v2015
        %v2728 = vpack.c.b16 %v2024, %v2016
        %v2729 = vpack.c.b16 %v2025, %v2017
        %v2730 = vpack.c.b16 %v2026, %v2018
        %v2731 = vpack.c.b16 %v2027, %v2019
        %v2732 = vpack.c.b16 %v2036, %v2028
        %v2733 = vpack.c.b16 %v2037, %v2029
        %v2734 = vpack.c.b16 %v2038, %v2030
        %v2735 = vpack.c.b16 %v2039, %v2031
        %v2736 = vpack.c.b16 %v2040, %v2032
        %v2737 = vpack.c.b16 %v2041, %v2033
        %v2738 = vpack.c.b16 %v2042, %v2034
        %v2739 = vpack.c.b16 %v2043, %v2035
        %v2740 = vpack.c.b16 %v2052, %v2044
        %v2741 = vpack.c.b16 %v2053, %v2045
        %v2742 = vpack.c.b16 %v2054, %v2046
        %v2743 = vpack.c.b16 %v2055, %v2047
        %v2744 = vpack.c.b16 %v2056, %v2048
        %v2745 = vpack.c.b16 %v2057, %v2049
        %v2746 = vpack.c.b16 %v2058, %v2050
        %v2747 = vpack.c.b16 %v2059, %v2051
        %v2748 = vpack.c.b16 %v2068, %v2060
        %v2749 = vpack.c.b16 %v2069, %v2061
        %v2750 = vpack.c.b16 %v2070, %v2062
        %v2751 = vpack.c.b16 %v2071, %v2063
        %v2752 = vpack.c.b16 %v2072, %v2064
        %v2753 = vpack.c.b16 %v2073, %v2065
        %v2754 = vpack.c.b16 %v2074, %v2066
        %v2755 = vpack.c.b16 %v2075, %v2067
        %v2756 = vpack.c.b16 %v2084, %v2076
        %v2757 = vpack.c.b16 %v2085, %v2077
        %v2758 = vpack.c.b16 %v2086, %v2078
        %v2759 = vpack.c.b16 %v2087, %v2079
        %v2760 = vpack.c.b16 %v2088, %v2080
        %v2761 = vpack.c.b16 %v2089, %v2081
        %v2762 = vpack.c.b16 %v2090, %v2082
        %v2763 = vpack.c.b16 %v2091, %v2083
        %v2764 = vpack.c.b16 %v2100, %v2092
        %v2765 = vpack.c.b16 %v2101, %v2093
        %v2766 = vpack.c.b16 %v2102, %v2094
        %v2767 = vpack.c.b16 %v2103, %v2095
        %v2768 = vpack.c.b16 %v2104, %v2096
        %v2769 = vpack.c.b16 %v2105, %v2097
        %v2770 = vpack.c.b16 %v2106, %v2098
        %v2771 = vpack.c.b16 %v2107, %v2099
        %v2772 = vpack.c.b16 %v2116, %v2108
        %v2773 = vpack.c.b16 %v2117, %v2109
        %v2774 = vpack.c.b16 %v2118, %v2110
        %v2775 = vpack.c.b16 %v2119, %v2111
        %v2776 = vpack.c.b16 %v2120, %v2112
        %v2777 = vpack.c.b16 %v2121, %v2113
        %v2778 = vpack.c.b16 %v2122, %v2114
        %v2779 = vpack.c.b16 %v2123, %v2115
        %v2780 = vpack.c.b16 %v2132, %v2124
        %v2781 = vpack.c.b16 %v2133, %v2125
        %v2782 = vpack.c.b16 %v2134, %v2126
        %v2783 = vpack.c.b16 %v2135, %v2127
        %v2784 = vpack.c.b16 %v2136, %v2128
        %v2785 = vpack.c.b16 %v2137, %v2129
        %v2786 = vpack.c.b16 %v2138, %v2130
        %v2787 = vpack.c.b16 %v2139, %v2131
        %v2788 = vpack.c.b16 %v2148, %v2140
        %v2789 = vpack.c.b16 %v2149, %v2141
        %v2790 = vpack.c.b16 %v2150, %v2142
        %v2791 = vpack.c.b16 %v2151, %v2143
        %v2792 = vpack.c.b16 %v2152, %v2144
        %v2793 = vpack.c.b16 %v2153, %v2145
        %v2794 = vpack.c.b16 %v2154, %v2146
        %v2795 = vpack.c.b16 %v2155, %v2147
        %v2796 = vpack.c.b16 %v2164, %v2156
        %v2797 = vpack.c.b16 %v2165, %v2157
        %v2798 = vpack.c.b16 %v2166, %v2158
        %v2799 = vpack.c.b16 %v2167, %v2159
        %v2800 = vpack.c.b16 %v2168, %v2160
        %v2801 = vpack.c.b16 %v2169, %v2161
        %v2802 = vpack.c.b16 %v2170, %v2162
        %v2803 = vpack.c.b16 %v2171, %v2163
        %v2804 = vpack.c.b16 %v2180, %v2172
        %v2805 = vpack.c.b16 %v2181, %v2173
        %v2806 = vpack.c.b16 %v2182, %v2174
        %v2807 = vpack.c.b16 %v2183, %v2175
        %v2808 = vpack.c.b16 %v2184, %v2176
        %v2809 = vpack.c.b16 %v2185, %v2177
        %v2810 = vpack.c.b16 %v2186, %v2178
        %v2811 = vpack.c.b16 %v2187, %v2179
        %v2812 = vpack.c.b16 %v2196, %v2188
        %v2813 = vpack.c.b16 %v2197, %v2189
        %v2814 = vpack.c.b16 %v2198, %v2190
        %v2815 = vpack.c.b16 %v2199, %v2191
        %v2816 = vpack.c.b16 %v2200, %v2192
        %v2817 = vpack.c.b16 %v2201, %v2193
        %v2818 = vpack.c.b16 %v2202, %v2194
        %v2819 = vpack.c.b16 %v2203, %v2195
        %v2820 = vpack.c.b16 %v2212, %v2204
        %v2821 = vpack.c.b16 %v2213, %v2205
        %v2822 = vpack.c.b16 %v2214, %v2206
        %v2823 = vpack.c.b16 %v2215, %v2207
        %v2824 = vpack.c.b16 %v2216, %v2208
        %v2825 = vpack.c.b16 %v2217, %v2209
        %v2826 = vpack.c.b16 %v2218, %v2210
        %v2827 = vpack.c.b16 %v2219, %v2211
        %v2828 = vpack.c.b16 %v2228, %v2220
        %v2829 = vpack.c.b16 %v2229, %v2221
        %v2830 = vpack.c.b16 %v2230, %v2222
        %v2831 = vpack.c.b16 %v2231, %v2223
        %v2832 = vpack.c.b16 %v2232, %v2224
        %v2833 = vpack.c.b16 %v2233, %v2225
        %v2834 = vpack.c.b16 %v2234, %v2226
        %v2835 = vpack.c.b16 %v2235, %v2227
        %v2836 = vpack.c.b16 %v2244, %v2236
        %v2837 = vpack.c.b16 %v2245, %v2237
        %v2838 = vpack.c.b16 %v2246, %v2238
        %v2839 = vpack.c.b16 %v2247, %v2239
        %v2840 = vpack.c.b16 %v2248, %v2240
        %v2841 = vpack.c.b16 %v2249, %v2241
        %v2842 = vpack.c.b16 %v2250, %v2242
        %v2843 = vpack.c.b16 %v2251, %v2243
        %v2844 = vpack.c.b16 %v2260, %v2252
        %v2845 = vpack.c.b16 %v2261, %v2253
        %v2846 = vpack.c.b16 %v2262, %v2254
        %v2847 = vpack.c.b16 %v2263, %v2255
        %v2848 = vpack.c.b16 %v2264, %v2256
        %v2849 = vpack.c.b16 %v2265, %v2257
        %v2850 = vpack.c.b16 %v2266, %v2258
        %v2851 = vpack.c.b16 %v2267, %v2259
        %v2852 = vpack.c.b16 %v2276, %v2268
        %v2853 = vpack.c.b16 %v2277, %v2269
        %v2854 = vpack.c.b16 %v2278, %v2270
        %v2855 = vpack.c.b16 %v2279, %v2271
        %v2856 = vpack.c.b16 %v2280, %v2272
        %v2857 = vpack.c.b16 %v2281, %v2273
        %v2858 = vpack.c.b16 %v2282, %v2274
        %v2859 = vpack.c.b16 %v2283, %v2275
        %v2860 = vpack.c.b16 %v2292, %v2284
        %v2861 = vpack.c.b16 %v2293, %v2285
        %v2862 = vpack.c.b16 %v2294, %v2286
        %v2863 = vpack.c.b16 %v2295, %v2287
        %v2864 = vpack.c.b16 %v2296, %v2288
        %v2865 = vpack.c.b16 %v2297, %v2289
        %v2866 = vpack.c.b16 %v2298, %v2290
        %v2867 = vpack.c.b16 %v2299, %v2291
        %v2868 = vpack.c.b16 %v2308, %v2300
        %v2869 = vpack.c.b16 %v2309, %v2301
        %v2870 = vpack.c.b16 %v2310, %v2302
        %v2871 = vpack.c.b16 %v2311, %v2303
        %v2872 = vpack.c.b16 %v2312, %v2304
        %v2873 = vpack.c.b16 %v2313, %v2305
        %v2874 = vpack.c.b16 %v2314, %v2306
        %v2875 = vpack.c.b16 %v2315, %v2307
        %v2876 = vpack.c.b16 %v2324, %v2316
        %v2877 = vpack.c.b16 %v2325, %v2317
        %v2878 = vpack.c.b16 %v2326, %v2318
        %v2879 = vpack.c.b16 %v2327, %v2319
        %v2880 = vpack.c.b16 %v2328, %v2320
        %v2881 = vpack.c.b16 %v2329, %v2321
        %v2882 = vpack.c.b16 %v2330, %v2322
        %v2883 = vpack.c.b16 %v2331, %v2323
        %v2884 = vpack.c.b16 %v2340, %v2332
        %v2885 = vpack.c.b16 %v2341, %v2333
        %v2886 = vpack.c.b16 %v2342, %v2334
        %v2887 = vpack.c.b16 %v2343, %v2335
        %v2888 = vpack.c.b16 %v2344, %v2336
        %v2889 = vpack.c.b16 %v2345, %v2337
        %v2890 = vpack.c.b16 %v2346, %v2338
        %v2891 = vpack.c.b16 %v2347, %v2339
        %v2892 = vpack.c.b16 %v2356, %v2348
        %v2893 = vpack.c.b16 %v2357, %v2349
        %v2894 = vpack.c.b16 %v2358, %v2350
        %v2895 = vpack.c.b16 %v2359, %v2351
        %v2896 = vpack.c.b16 %v2360, %v2352
        %v2897 = vpack.c.b16 %v2361, %v2353
        %v2898 = vpack.c.b16 %v2362, %v2354
        %v2899 = vpack.c.b16 %v2363, %v2355
        %v2900 = vpack.c.b16 %v2372, %v2364
        %v2901 = vpack.c.b16 %v2373, %v2365
        %v2902 = vpack.c.b16 %v2374, %v2366
        %v2903 = vpack.c.b16 %v2375, %v2367
        %v2904 = vpack.c.b16 %v2376, %v2368
        %v2905 = vpack.c.b16 %v2377, %v2369
        %v2906 = vpack.c.b16 %v2378, %v2370
        %v2907 = vpack.c.b16 %v2379, %v2371
        %v2908 = vpack.c.b16 %v2388, %v2380
        %v2909 = vpack.c.b16 %v2389, %v2381
        %v2910 = vpack.c.b16 %v2390, %v2382
        %v2911 = vpack.c.b16 %v2391, %v2383
        %v2912 = vpack.c.b16 %v2392, %v2384
        %v2913 = vpack.c.b16 %v2393, %v2385
        %v2914 = vpack.c.b16 %v2394, %v2386
        %v2915 = vpack.c.b16 %v2395, %v2387
        %v2916 = vpack.c.b16 %v2404, %v2396
        %v2917 = vpack.c.b16 %v2405, %v2397
        %v2918 = vpack.c.b16 %v2406, %v2398
        %v2919 = vpack.c.b16 %v2407, %v2399
        %v2920 = vpack.c.b16 %v2408, %v2400
        %v2921 = vpack.c.b16 %v2409, %v2401
        %v2922 = vpack.c.b16 %v2410, %v2402
        %v2923 = vpack.c.b16 %v2411, %v2403
        %3436 = vmatprep.subr.bf16.mxu0 %v2413
        %3437 = vmatpush1.bf16.msra.mxu0 %v2412
        %3438 = vmatprep.subr.bf16.mxu0 %v2421
        %3439 = vmatpush1.bf16.msra.mxu0 %v2420
        %3440 = vmatprep.subr.bf16.mxu0 %v2429
        %3441 = vmatpush1.bf16.msra.mxu0 %v2428
        %3442 = vmatprep.subr.bf16.mxu0 %v2437
        %3443 = vmatpush1.bf16.msra.mxu0 %v2436
        %3444 = vmatprep.subr.bf16.mxu0 %v2445
        %3445 = vmatpush1.bf16.msra.mxu0 %v2444
        %3446 = vmatprep.subr.bf16.mxu0 %v2453
        %3447 = vmatpush1.bf16.msra.mxu0 %v2452
        %3448 = vmatprep.subr.bf16.mxu0 %v2461
        %3449 = vmatpush1.bf16.msra.mxu0 %v2460
        %3450 = vmatprep.subr.bf16.mxu0 %v2469
        %3451 = vmatpush1.bf16.msra.mxu0 %v2468
        %3452 = vmatprep.subr.bf16.mxu0 %v2477
        %3453 = vmatpush1.bf16.msra.mxu0 %v2476
        %3454 = vmatprep.subr.bf16.mxu0 %v2485
        %3455 = vmatpush1.bf16.msra.mxu0 %v2484
        %3456 = vmatprep.subr.bf16.mxu0 %v2493
        %3457 = vmatpush1.bf16.msra.mxu0 %v2492
        %3458 = vmatprep.subr.bf16.mxu0 %v2501
        %3459 = vmatpush1.bf16.msra.mxu0 %v2500
        %3460 = vmatprep.subr.bf16.mxu0 %v2509
        %3461 = vmatpush1.bf16.msra.mxu0 %v2508
        %3462 = vmatprep.subr.bf16.mxu0 %v2517
        %3463 = vmatpush1.bf16.msra.mxu0 %v2516
        %3464 = vmatprep.subr.bf16.mxu0 %v2525
        %3465 = vmatpush1.bf16.msra.mxu0 %v2524
        %3466 = vmatprep.subr.bf16.mxu0 %v2533
        %3467 = vmatpush1.bf16.msra.mxu0 %v2532
        %3468 = vmatprep.mubr.bf16.mxu0 %v357
        %3469 = vmatmul.mubr.bf16.gmra.mrb[0].mxu0 %v356
        %v3470 = vpop.f32.mrb[0].mxu0
        %v3471 = vadd.f32 0.0, %v3470
        %v3472 = vpop.f32.mrb[0].mxu0
        %v3473 = vadd.f32 0.0, %v3472
        %v3474 = vpop.f32.mrb[0].mxu0
        %v3475 = vpop.f32.mrb[0].mxu0
        %3476 = vdwg.mxu0
        %3477 = vmatprep.subr.bf16.mxu0 %v2541
        %3478 = vmatpush1.bf16.msra.mxu0 %v2540
        %3479 = vmatprep.subr.bf16.mxu0 %v2549
        %3480 = vmatpush1.bf16.msra.mxu0 %v2548
        %3481 = vmatprep.subr.bf16.mxu0 %v2557
        %3482 = vmatpush1.bf16.msra.mxu0 %v2556
        %3483 = vmatprep.subr.bf16.mxu0 %v2565
        %3484 = vmatpush1.bf16.msra.mxu0 %v2564
        %3485 = vmatprep.subr.bf16.mxu0 %v2573
        %3486 = vmatpush1.bf16.msra.mxu0 %v2572
        %3487 = vmatprep.subr.bf16.mxu0 %v2581
        %3488 = vmatpush1.bf16.msra.mxu0 %v2580
        %3489 = vmatprep.subr.bf16.mxu0 %v2589
        %3490 = vmatpush1.bf16.msra.mxu0 %v2588
        %3491 = vmatprep.subr.bf16.mxu0 %v2597
        %3492 = vmatpush1.bf16.msra.mxu0 %v2596
        %3493 = vmatprep.subr.bf16.mxu0 %v2605
        %3494 = vmatpush1.bf16.msra.mxu0 %v2604
        %3495 = vmatprep.subr.bf16.mxu0 %v2613
        %3496 = vmatpush1.bf16.msra.mxu0 %v2612
        %3497 = vmatprep.subr.bf16.mxu0 %v2621
        %3498 = vmatpush1.bf16.msra.mxu0 %v2620
        %3499 = vmatprep.subr.bf16.mxu0 %v2629
        %3500 = vmatpush1.bf16.msra.mxu0 %v2628
        %3501 = vmatprep.subr.bf16.mxu0 %v2637
        %3502 = vmatpush1.bf16.msra.mxu0 %v2636
        %3503 = vmatprep.subr.bf16.mxu0 %v2645
        %3504 = vmatpush1.bf16.msra.mxu0 %v2644
        %3505 = vmatprep.subr.bf16.mxu0 %v2653
        %3506 = vmatpush1.bf16.msra.mxu0 %v2652
        %3507 = vmatprep.subr.bf16.mxu0 %v2661
        %3508 = vmatpush1.bf16.msra.mxu0 %v2660
        %3509 = vmatprep.mubr.bf16.mxu0 %v359
        %3510 = vmatmul.mubr.bf16.gmra.mrb[0].mxu0 %v358
        %v3511 = vpop.f32.mrb[0].mxu0
        %v3512 = vadd.f32 %v3471, %v3511
        %v3513 = vpop.f32.mrb[0].mxu0
        %v3514 = vadd.f32 %v3473, %v3513
        %v3515 = vpop.f32.mrb[0].mxu0
        %v3516 = vpop.f32.mrb[0].mxu0
        %3517 = vdwg.mxu0
        %3518 = vmatprep.subr.bf16.mxu0 %v2669
        %3519 = vmatpush1.bf16.msra.mxu0 %v2668
        %3520 = vmatprep.subr.bf16.mxu0 %v2677
        %3521 = vmatpush1.bf16.msra.mxu0 %v2676
        %3522 = vmatprep.subr.bf16.mxu0 %v2685
        %3523 = vmatpush1.bf16.msra.mxu0 %v2684
        %3524 = vmatprep.subr.bf16.mxu0 %v2693
        %3525 = vmatpush1.bf16.msra.mxu0 %v2692
        %3526 = vmatprep.subr.bf16.mxu0 %v2701
        %3527 = vmatpush1.bf16.msra.mxu0 %v2700
        %3528 = vmatprep.subr.bf16.mxu0 %v2709
        %3529 = vmatpush1.bf16.msra.mxu0 %v2708
        %3530 = vmatprep.subr.bf16.mxu0 %v2717
        %3531 = vmatpush1.bf16.msra.mxu0 %v2716
        %3532 = vmatprep.subr.bf16.mxu0 %v2725
        %3533 = vmatpush1.bf16.msra.mxu0 %v2724
        %3534 = vmatprep.subr.bf16.mxu0 %v2733
        %3535 = vmatpush1.bf16.msra.mxu0 %v2732
        %3536 = vmatprep.subr.bf16.mxu0 %v2741
        %3537 = vmatpush1.bf16.msra.mxu0 %v2740
        %3538 = vmatprep.subr.bf16.mxu0 %v2749
        %3539 = vmatpush1.bf16.msra.mxu0 %v2748
        %3540 = vmatprep.subr.bf16.mxu0 %v2757
        %3541 = vmatpush1.bf16.msra.mxu0 %v2756
        %3542 = vmatprep.subr.bf16.mxu0 %v2765
        %3543 = vmatpush1.bf16.msra.mxu0 %v2764
        %3544 = vmatprep.subr.bf16.mxu0 %v2773
        %3545 = vmatpush1.bf16.msra.mxu0 %v2772
        %3546 = vmatprep.subr.bf16.mxu0 %v2781
        %3547 = vmatpush1.bf16.msra.mxu0 %v2780
        %3548 = vmatprep.subr.bf16.mxu0 %v2789
        %3549 = vmatpush1.bf16.msra.mxu0 %v2788
        %3550 = vmatprep.mubr.bf16.mxu0 %v361
        %3551 = vmatmul.mubr.bf16.gmra.mrb[0].mxu0 %v360
        %v3552 = vpop.f32.mrb[0].mxu0
        %v3553 = vadd.f32 %v3512, %v3552
        %v3554 = vpop.f32.mrb[0].mxu0
        %v3555 = vadd.f32 %v3514, %v3554
        %v3556 = vpop.f32.mrb[0].mxu0
        %v3557 = vpop.f32.mrb[0].mxu0
        %3558 = vdwg.mxu0
        %3559 = vmatprep.subr.bf16.mxu0 %v2797
        %3560 = vmatpush1.bf16.msra.mxu0 %v2796
        %3561 = vmatprep.subr.bf16.mxu0 %v2805
        %3562 = vmatpush1.bf16.msra.mxu0 %v2804
        %3563 = vmatprep.subr.bf16.mxu0 %v2813
        %3564 = vmatpush1.bf16.msra.mxu0 %v2812
        %3565 = vmatprep.subr.bf16.mxu0 %v2821
        %3566 = vmatpush1.bf16.msra.mxu0 %v2820
        %3567 = vmatprep.subr.bf16.mxu0 %v2829
        %3568 = vmatpush1.bf16.msra.mxu0 %v2828
        %3569 = vmatprep.subr.bf16.mxu0 %v2837
        %3570 = vmatpush1.bf16.msra.mxu0 %v2836
        %3571 = vmatprep.subr.bf16.mxu0 %v2845
        %3572 = vmatpush1.bf16.msra.mxu0 %v2844
        %3573 = vmatprep.subr.bf16.mxu0 %v2853
        %3574 = vmatpush1.bf16.msra.mxu0 %v2852
        %3575 = vmatprep.subr.bf16.mxu0 %v2861
        %3576 = vmatpush1.bf16.msra.mxu0 %v2860
        %3577 = vmatprep.subr.bf16.mxu0 %v2869
        %3578 = vmatpush1.bf16.msra.mxu0 %v2868
        %3579 = vmatprep.subr.bf16.mxu0 %v2877
        %3580 = vmatpush1.bf16.msra.mxu0 %v2876
        %3581 = vmatprep.subr.bf16.mxu0 %v2885
        %3582 = vmatpush1.bf16.msra.mxu0 %v2884
        %3583 = vmatprep.subr.bf16.mxu0 %v2893
        %3584 = vmatpush1.bf16.msra.mxu0 %v2892
        %3585 = vmatprep.subr.bf16.mxu0 %v2901
        %3586 = vmatpush1.bf16.msra.mxu0 %v2900
        %3587 = vmatprep.subr.bf16.mxu0 %v2909
        %3588 = vmatpush1.bf16.msra.mxu0 %v2908
        %3589 = vmatprep.subr.bf16.mxu0 %v2917
        %3590 = vmatpush1.bf16.msra.mxu0 %v2916
        %3591 = vmatprep.mubr.bf16.mxu0 %v363
        %3592 = vmatmul.mubr.bf16.gmra.mrb[0].mxu0 %v362
        %v3593 = vpop.f32.mrb[0].mxu0
        %v3594 = vadd.f32 %v3553, %v3593
        %v3595 = vpop.f32.mrb[0].mxu0
        %v3596 = vadd.f32 %v3555, %v3595
        %v3597 = vpop.f32.mrb[0].mxu0
        %v3598 = vpop.f32.mrb[0].mxu0
        %3599 = vdwg.mxu0
        %3600 = vmatprep.subr.bf16.mxu0 %v2415
        %3601 = vmatpush1.bf16.msra.mxu0 %v2414
        %3602 = vmatprep.subr.bf16.mxu0 %v2423
        %3603 = vmatpush1.bf16.msra.mxu0 %v2422
        %3604 = vmatprep.subr.bf16.mxu0 %v2431
        %3605 = vmatpush1.bf16.msra.mxu0 %v2430
        %3606 = vmatprep.subr.bf16.mxu0 %v2439
        %3607 = vmatpush1.bf16.msra.mxu0 %v2438
        %3608 = vmatprep.subr.bf16.mxu0 %v2447
        %3609 = vmatpush1.bf16.msra.mxu0 %v2446
        %3610 = vmatprep.subr.bf16.mxu0 %v2455
        %3611 = vmatpush1.bf16.msra.mxu0 %v2454
        %3612 = vmatprep.subr.bf16.mxu0 %v2463
        %3613 = vmatpush1.bf16.msra.mxu0 %v2462
        %3614 = vmatprep.subr.bf16.mxu0 %v2471
        %3615 = vmatpush1.bf16.msra.mxu0 %v2470
        %3616 = vmatprep.subr.bf16.mxu0 %v2479
        %3617 = vmatpush1.bf16.msra.mxu0 %v2478
        %3618 = vmatprep.subr.bf16.mxu0 %v2487
        %3619 = vmatpush1.bf16.msra.mxu0 %v2486
        %3620 = vmatprep.subr.bf16.mxu0 %v2495
        %3621 = vmatpush1.bf16.msra.mxu0 %v2494
        %3622 = vmatprep.subr.bf16.mxu0 %v2503
        %3623 = vmatpush1.bf16.msra.mxu0 %v2502
        %3624 = vmatprep.subr.bf16.mxu0 %v2511
        %3625 = vmatpush1.bf16.msra.mxu0 %v2510
        %3626 = vmatprep.subr.bf16.mxu0 %v2519
        %3627 = vmatpush1.bf16.msra.mxu0 %v2518
        %3628 = vmatprep.subr.bf16.mxu0 %v2527
        %3629 = vmatpush1.bf16.msra.mxu0 %v2526
        %3630 = vmatprep.subr.bf16.mxu0 %v2535
        %3631 = vmatpush1.bf16.msra.mxu0 %v2534
        %3632 = vmatprep.mubr.bf16.mxu0 %v357
        %3633 = vmatmul.mubr.bf16.gmra.mrb[0].mxu0 %v356
        %v3634 = vpop.f32.mrb[0].mxu0
        %v3635 = vadd.f32 0.0, %v3634
        %v3636 = vpop.f32.mrb[0].mxu0
        %v3637 = vadd.f32 0.0, %v3636
        %v3638 = vpop.f32.mrb[0].mxu0
        %v3639 = vpop.f32.mrb[0].mxu0
        %3640 = vdwg.mxu0
        %3641 = vmatprep.subr.bf16.mxu0 %v2543
        %3642 = vmatpush1.bf16.msra.mxu0 %v2542
        %3643 = vmatprep.subr.bf16.mxu0 %v2551
        %3644 = vmatpush1.bf16.msra.mxu0 %v2550
        %3645 = vmatprep.subr.bf16.mxu0 %v2559
        %3646 = vmatpush1.bf16.msra.mxu0 %v2558
        %3647 = vmatprep.subr.bf16.mxu0 %v2567
        %3648 = vmatpush1.bf16.msra.mxu0 %v2566
        %3649 = vmatprep.subr.bf16.mxu0 %v2575
        %3650 = vmatpush1.bf16.msra.mxu0 %v2574
        %3651 = vmatprep.subr.bf16.mxu0 %v2583
        %3652 = vmatpush1.bf16.msra.mxu0 %v2582
        %3653 = vmatprep.subr.bf16.mxu0 %v2591
        %3654 = vmatpush1.bf16.msra.mxu0 %v2590
        %3655 = vmatprep.subr.bf16.mxu0 %v2599
        %3656 = vmatpush1.bf16.msra.mxu0 %v2598
        %3657 = vmatprep.subr.bf16.mxu0 %v2607
        %3658 = vmatpush1.bf16.msra.mxu0 %v2606
        %3659 = vmatprep.subr.bf16.mxu0 %v2615
        %3660 = vmatpush1.bf16.msra.mxu0 %v2614
        %3661 = vmatprep.subr.bf16.mxu0 %v2623
        %3662 = vmatpush1.bf16.msra.mxu0 %v2622
        %3663 = vmatprep.subr.bf16.mxu0 %v2631
        %3664 = vmatpush1.bf16.msra.mxu0 %v2630
        %3665 = vmatprep.subr.bf16.mxu0 %v2639
        %3666 = vmatpush1.bf16.msra.mxu0 %v2638
        %3667 = vmatprep.subr.bf16.mxu0 %v2647
        %3668 = vmatpush1.bf16.msra.mxu0 %v2646
        %3669 = vmatprep.subr.bf16.mxu0 %v2655
        %3670 = vmatpush1.bf16.msra.mxu0 %v2654
        %3671 = vmatprep.subr.bf16.mxu0 %v2663
        %3672 = vmatpush1.bf16.msra.mxu0 %v2662
        %3673 = vmatprep.mubr.bf16.mxu0 %v359
        %3674 = vmatmul.mubr.bf16.gmra.mrb[0].mxu0 %v358
        %v3675 = vpop.f32.mrb[0].mxu0
        %v3676 = vadd.f32 %v3635, %v3675
        %v3677 = vpop.f32.mrb[0].mxu0
        %v3678 = vadd.f32 %v3637, %v3677
        %v3679 = vpop.f32.mrb[0].mxu0
        %v3680 = vpop.f32.mrb[0].mxu0
        %3681 = vdwg.mxu0
        %3682 = vmatprep.subr.bf16.mxu0 %v2671
        %3683 = vmatpush1.bf16.msra.mxu0 %v2670
        %3684 = vmatprep.subr.bf16.mxu0 %v2679
        %3685 = vmatpush1.bf16.msra.mxu0 %v2678
        %3686 = vmatprep.subr.bf16.mxu0 %v2687
        %3687 = vmatpush1.bf16.msra.mxu0 %v2686
        %3688 = vmatprep.subr.bf16.mxu0 %v2695
        %3689 = vmatpush1.bf16.msra.mxu0 %v2694
        %3690 = vmatprep.subr.bf16.mxu0 %v2703
        %3691 = vmatpush1.bf16.msra.mxu0 %v2702
        %3692 = vmatprep.subr.bf16.mxu0 %v2711
        %3693 = vmatpush1.bf16.msra.mxu0 %v2710
        %3694 = vmatprep.subr.bf16.mxu0 %v2719
        %3695 = vmatpush1.bf16.msra.mxu0 %v2718
        %3696 = vmatprep.subr.bf16.mxu0 %v2727
        %3697 = vmatpush1.bf16.msra.mxu0 %v2726
        %3698 = vmatprep.subr.bf16.mxu0 %v2735
        %3699 = vmatpush1.bf16.msra.mxu0 %v2734
        %3700 = vmatprep.subr.bf16.mxu0 %v2743
        %3701 = vmatpush1.bf16.msra.mxu0 %v2742
        %3702 = vmatprep.subr.bf16.mxu0 %v2751
        %3703 = vmatpush1.bf16.msra.mxu0 %v2750
        %3704 = vmatprep.subr.bf16.mxu0 %v2759
        %3705 = vmatpush1.bf16.msra.mxu0 %v2758
        %3706 = vmatprep.subr.bf16.mxu0 %v2767
        %3707 = vmatpush1.bf16.msra.mxu0 %v2766
        %3708 = vmatprep.subr.bf16.mxu0 %v2775
        %3709 = vmatpush1.bf16.msra.mxu0 %v2774
        %3710 = vmatprep.subr.bf16.mxu0 %v2783
        %3711 = vmatpush1.bf16.msra.mxu0 %v2782
        %3712 = vmatprep.subr.bf16.mxu0 %v2791
        %3713 = vmatpush1.bf16.msra.mxu0 %v2790
        %3714 = vmatprep.mubr.bf16.mxu0 %v361
        %3715 = vmatmul.mubr.bf16.gmra.mrb[0].mxu0 %v360
        %v3716 = vpop.f32.mrb[0].mxu0
        %v3717 = vadd.f32 %v3676, %v3716
        %v3718 = vpop.f32.mrb[0].mxu0
        %v3719 = vadd.f32 %v3678, %v3718
        %v3720 = vpop.f32.mrb[0].mxu0
        %v3721 = vpop.f32.mrb[0].mxu0
        %3722 = vdwg.mxu0
        %3723 = vmatprep.subr.bf16.mxu0 %v2799
        %3724 = vmatpush1.bf16.msra.mxu0 %v2798
        %3725 = vmatprep.subr.bf16.mxu0 %v2807
        %3726 = vmatpush1.bf16.msra.mxu0 %v2806
        %3727 = vmatprep.subr.bf16.mxu0 %v2815
        %3728 = vmatpush1.bf16.msra.mxu0 %v2814
        %3729 = vmatprep.subr.bf16.mxu0 %v2823
        %3730 = vmatpush1.bf16.msra.mxu0 %v2822
        %3731 = vmatprep.subr.bf16.mxu0 %v2831
        %3732 = vmatpush1.bf16.msra.mxu0 %v2830
        %3733 = vmatprep.subr.bf16.mxu0 %v2839
        %3734 = vmatpush1.bf16.msra.mxu0 %v2838
        %3735 = vmatprep.subr.bf16.mxu0 %v2847
        %3736 = vmatpush1.bf16.msra.mxu0 %v2846
        %3737 = vmatprep.subr.bf16.mxu0 %v2855
        %3738 = vmatpush1.bf16.msra.mxu0 %v2854
        %3739 = vmatprep.subr.bf16.mxu0 %v2863
        %3740 = vmatpush1.bf16.msra.mxu0 %v2862
        %3741 = vmatprep.subr.bf16.mxu0 %v2871
        %3742 = vmatpush1.bf16.msra.mxu0 %v2870
        %3743 = vmatprep.subr.bf16.mxu0 %v2879
        %3744 = vmatpush1.bf16.msra.mxu0 %v2878
        %3745 = vmatprep.subr.bf16.mxu0 %v2887
        %3746 = vmatpush1.bf16.msra.mxu0 %v2886
        %3747 = vmatprep.subr.bf16.mxu0 %v2895
        %3748 = vmatpush1.bf16.msra.mxu0 %v2894
        %3749 = vmatprep.subr.bf16.mxu0 %v2903
        %3750 = vmatpush1.bf16.msra.mxu0 %v2902
        %3751 = vmatprep.subr.bf16.mxu0 %v2911
        %3752 = vmatpush1.bf16.msra.mxu0 %v2910
        %3753 = vmatprep.subr.bf16.mxu0 %v2919
        %3754 = vmatpush1.bf16.msra.mxu0 %v2918
        %3755 = vmatprep.mubr.bf16.mxu0 %v363
        %3756 = vmatmul.mubr.bf16.gmra.mrb[0].mxu0 %v362
        %v3757 = vpop.f32.mrb[0].mxu0
        %v3758 = vadd.f32 %v3717, %v3757
        %v3759 = vpop.f32.mrb[0].mxu0
        %v3760 = vadd.f32 %v3719, %v3759
        %v3761 = vpop.f32.mrb[0].mxu0
        %v3762 = vpop.f32.mrb[0].mxu0
        %3763 = vdwg.mxu0
        %3764 = vmatprep.subr.bf16.mxu0 %v2417
        %3765 = vmatpush1.bf16.msra.mxu0 %v2416
        %3766 = vmatprep.subr.bf16.mxu0 %v2425
        %3767 = vmatpush1.bf16.msra.mxu0 %v2424
        %3768 = vmatprep.subr.bf16.mxu0 %v2433
        %3769 = vmatpush1.bf16.msra.mxu0 %v2432
        %3770 = vmatprep.subr.bf16.mxu0 %v2441
        %3771 = vmatpush1.bf16.msra.mxu0 %v2440
        %3772 = vmatprep.subr.bf16.mxu0 %v2449
        %3773 = vmatpush1.bf16.msra.mxu0 %v2448
        %3774 = vmatprep.subr.bf16.mxu0 %v2457
        %3775 = vmatpush1.bf16.msra.mxu0 %v2456
        %3776 = vmatprep.subr.bf16.mxu0 %v2465
        %3777 = vmatpush1.bf16.msra.mxu0 %v2464
        %3778 = vmatprep.subr.bf16.mxu0 %v2473
        %3779 = vmatpush1.bf16.msra.mxu0 %v2472
        %3780 = vmatprep.subr.bf16.mxu0 %v2481
        %3781 = vmatpush1.bf16.msra.mxu0 %v2480
        %3782 = vmatprep.subr.bf16.mxu0 %v2489
        %3783 = vmatpush1.bf16.msra.mxu0 %v2488
        %3784 = vmatprep.subr.bf16.mxu0 %v2497
        %3785 = vmatpush1.bf16.msra.mxu0 %v2496
        %3786 = vmatprep.subr.bf16.mxu0 %v2505
        %3787 = vmatpush1.bf16.msra.mxu0 %v2504
        %3788 = vmatprep.subr.bf16.mxu0 %v2513
        %3789 = vmatpush1.bf16.msra.mxu0 %v2512
        %3790 = vmatprep.subr.bf16.mxu0 %v2521
        %3791 = vmatpush1.bf16.msra.mxu0 %v2520
        %3792 = vmatprep.subr.bf16.mxu0 %v2529
        %3793 = vmatpush1.bf16.msra.mxu0 %v2528
        %3794 = vmatprep.subr.bf16.mxu0 %v2537
        %3795 = vmatpush1.bf16.msra.mxu0 %v2536
        %3796 = vmatprep.mubr.bf16.mxu0 %v357
        %3797 = vmatmul.mubr.bf16.gmra.mrb[0].mxu0 %v356
        %v3798 = vpop.f32.mrb[0].mxu0
        %v3799 = vadd.f32 0.0, %v3798
        %v3800 = vpop.f32.mrb[0].mxu0
        %v3801 = vadd.f32 0.0, %v3800
        %v3802 = vpop.f32.mrb[0].mxu0
        %v3803 = vpop.f32.mrb[0].mxu0
        %3804 = vdwg.mxu0
        %3805 = vmatprep.subr.bf16.mxu0 %v2545
        %3806 = vmatpush1.bf16.msra.mxu0 %v2544
        %3807 = vmatprep.subr.bf16.mxu0 %v2553
        %3808 = vmatpush1.bf16.msra.mxu0 %v2552
        %3809 = vmatprep.subr.bf16.mxu0 %v2561
        %3810 = vmatpush1.bf16.msra.mxu0 %v2560
        %3811 = vmatprep.subr.bf16.mxu0 %v2569
        %3812 = vmatpush1.bf16.msra.mxu0 %v2568
        %3813 = vmatprep.subr.bf16.mxu0 %v2577
        %3814 = vmatpush1.bf16.msra.mxu0 %v2576
        %3815 = vmatprep.subr.bf16.mxu0 %v2585
        %3816 = vmatpush1.bf16.msra.mxu0 %v2584
        %3817 = vmatprep.subr.bf16.mxu0 %v2593
        %3818 = vmatpush1.bf16.msra.mxu0 %v2592
        %3819 = vmatprep.subr.bf16.mxu0 %v2601
        %3820 = vmatpush1.bf16.msra.mxu0 %v2600
        %3821 = vmatprep.subr.bf16.mxu0 %v2609
        %3822 = vmatpush1.bf16.msra.mxu0 %v2608
        %3823 = vmatprep.subr.bf16.mxu0 %v2617
        %3824 = vmatpush1.bf16.msra.mxu0 %v2616
        %3825 = vmatprep.subr.bf16.mxu0 %v2625
        %3826 = vmatpush1.bf16.msra.mxu0 %v2624
        %3827 = vmatprep.subr.bf16.mxu0 %v2633
        %3828 = vmatpush1.bf16.msra.mxu0 %v2632
        %3829 = vmatprep.subr.bf16.mxu0 %v2641
        %3830 = vmatpush1.bf16.msra.mxu0 %v2640
        %3831 = vmatprep.subr.bf16.mxu0 %v2649
        %3832 = vmatpush1.bf16.msra.mxu0 %v2648
        %3833 = vmatprep.subr.bf16.mxu0 %v2657
        %3834 = vmatpush1.bf16.msra.mxu0 %v2656
        %3835 = vmatprep.subr.bf16.mxu0 %v2665
        %3836 = vmatpush1.bf16.msra.mxu0 %v2664
        %3837 = vmatprep.mubr.bf16.mxu0 %v359
        %3838 = vmatmul.mubr.bf16.gmra.mrb[0].mxu0 %v358
        %v3839 = vpop.f32.mrb[0].mxu0
        %v3840 = vadd.f32 %v3799, %v3839
        %v3841 = vpop.f32.mrb[0].mxu0
        %v3842 = vadd.f32 %v3801, %v3841
        %v3843 = vpop.f32.mrb[0].mxu0
        %v3844 = vpop.f32.mrb[0].mxu0
        %3845 = vdwg.mxu0
        %3846 = vmatprep.subr.bf16.mxu0 %v2673
        %3847 = vmatpush1.bf16.msra.mxu0 %v2672
        %3848 = vmatprep.subr.bf16.mxu0 %v2681
        %3849 = vmatpush1.bf16.msra.mxu0 %v2680
        %3850 = vmatprep.subr.bf16.mxu0 %v2689
        %3851 = vmatpush1.bf16.msra.mxu0 %v2688
        %3852 = vmatprep.subr.bf16.mxu0 %v2697
        %3853 = vmatpush1.bf16.msra.mxu0 %v2696
        %3854 = vmatprep.subr.bf16.mxu0 %v2705
        %3855 = vmatpush1.bf16.msra.mxu0 %v2704
        %3856 = vmatprep.subr.bf16.mxu0 %v2713
        %3857 = vmatpush1.bf16.msra.mxu0 %v2712
        %3858 = vmatprep.subr.bf16.mxu0 %v2721
        %3859 = vmatpush1.bf16.msra.mxu0 %v2720
        %3860 = vmatprep.subr.bf16.mxu0 %v2729
        %3861 = vmatpush1.bf16.msra.mxu0 %v2728
        %3862 = vmatprep.subr.bf16.mxu0 %v2737
        %3863 = vmatpush1.bf16.msra.mxu0 %v2736
        %3864 = vmatprep.subr.bf16.mxu0 %v2745
        %3865 = vmatpush1.bf16.msra.mxu0 %v2744
        %3866 = vmatprep.subr.bf16.mxu0 %v2753
        %3867 = vmatpush1.bf16.msra.mxu0 %v2752
        %3868 = vmatprep.subr.bf16.mxu0 %v2761
        %3869 = vmatpush1.bf16.msra.mxu0 %v2760
        %3870 = vmatprep.subr.bf16.mxu0 %v2769
        %3871 = vmatpush1.bf16.msra.mxu0 %v2768
        %3872 = vmatprep.subr.bf16.mxu0 %v2777
        %3873 = vmatpush1.bf16.msra.mxu0 %v2776
        %3874 = vmatprep.subr.bf16.mxu0 %v2785
        %3875 = vmatpush1.bf16.msra.mxu0 %v2784
        %3876 = vmatprep.subr.bf16.mxu0 %v2793
        %3877 = vmatpush1.bf16.msra.mxu0 %v2792
        %3878 = vmatprep.mubr.bf16.mxu0 %v361
        %3879 = vmatmul.mubr.bf16.gmra.mrb[0].mxu0 %v360
        %v3880 = vpop.f32.mrb[0].mxu0
        %v3881 = vadd.f32 %v3840, %v3880
        %v3882 = vpop.f32.mrb[0].mxu0
        %v3883 = vadd.f32 %v3842, %v3882
        %v3884 = vpop.f32.mrb[0].mxu0
        %v3885 = vpop.f32.mrb[0].mxu0
        %3886 = vdwg.mxu0
        %3887 = vmatprep.subr.bf16.mxu0 %v2801
        %3888 = vmatpush1.bf16.msra.mxu0 %v2800
        %3889 = vmatprep.subr.bf16.mxu0 %v2809
        %3890 = vmatpush1.bf16.msra.mxu0 %v2808
        %3891 = vmatprep.subr.bf16.mxu0 %v2817
        %3892 = vmatpush1.bf16.msra.mxu0 %v2816
        %3893 = vmatprep.subr.bf16.mxu0 %v2825
        %3894 = vmatpush1.bf16.msra.mxu0 %v2824
        %3895 = vmatprep.subr.bf16.mxu0 %v2833
        %3896 = vmatpush1.bf16.msra.mxu0 %v2832
        %3897 = vmatprep.subr.bf16.mxu0 %v2841
        %3898 = vmatpush1.bf16.msra.mxu0 %v2840
        %3899 = vmatprep.subr.bf16.mxu0 %v2849
        %3900 = vmatpush1.bf16.msra.mxu0 %v2848
        %3901 = vmatprep.subr.bf16.mxu0 %v2857
        %3902 = vmatpush1.bf16.msra.mxu0 %v2856
        %3903 = vmatprep.subr.bf16.mxu0 %v2865
        %3904 = vmatpush1.bf16.msra.mxu0 %v2864
        %3905 = vmatprep.subr.bf16.mxu0 %v2873
        %3906 = vmatpush1.bf16.msra.mxu0 %v2872
        %3907 = vmatprep.subr.bf16.mxu0 %v2881
        %3908 = vmatpush1.bf16.msra.mxu0 %v2880
        %3909 = vmatprep.subr.bf16.mxu0 %v2889
        %3910 = vmatpush1.bf16.msra.mxu0 %v2888
        %3911 = vmatprep.subr.bf16.mxu0 %v2897
        %3912 = vmatpush1.bf16.msra.mxu0 %v2896
        %3913 = vmatprep.subr.bf16.mxu0 %v2905
        %3914 = vmatpush1.bf16.msra.mxu0 %v2904
        %3915 = vmatprep.subr.bf16.mxu0 %v2913
        %3916 = vmatpush1.bf16.msra.mxu0 %v2912
        %3917 = vmatprep.subr.bf16.mxu0 %v2921
        %3918 = vmatpush1.bf16.msra.mxu0 %v2920
        %3919 = vmatprep.mubr.bf16.mxu0 %v363
        %3920 = vmatmul.mubr.bf16.gmra.mrb[0].mxu0 %v362
        %v3921 = vpop.f32.mrb[0].mxu0
        %v3922 = vadd.f32 %v3881, %v3921
        %v3923 = vpop.f32.mrb[0].mxu0
        %v3924 = vadd.f32 %v3883, %v3923
        %v3925 = vpop.f32.mrb[0].mxu0
        %v3926 = vpop.f32.mrb[0].mxu0
        %3927 = vdwg.mxu0
        %3928 = vmatprep.subr.bf16.mxu0 %v2419
        %3929 = vmatpush1.bf16.msra.mxu0 %v2418
        %3930 = vmatprep.subr.bf16.mxu0 %v2427
        %3931 = vmatpush1.bf16.msra.mxu0 %v2426
        %3932 = vmatprep.subr.bf16.mxu0 %v2435
        %3933 = vmatpush1.bf16.msra.mxu0 %v2434
        %3934 = vmatprep.subr.bf16.mxu0 %v2443
        %3935 = vmatpush1.bf16.msra.mxu0 %v2442
        %3936 = vmatprep.subr.bf16.mxu0 %v2451
        %3937 = vmatpush1.bf16.msra.mxu0 %v2450
        %3938 = vmatprep.subr.bf16.mxu0 %v2459
        %3939 = vmatpush1.bf16.msra.mxu0 %v2458
        %3940 = vmatprep.subr.bf16.mxu0 %v2467
        %3941 = vmatpush1.bf16.msra.mxu0 %v2466
        %3942 = vmatprep.subr.bf16.mxu0 %v2475
        %3943 = vmatpush1.bf16.msra.mxu0 %v2474
        %3944 = vmatprep.subr.bf16.mxu0 %v2483
        %3945 = vmatpush1.bf16.msra.mxu0 %v2482
        %3946 = vmatprep.subr.bf16.mxu0 %v2491
        %3947 = vmatpush1.bf16.msra.mxu0 %v2490
        %3948 = vmatprep.subr.bf16.mxu0 %v2499
        %3949 = vmatpush1.bf16.msra.mxu0 %v2498
        %3950 = vmatprep.subr.bf16.mxu0 %v2507
        %3951 = vmatpush1.bf16.msra.mxu0 %v2506
        %3952 = vmatprep.subr.bf16.mxu0 %v2515
        %3953 = vmatpush1.bf16.msra.mxu0 %v2514
        %3954 = vmatprep.subr.bf16.mxu0 %v2523
        %3955 = vmatpush1.bf16.msra.mxu0 %v2522
        %3956 = vmatprep.subr.bf16.mxu0 %v2531
        %3957 = vmatpush1.bf16.msra.mxu0 %v2530
        %3958 = vmatprep.subr.bf16.mxu0 %v2539
        %3959 = vmatpush1.bf16.msra.mxu0 %v2538
        %3960 = vmatprep.mubr.bf16.mxu0 %v357
        %3961 = vmatmul.mubr.bf16.gmra.mrb[0].mxu0 %v356
        %v3962 = vpop.f32.mrb[0].mxu0
        %v3963 = vadd.f32 0.0, %v3962
        %v3964 = vpop.f32.mrb[0].mxu0
        %v3965 = vadd.f32 0.0, %v3964
        %v3966 = vpop.f32.mrb[0].mxu0
        %v3967 = vpop.f32.mrb[0].mxu0
        %3968 = vdwg.mxu0
        %3969 = vmatprep.subr.bf16.mxu0 %v2547
        %3970 = vmatpush1.bf16.msra.mxu0 %v2546
        %3971 = vmatprep.subr.bf16.mxu0 %v2555
        %3972 = vmatpush1.bf16.msra.mxu0 %v2554
        %3973 = vmatprep.subr.bf16.mxu0 %v2563
        %3974 = vmatpush1.bf16.msra.mxu0 %v2562
        %3975 = vmatprep.subr.bf16.mxu0 %v2571
        %3976 = vmatpush1.bf16.msra.mxu0 %v2570
        %3977 = vmatprep.subr.bf16.mxu0 %v2579
        %3978 = vmatpush1.bf16.msra.mxu0 %v2578
        %3979 = vmatprep.subr.bf16.mxu0 %v2587
        %3980 = vmatpush1.bf16.msra.mxu0 %v2586
        %3981 = vmatprep.subr.bf16.mxu0 %v2595
        %3982 = vmatpush1.bf16.msra.mxu0 %v2594
        %3983 = vmatprep.subr.bf16.mxu0 %v2603
        %3984 = vmatpush1.bf16.msra.mxu0 %v2602
        %3985 = vmatprep.subr.bf16.mxu0 %v2611
        %3986 = vmatpush1.bf16.msra.mxu0 %v2610
        %3987 = vmatprep.subr.bf16.mxu0 %v2619
        %3988 = vmatpush1.bf16.msra.mxu0 %v2618
        %3989 = vmatprep.subr.bf16.mxu0 %v2627
        %3990 = vmatpush1.bf16.msra.mxu0 %v2626
        %3991 = vmatprep.subr.bf16.mxu0 %v2635
        %3992 = vmatpush1.bf16.msra.mxu0 %v2634
        %3993 = vmatprep.subr.bf16.mxu0 %v2643
        %3994 = vmatpush1.bf16.msra.mxu0 %v2642
        %3995 = vmatprep.subr.bf16.mxu0 %v2651
        %3996 = vmatpush1.bf16.msra.mxu0 %v2650
        %3997 = vmatprep.subr.bf16.mxu0 %v2659
        %3998 = vmatpush1.bf16.msra.mxu0 %v2658
        %3999 = vmatprep.subr.bf16.mxu0 %v2667
        %4000 = vmatpush1.bf16.msra.mxu0 %v2666
        %4001 = vmatprep.mubr.bf16.mxu0 %v359
        %4002 = vmatmul.mubr.bf16.gmra.mrb[0].mxu0 %v358
        %v4003 = vpop.f32.mrb[0].mxu0
        %v4004 = vadd.f32 %v3963, %v4003
        %v4005 = vpop.f32.mrb[0].mxu0
        %v4006 = vadd.f32 %v3965, %v4005
        %v4007 = vpop.f32.mrb[0].mxu0
        %v4008 = vpop.f32.mrb[0].mxu0
        %4009 = vdwg.mxu0
        %4010 = vmatprep.subr.bf16.mxu0 %v2675
        %4011 = vmatpush1.bf16.msra.mxu0 %v2674
        %4012 = vmatprep.subr.bf16.mxu0 %v2683
        %4013 = vmatpush1.bf16.msra.mxu0 %v2682
        %4014 = vmatprep.subr.bf16.mxu0 %v2691
        %4015 = vmatpush1.bf16.msra.mxu0 %v2690
        %4016 = vmatprep.subr.bf16.mxu0 %v2699
        %4017 = vmatpush1.bf16.msra.mxu0 %v2698
        %4018 = vmatprep.subr.bf16.mxu0 %v2707
        %4019 = vmatpush1.bf16.msra.mxu0 %v2706
        %4020 = vmatprep.subr.bf16.mxu0 %v2715
        %4021 = vmatpush1.bf16.msra.mxu0 %v2714
        %4022 = vmatprep.subr.bf16.mxu0 %v2723
        %4023 = vmatpush1.bf16.msra.mxu0 %v2722
        %4024 = vmatprep.subr.bf16.mxu0 %v2731
        %4025 = vmatpush1.bf16.msra.mxu0 %v2730
        %4026 = vmatprep.subr.bf16.mxu0 %v2739
        %4027 = vmatpush1.bf16.msra.mxu0 %v2738
        %4028 = vmatprep.subr.bf16.mxu0 %v2747
        %4029 = vmatpush1.bf16.msra.mxu0 %v2746
        %4030 = vmatprep.subr.bf16.mxu0 %v2755
        %4031 = vmatpush1.bf16.msra.mxu0 %v2754
        %4032 = vmatprep.subr.bf16.mxu0 %v2763
        %4033 = vmatpush1.bf16.msra.mxu0 %v2762
        %4034 = vmatprep.subr.bf16.mxu0 %v2771
        %4035 = vmatpush1.bf16.msra.mxu0 %v2770
        %4036 = vmatprep.subr.bf16.mxu0 %v2779
        %4037 = vmatpush1.bf16.msra.mxu0 %v2778
        %4038 = vmatprep.subr.bf16.mxu0 %v2787
        %4039 = vmatpush1.bf16.msra.mxu0 %v2786
        %4040 = vmatprep.subr.bf16.mxu0 %v2795
        %4041 = vmatpush1.bf16.msra.mxu0 %v2794
        %4042 = vmatprep.mubr.bf16.mxu0 %v361
        %4043 = vmatmul.mubr.bf16.gmra.mrb[0].mxu0 %v360
        %v4044 = vpop.f32.mrb[0].mxu0
        %v4045 = vadd.f32 %v4004, %v4044
        %v4046 = vpop.f32.mrb[0].mxu0
        %v4047 = vadd.f32 %v4006, %v4046
        %v4048 = vpop.f32.mrb[0].mxu0
        %v4049 = vpop.f32.mrb[0].mxu0
        %4050 = vdwg.mxu0
        %4051 = vmatprep.subr.bf16.mxu0 %v2803
        %4052 = vmatpush1.bf16.msra.mxu0 %v2802
        %4053 = vmatprep.subr.bf16.mxu0 %v2811
        %4054 = vmatpush1.bf16.msra.mxu0 %v2810
        %4055 = vmatprep.subr.bf16.mxu0 %v2819
        %4056 = vmatpush1.bf16.msra.mxu0 %v2818
        %4057 = vmatprep.subr.bf16.mxu0 %v2827
        %4058 = vmatpush1.bf16.msra.mxu0 %v2826
        %4059 = vmatprep.subr.bf16.mxu0 %v2835
        %4060 = vmatpush1.bf16.msra.mxu0 %v2834
        %4061 = vmatprep.subr.bf16.mxu0 %v2843
        %4062 = vmatpush1.bf16.msra.mxu0 %v2842
        %4063 = vmatprep.subr.bf16.mxu0 %v2851
        %4064 = vmatpush1.bf16.msra.mxu0 %v2850
        %4065 = vmatprep.subr.bf16.mxu0 %v2859
        %4066 = vmatpush1.bf16.msra.mxu0 %v2858
        %4067 = vmatprep.subr.bf16.mxu0 %v2867
        %4068 = vmatpush1.bf16.msra.mxu0 %v2866
        %4069 = vmatprep.subr.bf16.mxu0 %v2875
        %4070 = vmatpush1.bf16.msra.mxu0 %v2874
        %4071 = vmatprep.subr.bf16.mxu0 %v2883
        %4072 = vmatpush1.bf16.msra.mxu0 %v2882
        %4073 = vmatprep.subr.bf16.mxu0 %v2891
        %4074 = vmatpush1.bf16.msra.mxu0 %v2890
        %4075 = vmatprep.subr.bf16.mxu0 %v2899
        %4076 = vmatpush1.bf16.msra.mxu0 %v2898
        %4077 = vmatprep.subr.bf16.mxu0 %v2907
        %4078 = vmatpush1.bf16.msra.mxu0 %v2906
        %4079 = vmatprep.subr.bf16.mxu0 %v2915
        %4080 = vmatpush1.bf16.msra.mxu0 %v2914
        %4081 = vmatprep.subr.bf16.mxu0 %v2923
        %4082 = vmatpush1.bf16.msra.mxu0 %v2922
        %4083 = vmatprep.mubr.bf16.mxu0 %v363
        %4084 = vmatmul.mubr.bf16.gmra.mrb[0].mxu0 %v362
        %v4085 = vpop.f32.mrb[0].mxu0
        %v4086 = vadd.f32 %v4045, %v4085
        %v4087 = vpop.f32.mrb[0].mxu0
        %v4088 = vadd.f32 %v4047, %v4087
        %v4089 = vpop.f32.mrb[0].mxu0
        %v4090 = vpop.f32.mrb[0].mxu0
        %4091 = vdwg.mxu0
        %v4100 = vcombine.low %v3594, %v3596
        %v4101 = vcombine.low %v3758, %v3760
        %v4103 = vunpack.c.l.s4 1983009808
        %v4104 = vunpack.c.0.s8 %v4103
        %v4105 = vlaneseq
        %v4106 = vshrl.u32 %v4105, 7
        %v4107 = vsub.s32 %v4104, %v4106
        %v4108 = vrot.slane %v4100, %v4107
        %v4110 = vunpack.c.l.s4 1983009808
        %v4111 = vunpack.c.0.s8 %v4110
        %v4112 = vlaneseq
        %v4113 = vshrl.u32 %v4112, 7
        %v4114 = vsub.s32 %v4111, %v4113
        %v4115 = vrot.slane %v4101, %v4114
        %v4116 = vcombine.low %v4108, %v4115
        %v4117 = vcombine.low %v3922, %v3924
        %v4118 = vcombine.low %v4086, %v4088
        %v4120 = vunpack.c.l.s4 1983009808
        %v4121 = vunpack.c.0.s8 %v4120
        %v4122 = vlaneseq
        %v4123 = vshrl.u32 %v4122, 7
        %v4124 = vsub.s32 %v4121, %v4123
        %v4125 = vrot.slane %v4117, %v4124
        %v4127 = vunpack.c.l.s4 1983009808
        %v4128 = vunpack.c.0.s8 %v4127
        %v4129 = vlaneseq
        %v4130 = vshrl.u32 %v4129, 7
        %v4131 = vsub.s32 %v4128, %v4130
        %v4132 = vrot.slane %v4118, %v4131
        %v4133 = vcombine.low %v4125, %v4132
        %v4136 = vadd.f32 %v308, %v4116
        %v4137 = vadd.f32 %v309, %v4133
        %4138 = vst [vmem:[#allocation2] sm:$0xff] %v4136
        %4139 = vst [vmem:[#allocation2 + $0x8] sm:$0xff] %v4137
        // Predicated region
        $region45: #{concat_mtl_forward.3} parent=31 // pred_check
          %p4140 = pneg %p302
        $region46: #{concat_mtl_forward.3} parent=31 // pred_check_branch
          %4142 = sbr.rel (%p4140) target = $region48
        $region47: #{concat_mtl_forward.3} parent=31 // pred_region
          %v4143 = vld [vmem:[#allocation2] sm:$0xff]
          %v4144 = vld [vmem:[#allocation2 + $0x8] sm:$0xff]
          %v4145 = vld [vmem:[%s245] sm:$0xff]
          %v4147 = vlaneseq
          %v4148 = vshrl.u32 %v4147, 7
          %v4149 = vsub.s32 0, %v4148
          %v4150 = vrot.slane %v4145, %v4149
          %v4151 = vlaneseq
          %v4152 = vshrl.u32 %v4151, 7
          %v4153 = vsub.s32 1, %v4152
          %v4154 = vrot.slane %v4145, %v4153
          %v4155 = vlaneseq
          %v4156 = vshrl.u32 %v4155, 7
          %v4157 = vsub.s32 2, %v4156
          %v4158 = vrot.slane %v4145, %v4157
          %v4159 = vlaneseq
          %v4160 = vshrl.u32 %v4159, 7
          %v4161 = vsub.s32 3, %v4160
          %v4162 = vrot.slane %v4145, %v4161
          %v4163 = vlaneseq
          %v4164 = vshrl.u32 %v4163, 7
          %v4165 = vsub.s32 4, %v4164
          %v4166 = vrot.slane %v4145, %v4165
          %v4167 = vlaneseq
          %v4168 = vshrl.u32 %v4167, 7
          %v4169 = vsub.s32 5, %v4168
          %v4170 = vrot.slane %v4145, %v4169
          %v4171 = vlaneseq
          %v4172 = vshrl.u32 %v4171, 7
          %v4173 = vsub.s32 6, %v4172
          %v4174 = vrot.slane %v4145, %v4173
          %v4175 = vlaneseq
          %v4176 = vshrl.u32 %v4175, 7
          %v4177 = vsub.s32 7, %v4176
          %v4178 = vrot.slane %v4145, %v4177
          %v4179 = vcombine.low %v4150, %v4154
          %v4180 = vcombine.low %v4158, %v4162
          %v4182 = vunpack.c.l.s4 1983009808
          %v4183 = vunpack.c.0.s8 %v4182
          %v4184 = vlaneseq
          %v4185 = vshrl.u32 %v4184, 7
          %v4186 = vsub.s32 %v4183, %v4185
          %v4187 = vrot.slane %v4179, %v4186
          %v4189 = vunpack.c.l.s4 1983009808
          %v4190 = vunpack.c.0.s8 %v4189
          %v4191 = vlaneseq
          %v4192 = vshrl.u32 %v4191, 7
          %v4193 = vsub.s32 %v4190, %v4192
          %v4194 = vrot.slane %v4180, %v4193
          %v4195 = vcombine.low %v4187, %v4194
          %v4196 = vcombine.low %v4166, %v4170
          %v4197 = vcombine.low %v4174, %v4178
          %v4199 = vunpack.c.l.s4 1983009808
          %v4200 = vunpack.c.0.s8 %v4199
          %v4201 = vlaneseq
          %v4202 = vshrl.u32 %v4201, 7
          %v4203 = vsub.s32 %v4200, %v4202
          %v4204 = vrot.slane %v4196, %v4203
          %v4206 = vunpack.c.l.s4 1983009808
          %v4207 = vunpack.c.0.s8 %v4206
          %v4208 = vlaneseq
          %v4209 = vshrl.u32 %v4208, 7
          %v4210 = vsub.s32 %v4207, %v4209
          %v4211 = vrot.slane %v4197, %v4210
          %v4212 = vcombine.low %v4204, %v4211
          %v4215 = vadd.f32 %v4143, %v4195
          %v4216 = vadd.f32 %v4144, %v4212
          %v4219 = vcombine.high %v4215, %v4215
          %v4221 = vunpack.c.l.s4 1983009808
          %v4222 = vunpack.c.0.s8 %v4221
          %v4223 = vlaneseq
          %v4224 = vshrl.u32 %v4223, 7
          %v4225 = vsub.s32 %v4222, %v4224
          %v4226 = vrot.slane %v4215, %v4225
          %v4228 = vunpack.c.l.s4 1983009808
          %v4229 = vunpack.c.0.s8 %v4228
          %v4230 = vlaneseq
          %v4231 = vshrl.u32 %v4230, 7
          %v4232 = vsub.s32 %v4229, %v4231
          %v4233 = vrot.slane %v4219, %v4232
          %v4234 = vcombine.high %v4226, %v4226
          %v4235 = vcombine.high %v4233, %v4233
          %v4236 = vcombine.high %v4216, %v4216
          %v4238 = vunpack.c.l.s4 1983009808
          %v4239 = vunpack.c.0.s8 %v4238
          %v4240 = vlaneseq
          %v4241 = vshrl.u32 %v4240, 7
          %v4242 = vsub.s32 %v4239, %v4241
          %v4243 = vrot.slane %v4216, %v4242
          %v4245 = vunpack.c.l.s4 1983009808
          %v4246 = vunpack.c.0.s8 %v4245
          %v4247 = vlaneseq
          %v4248 = vshrl.u32 %v4247, 7
          %v4249 = vsub.s32 %v4246, %v4248
          %v4250 = vrot.slane %v4236, %v4249
          %v4251 = vcombine.high %v4243, %v4243
          %v4252 = vcombine.high %v4250, %v4250
          %v4261 = vpack.c.bf16 %v4226, %v4226
          %v4262 = vpack.c.bf16 %v4234, %v4234
          %v4263 = vpack.c.bf16 %v4233, %v4233
          %v4264 = vpack.c.bf16 %v4235, %v4235
          %v4265 = vpack.c.bf16 %v4243, %v4243
          %v4266 = vpack.c.bf16 %v4251, %v4251
          %v4267 = vpack.c.bf16 %v4250, %v4250
          %v4268 = vpack.c.bf16 %v4252, %v4252
          %v4277 = vcombine.low %v4261, %v4262
          %v4278 = vcombine.low %v4263, %v4264
          %v4279 = vcombine.low %v4265, %v4266
          %v4280 = vcombine.low %v4267, %v4268
          %v4282 = vunpack.c.l.s4 1966171168
          %v4283 = vunpack.c.0.s8 %v4282
          %v4284 = vlaneseq
          %v4285 = vshrl.u32 %v4284, 7
          %v4286 = vsub.s32 %v4283, %v4285
          %v4287 = vrot.slane %v4277, %v4286
          %v4289 = vunpack.c.l.s4 1966171168
          %v4290 = vunpack.c.0.s8 %v4289
          %v4291 = vlaneseq
          %v4292 = vshrl.u32 %v4291, 7
          %v4293 = vsub.s32 %v4290, %v4292
          %v4294 = vrot.slane %v4278, %v4293
          %v4296 = vunpack.c.l.s4 1966171168
          %v4297 = vunpack.c.0.s8 %v4296
          %v4298 = vlaneseq
          %v4299 = vshrl.u32 %v4298, 7
          %v4300 = vsub.s32 %v4297, %v4299
          %v4301 = vrot.slane %v4279, %v4300
          %v4303 = vunpack.c.l.s4 1966171168
          %v4304 = vunpack.c.0.s8 %v4303
          %v4305 = vlaneseq
          %v4306 = vshrl.u32 %v4305, 7
          %v4307 = vsub.s32 %v4304, %v4306
          %v4308 = vrot.slane %v4280, %v4307
          %v4309 = vcombine.low %v4287, %v4294
          %v4310 = vcombine.low %v4301, %v4308
          %v4312 = vunpack.c.l.s4 1966171168
          %v4313 = vunpack.c.0.s8 %v4312
          %v4314 = vlaneseq
          %v4315 = vshrl.u32 %v4314, 7
          %v4316 = vsub.s32 %v4313, %v4315
          %v4317 = vrot.slane %v4309, %v4316
          %v4319 = vunpack.c.l.s4 1966171168
          %v4320 = vunpack.c.0.s8 %v4319
          %v4321 = vlaneseq
          %v4322 = vshrl.u32 %v4321, 7
          %v4323 = vsub.s32 %v4320, %v4322
          %v4324 = vrot.slane %v4310, %v4323
          %v4325 = vcombine.low %v4317, %v4324
          %4327 = vst [vmem:[%s300] sm:$0xff] %v4325
        $region48: #{concat_mtl_forward.3} parent=31 // pred_fallthru
          _
        %s4328 = smul.u32 8, %s26
        %p4329 = scmp.lt.s32.totalorder %s25, 2
        %s4330 = scalar_select %p4329, %s25, 2
        %p4331 = scmp.lt.s32.totalorder %s4328, 23
        %s4332 = scalar_select %p4331, %s4328, 23
        %s4333 = smul.addr %s4330, 24
        %s4334 = sadd.s32 %s4332, %s4333
        %s4335 = scalar_lea.vmem %s3, %s4334
        // Predicated region
        $region49: #{concat_mtl_forward.3} parent=31 // pred_check
          %p4336 = pneg %p145
        $region50: #{concat_mtl_forward.3} parent=31 // pred_check_branch
          %4338 = sbr.rel (%p4336) target = $region52
        $region51: #{concat_mtl_forward.3} parent=31 // pred_region
          %s4339 = smul.u32 8, %s26
        $region52: #{concat_mtl_forward.3} parent=31 // pred_fallthru
          _
      $region32: #{concat_mtl_forward.3} parent=5 // pred_fallthru
        _
      %p4340 = scmp.le.s32.totalorder 2, %s15
      // Predicated region
      $region53: #{concat_mtl_forward.3} parent=5 // pred_check
        %p4341 = pneg %p4340
      $region54: #{concat_mtl_forward.3} parent=5 // pred_check_branch
        %4343 = sbr.rel (%p4341) target = $region56
      $region55: #{concat_mtl_forward.3} parent=5 // pred_region
        %s4344 = ssub.s32 %s15, 2
        // Predicated region
        $region57: #{concat_mtl_forward.3} parent=55 // pred_check
          %p4345 = pneg %p151
        $region58: #{concat_mtl_forward.3} parent=55 // pred_check_branch
          %4347 = sbr.rel (%p4345) target = $region60
        $region59: #{concat_mtl_forward.3} parent=55 // pred_region
          %s4348 = smul.u32 8, %s29
          %p4349 = scmp.lt.s32.totalorder %s28, 2
          %s4350 = scalar_select %p4349, %s28, 2
          %p4351 = scmp.lt.s32.totalorder %s4348, 23
          %s4352 = scalar_select %p4351, %s4348, 23
          %s4353 = smul.addr %s4350, 24
          %s4354 = sadd.s32 %s4352, %s4353
          %s4355 = scalar_lea.vmem %s3, %s4354
        $region60: #{concat_mtl_forward.3} parent=55 // pred_fallthru
          _
      $region56: #{concat_mtl_forward.3} parent=5 // pred_fallthru
        _
    $region6: #{concat_mtl_forward.3} parent=1 // loop_footer
      %s19 = sadd.s32 1, %s15
    $region7: #{concat_mtl_forward.3} parent=1 // loop_footer_branch
      %14 = sbr.rel target = $region3
    $region8: #{concat_mtl_forward.3} parent=1 // loop_exit
      _
    %4356 = vsyncpa [#allocation4], 1
    %s4357 = scalar_lea.sflag [#allocation4], 1
    %4358 = vsyncpa %s4357, 1
    %4359 = vsyncpa [#allocation6], 1
    %s4360 = scalar_lea.sflag [#allocation6], 1
    %4361 = vsyncpa %s4360, 1

</llo_original>
